<compile_context>
chip_gen: v7x
topology: tpu7x:2x2x1
jax: 0.10.0
libtpu: 0.0.40
codegen_flags: <defaults>
</compile_context>

<pallas_src>
import jax
import jax.numpy as jnp
from jax import lax
from jax.experimental import pallas as pl
from jax.experimental.pallas import tpu as pltpu

LANE = 128          # MXU / vreg lane width
H = W = 16          # demo input spatial size
CIN = 3             # RGB input channels
C1 = 4              # layer1 width
C2 = 8              # layer2 width (= feat_dim of the stand-in backbone)
N_WEIGHTS = 7       # stem, w11, w12, wd, w21, w22, beta


# ---------------------------------------------------------------------------
# Fused whole-backbone kernel (one grid step == one image)
# ---------------------------------------------------------------------------
def _fused_kernel(x_ref, w_ref, feat_ref, pa_ref, padA, padB, patch, ds_ref):
    bf16 = jnp.bfloat16
    f32 = jnp.float32
    TAPS3 = [(di, dj) for di in range(3) for dj in range(3)]

    def fill_patch(src, taps, cin, ho, wo, stride):
        # Copy shifted (optionally strided) windows of the halo-padded
        # activation into the K-packed im2col patch (lane offset = tap*cin).
        for t, (r0, c0) in enumerate(taps):
            if stride == 1:
                rows, cols = pl.ds(r0, ho), pl.ds(c0, wo)
            else:
                rows = pl.ds(r0, ho, stride=stride)
                cols = pl.ds(c0, wo, stride=stride)
            patch[0:ho, 0:wo, t * cin:(t + 1) * cin] = src[rows, cols, 0:cin]

    def conv_matmul(widx, ho, wo):
        # single MXU matmul per conv: (ho*wo, 128) x (128, 128) -> f32
        pm = patch[0:ho, 0:wo, :].reshape(ho * wo, LANE).astype(bf16)
        return jnp.dot(pm, w_ref[widx], preferred_element_type=f32)

    def store_padded(dst, acc, cout, ho, wo):
        # write the conv output straight into the next layer's halo-padded
        # input buffer (no separate pad pass, no HBM traffic)
        dst[...] = jnp.zeros_like(dst)
        dst[1:ho + 1, 1:wo + 1, 0:cout] = acc.reshape(ho, wo, LANE)[:, :, 0:cout]

    # Unused patch lanes must hold finite values so the zero-padded weight rows
    # kill their contribution exactly (VMEM scratch is uninitialized).
    patch[...] = jnp.zeros_like(patch)

    # ---- stage the input image into padded buffer A ----
    padA[...] = jnp.zeros_like(padA)
    padA[1:H + 1, 1:W + 1, 0:CIN] = x_ref[0]

    # ---- stem: 3x3/s1 + fused ReLU           (padA -> padB) ----
    fill_patch(padA, TAPS3, CIN, H, W, 1)
    acc = jnp.maximum(conv_matmul(0, H, W), 0.0)
    store_padded(padB, acc, C1, H, W)                      # padB = x1 (identity)

    # ---- layer1 conv1 (alpha folded) + ReLU  (padB -> padA) ----
    fill_patch(padB, TAPS3, C1, H, W, 1)
    acc = jnp.maximum(conv_matmul(1, H, W), 0.0)
    store_padded(padA, acc, C1, H, W)

    # ---- layer1 conv2 (alpha folded) + residual(x1) + ReLU  (padA -> padA) ----
    fill_patch(padA, TAPS3, C1, H, W, 1)
    acc = conv_matmul(2, H, W)
    out = acc.reshape(H, W, LANE)[:, :, 0:C1] + padB[1:H + 1, 1:W + 1, 0:C1]
    out = jnp.maximum(out, 0.0)
    padA[...] = jnp.zeros_like(padA)
    padA[1:H + 1, 1:W + 1, 0:C1] = out                     # padA = x2 (layer2 input)

    Ho, Wo = H // 2, W // 2

    # ---- layer2 downsample: 1x1 stride-2 (in-kernel strided reads) ----
    fill_patch(padA, [(1, 1)], C1, Ho, Wo, 2)
    ds_ref[...] = conv_matmul(3, Ho, Wo)                   # identity for layer2

    # ---- layer2 conv1 (alpha folded, stride 2) + ReLU  (padA -> padB) ----
    fill_patch(padA, TAPS3, C1, Ho, Wo, 2)
    acc = jnp.maximum(conv_matmul(4, Ho, Wo), 0.0)
    store_padded(padB, acc, C2, Ho, Wo)

    # ---- layer2 conv2 (alpha folded) + residual + ReLU (kept as a value) ----
    fill_patch(padB, TAPS3, C2, Ho, Wo, 1)
    acc = jnp.maximum(conv_matmul(5, Ho, Wo) + ds_ref[...], 0.0)   # (64, 128)

    # ---- fused epilogue: global average pool + pa (beta) head ----
    pooled = jnp.sum(acc, axis=0, keepdims=True) * (1.0 / (Ho * Wo))  # (1, 128)
    feat_ref[0] = pooled[:, 0:C2]
    pa_out = jnp.dot(pooled.astype(bf16), w_ref[6], preferred_element_type=f32)
    pa_ref[0] = pa_out[:, 0:C2]


# ---------------------------------------------------------------------------
# Forward wrapper (single pallas_call for the whole backbone + pa head)
# ---------------------------------------------------------------------------
def resnet_tsa_forward(x_nchw, prep, feat_dim):
    x = jnp.transpose(x_nchw, (0, 2, 3, 1)).astype(jnp.float32)  # NCHW -> NHWC (tiny)
    N = x.shape[0]
    feats, pa_out = pl.pallas_call(
        _fused_kernel,
        out_shape=(jax.ShapeDtypeStruct((N, 1, C2), jnp.float32),
                   jax.ShapeDtypeStruct((N, 1, C2), jnp.float32)),
        grid=(N,),
        in_specs=[
            pl.BlockSpec((1, H, W, CIN), lambda n: (n, 0, 0, 0)),
            # same weight block every grid step -> resident in VMEM
            pl.BlockSpec((N_WEIGHTS, LANE, LANE), lambda n: (0, 0, 0)),
        ],
        out_specs=(pl.BlockSpec((1, 1, C2), lambda n: (n, 0, 0)),
                   pl.BlockSpec((1, 1, C2), lambda n: (n, 0, 0))),
        scratch_shapes=[
            pltpu.VMEM((H + 2, W + 2, C2), jnp.float32),   # padded activation A
            pltpu.VMEM((H + 2, W + 2, C2), jnp.float32),   # padded activation B
            pltpu.VMEM((H, W, LANE), jnp.float32),         # K-packed im2col patch
            pltpu.VMEM((H * W // 4, LANE), jnp.float32),   # layer2 identity (1x1/s2)
        ],
        compiler_params=pltpu.CompilerParams(
            dimension_semantics=("parallel",),
            vmem_limit_bytes=32 * 1024 * 1024),
    )(x, prep["wstack"])
    # primary output = backbone features; pa_out = attached `beta` (pa) head
    return feats[:, 0, :feat_dim], pa_out[:, 0, :feat_dim]


# ---------------------------------------------------------------------------
# one-time weight repacking (alpha fold + K-packing + pad to 128 + bf16)
# ---------------------------------------------------------------------------
def pack_conv3x3_ktap(w_oihw, alpha_oi=None):
    O, I, kh, kw = w_oihw.shape
    w = w_oihw
    if alpha_oi is not None:
        # conv_tsa: conv3x3(x,W,pad=1,stride) + conv1x1(x,alpha,stride).
        # The centre tap of the padded 3x3 conv reads the same pixel as the
        # stride-matched 1x1 adapter -> exact fold.
        w = w.at[:, :, 1, 1].add(alpha_oi)
    # rows ordered [tap, cin] to match the in-kernel patch packing
    wk = jnp.transpose(w, (2, 3, 1, 0)).reshape(kh * kw * I, O)
    out = jnp.zeros((LANE, LANE), jnp.float32)
    out = out.at[:kh * kw * I, :O].set(wk)
    return out.astype(jnp.bfloat16)


def pack_conv1x1_ktap(w_oi):
    O, I = w_oi.shape
    out = jnp.zeros((LANE, LANE), jnp.float32)
    out = out.at[:I, :O].set(w_oi.T)
    return out.astype(jnp.bfloat16)


def pack_pa(w_ddhw):
    D = w_ddhw.shape[0]
    out = jnp.zeros((LANE, LANE), jnp.float32)
    out = out.at[:D, :D].set(w_ddhw[:, :, 0, 0].T)
    return out.astype(jnp.bfloat16)


def prepare_params(raw):
    """Hoisted one-time repack: alpha-fold, K-pack, pad to 128, bf16, stack."""
    mats = [
        pack_conv3x3_ktap(raw["stem"]),
        pack_conv3x3_ktap(raw["w11"], raw["a11"]),
        pack_conv3x3_ktap(raw["w12"], raw["a12"]),
        pack_conv1x1_ktap(raw["wd"]),
        pack_conv3x3_ktap(raw["w21"], raw["a21"]),
        pack_conv3x3_ktap(raw["w22"], raw["a22"]),
        pack_pa(raw["beta_w"]),
    ]
    return {"wstack": jnp.stack(mats, axis=0)}      # (7, 128, 128) bf16


# ---------------------------------------------------------------------------
# stand-in backbone params + pure-JAX reference (validation)
# ---------------------------------------------------------------------------
def make_params(key, cin=3, c=4):
    ks = jax.random.split(key, 6)
    f = lambda k, shp: 0.1 * jax.random.normal(k, shp, dtype=jnp.float32)
    return {
        "stem": f(ks[0], (c, cin, 3, 3)),                  # plain 3x3 stem
        # layer1 basic block (stride 1, C -> C); 3x3 convs wrapped by conv_tsa
        "w11": f(ks[1], (c, c, 3, 3)), "a11": jnp.ones((c, c), jnp.float32),
        "w12": f(ks[2], (c, c, 3, 3)), "a12": jnp.ones((c, c), jnp.float32),
        # layer2 basic block (stride 2, C -> 2C)
        "w21": f(ks[3], (2 * c, c, 3, 3)), "a21": jnp.ones((2 * c, c), jnp.float32),
        "w22": f(ks[4], (2 * c, 2 * c, 3, 3)), "a22": jnp.ones((2 * c, 2 * c), jnp.float32),
        "wd": f(ks[5], (2 * c, c)),                        # 1x1 downsample (not wrapped)
        # pa / beta head: nn.Parameter(torch.ones(feat_dim, feat_dim, 1, 1))
        "beta_w": jnp.ones((2 * c, 2 * c, 1, 1), jnp.float32),
    }


def _conv_ref(x, w_oihw, stride, pad):
    return lax.conv_general_dilated(
        x, jnp.transpose(w_oihw, (2, 3, 1, 0)),
        window_strides=(stride, stride), padding=[(pad, pad), (pad, pad)],
        dimension_numbers=("NHWC", "HWIO", "NHWC"))


def reference_forward(x_nchw, raw):
    """Pure-JAX f32 reference of the same stand-in backbone."""
    def conv_tsa_ref(x, w, a, stride):
        return (_conv_ref(x, w, stride, 1)
                + _conv_ref(x, a[:, :, None, None], stride, 0))
    x = jnp.transpose(x_nchw, (0, 2, 3, 1))
    x = jax.nn.relu(_conv_ref(x, raw["stem"], 1, 1))
    identity = x
    out = jax.nn.relu(conv_tsa_ref(x, raw["w11"], raw["a11"], 1))
    out = conv_tsa_ref(out, raw["w12"], raw["a12"], 1)
    x = jax.nn.relu(out + identity)
    identity = _conv_ref(x, raw["wd"][:, :, None, None], 2, 0)
    out = jax.nn.relu(conv_tsa_ref(x, raw["w21"], raw["a21"], 2))
    out = conv_tsa_ref(out, raw["w22"], raw["a22"], 1)
    x = jax.nn.relu(out + identity)
    return jnp.mean(x, axis=(1, 2))


if __name__ == "__main__":
    key = jax.random.PRNGKey(0)
    kx, kp = jax.random.split(key)
    c = 4
    feat_dim = 2 * c
    x = jax.random.normal(kx, (2, 3, 16, 16), dtype=jnp.float32)   # NCHW input
    raw = make_params(kp, cin=3, c=c)
    prep = prepare_params(raw)            # one-time weight repack (hoisted)

    fwd = jax.jit(resnet_tsa_forward, static_argnames=("feat_dim",))
    feats, beta_out = fwd(x, prep, feat_dim=feat_dim)
    feats = jax.block_until_ready(feats)
    beta_out = jax.block_until_ready(beta_out)

    # validate against a pure-JAX f32 reference (loose tol for bf16 MXU path)
    ref_feats = reference_forward(x, raw)
    ref_beta = ref_feats @ raw["beta_w"][:, :, 0, 0].T
    err_f = float(jnp.max(jnp.abs(feats - ref_feats)) / (jnp.max(jnp.abs(ref_feats)) + 1e-6))
    err_b = float(jnp.max(jnp.abs(beta_out - ref_beta)) / (jnp.max(jnp.abs(ref_beta)) + 1e-6))

    assert feats.shape == (2, feat_dim) and beta_out.shape == (2, feat_dim)
    assert bool(jnp.all(jnp.isfinite(feats))) and bool(jnp.all(jnp.isfinite(beta_out)))
    assert err_f < 0.1, f"feats mismatch vs reference: rel_err={err_f}"
    assert err_b < 0.1, f"pa mismatch vs reference: rel_err={err_b}"
    print("KERNEL_OK")
</pallas_src>

<mosaic_0001>
module attributes {stable_mosaic.version = 11 : i64} {
  func.func @_fused_kernel(%arg0: i32, %arg1: memref<1x16x16x3xf32, #tpu.memory_space<vmem>>, %arg2: memref<7x128x128xbf16, #tpu.memory_space<vmem>>, %arg3: memref<1x1x8xf32, #tpu.memory_space<vmem>>, %arg4: memref<1x1x8xf32, #tpu.memory_space<vmem>>, %arg5: memref<18x18x8xf32, #tpu.memory_space<vmem>>, %arg6: memref<18x18x8xf32, #tpu.memory_space<vmem>>, %arg7: memref<16x16x128xf32, #tpu.memory_space<vmem>>, %arg8: memref<64x128xf32, #tpu.memory_space<vmem>>) attributes {dimension_semantics = [#tpu.dimension_semantics<parallel>], iteration_bounds = array<i64: 2>, scalar_prefetch = 0 : i64, scratch_operands = 4 : i64, tpu.core_type = #tpu.core_type<tc>, window_params = [{transform_indices = @transform_0, window_bounds = array<i64: 1, 16, 16, 3>}, {pipeline_mode = #tpu.pipeline_mode<synchronous>, transform_indices = @transform_1, window_bounds = array<i64: 7, 128, 128>}, {transform_indices = @transform_2, window_bounds = array<i64: 1, 1, 8>}, {transform_indices = @transform_3, window_bounds = array<i64: 1, 1, 8>}]} {
    %cst = arith.constant 0.000000e+00 : f32
    %0 = vector.broadcast %cst : f32 to vector<16x16x128xf32>
    %c0 = arith.constant 0 : index
    %c0_0 = arith.constant 0 : index
    %c0_1 = arith.constant 0 : index
    %1 = vector.load %arg7[%c0, %c0_0, %c0_1] : memref<16x16x128xf32, #tpu.memory_space<vmem>>, vector<16x16x128xf32>
    tpu.vector_store %arg7[%c0, %c0_0, %c0_1], %0 {strides = array<i32>} : memref<16x16x128xf32, #tpu.memory_space<vmem>>, vector<16x16x128xf32>,
    %cst_2 = arith.constant 0.000000e+00 : f32
    %2 = vector.broadcast %cst_2 : f32 to vector<18x18x8xf32>
    %c0_3 = arith.constant 0 : index
    %c0_4 = arith.constant 0 : index
    %c0_5 = arith.constant 0 : index
    %3 = vector.load %arg5[%c0_3, %c0_4, %c0_5] : memref<18x18x8xf32, #tpu.memory_space<vmem>>, vector<18x18x8xf32>
    tpu.vector_store %arg5[%c0_3, %c0_4, %c0_5], %2 {strides = array<i32>} : memref<18x18x8xf32, #tpu.memory_space<vmem>>, vector<18x18x8xf32>,
    %c0_6 = arith.constant 0 : index
    %c0_7 = arith.constant 0 : index
    %c0_8 = arith.constant 0 : index
    %c0_9 = arith.constant 0 : index
    %4 = vector.load %arg1[%c0_6, %c0_7, %c0_8, %c0_9] : memref<1x16x16x3xf32, #tpu.memory_space<vmem>>, vector<1x16x16x3xf32>
    %5 = vector.shape_cast %4 : vector<1x16x16x3xf32> to vector<16x16x3xf32>
    %c1 = arith.constant 1 : index
    %c1_10 = arith.constant 1 : index
    %c0_11 = arith.constant 0 : index
    %6 = vector.load %arg5[%c1, %c1_10, %c0_11] : memref<18x18x8xf32, #tpu.memory_space<vmem>>, vector<16x16x3xf32>
    tpu.vector_store %arg5[%c1, %c1_10, %c0_11], %5 {strides = array<i32>} : memref<18x18x8xf32, #tpu.memory_space<vmem>>, vector<16x16x3xf32>,
    %c0_12 = arith.constant 0 : index
    %c0_13 = arith.constant 0 : index
    %c0_14 = arith.constant 0 : index
    %7 = vector.load %arg5[%c0_12, %c0_13, %c0_14] : memref<18x18x8xf32, #tpu.memory_space<vmem>>, vector<16x16x3xf32>
    %c0_15 = arith.constant 0 : index
    %c0_16 = arith.constant 0 : index
    %c0_17 = arith.constant 0 : index
    %8 = vector.load %arg7[%c0_15, %c0_16, %c0_17] : memref<16x16x128xf32, #tpu.memory_space<vmem>>, vector<16x16x3xf32>
    tpu.vector_store %arg7[%c0_15, %c0_16, %c0_17], %7 {strides = array<i32>} : memref<16x16x128xf32, #tpu.memory_space<vmem>>, vector<16x16x3xf32>,
    %c0_18 = arith.constant 0 : index
    %c1_19 = arith.constant 1 : index
    %c0_20 = arith.constant 0 : index
    %9 = vector.load %arg5[%c0_18, %c1_19, %c0_20] : memref<18x18x8xf32, #tpu.memory_space<vmem>>, vector<16x16x3xf32>
    %c0_21 = arith.constant 0 : index
    %c0_22 = arith.constant 0 : index
    %c3 = arith.constant 3 : index
    %10 = vector.load %arg7[%c0_21, %c0_22, %c3] : memref<16x16x128xf32, #tpu.memory_space<vmem>>, vector<16x16x3xf32>
    tpu.vector_store %arg7[%c0_21, %c0_22, %c3], %9 {strides = array<i32>} : memref<16x16x128xf32, #tpu.memory_space<vmem>>, vector<16x16x3xf32>,
    %c0_23 = arith.constant 0 : index
    %c2 = arith.constant 2 : index
    %c0_24 = arith.constant 0 : index
    %11 = vector.load %arg5[%c0_23, %c2, %c0_24] : memref<18x18x8xf32, #tpu.memory_space<vmem>>, vector<16x16x3xf32>
    %c0_25 = arith.constant 0 : index
    %c0_26 = arith.constant 0 : index
    %c6 = arith.constant 6 : index
    %12 = vector.load %arg7[%c0_25, %c0_26, %c6] : memref<16x16x128xf32, #tpu.memory_space<vmem>>, vector<16x16x3xf32>
    tpu.vector_store %arg7[%c0_25, %c0_26, %c6], %11 {strides = array<i32>} : memref<16x16x128xf32, #tpu.memory_space<vmem>>, vector<16x16x3xf32>,
    %c1_27 = arith.constant 1 : index
    %c0_28 = arith.constant 0 : index
    %c0_29 = arith.constant 0 : index
    %13 = vector.load %arg5[%c1_27, %c0_28, %c0_29] : memref<18x18x8xf32, #tpu.memory_space<vmem>>, vector<16x16x3xf32>
    %c0_30 = arith.constant 0 : index
    %c0_31 = arith.constant 0 : index
    %c9 = arith.constant 9 : index
    %14 = vector.load %arg7[%c0_30, %c0_31, %c9] : memref<16x16x128xf32, #tpu.memory_space<vmem>>, vector<16x16x3xf32>
    tpu.vector_store %arg7[%c0_30, %c0_31, %c9], %13 {strides = array<i32>} : memref<16x16x128xf32, #tpu.memory_space<vmem>>, vector<16x16x3xf32>,
    %c1_32 = arith.constant 1 : index
    %c1_33 = arith.constant 1 : index
    %c0_34 = arith.constant 0 : index
    %15 = vector.load %arg5[%c1_32, %c1_33, %c0_34] : memref<18x18x8xf32, #tpu.memory_space<vmem>>, vector<16x16x3xf32>
    %c0_35 = arith.constant 0 : index
    %c0_36 = arith.constant 0 : index
    %c12 = arith.constant 12 : index
    %16 = vector.load %arg7[%c0_35, %c0_36, %c12] : memref<16x16x128xf32, #tpu.memory_space<vmem>>, vector<16x16x3xf32>
    tpu.vector_store %arg7[%c0_35, %c0_36, %c12], %15 {strides = array<i32>} : memref<16x16x128xf32, #tpu.memory_space<vmem>>, vector<16x16x3xf32>,
    %c1_37 = arith.constant 1 : index
    %c2_38 = arith.constant 2 : index
    %c0_39 = arith.constant 0 : index
    %17 = vector.load %arg5[%c1_37, %c2_38, %c0_39] : memref<18x18x8xf32, #tpu.memory_space<vmem>>, vector<16x16x3xf32>
    %c0_40 = arith.constant 0 : index
    %c0_41 = arith.constant 0 : index
    %c15 = arith.constant 15 : index
    %18 = vector.load %arg7[%c0_40, %c0_41, %c15] : memref<16x16x128xf32, #tpu.memory_space<vmem>>, vector<16x16x3xf32>
    tpu.vector_store %arg7[%c0_40, %c0_41, %c15], %17 {strides = array<i32>} : memref<16x16x128xf32, #tpu.memory_space<vmem>>, vector<16x16x3xf32>,
    %c2_42 = arith.constant 2 : index
    %c0_43 = arith.constant 0 : index
    %c0_44 = arith.constant 0 : index
    %19 = vector.load %arg5[%c2_42, %c0_43, %c0_44] : memref<18x18x8xf32, #tpu.memory_space<vmem>>, vector<16x16x3xf32>
    %c0_45 = arith.constant 0 : index
    %c0_46 = arith.constant 0 : index
    %c18 = arith.constant 18 : index
    %20 = vector.load %arg7[%c0_45, %c0_46, %c18] : memref<16x16x128xf32, #tpu.memory_space<vmem>>, vector<16x16x3xf32>
    tpu.vector_store %arg7[%c0_45, %c0_46, %c18], %19 {strides = array<i32>} : memref<16x16x128xf32, #tpu.memory_space<vmem>>, vector<16x16x3xf32>,
    %c2_47 = arith.constant 2 : index
    %c1_48 = arith.constant 1 : index
    %c0_49 = arith.constant 0 : index
    %21 = vector.load %arg5[%c2_47, %c1_48, %c0_49] : memref<18x18x8xf32, #tpu.memory_space<vmem>>, vector<16x16x3xf32>
    %c0_50 = arith.constant 0 : index
    %c0_51 = arith.constant 0 : index
    %c21 = arith.constant 21 : index
    %22 = vector.load %arg7[%c0_50, %c0_51, %c21] : memref<16x16x128xf32, #tpu.memory_space<vmem>>, vector<16x16x3xf32>
    tpu.vector_store %arg7[%c0_50, %c0_51, %c21], %21 {strides = array<i32>} : memref<16x16x128xf32, #tpu.memory_space<vmem>>, vector<16x16x3xf32>,
    %c2_52 = arith.constant 2 : index
    %c2_53 = arith.constant 2 : index
    %c0_54 = arith.constant 0 : index
    %23 = vector.load %arg5[%c2_52, %c2_53, %c0_54] : memref<18x18x8xf32, #tpu.memory_space<vmem>>, vector<16x16x3xf32>
    %c0_55 = arith.constant 0 : index
    %c0_56 = arith.constant 0 : index
    %c24 = arith.constant 24 : index
    %24 = vector.load %arg7[%c0_55, %c0_56, %c24] : memref<16x16x128xf32, #tpu.memory_space<vmem>>, vector<16x16x3xf32>
    tpu.vector_store %arg7[%c0_55, %c0_56, %c24], %23 {strides = array<i32>} : memref<16x16x128xf32, #tpu.memory_space<vmem>>, vector<16x16x3xf32>,
    %c0_57 = arith.constant 0 : index
    %c0_58 = arith.constant 0 : index
    %c0_59 = arith.constant 0 : index
    %25 = vector.load %arg7[%c0_57, %c0_58, %c0_59] : memref<16x16x128xf32, #tpu.memory_space<vmem>>, vector<16x16x128xf32>
    %26 = vector.shape_cast %25 : vector<16x16x128xf32> to vector<256x128xf32>
    %27 = arith.truncf %26 : vector<256x128xf32> to vector<256x128xbf16>
    %c0_60 = arith.constant 0 : index
    %c0_61 = arith.constant 0 : index
    %c0_62 = arith.constant 0 : index
    %28 = vector.load %arg2[%c0_60, %c0_61, %c0_62] : memref<7x128x128xbf16, #tpu.memory_space<vmem>>, vector<1x128x128xbf16>
    %29 = vector.shape_cast %28 : vector<1x128x128xbf16> to vector<128x128xbf16>
    %cst_63 = arith.constant dense<0.000000e+00> : vector<256x128xf32>
    %30 = tpu.matmul %27, %29, %cst_63 {dimension_numbers = #tpu.dot_dimension_numbers<[1], [0], [0], [1], [0, 0, 1, 1], [], []>} : vector<256x128xbf16>, vector<128x128xbf16>, vector<256x128xf32> -> vector<256x128xf32>
    %cst_64 = arith.constant 0.000000e+00 : f32
    %31 = vector.broadcast %cst_64 : f32 to vector<256x128xf32>
    %32 = arith.maximumf %30, %31 : vector<256x128xf32>
    %cst_65 = arith.constant 0.000000e+00 : f32
    %33 = vector.broadcast %cst_65 : f32 to vector<18x18x8xf32>
    %c0_66 = arith.constant 0 : index
    %c0_67 = arith.constant 0 : index
    %c0_68 = arith.constant 0 : index
    %34 = vector.load %arg6[%c0_66, %c0_67, %c0_68] : memref<18x18x8xf32, #tpu.memory_space<vmem>>, vector<18x18x8xf32>
    tpu.vector_store %arg6[%c0_66, %c0_67, %c0_68], %33 {strides = array<i32>} : memref<18x18x8xf32, #tpu.memory_space<vmem>>, vector<18x18x8xf32>,
    %35 = vector.shape_cast %32 : vector<256x128xf32> to vector<16x16x128xf32>
    %36 = vector.extract_strided_slice %35 {offsets = [0, 0, 0], sizes = [16, 16, 4], strides = [1, 1, 1]} : vector<16x16x128xf32> to vector<16x16x4xf32>
    %c1_69 = arith.constant 1 : index
    %c1_70 = arith.constant 1 : index
    %c0_71 = arith.constant 0 : index
    %37 = vector.load %arg6[%c1_69, %c1_70, %c0_71] : memref<18x18x8xf32, #tpu.memory_space<vmem>>, vector<16x16x4xf32>
    tpu.vector_store %arg6[%c1_69, %c1_70, %c0_71], %36 {strides = array<i32>} : memref<18x18x8xf32, #tpu.memory_space<vmem>>, vector<16x16x4xf32>,
    %c0_72 = arith.constant 0 : index
    %c0_73 = arith.constant 0 : index
    %c0_74 = arith.constant 0 : index
    %38 = vector.load %arg6[%c0_72, %c0_73, %c0_74] : memref<18x18x8xf32, #tpu.memory_space<vmem>>, vector<16x16x4xf32>
    %c0_75 = arith.constant 0 : index
    %c0_76 = arith.constant 0 : index
    %c0_77 = arith.constant 0 : index
    %39 = vector.load %arg7[%c0_75, %c0_76, %c0_77] : memref<16x16x128xf32, #tpu.memory_space<vmem>>, vector<16x16x4xf32>
    tpu.vector_store %arg7[%c0_75, %c0_76, %c0_77], %38 {strides = array<i32>} : memref<16x16x128xf32, #tpu.memory_space<vmem>>, vector<16x16x4xf32>,
    %c0_78 = arith.constant 0 : index
    %c1_79 = arith.constant 1 : index
    %c0_80 = arith.constant 0 : index
    %40 = vector.load %arg6[%c0_78, %c1_79, %c0_80] : memref<18x18x8xf32, #tpu.memory_space<vmem>>, vector<16x16x4xf32>
    %c0_81 = arith.constant 0 : index
    %c0_82 = arith.constant 0 : index
    %c4 = arith.constant 4 : index
    %41 = vector.load %arg7[%c0_81, %c0_82, %c4] : memref<16x16x128xf32, #tpu.memory_space<vmem>>, vector<16x16x4xf32>
    tpu.vector_store %arg7[%c0_81, %c0_82, %c4], %40 {strides = array<i32>} : memref<16x16x128xf32, #tpu.memory_space<vmem>>, vector<16x16x4xf32>,
    %c0_83 = arith.constant 0 : index
    %c2_84 = arith.constant 2 : index
    %c0_85 = arith.constant 0 : index
    %42 = vector.load %arg6[%c0_83, %c2_84, %c0_85] : memref<18x18x8xf32, #tpu.memory_space<vmem>>, vector<16x16x4xf32>
    %c0_86 = arith.constant 0 : index
    %c0_87 = arith.constant 0 : index
    %c8 = arith.constant 8 : index
    %43 = vector.load %arg7[%c0_86, %c0_87, %c8] : memref<16x16x128xf32, #tpu.memory_space<vmem>>, vector<16x16x4xf32>
    tpu.vector_store %arg7[%c0_86, %c0_87, %c8], %42 {strides = array<i32>} : memref<16x16x128xf32, #tpu.memory_space<vmem>>, vector<16x16x4xf32>,
    %c1_88 = arith.constant 1 : index
    %c0_89 = arith.constant 0 : index
    %c0_90 = arith.constant 0 : index
    %44 = vector.load %arg6[%c1_88, %c0_89, %c0_90] : memref<18x18x8xf32, #tpu.memory_space<vmem>>, vector<16x16x4xf32>
    %c0_91 = arith.constant 0 : index
    %c0_92 = arith.constant 0 : index
    %c12_93 = arith.constant 12 : index
    %45 = vector.load %arg7[%c0_91, %c0_92, %c12_93] : memref<16x16x128xf32, #tpu.memory_space<vmem>>, vector<16x16x4xf32>
    tpu.vector_store %arg7[%c0_91, %c0_92, %c12_93], %44 {strides = array<i32>} : memref<16x16x128xf32, #tpu.memory_space<vmem>>, vector<16x16x4xf32>,
    %c1_94 = arith.constant 1 : index
    %c1_95 = arith.constant 1 : index
    %c0_96 = arith.constant 0 : index
    %46 = vector.load %arg6[%c1_94, %c1_95, %c0_96] : memref<18x18x8xf32, #tpu.memory_space<vmem>>, vector<16x16x4xf32>
    %c0_97 = arith.constant 0 : index
    %c0_98 = arith.constant 0 : index
    %c16 = arith.constant 16 : index
    %47 = vector.load %arg7[%c0_97, %c0_98, %c16] : memref<16x16x128xf32, #tpu.memory_space<vmem>>, vector<16x16x4xf32>
    tpu.vector_store %arg7[%c0_97, %c0_98, %c16], %46 {strides = array<i32>} : memref<16x16x128xf32, #tpu.memory_space<vmem>>, vector<16x16x4xf32>,
    %c1_99 = arith.constant 1 : index
    %c2_100 = arith.constant 2 : index
    %c0_101 = arith.constant 0 : index
    %48 = vector.load %arg6[%c1_99, %c2_100, %c0_101] : memref<18x18x8xf32, #tpu.memory_space<vmem>>, vector<16x16x4xf32>
    %c0_102 = arith.constant 0 : index
    %c0_103 = arith.constant 0 : index
    %c20 = arith.constant 20 : index
    %49 = vector.load %arg7[%c0_102, %c0_103, %c20] : memref<16x16x128xf32, #tpu.memory_space<vmem>>, vector<16x16x4xf32>
    tpu.vector_store %arg7[%c0_102, %c0_103, %c20], %48 {strides = array<i32>} : memref<16x16x128xf32, #tpu.memory_space<vmem>>, vector<16x16x4xf32>,
    %c2_104 = arith.constant 2 : index
    %c0_105 = arith.constant 0 : index
    %c0_106 = arith.constant 0 : index
    %50 = vector.load %arg6[%c2_104, %c0_105, %c0_106] : memref<18x18x8xf32, #tpu.memory_space<vmem>>, vector<16x16x4xf32>
    %c0_107 = arith.constant 0 : index
    %c0_108 = arith.constant 0 : index
    %c24_109 = arith.constant 24 : index
    %51 = vector.load %arg7[%c0_107, %c0_108, %c24_109] : memref<16x16x128xf32, #tpu.memory_space<vmem>>, vector<16x16x4xf32>
    tpu.vector_store %arg7[%c0_107, %c0_108, %c24_109], %50 {strides = array<i32>} : memref<16x16x128xf32, #tpu.memory_space<vmem>>, vector<16x16x4xf32>,
    %c2_110 = arith.constant 2 : index
    %c1_111 = arith.constant 1 : index
    %c0_112 = arith.constant 0 : index
    %52 = vector.load %arg6[%c2_110, %c1_111, %c0_112] : memref<18x18x8xf32, #tpu.memory_space<vmem>>, vector<16x16x4xf32>
    %c0_113 = arith.constant 0 : index
    %c0_114 = arith.constant 0 : index
    %c28 = arith.constant 28 : index
    %53 = vector.load %arg7[%c0_113, %c0_114, %c28] : memref<16x16x128xf32, #tpu.memory_space<vmem>>, vector<16x16x4xf32>
    tpu.vector_store %arg7[%c0_113, %c0_114, %c28], %52 {strides = array<i32>} : memref<16x16x128xf32, #tpu.memory_space<vmem>>, vector<16x16x4xf32>,
    %c2_115 = arith.constant 2 : index
    %c2_116 = arith.constant 2 : index
    %c0_117 = arith.constant 0 : index
    %54 = vector.load %arg6[%c2_115, %c2_116, %c0_117] : memref<18x18x8xf32, #tpu.memory_space<vmem>>, vector<16x16x4xf32>
    %c0_118 = arith.constant 0 : index
    %c0_119 = arith.constant 0 : index
    %c32 = arith.constant 32 : index
    %55 = vector.load %arg7[%c0_118, %c0_119, %c32] : memref<16x16x128xf32, #tpu.memory_space<vmem>>, vector<16x16x4xf32>
    tpu.vector_store %arg7[%c0_118, %c0_119, %c32], %54 {strides = array<i32>} : memref<16x16x128xf32, #tpu.memory_space<vmem>>, vector<16x16x4xf32>,
    %c0_120 = arith.constant 0 : index
    %c0_121 = arith.constant 0 : index
    %c0_122 = arith.constant 0 : index
    %56 = vector.load %arg7[%c0_120, %c0_121, %c0_122] : memref<16x16x128xf32, #tpu.memory_space<vmem>>, vector<16x16x128xf32>
    %57 = vector.shape_cast %56 : vector<16x16x128xf32> to vector<256x128xf32>
    %58 = arith.truncf %57 : vector<256x128xf32> to vector<256x128xbf16>
    %c1_123 = arith.constant 1 : index
    %c0_124 = arith.constant 0 : index
    %c0_125 = arith.constant 0 : index
    %59 = vector.load %arg2[%c1_123, %c0_124, %c0_125] : memref<7x128x128xbf16, #tpu.memory_space<vmem>>, vector<1x128x128xbf16>
    %60 = vector.shape_cast %59 : vector<1x128x128xbf16> to vector<128x128xbf16>
    %cst_126 = arith.constant dense<0.000000e+00> : vector<256x128xf32>
    %61 = tpu.matmul %58, %60, %cst_126 {dimension_numbers = #tpu.dot_dimension_numbers<[1], [0], [0], [1], [0, 0, 1, 1], [], []>} : vector<256x128xbf16>, vector<128x128xbf16>, vector<256x128xf32> -> vector<256x128xf32>
    %cst_127 = arith.constant 0.000000e+00 : f32
    %62 = vector.broadcast %cst_127 : f32 to vector<256x128xf32>
    %63 = arith.maximumf %61, %62 : vector<256x128xf32>
    %cst_128 = arith.constant 0.000000e+00 : f32
    %64 = vector.broadcast %cst_128 : f32 to vector<18x18x8xf32>
    %c0_129 = arith.constant 0 : index
    %c0_130 = arith.constant 0 : index
    %c0_131 = arith.constant 0 : index
    %65 = vector.load %arg5[%c0_129, %c0_130, %c0_131] : memref<18x18x8xf32, #tpu.memory_space<vmem>>, vector<18x18x8xf32>
    tpu.vector_store %arg5[%c0_129, %c0_130, %c0_131], %64 {strides = array<i32>} : memref<18x18x8xf32, #tpu.memory_space<vmem>>, vector<18x18x8xf32>,
    %66 = vector.shape_cast %63 : vector<256x128xf32> to vector<16x16x128xf32>
    %67 = vector.extract_strided_slice %66 {offsets = [0, 0, 0], sizes = [16, 16, 4], strides = [1, 1, 1]} : vector<16x16x128xf32> to vector<16x16x4xf32>
    %c1_132 = arith.constant 1 : index
    %c1_133 = arith.constant 1 : index
    %c0_134 = arith.constant 0 : index
    %68 = vector.load %arg5[%c1_132, %c1_133, %c0_134] : memref<18x18x8xf32, #tpu.memory_space<vmem>>, vector<16x16x4xf32>
    tpu.vector_store %arg5[%c1_132, %c1_133, %c0_134], %67 {strides = array<i32>} : memref<18x18x8xf32, #tpu.memory_space<vmem>>, vector<16x16x4xf32>,
    %c0_135 = arith.constant 0 : index
    %c0_136 = arith.constant 0 : index
    %c0_137 = arith.constant 0 : index
    %69 = vector.load %arg5[%c0_135, %c0_136, %c0_137] : memref<18x18x8xf32, #tpu.memory_space<vmem>>, vector<16x16x4xf32>
    %c0_138 = arith.constant 0 : index
    %c0_139 = arith.constant 0 : index
    %c0_140 = arith.constant 0 : index
    %70 = vector.load %arg7[%c0_138, %c0_139, %c0_140] : memref<16x16x128xf32, #tpu.memory_space<vmem>>, vector<16x16x4xf32>
    tpu.vector_store %arg7[%c0_138, %c0_139, %c0_140], %69 {strides = array<i32>} : memref<16x16x128xf32, #tpu.memory_space<vmem>>, vector<16x16x4xf32>,
    %c0_141 = arith.constant 0 : index
    %c1_142 = arith.constant 1 : index
    %c0_143 = arith.constant 0 : index
    %71 = vector.load %arg5[%c0_141, %c1_142, %c0_143] : memref<18x18x8xf32, #tpu.memory_space<vmem>>, vector<16x16x4xf32>
    %c0_144 = arith.constant 0 : index
    %c0_145 = arith.constant 0 : index
    %c4_146 = arith.constant 4 : index
    %72 = vector.load %arg7[%c0_144, %c0_145, %c4_146] : memref<16x16x128xf32, #tpu.memory_space<vmem>>, vector<16x16x4xf32>
    tpu.vector_store %arg7[%c0_144, %c0_145, %c4_146], %71 {strides = array<i32>} : memref<16x16x128xf32, #tpu.memory_space<vmem>>, vector<16x16x4xf32>,
    %c0_147 = arith.constant 0 : index
    %c2_148 = arith.constant 2 : index
    %c0_149 = arith.constant 0 : index
    %73 = vector.load %arg5[%c0_147, %c2_148, %c0_149] : memref<18x18x8xf32, #tpu.memory_space<vmem>>, vector<16x16x4xf32>
    %c0_150 = arith.constant 0 : index
    %c0_151 = arith.constant 0 : index
    %c8_152 = arith.constant 8 : index
    %74 = vector.load %arg7[%c0_150, %c0_151, %c8_152] : memref<16x16x128xf32, #tpu.memory_space<vmem>>, vector<16x16x4xf32>
    tpu.vector_store %arg7[%c0_150, %c0_151, %c8_152], %73 {strides = array<i32>} : memref<16x16x128xf32, #tpu.memory_space<vmem>>, vector<16x16x4xf32>,
    %c1_153 = arith.constant 1 : index
    %c0_154 = arith.constant 0 : index
    %c0_155 = arith.constant 0 : index
    %75 = vector.load %arg5[%c1_153, %c0_154, %c0_155] : memref<18x18x8xf32, #tpu.memory_space<vmem>>, vector<16x16x4xf32>
    %c0_156 = arith.constant 0 : index
    %c0_157 = arith.constant 0 : index
    %c12_158 = arith.constant 12 : index
    %76 = vector.load %arg7[%c0_156, %c0_157, %c12_158] : memref<16x16x128xf32, #tpu.memory_space<vmem>>, vector<16x16x4xf32>
    tpu.vector_store %arg7[%c0_156, %c0_157, %c12_158], %75 {strides = array<i32>} : memref<16x16x128xf32, #tpu.memory_space<vmem>>, vector<16x16x4xf32>,
    %c1_159 = arith.constant 1 : index
    %c1_160 = arith.constant 1 : index
    %c0_161 = arith.constant 0 : index
    %77 = vector.load %arg5[%c1_159, %c1_160, %c0_161] : memref<18x18x8xf32, #tpu.memory_space<vmem>>, vector<16x16x4xf32>
    %c0_162 = arith.constant 0 : index
    %c0_163 = arith.constant 0 : index
    %c16_164 = arith.constant 16 : index
    %78 = vector.load %arg7[%c0_162, %c0_163, %c16_164] : memref<16x16x128xf32, #tpu.memory_space<vmem>>, vector<16x16x4xf32>
    tpu.vector_store %arg7[%c0_162, %c0_163, %c16_164], %77 {strides = array<i32>} : memref<16x16x128xf32, #tpu.memory_space<vmem>>, vector<16x16x4xf32>,
    %c1_165 = arith.constant 1 : index
    %c2_166 = arith.constant 2 : index
    %c0_167 = arith.constant 0 : index
    %79 = vector.load %arg5[%c1_165, %c2_166, %c0_167] : memref<18x18x8xf32, #tpu.memory_space<vmem>>, vector<16x16x4xf32>
    %c0_168 = arith.constant 0 : index
    %c0_169 = arith.constant 0 : index
    %c20_170 = arith.constant 20 : index
    %80 = vector.load %arg7[%c0_168, %c0_169, %c20_170] : memref<16x16x128xf32, #tpu.memory_space<vmem>>, vector<16x16x4xf32>
    tpu.vector_store %arg7[%c0_168, %c0_169, %c20_170], %79 {strides = array<i32>} : memref<16x16x128xf32, #tpu.memory_space<vmem>>, vector<16x16x4xf32>,
    %c2_171 = arith.constant 2 : index
    %c0_172 = arith.constant 0 : index
    %c0_173 = arith.constant 0 : index
    %81 = vector.load %arg5[%c2_171, %c0_172, %c0_173] : memref<18x18x8xf32, #tpu.memory_space<vmem>>, vector<16x16x4xf32>
    %c0_174 = arith.constant 0 : index
    %c0_175 = arith.constant 0 : index
    %c24_176 = arith.constant 24 : index
    %82 = vector.load %arg7[%c0_174, %c0_175, %c24_176] : memref<16x16x128xf32, #tpu.memory_space<vmem>>, vector<16x16x4xf32>
    tpu.vector_store %arg7[%c0_174, %c0_175, %c24_176], %81 {strides = array<i32>} : memref<16x16x128xf32, #tpu.memory_space<vmem>>, vector<16x16x4xf32>,
    %c2_177 = arith.constant 2 : index
    %c1_178 = arith.constant 1 : index
    %c0_179 = arith.constant 0 : index
    %83 = vector.load %arg5[%c2_177, %c1_178, %c0_179] : memref<18x18x8xf32, #tpu.memory_space<vmem>>, vector<16x16x4xf32>
    %c0_180 = arith.constant 0 : index
    %c0_181 = arith.constant 0 : index
    %c28_182 = arith.constant 28 : index
    %84 = vector.load %arg7[%c0_180, %c0_181, %c28_182] : memref<16x16x128xf32, #tpu.memory_space<vmem>>, vector<16x16x4xf32>
    tpu.vector_store %arg7[%c0_180, %c0_181, %c28_182], %83 {strides = array<i32>} : memref<16x16x128xf32, #tpu.memory_space<vmem>>, vector<16x16x4xf32>,
    %c2_183 = arith.constant 2 : index
    %c2_184 = arith.constant 2 : index
    %c0_185 = arith.constant 0 : index
    %85 = vector.load %arg5[%c2_183, %c2_184, %c0_185] : memref<18x18x8xf32, #tpu.memory_space<vmem>>, vector<16x16x4xf32>
    %c0_186 = arith.constant 0 : index
    %c0_187 = arith.constant 0 : index
    %c32_188 = arith.constant 32 : index
    %86 = vector.load %arg7[%c0_186, %c0_187, %c32_188] : memref<16x16x128xf32, #tpu.memory_space<vmem>>, vector<16x16x4xf32>
    tpu.vector_store %arg7[%c0_186, %c0_187, %c32_188], %85 {strides = array<i32>} : memref<16x16x128xf32, #tpu.memory_space<vmem>>, vector<16x16x4xf32>,
    %c0_189 = arith.constant 0 : index
    %c0_190 = arith.constant 0 : index
    %c0_191 = arith.constant 0 : index
    %87 = vector.load %arg7[%c0_189, %c0_190, %c0_191] : memref<16x16x128xf32, #tpu.memory_space<vmem>>, vector<16x16x128xf32>
    %88 = vector.shape_cast %87 : vector<16x16x128xf32> to vector<256x128xf32>
    %89 = arith.truncf %88 : vector<256x128xf32> to vector<256x128xbf16>
    %c2_192 = arith.constant 2 : index
    %c0_193 = arith.constant 0 : index
    %c0_194 = arith.constant 0 : index
    %90 = vector.load %arg2[%c2_192, %c0_193, %c0_194] : memref<7x128x128xbf16, #tpu.memory_space<vmem>>, vector<1x128x128xbf16>
    %91 = vector.shape_cast %90 : vector<1x128x128xbf16> to vector<128x128xbf16>
    %cst_195 = arith.constant dense<0.000000e+00> : vector<256x128xf32>
    %92 = tpu.matmul %89, %91, %cst_195 {dimension_numbers = #tpu.dot_dimension_numbers<[1], [0], [0], [1], [0, 0, 1, 1], [], []>} : vector<256x128xbf16>, vector<128x128xbf16>, vector<256x128xf32> -> vector<256x128xf32>
    %93 = vector.shape_cast %92 : vector<256x128xf32> to vector<16x16x128xf32>
    %94 = vector.extract_strided_slice %93 {offsets = [0, 0, 0], sizes = [16, 16, 4], strides = [1, 1, 1]} : vector<16x16x128xf32> to vector<16x16x4xf32>
    %c1_196 = arith.constant 1 : index
    %c1_197 = arith.constant 1 : index
    %c0_198 = arith.constant 0 : index
    %95 = vector.load %arg6[%c1_196, %c1_197, %c0_198] : memref<18x18x8xf32, #tpu.memory_space<vmem>>, vector<16x16x4xf32>
    %96 = arith.addf %94, %95 : vector<16x16x4xf32>
    %cst_199 = arith.constant 0.000000e+00 : f32
    %97 = vector.broadcast %cst_199 : f32 to vector<16x16x4xf32>
    %98 = arith.maximumf %96, %97 : vector<16x16x4xf32>
    %cst_200 = arith.constant 0.000000e+00 : f32
    %99 = vector.broadcast %cst_200 : f32 to vector<18x18x8xf32>
    %c0_201 = arith.constant 0 : index
    %c0_202 = arith.constant 0 : index
    %c0_203 = arith.constant 0 : index
    %100 = vector.load %arg5[%c0_201, %c0_202, %c0_203] : memref<18x18x8xf32, #tpu.memory_space<vmem>>, vector<18x18x8xf32>
    tpu.vector_store %arg5[%c0_201, %c0_202, %c0_203], %99 {strides = array<i32>} : memref<18x18x8xf32, #tpu.memory_space<vmem>>, vector<18x18x8xf32>,
    %c1_204 = arith.constant 1 : index
    %c1_205 = arith.constant 1 : index
    %c0_206 = arith.constant 0 : index
    %101 = vector.load %arg5[%c1_204, %c1_205, %c0_206] : memref<18x18x8xf32, #tpu.memory_space<vmem>>, vector<16x16x4xf32>
    tpu.vector_store %arg5[%c1_204, %c1_205, %c0_206], %98 {strides = array<i32>} : memref<18x18x8xf32, #tpu.memory_space<vmem>>, vector<16x16x4xf32>,
    %c1_207 = arith.constant 1 : index
    %c1_208 = arith.constant 1 : index
    %c0_209 = arith.constant 0 : index
    %102 = tpu.strided_load %arg5[%c1_207, %c1_208, %c0_209] {strides = array<i32: 2, 2, 1>} : memref<18x18x8xf32, #tpu.memory_space<vmem>>, vector<8x8x4xf32>
    %c0_210 = arith.constant 0 : index
    %c0_211 = arith.constant 0 : index
    %c0_212 = arith.constant 0 : index
    %103 = vector.load %arg7[%c0_210, %c0_211, %c0_212] : memref<16x16x128xf32, #tpu.memory_space<vmem>>, vector<8x8x4xf32>
    tpu.vector_store %arg7[%c0_210, %c0_211, %c0_212], %102 {strides = array<i32>} : memref<16x16x128xf32, #tpu.memory_space<vmem>>, vector<8x8x4xf32>,
    %c0_213 = arith.constant 0 : index
    %c0_214 = arith.constant 0 : index
    %c0_215 = arith.constant 0 : index
    %104 = vector.load %arg7[%c0_213, %c0_214, %c0_215] : memref<16x16x128xf32, #tpu.memory_space<vmem>>, vector<8x8x128xf32>
    %105 = vector.shape_cast %104 : vector<8x8x128xf32> to vector<64x128xf32>
    %106 = arith.truncf %105 : vector<64x128xf32> to vector<64x128xbf16>
    %c3_216 = arith.constant 3 : index
    %c0_217 = arith.constant 0 : index
    %c0_218 = arith.constant 0 : index
    %107 = vector.load %arg2[%c3_216, %c0_217, %c0_218] : memref<7x128x128xbf16, #tpu.memory_space<vmem>>, vector<1x128x128xbf16>
    %108 = vector.shape_cast %107 : vector<1x128x128xbf16> to vector<128x128xbf16>
    %cst_219 = arith.constant dense<0.000000e+00> : vector<64x128xf32>
    %109 = tpu.matmul %106, %108, %cst_219 {dimension_numbers = #tpu.dot_dimension_numbers<[1], [0], [0], [1], [0, 0, 1, 1], [], []>} : vector<64x128xbf16>, vector<128x128xbf16>, vector<64x128xf32> -> vector<64x128xf32>
    %c0_220 = arith.constant 0 : index
    %c0_221 = arith.constant 0 : index
    %110 = vector.load %arg8[%c0_220, %c0_221] : memref<64x128xf32, #tpu.memory_space<vmem>>, vector<64x128xf32>
    tpu.vector_store %arg8[%c0_220, %c0_221], %109 {strides = array<i32>} : memref<64x128xf32, #tpu.memory_space<vmem>>, vector<64x128xf32>,
    %c0_222 = arith.constant 0 : index
    %c0_223 = arith.constant 0 : index
    %c0_224 = arith.constant 0 : index
    %111 = tpu.strided_load %arg5[%c0_222, %c0_223, %c0_224] {strides = array<i32: 2, 2, 1>} : memref<18x18x8xf32, #tpu.memory_space<vmem>>, vector<8x8x4xf32>
    %c0_225 = arith.constant 0 : index
    %c0_226 = arith.constant 0 : index
    %c0_227 = arith.constant 0 : index
    %112 = vector.load %arg7[%c0_225, %c0_226, %c0_227] : memref<16x16x128xf32, #tpu.memory_space<vmem>>, vector<8x8x4xf32>
    tpu.vector_store %arg7[%c0_225, %c0_226, %c0_227], %111 {strides = array<i32>} : memref<16x16x128xf32, #tpu.memory_space<vmem>>, vector<8x8x4xf32>,
    %c0_228 = arith.constant 0 : index
    %c1_229 = arith.constant 1 : index
    %c0_230 = arith.constant 0 : index
    %113 = tpu.strided_load %arg5[%c0_228, %c1_229, %c0_230] {strides = array<i32: 2, 2, 1>} : memref<18x18x8xf32, #tpu.memory_space<vmem>>, vector<8x8x4xf32>
    %c0_231 = arith.constant 0 : index
    %c0_232 = arith.constant 0 : index
    %c4_233 = arith.constant 4 : index
    %114 = vector.load %arg7[%c0_231, %c0_232, %c4_233] : memref<16x16x128xf32, #tpu.memory_space<vmem>>, vector<8x8x4xf32>
    tpu.vector_store %arg7[%c0_231, %c0_232, %c4_233], %113 {strides = array<i32>} : memref<16x16x128xf32, #tpu.memory_space<vmem>>, vector<8x8x4xf32>,
    %c0_234 = arith.constant 0 : index
    %c2_235 = arith.constant 2 : index
    %c0_236 = arith.constant 0 : index
    %115 = tpu.strided_load %arg5[%c0_234, %c2_235, %c0_236] {strides = array<i32: 2, 2, 1>} : memref<18x18x8xf32, #tpu.memory_space<vmem>>, vector<8x8x4xf32>
    %c0_237 = arith.constant 0 : index
    %c0_238 = arith.constant 0 : index
    %c8_239 = arith.constant 8 : index
    %116 = vector.load %arg7[%c0_237, %c0_238, %c8_239] : memref<16x16x128xf32, #tpu.memory_space<vmem>>, vector<8x8x4xf32>
    tpu.vector_store %arg7[%c0_237, %c0_238, %c8_239], %115 {strides = array<i32>} : memref<16x16x128xf32, #tpu.memory_space<vmem>>, vector<8x8x4xf32>,
    %c1_240 = arith.constant 1 : index
    %c0_241 = arith.constant 0 : index
    %c0_242 = arith.constant 0 : index
    %117 = tpu.strided_load %arg5[%c1_240, %c0_241, %c0_242] {strides = array<i32: 2, 2, 1>} : memref<18x18x8xf32, #tpu.memory_space<vmem>>, vector<8x8x4xf32>
    %c0_243 = arith.constant 0 : index
    %c0_244 = arith.constant 0 : index
    %c12_245 = arith.constant 12 : index
    %118 = vector.load %arg7[%c0_243, %c0_244, %c12_245] : memref<16x16x128xf32, #tpu.memory_space<vmem>>, vector<8x8x4xf32>
    tpu.vector_store %arg7[%c0_243, %c0_244, %c12_245], %117 {strides = array<i32>} : memref<16x16x128xf32, #tpu.memory_space<vmem>>, vector<8x8x4xf32>,
    %c1_246 = arith.constant 1 : index
    %c1_247 = arith.constant 1 : index
    %c0_248 = arith.constant 0 : index
    %119 = tpu.strided_load %arg5[%c1_246, %c1_247, %c0_248] {strides = array<i32: 2, 2, 1>} : memref<18x18x8xf32, #tpu.memory_space<vmem>>, vector<8x8x4xf32>
    %c0_249 = arith.constant 0 : index
    %c0_250 = arith.constant 0 : index
    %c16_251 = arith.constant 16 : index
    %120 = vector.load %arg7[%c0_249, %c0_250, %c16_251] : memref<16x16x128xf32, #tpu.memory_space<vmem>>, vector<8x8x4xf32>
    tpu.vector_store %arg7[%c0_249, %c0_250, %c16_251], %119 {strides = array<i32>} : memref<16x16x128xf32, #tpu.memory_space<vmem>>, vector<8x8x4xf32>,
    %c1_252 = arith.constant 1 : index
    %c2_253 = arith.constant 2 : index
    %c0_254 = arith.constant 0 : index
    %121 = tpu.strided_load %arg5[%c1_252, %c2_253, %c0_254] {strides = array<i32: 2, 2, 1>} : memref<18x18x8xf32, #tpu.memory_space<vmem>>, vector<8x8x4xf32>
    %c0_255 = arith.constant 0 : index
    %c0_256 = arith.constant 0 : index
    %c20_257 = arith.constant 20 : index
    %122 = vector.load %arg7[%c0_255, %c0_256, %c20_257] : memref<16x16x128xf32, #tpu.memory_space<vmem>>, vector<8x8x4xf32>
    tpu.vector_store %arg7[%c0_255, %c0_256, %c20_257], %121 {strides = array<i32>} : memref<16x16x128xf32, #tpu.memory_space<vmem>>, vector<8x8x4xf32>,
    %c2_258 = arith.constant 2 : index
    %c0_259 = arith.constant 0 : index
    %c0_260 = arith.constant 0 : index
    %123 = tpu.strided_load %arg5[%c2_258, %c0_259, %c0_260] {strides = array<i32: 2, 2, 1>} : memref<18x18x8xf32, #tpu.memory_space<vmem>>, vector<8x8x4xf32>
    %c0_261 = arith.constant 0 : index
    %c0_262 = arith.constant 0 : index
    %c24_263 = arith.constant 24 : index
    %124 = vector.load %arg7[%c0_261, %c0_262, %c24_263] : memref<16x16x128xf32, #tpu.memory_space<vmem>>, vector<8x8x4xf32>
    tpu.vector_store %arg7[%c0_261, %c0_262, %c24_263], %123 {strides = array<i32>} : memref<16x16x128xf32, #tpu.memory_space<vmem>>, vector<8x8x4xf32>,
    %c2_264 = arith.constant 2 : index
    %c1_265 = arith.constant 1 : index
    %c0_266 = arith.constant 0 : index
    %125 = tpu.strided_load %arg5[%c2_264, %c1_265, %c0_266] {strides = array<i32: 2, 2, 1>} : memref<18x18x8xf32, #tpu.memory_space<vmem>>, vector<8x8x4xf32>
    %c0_267 = arith.constant 0 : index
    %c0_268 = arith.constant 0 : index
    %c28_269 = arith.constant 28 : index
    %126 = vector.load %arg7[%c0_267, %c0_268, %c28_269] : memref<16x16x128xf32, #tpu.memory_space<vmem>>, vector<8x8x4xf32>
    tpu.vector_store %arg7[%c0_267, %c0_268, %c28_269], %125 {strides = array<i32>} : memref<16x16x128xf32, #tpu.memory_space<vmem>>, vector<8x8x4xf32>,
    %c2_270 = arith.constant 2 : index
    %c2_271 = arith.constant 2 : index
    %c0_272 = arith.constant 0 : index
    %127 = tpu.strided_load %arg5[%c2_270, %c2_271, %c0_272] {strides = array<i32: 2, 2, 1>} : memref<18x18x8xf32, #tpu.memory_space<vmem>>, vector<8x8x4xf32>
    %c0_273 = arith.constant 0 : index
    %c0_274 = arith.constant 0 : index
    %c32_275 = arith.constant 32 : index
    %128 = vector.load %arg7[%c0_273, %c0_274, %c32_275] : memref<16x16x128xf32, #tpu.memory_space<vmem>>, vector<8x8x4xf32>
    tpu.vector_store %arg7[%c0_273, %c0_274, %c32_275], %127 {strides = array<i32>} : memref<16x16x128xf32, #tpu.memory_space<vmem>>, vector<8x8x4xf32>,
    %c0_276 = arith.constant 0 : index
    %c0_277 = arith.constant 0 : index
    %c0_278 = arith.constant 0 : index
    %129 = vector.load %arg7[%c0_276, %c0_277, %c0_278] : memref<16x16x128xf32, #tpu.memory_space<vmem>>, vector<8x8x128xf32>
    %130 = vector.shape_cast %129 : vector<8x8x128xf32> to vector<64x128xf32>
    %131 = arith.truncf %130 : vector<64x128xf32> to vector<64x128xbf16>
    %c4_279 = arith.constant 4 : index
    %c0_280 = arith.constant 0 : index
    %c0_281 = arith.constant 0 : index
    %132 = vector.load %arg2[%c4_279, %c0_280, %c0_281] : memref<7x128x128xbf16, #tpu.memory_space<vmem>>, vector<1x128x128xbf16>
    %133 = vector.shape_cast %132 : vector<1x128x128xbf16> to vector<128x128xbf16>
    %cst_282 = arith.constant dense<0.000000e+00> : vector<64x128xf32>
    %134 = tpu.matmul %131, %133, %cst_282 {dimension_numbers = #tpu.dot_dimension_numbers<[1], [0], [0], [1], [0, 0, 1, 1], [], []>} : vector<64x128xbf16>, vector<128x128xbf16>, vector<64x128xf32> -> vector<64x128xf32>
    %cst_283 = arith.constant 0.000000e+00 : f32
    %135 = vector.broadcast %cst_283 : f32 to vector<64x128xf32>
    %136 = arith.maximumf %134, %135 : vector<64x128xf32>
    %cst_284 = arith.constant 0.000000e+00 : f32
    %137 = vector.broadcast %cst_284 : f32 to vector<18x18x8xf32>
    %c0_285 = arith.constant 0 : index
    %c0_286 = arith.constant 0 : index
    %c0_287 = arith.constant 0 : index
    %138 = vector.load %arg6[%c0_285, %c0_286, %c0_287] : memref<18x18x8xf32, #tpu.memory_space<vmem>>, vector<18x18x8xf32>
    tpu.vector_store %arg6[%c0_285, %c0_286, %c0_287], %137 {strides = array<i32>} : memref<18x18x8xf32, #tpu.memory_space<vmem>>, vector<18x18x8xf32>,
    %139 = vector.shape_cast %136 : vector<64x128xf32> to vector<8x8x128xf32>
    %140 = vector.extract_strided_slice %139 {offsets = [0, 0, 0], sizes = [8, 8, 8], strides = [1, 1, 1]} : vector<8x8x128xf32> to vector<8x8x8xf32>
    %c1_288 = arith.constant 1 : index
    %c1_289 = arith.constant 1 : index
    %c0_290 = arith.constant 0 : index
    %141 = vector.load %arg6[%c1_288, %c1_289, %c0_290] : memref<18x18x8xf32, #tpu.memory_space<vmem>>, vector<8x8x8xf32>
    tpu.vector_store %arg6[%c1_288, %c1_289, %c0_290], %140 {strides = array<i32>} : memref<18x18x8xf32, #tpu.memory_space<vmem>>, vector<8x8x8xf32>,
    %c0_291 = arith.constant 0 : index
    %c0_292 = arith.constant 0 : index
    %c0_293 = arith.constant 0 : index
    %142 = vector.load %arg6[%c0_291, %c0_292, %c0_293] : memref<18x18x8xf32, #tpu.memory_space<vmem>>, vector<8x8x8xf32>
    %c0_294 = arith.constant 0 : index
    %c0_295 = arith.constant 0 : index
    %c0_296 = arith.constant 0 : index
    %143 = vector.load %arg7[%c0_294, %c0_295, %c0_296] : memref<16x16x128xf32, #tpu.memory_space<vmem>>, vector<8x8x8xf32>
    tpu.vector_store %arg7[%c0_294, %c0_295, %c0_296], %142 {strides = array<i32>} : memref<16x16x128xf32, #tpu.memory_space<vmem>>, vector<8x8x8xf32>,
    %c0_297 = arith.constant 0 : index
    %c1_298 = arith.constant 1 : index
    %c0_299 = arith.constant 0 : index
    %144 = vector.load %arg6[%c0_297, %c1_298, %c0_299] : memref<18x18x8xf32, #tpu.memory_space<vmem>>, vector<8x8x8xf32>
    %c0_300 = arith.constant 0 : index
    %c0_301 = arith.constant 0 : index
    %c8_302 = arith.constant 8 : index
    %145 = vector.load %arg7[%c0_300, %c0_301, %c8_302] : memref<16x16x128xf32, #tpu.memory_space<vmem>>, vector<8x8x8xf32>
    tpu.vector_store %arg7[%c0_300, %c0_301, %c8_302], %144 {strides = array<i32>} : memref<16x16x128xf32, #tpu.memory_space<vmem>>, vector<8x8x8xf32>,
    %c0_303 = arith.constant 0 : index
    %c2_304 = arith.constant 2 : index
    %c0_305 = arith.constant 0 : index
    %146 = vector.load %arg6[%c0_303, %c2_304, %c0_305] : memref<18x18x8xf32, #tpu.memory_space<vmem>>, vector<8x8x8xf32>
    %c0_306 = arith.constant 0 : index
    %c0_307 = arith.constant 0 : index
    %c16_308 = arith.constant 16 : index
    %147 = vector.load %arg7[%c0_306, %c0_307, %c16_308] : memref<16x16x128xf32, #tpu.memory_space<vmem>>, vector<8x8x8xf32>
    tpu.vector_store %arg7[%c0_306, %c0_307, %c16_308], %146 {strides = array<i32>} : memref<16x16x128xf32, #tpu.memory_space<vmem>>, vector<8x8x8xf32>,
    %c1_309 = arith.constant 1 : index
    %c0_310 = arith.constant 0 : index
    %c0_311 = arith.constant 0 : index
    %148 = vector.load %arg6[%c1_309, %c0_310, %c0_311] : memref<18x18x8xf32, #tpu.memory_space<vmem>>, vector<8x8x8xf32>
    %c0_312 = arith.constant 0 : index
    %c0_313 = arith.constant 0 : index
    %c24_314 = arith.constant 24 : index
    %149 = vector.load %arg7[%c0_312, %c0_313, %c24_314] : memref<16x16x128xf32, #tpu.memory_space<vmem>>, vector<8x8x8xf32>
    tpu.vector_store %arg7[%c0_312, %c0_313, %c24_314], %148 {strides = array<i32>} : memref<16x16x128xf32, #tpu.memory_space<vmem>>, vector<8x8x8xf32>,
    %c1_315 = arith.constant 1 : index
    %c1_316 = arith.constant 1 : index
    %c0_317 = arith.constant 0 : index
    %150 = vector.load %arg6[%c1_315, %c1_316, %c0_317] : memref<18x18x8xf32, #tpu.memory_space<vmem>>, vector<8x8x8xf32>
    %c0_318 = arith.constant 0 : index
    %c0_319 = arith.constant 0 : index
    %c32_320 = arith.constant 32 : index
    %151 = vector.load %arg7[%c0_318, %c0_319, %c32_320] : memref<16x16x128xf32, #tpu.memory_space<vmem>>, vector<8x8x8xf32>
    tpu.vector_store %arg7[%c0_318, %c0_319, %c32_320], %150 {strides = array<i32>} : memref<16x16x128xf32, #tpu.memory_space<vmem>>, vector<8x8x8xf32>,
    %c1_321 = arith.constant 1 : index
    %c2_322 = arith.constant 2 : index
    %c0_323 = arith.constant 0 : index
    %152 = vector.load %arg6[%c1_321, %c2_322, %c0_323] : memref<18x18x8xf32, #tpu.memory_space<vmem>>, vector<8x8x8xf32>
    %c0_324 = arith.constant 0 : index
    %c0_325 = arith.constant 0 : index
    %c40 = arith.constant 40 : index
    %153 = vector.load %arg7[%c0_324, %c0_325, %c40] : memref<16x16x128xf32, #tpu.memory_space<vmem>>, vector<8x8x8xf32>
    tpu.vector_store %arg7[%c0_324, %c0_325, %c40], %152 {strides = array<i32>} : memref<16x16x128xf32, #tpu.memory_space<vmem>>, vector<8x8x8xf32>,
    %c2_326 = arith.constant 2 : index
    %c0_327 = arith.constant 0 : index
    %c0_328 = arith.constant 0 : index
    %154 = vector.load %arg6[%c2_326, %c0_327, %c0_328] : memref<18x18x8xf32, #tpu.memory_space<vmem>>, vector<8x8x8xf32>
    %c0_329 = arith.constant 0 : index
    %c0_330 = arith.constant 0 : index
    %c48 = arith.constant 48 : index
    %155 = vector.load %arg7[%c0_329, %c0_330, %c48] : memref<16x16x128xf32, #tpu.memory_space<vmem>>, vector<8x8x8xf32>
    tpu.vector_store %arg7[%c0_329, %c0_330, %c48], %154 {strides = array<i32>} : memref<16x16x128xf32, #tpu.memory_space<vmem>>, vector<8x8x8xf32>,
    %c2_331 = arith.constant 2 : index
    %c1_332 = arith.constant 1 : index
    %c0_333 = arith.constant 0 : index
    %156 = vector.load %arg6[%c2_331, %c1_332, %c0_333] : memref<18x18x8xf32, #tpu.memory_space<vmem>>, vector<8x8x8xf32>
    %c0_334 = arith.constant 0 : index
    %c0_335 = arith.constant 0 : index
    %c56 = arith.constant 56 : index
    %157 = vector.load %arg7[%c0_334, %c0_335, %c56] : memref<16x16x128xf32, #tpu.memory_space<vmem>>, vector<8x8x8xf32>
    tpu.vector_store %arg7[%c0_334, %c0_335, %c56], %156 {strides = array<i32>} : memref<16x16x128xf32, #tpu.memory_space<vmem>>, vector<8x8x8xf32>,
    %c2_336 = arith.constant 2 : index
    %c2_337 = arith.constant 2 : index
    %c0_338 = arith.constant 0 : index
    %158 = vector.load %arg6[%c2_336, %c2_337, %c0_338] : memref<18x18x8xf32, #tpu.memory_space<vmem>>, vector<8x8x8xf32>
    %c0_339 = arith.constant 0 : index
    %c0_340 = arith.constant 0 : index
    %c64 = arith.constant 64 : index
    %159 = vector.load %arg7[%c0_339, %c0_340, %c64] : memref<16x16x128xf32, #tpu.memory_space<vmem>>, vector<8x8x8xf32>
    tpu.vector_store %arg7[%c0_339, %c0_340, %c64], %158 {strides = array<i32>} : memref<16x16x128xf32, #tpu.memory_space<vmem>>, vector<8x8x8xf32>,
    %c0_341 = arith.constant 0 : index
    %c0_342 = arith.constant 0 : index
    %c0_343 = arith.constant 0 : index
    %160 = vector.load %arg7[%c0_341, %c0_342, %c0_343] : memref<16x16x128xf32, #tpu.memory_space<vmem>>, vector<8x8x128xf32>
    %161 = vector.shape_cast %160 : vector<8x8x128xf32> to vector<64x128xf32>
    %162 = arith.truncf %161 : vector<64x128xf32> to vector<64x128xbf16>
    %c5 = arith.constant 5 : index
    %c0_344 = arith.constant 0 : index
    %c0_345 = arith.constant 0 : index
    %163 = vector.load %arg2[%c5, %c0_344, %c0_345] : memref<7x128x128xbf16, #tpu.memory_space<vmem>>, vector<1x128x128xbf16>
    %164 = vector.shape_cast %163 : vector<1x128x128xbf16> to vector<128x128xbf16>
    %cst_346 = arith.constant dense<0.000000e+00> : vector<64x128xf32>
    %165 = tpu.matmul %162, %164, %cst_346 {dimension_numbers = #tpu.dot_dimension_numbers<[1], [0], [0], [1], [0, 0, 1, 1], [], []>} : vector<64x128xbf16>, vector<128x128xbf16>, vector<64x128xf32> -> vector<64x128xf32>
    %c0_347 = arith.constant 0 : index
    %c0_348 = arith.constant 0 : index
    %166 = vector.load %arg8[%c0_347, %c0_348] : memref<64x128xf32, #tpu.memory_space<vmem>>, vector<64x128xf32>
    %167 = arith.addf %165, %166 : vector<64x128xf32>
    %cst_349 = arith.constant 0.000000e+00 : f32
    %168 = vector.broadcast %cst_349 : f32 to vector<64x128xf32>
    %169 = arith.maximumf %167, %168 : vector<64x128xf32>
    %cst_350 = arith.constant dense<0.000000e+00> : vector<128xf32>
    %170 = vector.multi_reduction <add>, %169, %cst_350 [0] : vector<64x128xf32> to vector<128xf32>
    %171 = vector.shape_cast %170 : vector<128xf32> to vector<1x128xf32>
    %cst_351 = arith.constant 1.562500e-02 : f32
    %172 = vector.broadcast %cst_351 : f32 to vector<1x128xf32>
    %173 = arith.mulf %171, %172 : vector<1x128xf32>
    %174 = vector.extract_strided_slice %173 {offsets = [0, 0], sizes = [1, 8], strides = [1, 1]} : vector<1x128xf32> to vector<1x8xf32>
    %c0_352 = arith.constant 0 : index
    %c0_353 = arith.constant 0 : index
    %c0_354 = arith.constant 0 : index
    %175 = vector.load %arg3[%c0_352, %c0_353, %c0_354] : memref<1x1x8xf32, #tpu.memory_space<vmem>>, vector<1x1x8xf32>
    %176 = vector.shape_cast %175 : vector<1x1x8xf32> to vector<1x8xf32>
    %177 = vector.shape_cast %174 : vector<1x8xf32> to vector<1x1x8xf32>
    tpu.vector_store %arg3[%c0_352, %c0_353, %c0_354], %177 {strides = array<i32>} : memref<1x1x8xf32, #tpu.memory_space<vmem>>, vector<1x1x8xf32>,
    %178 = arith.truncf %173 : vector<1x128xf32> to vector<1x128xbf16>
    %c6_355 = arith.constant 6 : index
    %c0_356 = arith.constant 0 : index
    %c0_357 = arith.constant 0 : index
    %179 = vector.load %arg2[%c6_355, %c0_356, %c0_357] : memref<7x128x128xbf16, #tpu.memory_space<vmem>>, vector<1x128x128xbf16>
    %180 = vector.shape_cast %179 : vector<1x128x128xbf16> to vector<128x128xbf16>
    %cst_358 = arith.constant dense<0.000000e+00> : vector<1x128xf32>
    %181 = tpu.matmul %178, %180, %cst_358 {dimension_numbers = #tpu.dot_dimension_numbers<[1], [0], [0], [1], [0, 0, 1, 1], [], []>} : vector<1x128xbf16>, vector<128x128xbf16>, vector<1x128xf32> -> vector<1x128xf32>
    %182 = vector.extract_strided_slice %181 {offsets = [0, 0], sizes = [1, 8], strides = [1, 1]} : vector<1x128xf32> to vector<1x8xf32>
    %c0_359 = arith.constant 0 : index
    %c0_360 = arith.constant 0 : index
    %c0_361 = arith.constant 0 : index
    %183 = vector.load %arg4[%c0_359, %c0_360, %c0_361] : memref<1x1x8xf32, #tpu.memory_space<vmem>>, vector<1x1x8xf32>
    %184 = vector.shape_cast %183 : vector<1x1x8xf32> to vector<1x8xf32>
    %185 = vector.shape_cast %182 : vector<1x8xf32> to vector<1x1x8xf32>
    tpu.vector_store %arg4[%c0_359, %c0_360, %c0_361], %185 {strides = array<i32>} : memref<1x1x8xf32, #tpu.memory_space<vmem>>, vector<1x1x8xf32>,
    return
  }
  func.func @transform_0(%arg0: i32) -> (i32, i32, i32, i32) {
    %c0_i32 = arith.constant 0 : i32
    %c0_i32_0 = arith.constant 0 : i32
    %c0_i32_1 = arith.constant 0 : i32
    %c0_i32_2 = arith.constant 0 : i32
    return %arg0, %c0_i32, %c0_i32_0, %c0_i32_1 : i32, i32, i32, i32
  }
  func.func @transform_1(%arg0: i32) -> (i32, i32, i32) {
    %c0_i32 = arith.constant 0 : i32
    %c0_i32_0 = arith.constant 0 : i32
    %c0_i32_1 = arith.constant 0 : i32
    %c0_i32_2 = arith.constant 0 : i32
    return %c0_i32, %c0_i32_0, %c0_i32_1 : i32, i32, i32
  }
  func.func @transform_2(%arg0: i32) -> (i32, i32, i32) {
    %c0_i32 = arith.constant 0 : i32
    %c0_i32_0 = arith.constant 0 : i32
    %c0_i32_1 = arith.constant 0 : i32
    return %arg0, %c0_i32, %c0_i32_0 : i32, i32, i32
  }
  func.func @transform_3(%arg0: i32) -> (i32, i32, i32) {
    %c0_i32 = arith.constant 0 : i32
    %c0_i32_0 = arith.constant 0 : i32
    %c0_i32_1 = arith.constant 0 : i32
    return %arg0, %c0_i32, %c0_i32_0 : i32, i32, i32
  }
}

</mosaic_0001>

<llo_original>
// kernel: resnet_tsa_forward.1
$region0: #{resnet_tsa_forward.1}
  #allocation0 [shape = 'u32[]', space=smem, size = 0x4, offset = 0x4, fixed_abs, tag = 'smem constant byte address 0x4 - core index']
  #allocation1 [shape = 'u32[144,128]{1,0:T(1,128)}', space=vmem, size = 0x12000, scoped, tag = 'internal scratch']
  #allocation2 [shape = 'f32[18,18,8]{2,1,0:T(8,128)}', space=vmem, size = 0x36000, scoped, tag = 'scratch operand']
  #allocation3 [shape = 'f32[18,18,8]{2,1,0:T(8,128)}', space=vmem, size = 0x36000, scoped, tag = 'scratch operand']
  #allocation4 [shape = 'f32[16,16,128]{2,1,0:T(8,128)}', space=vmem, size = 0x20000, scoped, tag = 'scratch operand']
  #allocation5 [shape = 'f32[64,128]{1,0:T(8,128)}', space=vmem, size = 0x8000, scoped, tag = 'scratch operand']
  %s0 = inlined_call_operand.vmem [shape: f32[2,16,16,3], index: 0, kind: input, shape index: {}]
  %s1 = inlined_call_operand.vmem [shape: bf16[7,128,128], index: 1, kind: input, shape index: {}]
  %s2 = inlined_call_operand.hbm [shape: f32[2,1,8], index: 2, kind: output, shape index: {0}]
  %s3 = inlined_call_operand.hbm [shape: f32[2,1,8], index: 3, kind: output, shape index: {1}]
  %4 = xla_tuple %s2, %s3
  %s5 = sld [smem:[#allocation0]]
  $region49: #{resnet_tsa_forward.1} parent=0
    _
  %s7 = ssub.s32 1, %s5
  %s8 = scalar_select 0, %s7, %s5
  $region1: #{resnet_tsa_forward.1} parent=0
    #allocation6 [shape = 'u8[1024]{0}', space=vmem, size = 0x400, scoped, tag = 'output window, operand 0']
    #allocation7 [shape = 's32[2]{0}', space=sflag, size = 0x8, scoped, tag = 'scoped memory for resnet_tsa_forward.1']
    #allocation8 [shape = 'u8[1024]{0}', space=vmem, size = 0x400, scoped, tag = 'output window, operand 1']
    #allocation9 [shape = 's32[2]{0}', space=sflag, size = 0x8, scoped, tag = 'scoped memory for resnet_tsa_forward.1']
    %9 = vsyncpa [#allocation7], 0
    %s10 = scalar_lea.sflag [#allocation7], 1
    %11 = vsyncpa %s10, 0
    %12 = vsyncpa [#allocation9], 0
    %s13 = scalar_lea.sflag [#allocation9], 1
    %14 = vsyncpa %s13, 0
    loop: start=0, step=1, limit=4
    $region2: #{resnet_tsa_forward.1} parent=1 // loop_pre_header
      _
    $region3: #{resnet_tsa_forward.1} parent=1 // loop_header
      %s16 = sphi 0, %s20
      %p17 = scmp.ge.s32.totalorder %s16, 4
      %s26 = sphi 0, %s28
      %s29 = sphi 0, %s26
      %s30 = sphi 0, %s29
      %s46 = sphi 0, %s30
      %s50 = sphi 0, %s50
      %s52 = sphi 0, %s50
      %s53 = sphi 0, %s52
      %s67 = sphi 0, %s53
      %s73 = sphi 0, %s75
      %s76 = sphi 0, %s73
      %s77 = sphi 0, %s76
      %s93 = sphi 0, %s77
      %s99 = sphi 0, %s101
      %s102 = sphi 0, %s99
      %s103 = sphi 0, %s102
      %s119 = sphi 0, %s103
    $region4: #{resnet_tsa_forward.1} parent=1 // loop_header_branch
      %19 = sbr.rel (%p17) target = $region8
    $region5: #{resnet_tsa_forward.1} parent=1 // loop_body
      %s21 = ssub.s32 %s16, 1
      %s22 = ssub.s32 %s16, 2
      %s23 = sadd.s32 %s16, 1
      %s24 = ssub.s32 %s16, %s23
      %p25 = scmp.eq.s32.totalorder %s24, 0
      %s27 = sadd.s32 %s26, 1
      %s28 = scalar_select %p25, %s26, %s27
      %p31 = pneg %p25
      %p32 = scmp.eq.s32.totalorder %s16, 1
      %p33 = por %p31, %p32
      %p34 = scmp.ne.s32.totalorder %s26, %s29
      %p35 = scmp.eq.s32.totalorder %s16, 0
      %p36 = por %p34, %p35
      %p37 = scmp.ne.s32.totalorder %s26, %s29
      %p38 = scmp.eq.s32.totalorder %s21, 1
      %p39 = por %p37, %p38
      %p40 = scmp.ne.s32.totalorder %s29, %s30
      %p41 = scmp.eq.s32.totalorder %s21, 0
      %p42 = por %p40, %p41
      %p43 = scmp.ne.s32.totalorder %s29, %s30
      %p44 = scmp.eq.s32.totalorder %s22, 1
      %p45 = por %p43, %p44
      %p47 = scmp.ne.s32.totalorder %s30, %s46
      %p48 = scmp.eq.s32.totalorder %s22, 0
      %p49 = por %p47, %p48
      %s51 = sadd.s32 %s50, 1
      %p54 = scmp.eq.s32.totalorder %s16, 1
      %p55 = scmp.ne.s32.totalorder %s50, %s52
      %p56 = scmp.eq.s32.totalorder %s16, 0
      %p57 = por %p55, %p56
      %p58 = scmp.ne.s32.totalorder %s50, %s52
      %p59 = scmp.eq.s32.totalorder %s21, 1
      %p60 = por %p58, %p59
      %p61 = scmp.ne.s32.totalorder %s52, %s53
      %p62 = scmp.eq.s32.totalorder %s21, 0
      %p63 = por %p61, %p62
      %p64 = scmp.ne.s32.totalorder %s52, %s53
      %p65 = scmp.eq.s32.totalorder %s22, 1
      %p66 = por %p64, %p65
      %p68 = scmp.ne.s32.totalorder %s53, %s67
      %p69 = scmp.eq.s32.totalorder %s22, 0
      %p70 = por %p68, %p69
      %s71 = ssub.s32 %s16, %s23
      %p72 = scmp.eq.s32.totalorder %s71, 0
      %s74 = sadd.s32 %s73, 1
      %s75 = scalar_select %p72, %s73, %s74
      %p78 = pneg %p72
      %p79 = scmp.eq.s32.totalorder %s16, 1
      %p80 = por %p78, %p79
      %p81 = scmp.ne.s32.totalorder %s73, %s76
      %p82 = scmp.eq.s32.totalorder %s16, 0
      %p83 = por %p81, %p82
      %p84 = scmp.ne.s32.totalorder %s73, %s76
      %p85 = scmp.eq.s32.totalorder %s21, 1
      %p86 = por %p84, %p85
      %p87 = scmp.ne.s32.totalorder %s76, %s77
      %p88 = scmp.eq.s32.totalorder %s21, 0
      %p89 = por %p87, %p88
      %p90 = scmp.ne.s32.totalorder %s76, %s77
      %p91 = scmp.eq.s32.totalorder %s22, 1
      %p92 = por %p90, %p91
      %p94 = scmp.ne.s32.totalorder %s77, %s93
      %p95 = scmp.eq.s32.totalorder %s22, 0
      %p96 = por %p94, %p95
      %s97 = ssub.s32 %s16, %s23
      %p98 = scmp.eq.s32.totalorder %s97, 0
      %s100 = sadd.s32 %s99, 1
      %s101 = scalar_select %p98, %s99, %s100
      %p104 = pneg %p98
      %p105 = scmp.eq.s32.totalorder %s16, 1
      %p106 = por %p104, %p105
      %p107 = scmp.ne.s32.totalorder %s99, %s102
      %p108 = scmp.eq.s32.totalorder %s16, 0
      %p109 = por %p107, %p108
      %p110 = scmp.ne.s32.totalorder %s99, %s102
      %p111 = scmp.eq.s32.totalorder %s21, 1
      %p112 = por %p110, %p111
      %p113 = scmp.ne.s32.totalorder %s102, %s103
      %p114 = scmp.eq.s32.totalorder %s21, 0
      %p115 = por %p113, %p114
      %p116 = scmp.ne.s32.totalorder %s102, %s103
      %p117 = scmp.eq.s32.totalorder %s22, 1
      %p118 = por %p116, %p117
      %p120 = scmp.ne.s32.totalorder %s103, %s119
      %p121 = scmp.eq.s32.totalorder %s22, 0
      %p122 = por %p120, %p121
      %p123 = scmp.le.s32.totalorder 1, %s16
      %p124 = scmp.lt.s32.totalorder %s16, 3
      %p125 = pnand %p123, %p124
      %p126 = pneg %p125
      // Predicated region
      $region9: #{resnet_tsa_forward.1} parent=5 // pred_check
        _
      $region10: #{resnet_tsa_forward.1} parent=5 // pred_check_branch
        %128 = sbr.rel (%p125) target = $region12
      $region11: #{resnet_tsa_forward.1} parent=5 // pred_region
        %s129 = ssub.s32 %s16, 1
        // Predicated region
        $region13: #{resnet_tsa_forward.1} parent=11 // pred_check
          %p130 = pneg %p63
        $region14: #{resnet_tsa_forward.1} parent=11 // pred_check_branch
          %132 = sbr.rel (%p130) target = $region16
        $region15: #{resnet_tsa_forward.1} parent=11 // pred_region
          _
        $region16: #{resnet_tsa_forward.1} parent=11 // pred_fallthru
          _
      $region12: #{resnet_tsa_forward.1} parent=5 // pred_fallthru
        _
      %p133 = scmp.lt.s32.totalorder %s16, 2
      // Predicated region
      $region17: #{resnet_tsa_forward.1} parent=5 // pred_check
        %p134 = pneg %p133
      $region18: #{resnet_tsa_forward.1} parent=5 // pred_check_branch
        %136 = sbr.rel (%p134) target = $region20
      $region19: #{resnet_tsa_forward.1} parent=5 // pred_region
        // Predicated region
        $region21: #{resnet_tsa_forward.1} parent=19 // pred_check
          %p137 = pneg %p36
        $region22: #{resnet_tsa_forward.1} parent=19 // pred_check_branch
          %139 = sbr.rel (%p137) target = $region24
        $region23: #{resnet_tsa_forward.1} parent=19 // pred_region
          %p140 = scmp.lt.s32.totalorder %s16, 1
          %s141 = scalar_select %p140, %s16, 1
          %s142 = smul.addr %s141, 32
          %s143 = smul.addr %s142, 8
          %s144 = scalar_lea.vmem %s0, %s143
        $region24: #{resnet_tsa_forward.1} parent=19 // pred_fallthru
          _
      $region20: #{resnet_tsa_forward.1} parent=5 // pred_fallthru
        _
      %p145 = scmp.le.s32.totalorder 1, %s16
      %p146 = scmp.lt.s32.totalorder %s16, 3
      %p147 = pnand %p145, %p146
      %p148 = pneg %p147
      // Predicated region
      $region25: #{resnet_tsa_forward.1} parent=5 // pred_check
        _
      $region26: #{resnet_tsa_forward.1} parent=5 // pred_check_branch
        %150 = sbr.rel (%p147) target = $region28
      $region27: #{resnet_tsa_forward.1} parent=5 // pred_region
        %s151 = ssub.s32 %s16, 1
        %p152 = scmp.lt.s32.totalorder %s21, 1
        %s153 = scalar_select %p152, %s21, 1
        %s154 = smul.addr %s153, 32
        %s155 = smul.addr %s154, 8
        %s156 = scalar_lea.vmem %s0, %s155
        %p157 = pneg %p42
        %p158 = pneg %p39
        %p159 = pneg %p63
        %p160 = pneg %p60
        %p161 = pneg %p89
        %p162 = pneg %p86
        %s163 = sand.u32 %s76, 1
        %s164 = scalar_lea.sflag [#allocation7], %s163
        %s165 = sand.u32 %s76, 1
        %s166 = scalar_lea.vmem [#allocation6], %s165
        %p167 = pneg %p115
        %p168 = pneg %p112
        %s169 = sand.u32 %s102, 1
        %s170 = scalar_lea.sflag [#allocation9], %s169
        %s171 = sand.u32 %s102, 1
        %s172 = scalar_lea.vmem [#allocation8], %s171
        %p173 = scmp.lt.s32.totalorder %s21, 1
        %s174 = scalar_select %p173, %s21, 1
        %s175 = smul.addr %s174, 32
        %s176 = smul.addr %s175, 8
        %s177 = scalar_lea.vmem %s0, %s176
        %179 = vst [vmem:[#allocation4] sm:$0xff] 0.0
        %180 = vst [vmem:[#allocation4 + $0x8] sm:$0xff] 0.0
        %181 = vst [vmem:[#allocation4 + $0x10] sm:$0xff] 0.0
        %182 = vst [vmem:[#allocation4 + $0x18] sm:$0xff] 0.0
        %183 = vst [vmem:[#allocation4 + $0x20] sm:$0xff] 0.0
        %184 = vst [vmem:[#allocation4 + $0x28] sm:$0xff] 0.0
        %185 = vst [vmem:[#allocation4 + $0x30] sm:$0xff] 0.0
        %186 = vst [vmem:[#allocation4 + $0x38] sm:$0xff] 0.0
        %187 = vst [vmem:[#allocation4 + $0x40] sm:$0xff] 0.0
        %188 = vst [vmem:[#allocation4 + $0x48] sm:$0xff] 0.0
        %189 = vst [vmem:[#allocation4 + $0x50] sm:$0xff] 0.0
        %190 = vst [vmem:[#allocation4 + $0x58] sm:$0xff] 0.0
        %191 = vst [vmem:[#allocation4 + $0x60] sm:$0xff] 0.0
        %192 = vst [vmem:[#allocation4 + $0x68] sm:$0xff] 0.0
        %193 = vst [vmem:[#allocation4 + $0x70] sm:$0xff] 0.0
        %194 = vst [vmem:[#allocation4 + $0x78] sm:$0xff] 0.0
        %195 = vst [vmem:[#allocation4 + $0x80] sm:$0xff] 0.0
        %196 = vst [vmem:[#allocation4 + $0x88] sm:$0xff] 0.0
        %197 = vst [vmem:[#allocation4 + $0x90] sm:$0xff] 0.0
        %198 = vst [vmem:[#allocation4 + $0x98] sm:$0xff] 0.0
        %199 = vst [vmem:[#allocation4 + $0xa0] sm:$0xff] 0.0
        %200 = vst [vmem:[#allocation4 + $0xa8] sm:$0xff] 0.0
        %201 = vst [vmem:[#allocation4 + $0xb0] sm:$0xff] 0.0
        %202 = vst [vmem:[#allocation4 + $0xb8] sm:$0xff] 0.0
        %203 = vst [vmem:[#allocation4 + $0xc0] sm:$0xff] 0.0
        %204 = vst [vmem:[#allocation4 + $0xc8] sm:$0xff] 0.0
        %205 = vst [vmem:[#allocation4 + $0xd0] sm:$0xff] 0.0
        %206 = vst [vmem:[#allocation4 + $0xd8] sm:$0xff] 0.0
        %207 = vst [vmem:[#allocation4 + $0xe0] sm:$0xff] 0.0
        %208 = vst [vmem:[#allocation4 + $0xe8] sm:$0xff] 0.0
        %209 = vst [vmem:[#allocation4 + $0xf0] sm:$0xff] 0.0
        %210 = vst [vmem:[#allocation4 + $0xf8] sm:$0xff] 0.0
        %vm211 = vcmask 64512
        %212 = vst.msk [vmem:[#allocation2] sm:$0xff] %vm211, 0.0
        %213 = vst.msk [vmem:[#allocation2 + $0x8] sm:$0xff] %vm211, 0.0
        %vm214 = vcmask 58368
        %215 = vst.msk [vmem:[#allocation2 + $0x10] sm:$0x3] %vm214, 0.0
        %216 = vst.msk [vmem:[#allocation2 + $0x18] sm:$0xff] %vm211, 0.0
        %217 = vst.msk [vmem:[#allocation2 + $0x20] sm:$0xff] %vm211, 0.0
        %218 = vst.msk [vmem:[#allocation2 + $0x28] sm:$0x3] %vm214, 0.0
        %219 = vst.msk [vmem:[#allocation2 + $0x30] sm:$0xff] %vm211, 0.0
        %220 = vst.msk [vmem:[#allocation2 + $0x38] sm:$0xff] %vm211, 0.0
        %221 = vst.msk [vmem:[#allocation2 + $0x40] sm:$0x3] %vm214, 0.0
        %222 = vst.msk [vmem:[#allocation2 + $0x48] sm:$0xff] %vm211, 0.0
        %223 = vst.msk [vmem:[#allocation2 + $0x50] sm:$0xff] %vm211, 0.0
        %224 = vst.msk [vmem:[#allocation2 + $0x58] sm:$0x3] %vm214, 0.0
        %225 = vst.msk [vmem:[#allocation2 + $0x60] sm:$0xff] %vm211, 0.0
        %226 = vst.msk [vmem:[#allocation2 + $0x68] sm:$0xff] %vm211, 0.0
        %227 = vst.msk [vmem:[#allocation2 + $0x70] sm:$0x3] %vm214, 0.0
        %228 = vst.msk [vmem:[#allocation2 + $0x78] sm:$0xff] %vm211, 0.0
        %229 = vst.msk [vmem:[#allocation2 + $0x80] sm:$0xff] %vm211, 0.0
        %230 = vst.msk [vmem:[#allocation2 + $0x88] sm:$0x3] %vm214, 0.0
        %231 = vst.msk [vmem:[#allocation2 + $0x90] sm:$0xff] %vm211, 0.0
        %232 = vst.msk [vmem:[#allocation2 + $0x98] sm:$0xff] %vm211, 0.0
        %233 = vst.msk [vmem:[#allocation2 + $0xa0] sm:$0x3] %vm214, 0.0
        %234 = vst.msk [vmem:[#allocation2 + $0xa8] sm:$0xff] %vm211, 0.0
        %235 = vst.msk [vmem:[#allocation2 + $0xb0] sm:$0xff] %vm211, 0.0
        %236 = vst.msk [vmem:[#allocation2 + $0xb8] sm:$0x3] %vm214, 0.0
        %237 = vst.msk [vmem:[#allocation2 + $0xc0] sm:$0xff] %vm211, 0.0
        %238 = vst.msk [vmem:[#allocation2 + $0xc8] sm:$0xff] %vm211, 0.0
        %239 = vst.msk [vmem:[#allocation2 + $0xd0] sm:$0x3] %vm214, 0.0
        %240 = vst.msk [vmem:[#allocation2 + $0xd8] sm:$0xff] %vm211, 0.0
        %241 = vst.msk [vmem:[#allocation2 + $0xe0] sm:$0xff] %vm211, 0.0
        %242 = vst.msk [vmem:[#allocation2 + $0xe8] sm:$0x3] %vm214, 0.0
        %243 = vst.msk [vmem:[#allocation2 + $0xf0] sm:$0xff] %vm211, 0.0
        %244 = vst.msk [vmem:[#allocation2 + $0xf8] sm:$0xff] %vm211, 0.0
        %245 = vst.msk [vmem:[#allocation2 + $0x100] sm:$0x3] %vm214, 0.0
        %246 = vst.msk [vmem:[#allocation2 + $0x108] sm:$0xff] %vm211, 0.0
        %247 = vst.msk [vmem:[#allocation2 + $0x110] sm:$0xff] %vm211, 0.0
        %248 = vst.msk [vmem:[#allocation2 + $0x118] sm:$0x3] %vm214, 0.0
        %249 = vst.msk [vmem:[#allocation2 + $0x120] sm:$0xff] %vm211, 0.0
        %250 = vst.msk [vmem:[#allocation2 + $0x128] sm:$0xff] %vm211, 0.0
        %251 = vst.msk [vmem:[#allocation2 + $0x130] sm:$0x3] %vm214, 0.0
        %252 = vst.msk [vmem:[#allocation2 + $0x138] sm:$0xff] %vm211, 0.0
        %253 = vst.msk [vmem:[#allocation2 + $0x140] sm:$0xff] %vm211, 0.0
        %254 = vst.msk [vmem:[#allocation2 + $0x148] sm:$0x3] %vm214, 0.0
        %255 = vst.msk [vmem:[#allocation2 + $0x150] sm:$0xff] %vm211, 0.0
        %256 = vst.msk [vmem:[#allocation2 + $0x158] sm:$0xff] %vm211, 0.0
        %257 = vst.msk [vmem:[#allocation2 + $0x160] sm:$0x3] %vm214, 0.0
        %258 = vst.msk [vmem:[#allocation2 + $0x168] sm:$0xff] %vm211, 0.0
        %259 = vst.msk [vmem:[#allocation2 + $0x170] sm:$0xff] %vm211, 0.0
        %260 = vst.msk [vmem:[#allocation2 + $0x178] sm:$0x3] %vm214, 0.0
        %261 = vst.msk [vmem:[#allocation2 + $0x180] sm:$0xff] %vm211, 0.0
        %262 = vst.msk [vmem:[#allocation2 + $0x188] sm:$0xff] %vm211, 0.0
        %263 = vst.msk [vmem:[#allocation2 + $0x190] sm:$0x3] %vm214, 0.0
        %264 = vst.msk [vmem:[#allocation2 + $0x198] sm:$0xff] %vm211, 0.0
        %265 = vst.msk [vmem:[#allocation2 + $0x1a0] sm:$0xff] %vm211, 0.0
        %266 = vst.msk [vmem:[#allocation2 + $0x1a8] sm:$0x3] %vm214, 0.0
        %v267 = vld [vmem:[%s177] sm:$0xff]
        %v268 = vld [vmem:[%s177 + $0x8] sm:$0xff]
        %v269 = vld [vmem:[%s177 + $0x10] sm:$0xff]
        %v270 = vld [vmem:[%s177 + $0x18] sm:$0xff]
        %v271 = vld [vmem:[%s177 + $0x20] sm:$0xff]
        %v272 = vld [vmem:[%s177 + $0x28] sm:$0xff]
        %v273 = vld [vmem:[%s177 + $0x30] sm:$0xff]
        %v274 = vld [vmem:[%s177 + $0x38] sm:$0xff]
        %v275 = vld [vmem:[%s177 + $0x40] sm:$0xff]
        %v276 = vld [vmem:[%s177 + $0x48] sm:$0xff]
        %v277 = vld [vmem:[%s177 + $0x50] sm:$0xff]
        %v278 = vld [vmem:[%s177 + $0x58] sm:$0xff]
        %v279 = vld [vmem:[%s177 + $0x60] sm:$0xff]
        %v280 = vld [vmem:[%s177 + $0x68] sm:$0xff]
        %v281 = vld [vmem:[%s177 + $0x70] sm:$0xff]
        %v282 = vld [vmem:[%s177 + $0x78] sm:$0xff]
        %v283 = vld [vmem:[%s177 + $0x80] sm:$0xff]
        %v284 = vld [vmem:[%s177 + $0x88] sm:$0xff]
        %v285 = vld [vmem:[%s177 + $0x90] sm:$0xff]
        %v286 = vld [vmem:[%s177 + $0x98] sm:$0xff]
        %v287 = vld [vmem:[%s177 + $0xa0] sm:$0xff]
        %v288 = vld [vmem:[%s177 + $0xa8] sm:$0xff]
        %v289 = vld [vmem:[%s177 + $0xb0] sm:$0xff]
        %v290 = vld [vmem:[%s177 + $0xb8] sm:$0xff]
        %v291 = vld [vmem:[%s177 + $0xc0] sm:$0xff]
        %v292 = vld [vmem:[%s177 + $0xc8] sm:$0xff]
        %v293 = vld [vmem:[%s177 + $0xd0] sm:$0xff]
        %v294 = vld [vmem:[%s177 + $0xd8] sm:$0xff]
        %v295 = vld [vmem:[%s177 + $0xe0] sm:$0xff]
        %v296 = vld [vmem:[%s177 + $0xe8] sm:$0xff]
        %v297 = vld [vmem:[%s177 + $0xf0] sm:$0xff]
        %v298 = vld [vmem:[%s177 + $0xf8] sm:$0xff]
        %s299 = scalar_lea.vmem [#allocation2], 24
        %vm300 = vcmask 23552
        %301 = vst.msk [vmem:[%s299 + $0x1] sm:$0xff] %vm300, %v267
        %302 = vst.msk [vmem:[%s299 + $0x9] sm:$0xff] %vm300, %v268
        %303 = vst.msk [vmem:[%s299 + $0x19] sm:$0xff] %vm300, %v269
        %304 = vst.msk [vmem:[%s299 + $0x21] sm:$0xff] %vm300, %v270
        %305 = vst.msk [vmem:[%s299 + $0x31] sm:$0xff] %vm300, %v271
        %306 = vst.msk [vmem:[%s299 + $0x39] sm:$0xff] %vm300, %v272
        %307 = vst.msk [vmem:[%s299 + $0x49] sm:$0xff] %vm300, %v273
        %308 = vst.msk [vmem:[%s299 + $0x51] sm:$0xff] %vm300, %v274
        %309 = vst.msk [vmem:[%s299 + $0x61] sm:$0xff] %vm300, %v275
        %310 = vst.msk [vmem:[%s299 + $0x69] sm:$0xff] %vm300, %v276
        %311 = vst.msk [vmem:[%s299 + $0x79] sm:$0xff] %vm300, %v277
        %312 = vst.msk [vmem:[%s299 + $0x81] sm:$0xff] %vm300, %v278
        %313 = vst.msk [vmem:[%s299 + $0x91] sm:$0xff] %vm300, %v279
        %314 = vst.msk [vmem:[%s299 + $0x99] sm:$0xff] %vm300, %v280
        %315 = vst.msk [vmem:[%s299 + $0xa9] sm:$0xff] %vm300, %v281
        %316 = vst.msk [vmem:[%s299 + $0xb1] sm:$0xff] %vm300, %v282
        %317 = vst.msk [vmem:[%s299 + $0xc1] sm:$0xff] %vm300, %v283
        %318 = vst.msk [vmem:[%s299 + $0xc9] sm:$0xff] %vm300, %v284
        %319 = vst.msk [vmem:[%s299 + $0xd9] sm:$0xff] %vm300, %v285
        %320 = vst.msk [vmem:[%s299 + $0xe1] sm:$0xff] %vm300, %v286
        %321 = vst.msk [vmem:[%s299 + $0xf1] sm:$0xff] %vm300, %v287
        %322 = vst.msk [vmem:[%s299 + $0xf9] sm:$0xff] %vm300, %v288
        %323 = vst.msk [vmem:[%s299 + $0x109] sm:$0xff] %vm300, %v289
        %324 = vst.msk [vmem:[%s299 + $0x111] sm:$0xff] %vm300, %v290
        %325 = vst.msk [vmem:[%s299 + $0x121] sm:$0xff] %vm300, %v291
        %326 = vst.msk [vmem:[%s299 + $0x129] sm:$0xff] %vm300, %v292
        %327 = vst.msk [vmem:[%s299 + $0x139] sm:$0xff] %vm300, %v293
        %328 = vst.msk [vmem:[%s299 + $0x141] sm:$0xff] %vm300, %v294
        %329 = vst.msk [vmem:[%s299 + $0x151] sm:$0xff] %vm300, %v295
        %330 = vst.msk [vmem:[%s299 + $0x159] sm:$0xff] %vm300, %v296
        %331 = vst.msk [vmem:[%s299 + $0x169] sm:$0xff] %vm300, %v297
        %332 = vst.msk [vmem:[%s299 + $0x171] sm:$0xff] %vm300, %v298
        %v333 = vld [vmem:[#allocation2] sm:$0xff]
        %v334 = vld [vmem:[#allocation2 + $0x8] sm:$0xff]
        %v335 = vld [vmem:[#allocation2 + $0x18] sm:$0xff]
        %v336 = vld [vmem:[#allocation2 + $0x20] sm:$0xff]
        %v337 = vld [vmem:[#allocation2 + $0x30] sm:$0xff]
        %v338 = vld [vmem:[#allocation2 + $0x38] sm:$0xff]
        %v339 = vld [vmem:[#allocation2 + $0x48] sm:$0xff]
        %v340 = vld [vmem:[#allocation2 + $0x50] sm:$0xff]
        %v341 = vld [vmem:[#allocation2 + $0x60] sm:$0xff]
        %v342 = vld [vmem:[#allocation2 + $0x68] sm:$0xff]
        %v343 = vld [vmem:[#allocation2 + $0x78] sm:$0xff]
        %v344 = vld [vmem:[#allocation2 + $0x80] sm:$0xff]
        %v345 = vld [vmem:[#allocation2 + $0x90] sm:$0xff]
        %v346 = vld [vmem:[#allocation2 + $0x98] sm:$0xff]
        %v347 = vld [vmem:[#allocation2 + $0xa8] sm:$0xff]
        %v348 = vld [vmem:[#allocation2 + $0xb0] sm:$0xff]
        %v349 = vld [vmem:[#allocation2 + $0xc0] sm:$0xff]
        %v350 = vld [vmem:[#allocation2 + $0xc8] sm:$0xff]
        %v351 = vld [vmem:[#allocation2 + $0xd8] sm:$0xff]
        %v352 = vld [vmem:[#allocation2 + $0xe0] sm:$0xff]
        %v353 = vld [vmem:[#allocation2 + $0xf0] sm:$0xff]
        %v354 = vld [vmem:[#allocation2 + $0xf8] sm:$0xff]
        %v355 = vld [vmem:[#allocation2 + $0x108] sm:$0xff]
        %v356 = vld [vmem:[#allocation2 + $0x110] sm:$0xff]
        %v357 = vld [vmem:[#allocation2 + $0x120] sm:$0xff]
        %v358 = vld [vmem:[#allocation2 + $0x128] sm:$0xff]
        %v359 = vld [vmem:[#allocation2 + $0x138] sm:$0xff]
        %v360 = vld [vmem:[#allocation2 + $0x140] sm:$0xff]
        %v361 = vld [vmem:[#allocation2 + $0x150] sm:$0xff]
        %v362 = vld [vmem:[#allocation2 + $0x158] sm:$0xff]
        %v363 = vld [vmem:[#allocation2 + $0x168] sm:$0xff]
        %v364 = vld [vmem:[#allocation2 + $0x170] sm:$0xff]
        %365 = vst.msk [vmem:[#allocation4] sm:$0xff] %vm300, %v333
        %366 = vst.msk [vmem:[#allocation4 + $0x8] sm:$0xff] %vm300, %v334
        %367 = vst.msk [vmem:[#allocation4 + $0x10] sm:$0xff] %vm300, %v335
        %368 = vst.msk [vmem:[#allocation4 + $0x18] sm:$0xff] %vm300, %v336
        %369 = vst.msk [vmem:[#allocation4 + $0x20] sm:$0xff] %vm300, %v337
        %370 = vst.msk [vmem:[#allocation4 + $0x28] sm:$0xff] %vm300, %v338
        %371 = vst.msk [vmem:[#allocation4 + $0x30] sm:$0xff] %vm300, %v339
        %372 = vst.msk [vmem:[#allocation4 + $0x38] sm:$0xff] %vm300, %v340
        %373 = vst.msk [vmem:[#allocation4 + $0x40] sm:$0xff] %vm300, %v341
        %374 = vst.msk [vmem:[#allocation4 + $0x48] sm:$0xff] %vm300, %v342
        %375 = vst.msk [vmem:[#allocation4 + $0x50] sm:$0xff] %vm300, %v343
        %376 = vst.msk [vmem:[#allocation4 + $0x58] sm:$0xff] %vm300, %v344
        %377 = vst.msk [vmem:[#allocation4 + $0x60] sm:$0xff] %vm300, %v345
        %378 = vst.msk [vmem:[#allocation4 + $0x68] sm:$0xff] %vm300, %v346
        %379 = vst.msk [vmem:[#allocation4 + $0x70] sm:$0xff] %vm300, %v347
        %380 = vst.msk [vmem:[#allocation4 + $0x78] sm:$0xff] %vm300, %v348
        %381 = vst.msk [vmem:[#allocation4 + $0x80] sm:$0xff] %vm300, %v349
        %382 = vst.msk [vmem:[#allocation4 + $0x88] sm:$0xff] %vm300, %v350
        %383 = vst.msk [vmem:[#allocation4 + $0x90] sm:$0xff] %vm300, %v351
        %384 = vst.msk [vmem:[#allocation4 + $0x98] sm:$0xff] %vm300, %v352
        %385 = vst.msk [vmem:[#allocation4 + $0xa0] sm:$0xff] %vm300, %v353
        %386 = vst.msk [vmem:[#allocation4 + $0xa8] sm:$0xff] %vm300, %v354
        %387 = vst.msk [vmem:[#allocation4 + $0xb0] sm:$0xff] %vm300, %v355
        %388 = vst.msk [vmem:[#allocation4 + $0xb8] sm:$0xff] %vm300, %v356
        %389 = vst.msk [vmem:[#allocation4 + $0xc0] sm:$0xff] %vm300, %v357
        %390 = vst.msk [vmem:[#allocation4 + $0xc8] sm:$0xff] %vm300, %v358
        %391 = vst.msk [vmem:[#allocation4 + $0xd0] sm:$0xff] %vm300, %v359
        %392 = vst.msk [vmem:[#allocation4 + $0xd8] sm:$0xff] %vm300, %v360
        %393 = vst.msk [vmem:[#allocation4 + $0xe0] sm:$0xff] %vm300, %v361
        %394 = vst.msk [vmem:[#allocation4 + $0xe8] sm:$0xff] %vm300, %v362
        %395 = vst.msk [vmem:[#allocation4 + $0xf0] sm:$0xff] %vm300, %v363
        %396 = vst.msk [vmem:[#allocation4 + $0xf8] sm:$0xff] %vm300, %v364
        %v397 = vld [vmem:[#allocation2 + $0x1] sm:$0xff]
        %v398 = vld [vmem:[#allocation2 + $0x9] sm:$0xff]
        %v399 = vld [vmem:[#allocation2 + $0x19] sm:$0xff]
        %v400 = vld [vmem:[#allocation2 + $0x21] sm:$0xff]
        %v401 = vld [vmem:[#allocation2 + $0x31] sm:$0xff]
        %v402 = vld [vmem:[#allocation2 + $0x39] sm:$0xff]
        %v403 = vld [vmem:[#allocation2 + $0x49] sm:$0xff]
        %v404 = vld [vmem:[#allocation2 + $0x51] sm:$0xff]
        %v405 = vld [vmem:[#allocation2 + $0x61] sm:$0xff]
        %v406 = vld [vmem:[#allocation2 + $0x69] sm:$0xff]
        %v407 = vld [vmem:[#allocation2 + $0x79] sm:$0xff]
        %v408 = vld [vmem:[#allocation2 + $0x81] sm:$0xff]
        %v409 = vld [vmem:[#allocation2 + $0x91] sm:$0xff]
        %v410 = vld [vmem:[#allocation2 + $0x99] sm:$0xff]
        %v411 = vld [vmem:[#allocation2 + $0xa9] sm:$0xff]
        %v412 = vld [vmem:[#allocation2 + $0xb1] sm:$0xff]
        %v413 = vld [vmem:[#allocation2 + $0xc1] sm:$0xff]
        %v414 = vld [vmem:[#allocation2 + $0xc9] sm:$0xff]
        %v415 = vld [vmem:[#allocation2 + $0xd9] sm:$0xff]
        %v416 = vld [vmem:[#allocation2 + $0xe1] sm:$0xff]
        %v417 = vld [vmem:[#allocation2 + $0xf1] sm:$0xff]
        %v418 = vld [vmem:[#allocation2 + $0xf9] sm:$0xff]
        %v419 = vld [vmem:[#allocation2 + $0x109] sm:$0xff]
        %v420 = vld [vmem:[#allocation2 + $0x111] sm:$0xff]
        %v421 = vld [vmem:[#allocation2 + $0x121] sm:$0xff]
        %v422 = vld [vmem:[#allocation2 + $0x129] sm:$0xff]
        %v423 = vld [vmem:[#allocation2 + $0x139] sm:$0xff]
        %v424 = vld [vmem:[#allocation2 + $0x141] sm:$0xff]
        %v425 = vld [vmem:[#allocation2 + $0x151] sm:$0xff]
        %v426 = vld [vmem:[#allocation2 + $0x159] sm:$0xff]
        %v427 = vld [vmem:[#allocation2 + $0x169] sm:$0xff]
        %v428 = vld [vmem:[#allocation2 + $0x171] sm:$0xff]
        %461 = vrot.lane.b32.xlu0 %v397, 3
        %v462 = vpop.permute.xlu0 %461
        %463 = vrot.lane.b32.xlu0 %v398, 3
        %v464 = vpop.permute.xlu0 %463
        %465 = vrot.lane.b32.xlu0 %v399, 3
        %v466 = vpop.permute.xlu0 %465
        %467 = vrot.lane.b32.xlu0 %v400, 3
        %v468 = vpop.permute.xlu0 %467
        %469 = vrot.lane.b32.xlu0 %v401, 3
        %v470 = vpop.permute.xlu0 %469
        %471 = vrot.lane.b32.xlu0 %v402, 3
        %v472 = vpop.permute.xlu0 %471
        %473 = vrot.lane.b32.xlu0 %v403, 3
        %v474 = vpop.permute.xlu0 %473
        %475 = vrot.lane.b32.xlu0 %v404, 3
        %v476 = vpop.permute.xlu0 %475
        %477 = vrot.lane.b32.xlu0 %v405, 3
        %v478 = vpop.permute.xlu0 %477
        %479 = vrot.lane.b32.xlu0 %v406, 3
        %v480 = vpop.permute.xlu0 %479
        %481 = vrot.lane.b32.xlu0 %v407, 3
        %v482 = vpop.permute.xlu0 %481
        %483 = vrot.lane.b32.xlu0 %v408, 3
        %v484 = vpop.permute.xlu0 %483
        %485 = vrot.lane.b32.xlu0 %v409, 3
        %v486 = vpop.permute.xlu0 %485
        %487 = vrot.lane.b32.xlu0 %v410, 3
        %v488 = vpop.permute.xlu0 %487
        %489 = vrot.lane.b32.xlu0 %v411, 3
        %v490 = vpop.permute.xlu0 %489
        %491 = vrot.lane.b32.xlu0 %v412, 3
        %v492 = vpop.permute.xlu0 %491
        %493 = vrot.lane.b32.xlu0 %v413, 3
        %v494 = vpop.permute.xlu0 %493
        %495 = vrot.lane.b32.xlu0 %v414, 3
        %v496 = vpop.permute.xlu0 %495
        %497 = vrot.lane.b32.xlu0 %v415, 3
        %v498 = vpop.permute.xlu0 %497
        %499 = vrot.lane.b32.xlu0 %v416, 3
        %v500 = vpop.permute.xlu0 %499
        %501 = vrot.lane.b32.xlu0 %v417, 3
        %v502 = vpop.permute.xlu0 %501
        %503 = vrot.lane.b32.xlu0 %v418, 3
        %v504 = vpop.permute.xlu0 %503
        %505 = vrot.lane.b32.xlu0 %v419, 3
        %v506 = vpop.permute.xlu0 %505
        %507 = vrot.lane.b32.xlu0 %v420, 3
        %v508 = vpop.permute.xlu0 %507
        %509 = vrot.lane.b32.xlu0 %v421, 3
        %v510 = vpop.permute.xlu0 %509
        %511 = vrot.lane.b32.xlu0 %v422, 3
        %v512 = vpop.permute.xlu0 %511
        %513 = vrot.lane.b32.xlu0 %v423, 3
        %v514 = vpop.permute.xlu0 %513
        %515 = vrot.lane.b32.xlu0 %v424, 3
        %v516 = vpop.permute.xlu0 %515
        %517 = vrot.lane.b32.xlu0 %v425, 3
        %v518 = vpop.permute.xlu0 %517
        %519 = vrot.lane.b32.xlu0 %v426, 3
        %v520 = vpop.permute.xlu0 %519
        %521 = vrot.lane.b32.xlu0 %v427, 3
        %v522 = vpop.permute.xlu0 %521
        %523 = vrot.lane.b32.xlu0 %v428, 3
        %v524 = vpop.permute.xlu0 %523
        %vm557 = vcmask 48152
        %558 = vst.msk [vmem:[#allocation4] sm:$0xff] %vm557, %v462
        %559 = vst.msk [vmem:[#allocation4 + $0x8] sm:$0xff] %vm557, %v464
        %560 = vst.msk [vmem:[#allocation4 + $0x10] sm:$0xff] %vm557, %v466
        %561 = vst.msk [vmem:[#allocation4 + $0x18] sm:$0xff] %vm557, %v468
        %562 = vst.msk [vmem:[#allocation4 + $0x20] sm:$0xff] %vm557, %v470
        %563 = vst.msk [vmem:[#allocation4 + $0x28] sm:$0xff] %vm557, %v472
        %564 = vst.msk [vmem:[#allocation4 + $0x30] sm:$0xff] %vm557, %v474
        %565 = vst.msk [vmem:[#allocation4 + $0x38] sm:$0xff] %vm557, %v476
        %566 = vst.msk [vmem:[#allocation4 + $0x40] sm:$0xff] %vm557, %v478
        %567 = vst.msk [vmem:[#allocation4 + $0x48] sm:$0xff] %vm557, %v480
        %568 = vst.msk [vmem:[#allocation4 + $0x50] sm:$0xff] %vm557, %v482
        %569 = vst.msk [vmem:[#allocation4 + $0x58] sm:$0xff] %vm557, %v484
        %570 = vst.msk [vmem:[#allocation4 + $0x60] sm:$0xff] %vm557, %v486
        %571 = vst.msk [vmem:[#allocation4 + $0x68] sm:$0xff] %vm557, %v488
        %572 = vst.msk [vmem:[#allocation4 + $0x70] sm:$0xff] %vm557, %v490
        %573 = vst.msk [vmem:[#allocation4 + $0x78] sm:$0xff] %vm557, %v492
        %574 = vst.msk [vmem:[#allocation4 + $0x80] sm:$0xff] %vm557, %v494
        %575 = vst.msk [vmem:[#allocation4 + $0x88] sm:$0xff] %vm557, %v496
        %576 = vst.msk [vmem:[#allocation4 + $0x90] sm:$0xff] %vm557, %v498
        %577 = vst.msk [vmem:[#allocation4 + $0x98] sm:$0xff] %vm557, %v500
        %578 = vst.msk [vmem:[#allocation4 + $0xa0] sm:$0xff] %vm557, %v502
        %579 = vst.msk [vmem:[#allocation4 + $0xa8] sm:$0xff] %vm557, %v504
        %580 = vst.msk [vmem:[#allocation4 + $0xb0] sm:$0xff] %vm557, %v506
        %581 = vst.msk [vmem:[#allocation4 + $0xb8] sm:$0xff] %vm557, %v508
        %582 = vst.msk [vmem:[#allocation4 + $0xc0] sm:$0xff] %vm557, %v510
        %583 = vst.msk [vmem:[#allocation4 + $0xc8] sm:$0xff] %vm557, %v512
        %584 = vst.msk [vmem:[#allocation4 + $0xd0] sm:$0xff] %vm557, %v514
        %585 = vst.msk [vmem:[#allocation4 + $0xd8] sm:$0xff] %vm557, %v516
        %586 = vst.msk [vmem:[#allocation4 + $0xe0] sm:$0xff] %vm557, %v518
        %587 = vst.msk [vmem:[#allocation4 + $0xe8] sm:$0xff] %vm557, %v520
        %588 = vst.msk [vmem:[#allocation4 + $0xf0] sm:$0xff] %vm557, %v522
        %589 = vst.msk [vmem:[#allocation4 + $0xf8] sm:$0xff] %vm557, %v524
        %v590 = vld [vmem:[#allocation2 + $0x2] sm:$0xff]
        %v591 = vld [vmem:[#allocation2 + $0xa] sm:$0xff]
        %v592 = vld [vmem:[#allocation2 + $0x1a] sm:$0xff]
        %v593 = vld [vmem:[#allocation2 + $0x22] sm:$0xff]
        %v594 = vld [vmem:[#allocation2 + $0x32] sm:$0xff]
        %v595 = vld [vmem:[#allocation2 + $0x3a] sm:$0xff]
        %v596 = vld [vmem:[#allocation2 + $0x4a] sm:$0xff]
        %v597 = vld [vmem:[#allocation2 + $0x52] sm:$0xff]
        %v598 = vld [vmem:[#allocation2 + $0x62] sm:$0xff]
        %v599 = vld [vmem:[#allocation2 + $0x6a] sm:$0xff]
        %v600 = vld [vmem:[#allocation2 + $0x7a] sm:$0xff]
        %v601 = vld [vmem:[#allocation2 + $0x82] sm:$0xff]
        %v602 = vld [vmem:[#allocation2 + $0x92] sm:$0xff]
        %v603 = vld [vmem:[#allocation2 + $0x9a] sm:$0xff]
        %v604 = vld [vmem:[#allocation2 + $0xaa] sm:$0xff]
        %v605 = vld [vmem:[#allocation2 + $0xb2] sm:$0xff]
        %v606 = vld [vmem:[#allocation2 + $0xc2] sm:$0xff]
        %v607 = vld [vmem:[#allocation2 + $0xca] sm:$0xff]
        %v608 = vld [vmem:[#allocation2 + $0xda] sm:$0xff]
        %v609 = vld [vmem:[#allocation2 + $0xe2] sm:$0xff]
        %v610 = vld [vmem:[#allocation2 + $0xf2] sm:$0xff]
        %v611 = vld [vmem:[#allocation2 + $0xfa] sm:$0xff]
        %v612 = vld [vmem:[#allocation2 + $0x10a] sm:$0xff]
        %v613 = vld [vmem:[#allocation2 + $0x112] sm:$0xff]
        %v614 = vld [vmem:[#allocation2 + $0x122] sm:$0xff]
        %v615 = vld [vmem:[#allocation2 + $0x12a] sm:$0xff]
        %v616 = vld [vmem:[#allocation2 + $0x13a] sm:$0xff]
        %v617 = vld [vmem:[#allocation2 + $0x142] sm:$0xff]
        %v618 = vld [vmem:[#allocation2 + $0x152] sm:$0xff]
        %v619 = vld [vmem:[#allocation2 + $0x15a] sm:$0xff]
        %v620 = vld [vmem:[#allocation2 + $0x16a] sm:$0xff]
        %v621 = vld [vmem:[#allocation2 + $0x172] sm:$0xff]
        %654 = vrot.lane.b32.xlu0 %v590, 6
        %v655 = vpop.permute.xlu0 %654
        %656 = vrot.lane.b32.xlu0 %v591, 6
        %v657 = vpop.permute.xlu0 %656
        %658 = vrot.lane.b32.xlu0 %v592, 6
        %v659 = vpop.permute.xlu0 %658
        %660 = vrot.lane.b32.xlu0 %v593, 6
        %v661 = vpop.permute.xlu0 %660
        %662 = vrot.lane.b32.xlu0 %v594, 6
        %v663 = vpop.permute.xlu0 %662
        %664 = vrot.lane.b32.xlu0 %v595, 6
        %v665 = vpop.permute.xlu0 %664
        %666 = vrot.lane.b32.xlu0 %v596, 6
        %v667 = vpop.permute.xlu0 %666
        %668 = vrot.lane.b32.xlu0 %v597, 6
        %v669 = vpop.permute.xlu0 %668
        %670 = vrot.lane.b32.xlu0 %v598, 6
        %v671 = vpop.permute.xlu0 %670
        %672 = vrot.lane.b32.xlu0 %v599, 6
        %v673 = vpop.permute.xlu0 %672
        %674 = vrot.lane.b32.xlu0 %v600, 6
        %v675 = vpop.permute.xlu0 %674
        %676 = vrot.lane.b32.xlu0 %v601, 6
        %v677 = vpop.permute.xlu0 %676
        %678 = vrot.lane.b32.xlu0 %v602, 6
        %v679 = vpop.permute.xlu0 %678
        %680 = vrot.lane.b32.xlu0 %v603, 6
        %v681 = vpop.permute.xlu0 %680
        %682 = vrot.lane.b32.xlu0 %v604, 6
        %v683 = vpop.permute.xlu0 %682
        %684 = vrot.lane.b32.xlu0 %v605, 6
        %v685 = vpop.permute.xlu0 %684
        %686 = vrot.lane.b32.xlu0 %v606, 6
        %v687 = vpop.permute.xlu0 %686
        %688 = vrot.lane.b32.xlu0 %v607, 6
        %v689 = vpop.permute.xlu0 %688
        %690 = vrot.lane.b32.xlu0 %v608, 6
        %v691 = vpop.permute.xlu0 %690
        %692 = vrot.lane.b32.xlu0 %v609, 6
        %v693 = vpop.permute.xlu0 %692
        %694 = vrot.lane.b32.xlu0 %v610, 6
        %v695 = vpop.permute.xlu0 %694
        %696 = vrot.lane.b32.xlu0 %v611, 6
        %v697 = vpop.permute.xlu0 %696
        %698 = vrot.lane.b32.xlu0 %v612, 6
        %v699 = vpop.permute.xlu0 %698
        %700 = vrot.lane.b32.xlu0 %v613, 6
        %v701 = vpop.permute.xlu0 %700
        %702 = vrot.lane.b32.xlu0 %v614, 6
        %v703 = vpop.permute.xlu0 %702
        %704 = vrot.lane.b32.xlu0 %v615, 6
        %v705 = vpop.permute.xlu0 %704
        %706 = vrot.lane.b32.xlu0 %v616, 6
        %v707 = vpop.permute.xlu0 %706
        %708 = vrot.lane.b32.xlu0 %v617, 6
        %v709 = vpop.permute.xlu0 %708
        %710 = vrot.lane.b32.xlu0 %v618, 6
        %v711 = vpop.permute.xlu0 %710
        %712 = vrot.lane.b32.xlu0 %v619, 6
        %v713 = vpop.permute.xlu0 %712
        %714 = vrot.lane.b32.xlu0 %v620, 6
        %v715 = vpop.permute.xlu0 %714
        %716 = vrot.lane.b32.xlu0 %v621, 6
        %v717 = vpop.permute.xlu0 %716
        %vm750 = vcmask 72752
        %751 = vst.msk [vmem:[#allocation4] sm:$0xff] %vm750, %v655
        %752 = vst.msk [vmem:[#allocation4 + $0x8] sm:$0xff] %vm750, %v657
        %753 = vst.msk [vmem:[#allocation4 + $0x10] sm:$0xff] %vm750, %v659
        %754 = vst.msk [vmem:[#allocation4 + $0x18] sm:$0xff] %vm750, %v661
        %755 = vst.msk [vmem:[#allocation4 + $0x20] sm:$0xff] %vm750, %v663
        %756 = vst.msk [vmem:[#allocation4 + $0x28] sm:$0xff] %vm750, %v665
        %757 = vst.msk [vmem:[#allocation4 + $0x30] sm:$0xff] %vm750, %v667
        %758 = vst.msk [vmem:[#allocation4 + $0x38] sm:$0xff] %vm750, %v669
        %759 = vst.msk [vmem:[#allocation4 + $0x40] sm:$0xff] %vm750, %v671
        %760 = vst.msk [vmem:[#allocation4 + $0x48] sm:$0xff] %vm750, %v673
        %761 = vst.msk [vmem:[#allocation4 + $0x50] sm:$0xff] %vm750, %v675
        %762 = vst.msk [vmem:[#allocation4 + $0x58] sm:$0xff] %vm750, %v677
        %763 = vst.msk [vmem:[#allocation4 + $0x60] sm:$0xff] %vm750, %v679
        %764 = vst.msk [vmem:[#allocation4 + $0x68] sm:$0xff] %vm750, %v681
        %765 = vst.msk [vmem:[#allocation4 + $0x70] sm:$0xff] %vm750, %v683
        %766 = vst.msk [vmem:[#allocation4 + $0x78] sm:$0xff] %vm750, %v685
        %767 = vst.msk [vmem:[#allocation4 + $0x80] sm:$0xff] %vm750, %v687
        %768 = vst.msk [vmem:[#allocation4 + $0x88] sm:$0xff] %vm750, %v689
        %769 = vst.msk [vmem:[#allocation4 + $0x90] sm:$0xff] %vm750, %v691
        %770 = vst.msk [vmem:[#allocation4 + $0x98] sm:$0xff] %vm750, %v693
        %771 = vst.msk [vmem:[#allocation4 + $0xa0] sm:$0xff] %vm750, %v695
        %772 = vst.msk [vmem:[#allocation4 + $0xa8] sm:$0xff] %vm750, %v697
        %773 = vst.msk [vmem:[#allocation4 + $0xb0] sm:$0xff] %vm750, %v699
        %774 = vst.msk [vmem:[#allocation4 + $0xb8] sm:$0xff] %vm750, %v701
        %775 = vst.msk [vmem:[#allocation4 + $0xc0] sm:$0xff] %vm750, %v703
        %776 = vst.msk [vmem:[#allocation4 + $0xc8] sm:$0xff] %vm750, %v705
        %777 = vst.msk [vmem:[#allocation4 + $0xd0] sm:$0xff] %vm750, %v707
        %778 = vst.msk [vmem:[#allocation4 + $0xd8] sm:$0xff] %vm750, %v709
        %779 = vst.msk [vmem:[#allocation4 + $0xe0] sm:$0xff] %vm750, %v711
        %780 = vst.msk [vmem:[#allocation4 + $0xe8] sm:$0xff] %vm750, %v713
        %781 = vst.msk [vmem:[#allocation4 + $0xf0] sm:$0xff] %vm750, %v715
        %782 = vst.msk [vmem:[#allocation4 + $0xf8] sm:$0xff] %vm750, %v717
        %v783 = vld [vmem:[%s299] sm:$0xff]
        %v784 = vld [vmem:[%s299 + $0x8] sm:$0xff]
        %v785 = vld [vmem:[%s299 + $0x18] sm:$0xff]
        %v786 = vld [vmem:[%s299 + $0x20] sm:$0xff]
        %v787 = vld [vmem:[%s299 + $0x30] sm:$0xff]
        %v788 = vld [vmem:[%s299 + $0x38] sm:$0xff]
        %v789 = vld [vmem:[%s299 + $0x48] sm:$0xff]
        %v790 = vld [vmem:[%s299 + $0x50] sm:$0xff]
        %v791 = vld [vmem:[%s299 + $0x60] sm:$0xff]
        %v792 = vld [vmem:[%s299 + $0x68] sm:$0xff]
        %v793 = vld [vmem:[%s299 + $0x78] sm:$0xff]
        %v794 = vld [vmem:[%s299 + $0x80] sm:$0xff]
        %v795 = vld [vmem:[%s299 + $0x90] sm:$0xff]
        %v796 = vld [vmem:[%s299 + $0x98] sm:$0xff]
        %v797 = vld [vmem:[%s299 + $0xa8] sm:$0xff]
        %v798 = vld [vmem:[%s299 + $0xb0] sm:$0xff]
        %v799 = vld [vmem:[%s299 + $0xc0] sm:$0xff]
        %v800 = vld [vmem:[%s299 + $0xc8] sm:$0xff]
        %v801 = vld [vmem:[%s299 + $0xd8] sm:$0xff]
        %v802 = vld [vmem:[%s299 + $0xe0] sm:$0xff]
        %v803 = vld [vmem:[%s299 + $0xf0] sm:$0xff]
        %v804 = vld [vmem:[%s299 + $0xf8] sm:$0xff]
        %v805 = vld [vmem:[%s299 + $0x108] sm:$0xff]
        %v806 = vld [vmem:[%s299 + $0x110] sm:$0xff]
        %v807 = vld [vmem:[%s299 + $0x120] sm:$0xff]
        %v808 = vld [vmem:[%s299 + $0x128] sm:$0xff]
        %v809 = vld [vmem:[%s299 + $0x138] sm:$0xff]
        %v810 = vld [vmem:[%s299 + $0x140] sm:$0xff]
        %v811 = vld [vmem:[%s299 + $0x150] sm:$0xff]
        %v812 = vld [vmem:[%s299 + $0x158] sm:$0xff]
        %v813 = vld [vmem:[%s299 + $0x168] sm:$0xff]
        %v814 = vld [vmem:[%s299 + $0x170] sm:$0xff]
        %847 = vrot.lane.b32.xlu0 %v783, 9
        %v848 = vpop.permute.xlu0 %847
        %849 = vrot.lane.b32.xlu0 %v784, 9
        %v850 = vpop.permute.xlu0 %849
        %851 = vrot.lane.b32.xlu0 %v785, 9
        %v852 = vpop.permute.xlu0 %851
        %853 = vrot.lane.b32.xlu0 %v786, 9
        %v854 = vpop.permute.xlu0 %853
        %855 = vrot.lane.b32.xlu0 %v787, 9
        %v856 = vpop.permute.xlu0 %855
        %857 = vrot.lane.b32.xlu0 %v788, 9
        %v858 = vpop.permute.xlu0 %857
        %859 = vrot.lane.b32.xlu0 %v789, 9
        %v860 = vpop.permute.xlu0 %859
        %861 = vrot.lane.b32.xlu0 %v790, 9
        %v862 = vpop.permute.xlu0 %861
        %863 = vrot.lane.b32.xlu0 %v791, 9
        %v864 = vpop.permute.xlu0 %863
        %865 = vrot.lane.b32.xlu0 %v792, 9
        %v866 = vpop.permute.xlu0 %865
        %867 = vrot.lane.b32.xlu0 %v793, 9
        %v868 = vpop.permute.xlu0 %867
        %869 = vrot.lane.b32.xlu0 %v794, 9
        %v870 = vpop.permute.xlu0 %869
        %871 = vrot.lane.b32.xlu0 %v795, 9
        %v872 = vpop.permute.xlu0 %871
        %873 = vrot.lane.b32.xlu0 %v796, 9
        %v874 = vpop.permute.xlu0 %873
        %875 = vrot.lane.b32.xlu0 %v797, 9
        %v876 = vpop.permute.xlu0 %875
        %877 = vrot.lane.b32.xlu0 %v798, 9
        %v878 = vpop.permute.xlu0 %877
        %879 = vrot.lane.b32.xlu0 %v799, 9
        %v880 = vpop.permute.xlu0 %879
        %881 = vrot.lane.b32.xlu0 %v800, 9
        %v882 = vpop.permute.xlu0 %881
        %883 = vrot.lane.b32.xlu0 %v801, 9
        %v884 = vpop.permute.xlu0 %883
        %885 = vrot.lane.b32.xlu0 %v802, 9
        %v886 = vpop.permute.xlu0 %885
        %887 = vrot.lane.b32.xlu0 %v803, 9
        %v888 = vpop.permute.xlu0 %887
        %889 = vrot.lane.b32.xlu0 %v804, 9
        %v890 = vpop.permute.xlu0 %889
        %891 = vrot.lane.b32.xlu0 %v805, 9
        %v892 = vpop.permute.xlu0 %891
        %893 = vrot.lane.b32.xlu0 %v806, 9
        %v894 = vpop.permute.xlu0 %893
        %895 = vrot.lane.b32.xlu0 %v807, 9
        %v896 = vpop.permute.xlu0 %895
        %897 = vrot.lane.b32.xlu0 %v808, 9
        %v898 = vpop.permute.xlu0 %897
        %899 = vrot.lane.b32.xlu0 %v809, 9
        %v900 = vpop.permute.xlu0 %899
        %901 = vrot.lane.b32.xlu0 %v810, 9
        %v902 = vpop.permute.xlu0 %901
        %903 = vrot.lane.b32.xlu0 %v811, 9
        %v904 = vpop.permute.xlu0 %903
        %905 = vrot.lane.b32.xlu0 %v812, 9
        %v906 = vpop.permute.xlu0 %905
        %907 = vrot.lane.b32.xlu0 %v813, 9
        %v908 = vpop.permute.xlu0 %907
        %909 = vrot.lane.b32.xlu0 %v814, 9
        %v910 = vpop.permute.xlu0 %909
        %vm943 = vcmask 97352
        %944 = vst.msk [vmem:[#allocation4] sm:$0xff] %vm943, %v848
        %945 = vst.msk [vmem:[#allocation4 + $0x8] sm:$0xff] %vm943, %v850
        %946 = vst.msk [vmem:[#allocation4 + $0x10] sm:$0xff] %vm943, %v852
        %947 = vst.msk [vmem:[#allocation4 + $0x18] sm:$0xff] %vm943, %v854
        %948 = vst.msk [vmem:[#allocation4 + $0x20] sm:$0xff] %vm943, %v856
        %949 = vst.msk [vmem:[#allocation4 + $0x28] sm:$0xff] %vm943, %v858
        %950 = vst.msk [vmem:[#allocation4 + $0x30] sm:$0xff] %vm943, %v860
        %951 = vst.msk [vmem:[#allocation4 + $0x38] sm:$0xff] %vm943, %v862
        %952 = vst.msk [vmem:[#allocation4 + $0x40] sm:$0xff] %vm943, %v864
        %953 = vst.msk [vmem:[#allocation4 + $0x48] sm:$0xff] %vm943, %v866
        %954 = vst.msk [vmem:[#allocation4 + $0x50] sm:$0xff] %vm943, %v868
        %955 = vst.msk [vmem:[#allocation4 + $0x58] sm:$0xff] %vm943, %v870
        %956 = vst.msk [vmem:[#allocation4 + $0x60] sm:$0xff] %vm943, %v872
        %957 = vst.msk [vmem:[#allocation4 + $0x68] sm:$0xff] %vm943, %v874
        %958 = vst.msk [vmem:[#allocation4 + $0x70] sm:$0xff] %vm943, %v876
        %959 = vst.msk [vmem:[#allocation4 + $0x78] sm:$0xff] %vm943, %v878
        %960 = vst.msk [vmem:[#allocation4 + $0x80] sm:$0xff] %vm943, %v880
        %961 = vst.msk [vmem:[#allocation4 + $0x88] sm:$0xff] %vm943, %v882
        %962 = vst.msk [vmem:[#allocation4 + $0x90] sm:$0xff] %vm943, %v884
        %963 = vst.msk [vmem:[#allocation4 + $0x98] sm:$0xff] %vm943, %v886
        %964 = vst.msk [vmem:[#allocation4 + $0xa0] sm:$0xff] %vm943, %v888
        %965 = vst.msk [vmem:[#allocation4 + $0xa8] sm:$0xff] %vm943, %v890
        %966 = vst.msk [vmem:[#allocation4 + $0xb0] sm:$0xff] %vm943, %v892
        %967 = vst.msk [vmem:[#allocation4 + $0xb8] sm:$0xff] %vm943, %v894
        %968 = vst.msk [vmem:[#allocation4 + $0xc0] sm:$0xff] %vm943, %v896
        %969 = vst.msk [vmem:[#allocation4 + $0xc8] sm:$0xff] %vm943, %v898
        %970 = vst.msk [vmem:[#allocation4 + $0xd0] sm:$0xff] %vm943, %v900
        %971 = vst.msk [vmem:[#allocation4 + $0xd8] sm:$0xff] %vm943, %v902
        %972 = vst.msk [vmem:[#allocation4 + $0xe0] sm:$0xff] %vm943, %v904
        %973 = vst.msk [vmem:[#allocation4 + $0xe8] sm:$0xff] %vm943, %v906
        %974 = vst.msk [vmem:[#allocation4 + $0xf0] sm:$0xff] %vm943, %v908
        %975 = vst.msk [vmem:[#allocation4 + $0xf8] sm:$0xff] %vm943, %v910
        %v976 = vld [vmem:[%s299 + $0x1] sm:$0xff]
        %v977 = vld [vmem:[%s299 + $0x9] sm:$0xff]
        %v978 = vld [vmem:[%s299 + $0x19] sm:$0xff]
        %v979 = vld [vmem:[%s299 + $0x21] sm:$0xff]
        %v980 = vld [vmem:[%s299 + $0x31] sm:$0xff]
        %v981 = vld [vmem:[%s299 + $0x39] sm:$0xff]
        %v982 = vld [vmem:[%s299 + $0x49] sm:$0xff]
        %v983 = vld [vmem:[%s299 + $0x51] sm:$0xff]
        %v984 = vld [vmem:[%s299 + $0x61] sm:$0xff]
        %v985 = vld [vmem:[%s299 + $0x69] sm:$0xff]
        %v986 = vld [vmem:[%s299 + $0x79] sm:$0xff]
        %v987 = vld [vmem:[%s299 + $0x81] sm:$0xff]
        %v988 = vld [vmem:[%s299 + $0x91] sm:$0xff]
        %v989 = vld [vmem:[%s299 + $0x99] sm:$0xff]
        %v990 = vld [vmem:[%s299 + $0xa9] sm:$0xff]
        %v991 = vld [vmem:[%s299 + $0xb1] sm:$0xff]
        %v992 = vld [vmem:[%s299 + $0xc1] sm:$0xff]
        %v993 = vld [vmem:[%s299 + $0xc9] sm:$0xff]
        %v994 = vld [vmem:[%s299 + $0xd9] sm:$0xff]
        %v995 = vld [vmem:[%s299 + $0xe1] sm:$0xff]
        %v996 = vld [vmem:[%s299 + $0xf1] sm:$0xff]
        %v997 = vld [vmem:[%s299 + $0xf9] sm:$0xff]
        %v998 = vld [vmem:[%s299 + $0x109] sm:$0xff]
        %v999 = vld [vmem:[%s299 + $0x111] sm:$0xff]
        %v1000 = vld [vmem:[%s299 + $0x121] sm:$0xff]
        %v1001 = vld [vmem:[%s299 + $0x129] sm:$0xff]
        %v1002 = vld [vmem:[%s299 + $0x139] sm:$0xff]
        %v1003 = vld [vmem:[%s299 + $0x141] sm:$0xff]
        %v1004 = vld [vmem:[%s299 + $0x151] sm:$0xff]
        %v1005 = vld [vmem:[%s299 + $0x159] sm:$0xff]
        %v1006 = vld [vmem:[%s299 + $0x169] sm:$0xff]
        %v1007 = vld [vmem:[%s299 + $0x171] sm:$0xff]
        %1040 = vrot.lane.b32.xlu0 %v976, 12
        %v1041 = vpop.permute.xlu0 %1040
        %1042 = vrot.lane.b32.xlu0 %v977, 12
        %v1043 = vpop.permute.xlu0 %1042
        %1044 = vrot.lane.b32.xlu0 %v978, 12
        %v1045 = vpop.permute.xlu0 %1044
        %1046 = vrot.lane.b32.xlu0 %v979, 12
        %v1047 = vpop.permute.xlu0 %1046
        %1048 = vrot.lane.b32.xlu0 %v980, 12
        %v1049 = vpop.permute.xlu0 %1048
        %1050 = vrot.lane.b32.xlu0 %v981, 12
        %v1051 = vpop.permute.xlu0 %1050
        %1052 = vrot.lane.b32.xlu0 %v982, 12
        %v1053 = vpop.permute.xlu0 %1052
        %1054 = vrot.lane.b32.xlu0 %v983, 12
        %v1055 = vpop.permute.xlu0 %1054
        %1056 = vrot.lane.b32.xlu0 %v984, 12
        %v1057 = vpop.permute.xlu0 %1056
        %1058 = vrot.lane.b32.xlu0 %v985, 12
        %v1059 = vpop.permute.xlu0 %1058
        %1060 = vrot.lane.b32.xlu0 %v986, 12
        %v1061 = vpop.permute.xlu0 %1060
        %1062 = vrot.lane.b32.xlu0 %v987, 12
        %v1063 = vpop.permute.xlu0 %1062
        %1064 = vrot.lane.b32.xlu0 %v988, 12
        %v1065 = vpop.permute.xlu0 %1064
        %1066 = vrot.lane.b32.xlu0 %v989, 12
        %v1067 = vpop.permute.xlu0 %1066
        %1068 = vrot.lane.b32.xlu0 %v990, 12
        %v1069 = vpop.permute.xlu0 %1068
        %1070 = vrot.lane.b32.xlu0 %v991, 12
        %v1071 = vpop.permute.xlu0 %1070
        %1072 = vrot.lane.b32.xlu0 %v992, 12
        %v1073 = vpop.permute.xlu0 %1072
        %1074 = vrot.lane.b32.xlu0 %v993, 12
        %v1075 = vpop.permute.xlu0 %1074
        %1076 = vrot.lane.b32.xlu0 %v994, 12
        %v1077 = vpop.permute.xlu0 %1076
        %1078 = vrot.lane.b32.xlu0 %v995, 12
        %v1079 = vpop.permute.xlu0 %1078
        %1080 = vrot.lane.b32.xlu0 %v996, 12
        %v1081 = vpop.permute.xlu0 %1080
        %1082 = vrot.lane.b32.xlu0 %v997, 12
        %v1083 = vpop.permute.xlu0 %1082
        %1084 = vrot.lane.b32.xlu0 %v998, 12
        %v1085 = vpop.permute.xlu0 %1084
        %1086 = vrot.lane.b32.xlu0 %v999, 12
        %v1087 = vpop.permute.xlu0 %1086
        %1088 = vrot.lane.b32.xlu0 %v1000, 12
        %v1089 = vpop.permute.xlu0 %1088
        %1090 = vrot.lane.b32.xlu0 %v1001, 12
        %v1091 = vpop.permute.xlu0 %1090
        %1092 = vrot.lane.b32.xlu0 %v1002, 12
        %v1093 = vpop.permute.xlu0 %1092
        %1094 = vrot.lane.b32.xlu0 %v1003, 12
        %v1095 = vpop.permute.xlu0 %1094
        %1096 = vrot.lane.b32.xlu0 %v1004, 12
        %v1097 = vpop.permute.xlu0 %1096
        %1098 = vrot.lane.b32.xlu0 %v1005, 12
        %v1099 = vpop.permute.xlu0 %1098
        %1100 = vrot.lane.b32.xlu0 %v1006, 12
        %v1101 = vpop.permute.xlu0 %1100
        %1102 = vrot.lane.b32.xlu0 %v1007, 12
        %v1103 = vpop.permute.xlu0 %1102
        %vm1136 = vcmask 121952
        %1137 = vst.msk [vmem:[#allocation4] sm:$0xff] %vm1136, %v1041
        %1138 = vst.msk [vmem:[#allocation4 + $0x8] sm:$0xff] %vm1136, %v1043
        %1139 = vst.msk [vmem:[#allocation4 + $0x10] sm:$0xff] %vm1136, %v1045
        %1140 = vst.msk [vmem:[#allocation4 + $0x18] sm:$0xff] %vm1136, %v1047
        %1141 = vst.msk [vmem:[#allocation4 + $0x20] sm:$0xff] %vm1136, %v1049
        %1142 = vst.msk [vmem:[#allocation4 + $0x28] sm:$0xff] %vm1136, %v1051
        %1143 = vst.msk [vmem:[#allocation4 + $0x30] sm:$0xff] %vm1136, %v1053
        %1144 = vst.msk [vmem:[#allocation4 + $0x38] sm:$0xff] %vm1136, %v1055
        %1145 = vst.msk [vmem:[#allocation4 + $0x40] sm:$0xff] %vm1136, %v1057
        %1146 = vst.msk [vmem:[#allocation4 + $0x48] sm:$0xff] %vm1136, %v1059
        %1147 = vst.msk [vmem:[#allocation4 + $0x50] sm:$0xff] %vm1136, %v1061
        %1148 = vst.msk [vmem:[#allocation4 + $0x58] sm:$0xff] %vm1136, %v1063
        %1149 = vst.msk [vmem:[#allocation4 + $0x60] sm:$0xff] %vm1136, %v1065
        %1150 = vst.msk [vmem:[#allocation4 + $0x68] sm:$0xff] %vm1136, %v1067
        %1151 = vst.msk [vmem:[#allocation4 + $0x70] sm:$0xff] %vm1136, %v1069
        %1152 = vst.msk [vmem:[#allocation4 + $0x78] sm:$0xff] %vm1136, %v1071
        %1153 = vst.msk [vmem:[#allocation4 + $0x80] sm:$0xff] %vm1136, %v1073
        %1154 = vst.msk [vmem:[#allocation4 + $0x88] sm:$0xff] %vm1136, %v1075
        %1155 = vst.msk [vmem:[#allocation4 + $0x90] sm:$0xff] %vm1136, %v1077
        %1156 = vst.msk [vmem:[#allocation4 + $0x98] sm:$0xff] %vm1136, %v1079
        %1157 = vst.msk [vmem:[#allocation4 + $0xa0] sm:$0xff] %vm1136, %v1081
        %1158 = vst.msk [vmem:[#allocation4 + $0xa8] sm:$0xff] %vm1136, %v1083
        %1159 = vst.msk [vmem:[#allocation4 + $0xb0] sm:$0xff] %vm1136, %v1085
        %1160 = vst.msk [vmem:[#allocation4 + $0xb8] sm:$0xff] %vm1136, %v1087
        %1161 = vst.msk [vmem:[#allocation4 + $0xc0] sm:$0xff] %vm1136, %v1089
        %1162 = vst.msk [vmem:[#allocation4 + $0xc8] sm:$0xff] %vm1136, %v1091
        %1163 = vst.msk [vmem:[#allocation4 + $0xd0] sm:$0xff] %vm1136, %v1093
        %1164 = vst.msk [vmem:[#allocation4 + $0xd8] sm:$0xff] %vm1136, %v1095
        %1165 = vst.msk [vmem:[#allocation4 + $0xe0] sm:$0xff] %vm1136, %v1097
        %1166 = vst.msk [vmem:[#allocation4 + $0xe8] sm:$0xff] %vm1136, %v1099
        %1167 = vst.msk [vmem:[#allocation4 + $0xf0] sm:$0xff] %vm1136, %v1101
        %1168 = vst.msk [vmem:[#allocation4 + $0xf8] sm:$0xff] %vm1136, %v1103
        %v1169 = vld [vmem:[%s299 + $0x2] sm:$0xff]
        %v1170 = vld [vmem:[%s299 + $0xa] sm:$0xff]
        %v1171 = vld [vmem:[%s299 + $0x1a] sm:$0xff]
        %v1172 = vld [vmem:[%s299 + $0x22] sm:$0xff]
        %v1173 = vld [vmem:[%s299 + $0x32] sm:$0xff]
        %v1174 = vld [vmem:[%s299 + $0x3a] sm:$0xff]
        %v1175 = vld [vmem:[%s299 + $0x4a] sm:$0xff]
        %v1176 = vld [vmem:[%s299 + $0x52] sm:$0xff]
        %v1177 = vld [vmem:[%s299 + $0x62] sm:$0xff]
        %v1178 = vld [vmem:[%s299 + $0x6a] sm:$0xff]
        %v1179 = vld [vmem:[%s299 + $0x7a] sm:$0xff]
        %v1180 = vld [vmem:[%s299 + $0x82] sm:$0xff]
        %v1181 = vld [vmem:[%s299 + $0x92] sm:$0xff]
        %v1182 = vld [vmem:[%s299 + $0x9a] sm:$0xff]
        %v1183 = vld [vmem:[%s299 + $0xaa] sm:$0xff]
        %v1184 = vld [vmem:[%s299 + $0xb2] sm:$0xff]
        %v1185 = vld [vmem:[%s299 + $0xc2] sm:$0xff]
        %v1186 = vld [vmem:[%s299 + $0xca] sm:$0xff]
        %v1187 = vld [vmem:[%s299 + $0xda] sm:$0xff]
        %v1188 = vld [vmem:[%s299 + $0xe2] sm:$0xff]
        %v1189 = vld [vmem:[%s299 + $0xf2] sm:$0xff]
        %v1190 = vld [vmem:[%s299 + $0xfa] sm:$0xff]
        %v1191 = vld [vmem:[%s299 + $0x10a] sm:$0xff]
        %v1192 = vld [vmem:[%s299 + $0x112] sm:$0xff]
        %v1193 = vld [vmem:[%s299 + $0x122] sm:$0xff]
        %v1194 = vld [vmem:[%s299 + $0x12a] sm:$0xff]
        %v1195 = vld [vmem:[%s299 + $0x13a] sm:$0xff]
        %v1196 = vld [vmem:[%s299 + $0x142] sm:$0xff]
        %v1197 = vld [vmem:[%s299 + $0x152] sm:$0xff]
        %v1198 = vld [vmem:[%s299 + $0x15a] sm:$0xff]
        %v1199 = vld [vmem:[%s299 + $0x16a] sm:$0xff]
        %v1200 = vld [vmem:[%s299 + $0x172] sm:$0xff]
        %1233 = vrot.lane.b32.xlu0 %v1169, 15
        %v1234 = vpop.permute.xlu0 %1233
        %1235 = vrot.lane.b32.xlu0 %v1170, 15
        %v1236 = vpop.permute.xlu0 %1235
        %1237 = vrot.lane.b32.xlu0 %v1171, 15
        %v1238 = vpop.permute.xlu0 %1237
        %1239 = vrot.lane.b32.xlu0 %v1172, 15
        %v1240 = vpop.permute.xlu0 %1239
        %1241 = vrot.lane.b32.xlu0 %v1173, 15
        %v1242 = vpop.permute.xlu0 %1241
        %1243 = vrot.lane.b32.xlu0 %v1174, 15
        %v1244 = vpop.permute.xlu0 %1243
        %1245 = vrot.lane.b32.xlu0 %v1175, 15
        %v1246 = vpop.permute.xlu0 %1245
        %1247 = vrot.lane.b32.xlu0 %v1176, 15
        %v1248 = vpop.permute.xlu0 %1247
        %1249 = vrot.lane.b32.xlu0 %v1177, 15
        %v1250 = vpop.permute.xlu0 %1249
        %1251 = vrot.lane.b32.xlu0 %v1178, 15
        %v1252 = vpop.permute.xlu0 %1251
        %1253 = vrot.lane.b32.xlu0 %v1179, 15
        %v1254 = vpop.permute.xlu0 %1253
        %1255 = vrot.lane.b32.xlu0 %v1180, 15
        %v1256 = vpop.permute.xlu0 %1255
        %1257 = vrot.lane.b32.xlu0 %v1181, 15
        %v1258 = vpop.permute.xlu0 %1257
        %1259 = vrot.lane.b32.xlu0 %v1182, 15
        %v1260 = vpop.permute.xlu0 %1259
        %1261 = vrot.lane.b32.xlu0 %v1183, 15
        %v1262 = vpop.permute.xlu0 %1261
        %1263 = vrot.lane.b32.xlu0 %v1184, 15
        %v1264 = vpop.permute.xlu0 %1263
        %1265 = vrot.lane.b32.xlu0 %v1185, 15
        %v1266 = vpop.permute.xlu0 %1265
        %1267 = vrot.lane.b32.xlu0 %v1186, 15
        %v1268 = vpop.permute.xlu0 %1267
        %1269 = vrot.lane.b32.xlu0 %v1187, 15
        %v1270 = vpop.permute.xlu0 %1269
        %1271 = vrot.lane.b32.xlu0 %v1188, 15
        %v1272 = vpop.permute.xlu0 %1271
        %1273 = vrot.lane.b32.xlu0 %v1189, 15
        %v1274 = vpop.permute.xlu0 %1273
        %1275 = vrot.lane.b32.xlu0 %v1190, 15
        %v1276 = vpop.permute.xlu0 %1275
        %1277 = vrot.lane.b32.xlu0 %v1191, 15
        %v1278 = vpop.permute.xlu0 %1277
        %1279 = vrot.lane.b32.xlu0 %v1192, 15
        %v1280 = vpop.permute.xlu0 %1279
        %1281 = vrot.lane.b32.xlu0 %v1193, 15
        %v1282 = vpop.permute.xlu0 %1281
        %1283 = vrot.lane.b32.xlu0 %v1194, 15
        %v1284 = vpop.permute.xlu0 %1283
        %1285 = vrot.lane.b32.xlu0 %v1195, 15
        %v1286 = vpop.permute.xlu0 %1285
        %1287 = vrot.lane.b32.xlu0 %v1196, 15
        %v1288 = vpop.permute.xlu0 %1287
        %1289 = vrot.lane.b32.xlu0 %v1197, 15
        %v1290 = vpop.permute.xlu0 %1289
        %1291 = vrot.lane.b32.xlu0 %v1198, 15
        %v1292 = vpop.permute.xlu0 %1291
        %1293 = vrot.lane.b32.xlu0 %v1199, 15
        %v1294 = vpop.permute.xlu0 %1293
        %1295 = vrot.lane.b32.xlu0 %v1200, 15
        %v1296 = vpop.permute.xlu0 %1295
        %vm1329 = vcmask 146552
        %1330 = vst.msk [vmem:[#allocation4] sm:$0xff] %vm1329, %v1234
        %1331 = vst.msk [vmem:[#allocation4 + $0x8] sm:$0xff] %vm1329, %v1236
        %1332 = vst.msk [vmem:[#allocation4 + $0x10] sm:$0xff] %vm1329, %v1238
        %1333 = vst.msk [vmem:[#allocation4 + $0x18] sm:$0xff] %vm1329, %v1240
        %1334 = vst.msk [vmem:[#allocation4 + $0x20] sm:$0xff] %vm1329, %v1242
        %1335 = vst.msk [vmem:[#allocation4 + $0x28] sm:$0xff] %vm1329, %v1244
        %1336 = vst.msk [vmem:[#allocation4 + $0x30] sm:$0xff] %vm1329, %v1246
        %1337 = vst.msk [vmem:[#allocation4 + $0x38] sm:$0xff] %vm1329, %v1248
        %1338 = vst.msk [vmem:[#allocation4 + $0x40] sm:$0xff] %vm1329, %v1250
        %1339 = vst.msk [vmem:[#allocation4 + $0x48] sm:$0xff] %vm1329, %v1252
        %1340 = vst.msk [vmem:[#allocation4 + $0x50] sm:$0xff] %vm1329, %v1254
        %1341 = vst.msk [vmem:[#allocation4 + $0x58] sm:$0xff] %vm1329, %v1256
        %1342 = vst.msk [vmem:[#allocation4 + $0x60] sm:$0xff] %vm1329, %v1258
        %1343 = vst.msk [vmem:[#allocation4 + $0x68] sm:$0xff] %vm1329, %v1260
        %1344 = vst.msk [vmem:[#allocation4 + $0x70] sm:$0xff] %vm1329, %v1262
        %1345 = vst.msk [vmem:[#allocation4 + $0x78] sm:$0xff] %vm1329, %v1264
        %1346 = vst.msk [vmem:[#allocation4 + $0x80] sm:$0xff] %vm1329, %v1266
        %1347 = vst.msk [vmem:[#allocation4 + $0x88] sm:$0xff] %vm1329, %v1268
        %1348 = vst.msk [vmem:[#allocation4 + $0x90] sm:$0xff] %vm1329, %v1270
        %1349 = vst.msk [vmem:[#allocation4 + $0x98] sm:$0xff] %vm1329, %v1272
        %1350 = vst.msk [vmem:[#allocation4 + $0xa0] sm:$0xff] %vm1329, %v1274
        %1351 = vst.msk [vmem:[#allocation4 + $0xa8] sm:$0xff] %vm1329, %v1276
        %1352 = vst.msk [vmem:[#allocation4 + $0xb0] sm:$0xff] %vm1329, %v1278
        %1353 = vst.msk [vmem:[#allocation4 + $0xb8] sm:$0xff] %vm1329, %v1280
        %1354 = vst.msk [vmem:[#allocation4 + $0xc0] sm:$0xff] %vm1329, %v1282
        %1355 = vst.msk [vmem:[#allocation4 + $0xc8] sm:$0xff] %vm1329, %v1284
        %1356 = vst.msk [vmem:[#allocation4 + $0xd0] sm:$0xff] %vm1329, %v1286
        %1357 = vst.msk [vmem:[#allocation4 + $0xd8] sm:$0xff] %vm1329, %v1288
        %1358 = vst.msk [vmem:[#allocation4 + $0xe0] sm:$0xff] %vm1329, %v1290
        %1359 = vst.msk [vmem:[#allocation4 + $0xe8] sm:$0xff] %vm1329, %v1292
        %1360 = vst.msk [vmem:[#allocation4 + $0xf0] sm:$0xff] %vm1329, %v1294
        %1361 = vst.msk [vmem:[#allocation4 + $0xf8] sm:$0xff] %vm1329, %v1296
        %s1362 = scalar_lea.vmem [#allocation2], 48
        %v1363 = vld [vmem:[%s1362] sm:$0xff]
        %v1364 = vld [vmem:[%s1362 + $0x8] sm:$0xff]
        %v1365 = vld [vmem:[%s1362 + $0x18] sm:$0xff]
        %v1366 = vld [vmem:[%s1362 + $0x20] sm:$0xff]
        %v1367 = vld [vmem:[%s1362 + $0x30] sm:$0xff]
        %v1368 = vld [vmem:[%s1362 + $0x38] sm:$0xff]
        %v1369 = vld [vmem:[%s1362 + $0x48] sm:$0xff]
        %v1370 = vld [vmem:[%s1362 + $0x50] sm:$0xff]
        %v1371 = vld [vmem:[%s1362 + $0x60] sm:$0xff]
        %v1372 = vld [vmem:[%s1362 + $0x68] sm:$0xff]
        %v1373 = vld [vmem:[%s1362 + $0x78] sm:$0xff]
        %v1374 = vld [vmem:[%s1362 + $0x80] sm:$0xff]
        %v1375 = vld [vmem:[%s1362 + $0x90] sm:$0xff]
        %v1376 = vld [vmem:[%s1362 + $0x98] sm:$0xff]
        %v1377 = vld [vmem:[%s1362 + $0xa8] sm:$0xff]
        %v1378 = vld [vmem:[%s1362 + $0xb0] sm:$0xff]
        %v1379 = vld [vmem:[%s1362 + $0xc0] sm:$0xff]
        %v1380 = vld [vmem:[%s1362 + $0xc8] sm:$0xff]
        %v1381 = vld [vmem:[%s1362 + $0xd8] sm:$0xff]
        %v1382 = vld [vmem:[%s1362 + $0xe0] sm:$0xff]
        %v1383 = vld [vmem:[%s1362 + $0xf0] sm:$0xff]
        %v1384 = vld [vmem:[%s1362 + $0xf8] sm:$0xff]
        %v1385 = vld [vmem:[%s1362 + $0x108] sm:$0xff]
        %v1386 = vld [vmem:[%s1362 + $0x110] sm:$0xff]
        %v1387 = vld [vmem:[%s1362 + $0x120] sm:$0xff]
        %v1388 = vld [vmem:[%s1362 + $0x128] sm:$0xff]
        %v1389 = vld [vmem:[%s1362 + $0x138] sm:$0xff]
        %v1390 = vld [vmem:[%s1362 + $0x140] sm:$0xff]
        %v1391 = vld [vmem:[%s1362 + $0x150] sm:$0xff]
        %v1392 = vld [vmem:[%s1362 + $0x158] sm:$0xff]
        %v1393 = vld [vmem:[%s1362 + $0x168] sm:$0xff]
        %v1394 = vld [vmem:[%s1362 + $0x170] sm:$0xff]
        %1427 = vrot.lane.b32.xlu0 %v1363, 18
        %v1428 = vpop.permute.xlu0 %1427
        %1429 = vrot.lane.b32.xlu0 %v1364, 18
        %v1430 = vpop.permute.xlu0 %1429
        %1431 = vrot.lane.b32.xlu0 %v1365, 18
        %v1432 = vpop.permute.xlu0 %1431
        %1433 = vrot.lane.b32.xlu0 %v1366, 18
        %v1434 = vpop.permute.xlu0 %1433
        %1435 = vrot.lane.b32.xlu0 %v1367, 18
        %v1436 = vpop.permute.xlu0 %1435
        %1437 = vrot.lane.b32.xlu0 %v1368, 18
        %v1438 = vpop.permute.xlu0 %1437
        %1439 = vrot.lane.b32.xlu0 %v1369, 18
        %v1440 = vpop.permute.xlu0 %1439
        %1441 = vrot.lane.b32.xlu0 %v1370, 18
        %v1442 = vpop.permute.xlu0 %1441
        %1443 = vrot.lane.b32.xlu0 %v1371, 18
        %v1444 = vpop.permute.xlu0 %1443
        %1445 = vrot.lane.b32.xlu0 %v1372, 18
        %v1446 = vpop.permute.xlu0 %1445
        %1447 = vrot.lane.b32.xlu0 %v1373, 18
        %v1448 = vpop.permute.xlu0 %1447
        %1449 = vrot.lane.b32.xlu0 %v1374, 18
        %v1450 = vpop.permute.xlu0 %1449
        %1451 = vrot.lane.b32.xlu0 %v1375, 18
        %v1452 = vpop.permute.xlu0 %1451
        %1453 = vrot.lane.b32.xlu0 %v1376, 18
        %v1454 = vpop.permute.xlu0 %1453
        %1455 = vrot.lane.b32.xlu0 %v1377, 18
        %v1456 = vpop.permute.xlu0 %1455
        %1457 = vrot.lane.b32.xlu0 %v1378, 18
        %v1458 = vpop.permute.xlu0 %1457
        %1459 = vrot.lane.b32.xlu0 %v1379, 18
        %v1460 = vpop.permute.xlu0 %1459
        %1461 = vrot.lane.b32.xlu0 %v1380, 18
        %v1462 = vpop.permute.xlu0 %1461
        %1463 = vrot.lane.b32.xlu0 %v1381, 18
        %v1464 = vpop.permute.xlu0 %1463
        %1465 = vrot.lane.b32.xlu0 %v1382, 18
        %v1466 = vpop.permute.xlu0 %1465
        %1467 = vrot.lane.b32.xlu0 %v1383, 18
        %v1468 = vpop.permute.xlu0 %1467
        %1469 = vrot.lane.b32.xlu0 %v1384, 18
        %v1470 = vpop.permute.xlu0 %1469
        %1471 = vrot.lane.b32.xlu0 %v1385, 18
        %v1472 = vpop.permute.xlu0 %1471
        %1473 = vrot.lane.b32.xlu0 %v1386, 18
        %v1474 = vpop.permute.xlu0 %1473
        %1475 = vrot.lane.b32.xlu0 %v1387, 18
        %v1476 = vpop.permute.xlu0 %1475
        %1477 = vrot.lane.b32.xlu0 %v1388, 18
        %v1478 = vpop.permute.xlu0 %1477
        %1479 = vrot.lane.b32.xlu0 %v1389, 18
        %v1480 = vpop.permute.xlu0 %1479
        %1481 = vrot.lane.b32.xlu0 %v1390, 18
        %v1482 = vpop.permute.xlu0 %1481
        %1483 = vrot.lane.b32.xlu0 %v1391, 18
        %v1484 = vpop.permute.xlu0 %1483
        %1485 = vrot.lane.b32.xlu0 %v1392, 18
        %v1486 = vpop.permute.xlu0 %1485
        %1487 = vrot.lane.b32.xlu0 %v1393, 18
        %v1488 = vpop.permute.xlu0 %1487
        %1489 = vrot.lane.b32.xlu0 %v1394, 18
        %v1490 = vpop.permute.xlu0 %1489
        %vm1523 = vcmask 171152
        %1524 = vst.msk [vmem:[#allocation4] sm:$0xff] %vm1523, %v1428
        %1525 = vst.msk [vmem:[#allocation4 + $0x8] sm:$0xff] %vm1523, %v1430
        %1526 = vst.msk [vmem:[#allocation4 + $0x10] sm:$0xff] %vm1523, %v1432
        %1527 = vst.msk [vmem:[#allocation4 + $0x18] sm:$0xff] %vm1523, %v1434
        %1528 = vst.msk [vmem:[#allocation4 + $0x20] sm:$0xff] %vm1523, %v1436
        %1529 = vst.msk [vmem:[#allocation4 + $0x28] sm:$0xff] %vm1523, %v1438
        %1530 = vst.msk [vmem:[#allocation4 + $0x30] sm:$0xff] %vm1523, %v1440
        %1531 = vst.msk [vmem:[#allocation4 + $0x38] sm:$0xff] %vm1523, %v1442
        %1532 = vst.msk [vmem:[#allocation4 + $0x40] sm:$0xff] %vm1523, %v1444
        %1533 = vst.msk [vmem:[#allocation4 + $0x48] sm:$0xff] %vm1523, %v1446
        %1534 = vst.msk [vmem:[#allocation4 + $0x50] sm:$0xff] %vm1523, %v1448
        %1535 = vst.msk [vmem:[#allocation4 + $0x58] sm:$0xff] %vm1523, %v1450
        %1536 = vst.msk [vmem:[#allocation4 + $0x60] sm:$0xff] %vm1523, %v1452
        %1537 = vst.msk [vmem:[#allocation4 + $0x68] sm:$0xff] %vm1523, %v1454
        %1538 = vst.msk [vmem:[#allocation4 + $0x70] sm:$0xff] %vm1523, %v1456
        %1539 = vst.msk [vmem:[#allocation4 + $0x78] sm:$0xff] %vm1523, %v1458
        %1540 = vst.msk [vmem:[#allocation4 + $0x80] sm:$0xff] %vm1523, %v1460
        %1541 = vst.msk [vmem:[#allocation4 + $0x88] sm:$0xff] %vm1523, %v1462
        %1542 = vst.msk [vmem:[#allocation4 + $0x90] sm:$0xff] %vm1523, %v1464
        %1543 = vst.msk [vmem:[#allocation4 + $0x98] sm:$0xff] %vm1523, %v1466
        %1544 = vst.msk [vmem:[#allocation4 + $0xa0] sm:$0xff] %vm1523, %v1468
        %1545 = vst.msk [vmem:[#allocation4 + $0xa8] sm:$0xff] %vm1523, %v1470
        %1546 = vst.msk [vmem:[#allocation4 + $0xb0] sm:$0xff] %vm1523, %v1472
        %1547 = vst.msk [vmem:[#allocation4 + $0xb8] sm:$0xff] %vm1523, %v1474
        %1548 = vst.msk [vmem:[#allocation4 + $0xc0] sm:$0xff] %vm1523, %v1476
        %1549 = vst.msk [vmem:[#allocation4 + $0xc8] sm:$0xff] %vm1523, %v1478
        %1550 = vst.msk [vmem:[#allocation4 + $0xd0] sm:$0xff] %vm1523, %v1480
        %1551 = vst.msk [vmem:[#allocation4 + $0xd8] sm:$0xff] %vm1523, %v1482
        %1552 = vst.msk [vmem:[#allocation4 + $0xe0] sm:$0xff] %vm1523, %v1484
        %1553 = vst.msk [vmem:[#allocation4 + $0xe8] sm:$0xff] %vm1523, %v1486
        %1554 = vst.msk [vmem:[#allocation4 + $0xf0] sm:$0xff] %vm1523, %v1488
        %1555 = vst.msk [vmem:[#allocation4 + $0xf8] sm:$0xff] %vm1523, %v1490
        %v1556 = vld [vmem:[%s1362 + $0x1] sm:$0xff]
        %v1557 = vld [vmem:[%s1362 + $0x9] sm:$0xff]
        %v1558 = vld [vmem:[%s1362 + $0x19] sm:$0xff]
        %v1559 = vld [vmem:[%s1362 + $0x21] sm:$0xff]
        %v1560 = vld [vmem:[%s1362 + $0x31] sm:$0xff]
        %v1561 = vld [vmem:[%s1362 + $0x39] sm:$0xff]
        %v1562 = vld [vmem:[%s1362 + $0x49] sm:$0xff]
        %v1563 = vld [vmem:[%s1362 + $0x51] sm:$0xff]
        %v1564 = vld [vmem:[%s1362 + $0x61] sm:$0xff]
        %v1565 = vld [vmem:[%s1362 + $0x69] sm:$0xff]
        %v1566 = vld [vmem:[%s1362 + $0x79] sm:$0xff]
        %v1567 = vld [vmem:[%s1362 + $0x81] sm:$0xff]
        %v1568 = vld [vmem:[%s1362 + $0x91] sm:$0xff]
        %v1569 = vld [vmem:[%s1362 + $0x99] sm:$0xff]
        %v1570 = vld [vmem:[%s1362 + $0xa9] sm:$0xff]
        %v1571 = vld [vmem:[%s1362 + $0xb1] sm:$0xff]
        %v1572 = vld [vmem:[%s1362 + $0xc1] sm:$0xff]
        %v1573 = vld [vmem:[%s1362 + $0xc9] sm:$0xff]
        %v1574 = vld [vmem:[%s1362 + $0xd9] sm:$0xff]
        %v1575 = vld [vmem:[%s1362 + $0xe1] sm:$0xff]
        %v1576 = vld [vmem:[%s1362 + $0xf1] sm:$0xff]
        %v1577 = vld [vmem:[%s1362 + $0xf9] sm:$0xff]
        %v1578 = vld [vmem:[%s1362 + $0x109] sm:$0xff]
        %v1579 = vld [vmem:[%s1362 + $0x111] sm:$0xff]
        %v1580 = vld [vmem:[%s1362 + $0x121] sm:$0xff]
        %v1581 = vld [vmem:[%s1362 + $0x129] sm:$0xff]
        %v1582 = vld [vmem:[%s1362 + $0x139] sm:$0xff]
        %v1583 = vld [vmem:[%s1362 + $0x141] sm:$0xff]
        %v1584 = vld [vmem:[%s1362 + $0x151] sm:$0xff]
        %v1585 = vld [vmem:[%s1362 + $0x159] sm:$0xff]
        %v1586 = vld [vmem:[%s1362 + $0x169] sm:$0xff]
        %v1587 = vld [vmem:[%s1362 + $0x171] sm:$0xff]
        %1620 = vrot.lane.b32.xlu0 %v1556, 21
        %v1621 = vpop.permute.xlu0 %1620
        %1622 = vrot.lane.b32.xlu0 %v1557, 21
        %v1623 = vpop.permute.xlu0 %1622
        %1624 = vrot.lane.b32.xlu0 %v1558, 21
        %v1625 = vpop.permute.xlu0 %1624
        %1626 = vrot.lane.b32.xlu0 %v1559, 21
        %v1627 = vpop.permute.xlu0 %1626
        %1628 = vrot.lane.b32.xlu0 %v1560, 21
        %v1629 = vpop.permute.xlu0 %1628
        %1630 = vrot.lane.b32.xlu0 %v1561, 21
        %v1631 = vpop.permute.xlu0 %1630
        %1632 = vrot.lane.b32.xlu0 %v1562, 21
        %v1633 = vpop.permute.xlu0 %1632
        %1634 = vrot.lane.b32.xlu0 %v1563, 21
        %v1635 = vpop.permute.xlu0 %1634
        %1636 = vrot.lane.b32.xlu0 %v1564, 21
        %v1637 = vpop.permute.xlu0 %1636
        %1638 = vrot.lane.b32.xlu0 %v1565, 21
        %v1639 = vpop.permute.xlu0 %1638
        %1640 = vrot.lane.b32.xlu0 %v1566, 21
        %v1641 = vpop.permute.xlu0 %1640
        %1642 = vrot.lane.b32.xlu0 %v1567, 21
        %v1643 = vpop.permute.xlu0 %1642
        %1644 = vrot.lane.b32.xlu0 %v1568, 21
        %v1645 = vpop.permute.xlu0 %1644
        %1646 = vrot.lane.b32.xlu0 %v1569, 21
        %v1647 = vpop.permute.xlu0 %1646
        %1648 = vrot.lane.b32.xlu0 %v1570, 21
        %v1649 = vpop.permute.xlu0 %1648
        %1650 = vrot.lane.b32.xlu0 %v1571, 21
        %v1651 = vpop.permute.xlu0 %1650
        %1652 = vrot.lane.b32.xlu0 %v1572, 21
        %v1653 = vpop.permute.xlu0 %1652
        %1654 = vrot.lane.b32.xlu0 %v1573, 21
        %v1655 = vpop.permute.xlu0 %1654
        %1656 = vrot.lane.b32.xlu0 %v1574, 21
        %v1657 = vpop.permute.xlu0 %1656
        %1658 = vrot.lane.b32.xlu0 %v1575, 21
        %v1659 = vpop.permute.xlu0 %1658
        %1660 = vrot.lane.b32.xlu0 %v1576, 21
        %v1661 = vpop.permute.xlu0 %1660
        %1662 = vrot.lane.b32.xlu0 %v1577, 21
        %v1663 = vpop.permute.xlu0 %1662
        %1664 = vrot.lane.b32.xlu0 %v1578, 21
        %v1665 = vpop.permute.xlu0 %1664
        %1666 = vrot.lane.b32.xlu0 %v1579, 21
        %v1667 = vpop.permute.xlu0 %1666
        %1668 = vrot.lane.b32.xlu0 %v1580, 21
        %v1669 = vpop.permute.xlu0 %1668
        %1670 = vrot.lane.b32.xlu0 %v1581, 21
        %v1671 = vpop.permute.xlu0 %1670
        %1672 = vrot.lane.b32.xlu0 %v1582, 21
        %v1673 = vpop.permute.xlu0 %1672
        %1674 = vrot.lane.b32.xlu0 %v1583, 21
        %v1675 = vpop.permute.xlu0 %1674
        %1676 = vrot.lane.b32.xlu0 %v1584, 21
        %v1677 = vpop.permute.xlu0 %1676
        %1678 = vrot.lane.b32.xlu0 %v1585, 21
        %v1679 = vpop.permute.xlu0 %1678
        %1680 = vrot.lane.b32.xlu0 %v1586, 21
        %v1681 = vpop.permute.xlu0 %1680
        %1682 = vrot.lane.b32.xlu0 %v1587, 21
        %v1683 = vpop.permute.xlu0 %1682
        %vm1716 = vcmask 195752
        %1717 = vst.msk [vmem:[#allocation4] sm:$0xff] %vm1716, %v1621
        %1718 = vst.msk [vmem:[#allocation4 + $0x8] sm:$0xff] %vm1716, %v1623
        %1719 = vst.msk [vmem:[#allocation4 + $0x10] sm:$0xff] %vm1716, %v1625
        %1720 = vst.msk [vmem:[#allocation4 + $0x18] sm:$0xff] %vm1716, %v1627
        %1721 = vst.msk [vmem:[#allocation4 + $0x20] sm:$0xff] %vm1716, %v1629
        %1722 = vst.msk [vmem:[#allocation4 + $0x28] sm:$0xff] %vm1716, %v1631
        %1723 = vst.msk [vmem:[#allocation4 + $0x30] sm:$0xff] %vm1716, %v1633
        %1724 = vst.msk [vmem:[#allocation4 + $0x38] sm:$0xff] %vm1716, %v1635
        %1725 = vst.msk [vmem:[#allocation4 + $0x40] sm:$0xff] %vm1716, %v1637
        %1726 = vst.msk [vmem:[#allocation4 + $0x48] sm:$0xff] %vm1716, %v1639
        %1727 = vst.msk [vmem:[#allocation4 + $0x50] sm:$0xff] %vm1716, %v1641
        %1728 = vst.msk [vmem:[#allocation4 + $0x58] sm:$0xff] %vm1716, %v1643
        %1729 = vst.msk [vmem:[#allocation4 + $0x60] sm:$0xff] %vm1716, %v1645
        %1730 = vst.msk [vmem:[#allocation4 + $0x68] sm:$0xff] %vm1716, %v1647
        %1731 = vst.msk [vmem:[#allocation4 + $0x70] sm:$0xff] %vm1716, %v1649
        %1732 = vst.msk [vmem:[#allocation4 + $0x78] sm:$0xff] %vm1716, %v1651
        %1733 = vst.msk [vmem:[#allocation4 + $0x80] sm:$0xff] %vm1716, %v1653
        %1734 = vst.msk [vmem:[#allocation4 + $0x88] sm:$0xff] %vm1716, %v1655
        %1735 = vst.msk [vmem:[#allocation4 + $0x90] sm:$0xff] %vm1716, %v1657
        %1736 = vst.msk [vmem:[#allocation4 + $0x98] sm:$0xff] %vm1716, %v1659
        %1737 = vst.msk [vmem:[#allocation4 + $0xa0] sm:$0xff] %vm1716, %v1661
        %1738 = vst.msk [vmem:[#allocation4 + $0xa8] sm:$0xff] %vm1716, %v1663
        %1739 = vst.msk [vmem:[#allocation4 + $0xb0] sm:$0xff] %vm1716, %v1665
        %1740 = vst.msk [vmem:[#allocation4 + $0xb8] sm:$0xff] %vm1716, %v1667
        %1741 = vst.msk [vmem:[#allocation4 + $0xc0] sm:$0xff] %vm1716, %v1669
        %1742 = vst.msk [vmem:[#allocation4 + $0xc8] sm:$0xff] %vm1716, %v1671
        %1743 = vst.msk [vmem:[#allocation4 + $0xd0] sm:$0xff] %vm1716, %v1673
        %1744 = vst.msk [vmem:[#allocation4 + $0xd8] sm:$0xff] %vm1716, %v1675
        %1745 = vst.msk [vmem:[#allocation4 + $0xe0] sm:$0xff] %vm1716, %v1677
        %1746 = vst.msk [vmem:[#allocation4 + $0xe8] sm:$0xff] %vm1716, %v1679
        %1747 = vst.msk [vmem:[#allocation4 + $0xf0] sm:$0xff] %vm1716, %v1681
        %1748 = vst.msk [vmem:[#allocation4 + $0xf8] sm:$0xff] %vm1716, %v1683
        %v1749 = vld [vmem:[%s1362 + $0x2] sm:$0xff]
        %v1750 = vld [vmem:[%s1362 + $0xa] sm:$0xff]
        %v1751 = vld [vmem:[%s1362 + $0x1a] sm:$0xff]
        %v1752 = vld [vmem:[%s1362 + $0x22] sm:$0xff]
        %v1753 = vld [vmem:[%s1362 + $0x32] sm:$0xff]
        %v1754 = vld [vmem:[%s1362 + $0x3a] sm:$0xff]
        %v1755 = vld [vmem:[%s1362 + $0x4a] sm:$0xff]
        %v1756 = vld [vmem:[%s1362 + $0x52] sm:$0xff]
        %v1757 = vld [vmem:[%s1362 + $0x62] sm:$0xff]
        %v1758 = vld [vmem:[%s1362 + $0x6a] sm:$0xff]
        %v1759 = vld [vmem:[%s1362 + $0x7a] sm:$0xff]
        %v1760 = vld [vmem:[%s1362 + $0x82] sm:$0xff]
        %v1761 = vld [vmem:[%s1362 + $0x92] sm:$0xff]
        %v1762 = vld [vmem:[%s1362 + $0x9a] sm:$0xff]
        %v1763 = vld [vmem:[%s1362 + $0xaa] sm:$0xff]
        %v1764 = vld [vmem:[%s1362 + $0xb2] sm:$0xff]
        %v1765 = vld [vmem:[%s1362 + $0xc2] sm:$0xff]
        %v1766 = vld [vmem:[%s1362 + $0xca] sm:$0xff]
        %v1767 = vld [vmem:[%s1362 + $0xda] sm:$0xff]
        %v1768 = vld [vmem:[%s1362 + $0xe2] sm:$0xff]
        %v1769 = vld [vmem:[%s1362 + $0xf2] sm:$0xff]
        %v1770 = vld [vmem:[%s1362 + $0xfa] sm:$0xff]
        %v1771 = vld [vmem:[%s1362 + $0x10a] sm:$0xff]
        %v1772 = vld [vmem:[%s1362 + $0x112] sm:$0xff]
        %v1773 = vld [vmem:[%s1362 + $0x122] sm:$0xff]
        %v1774 = vld [vmem:[%s1362 + $0x12a] sm:$0xff]
        %v1775 = vld [vmem:[%s1362 + $0x13a] sm:$0xff]
        %v1776 = vld [vmem:[%s1362 + $0x142] sm:$0xff]
        %v1777 = vld [vmem:[%s1362 + $0x152] sm:$0xff]
        %v1778 = vld [vmem:[%s1362 + $0x15a] sm:$0xff]
        %v1779 = vld [vmem:[%s1362 + $0x16a] sm:$0xff]
        %v1780 = vld [vmem:[%s1362 + $0x172] sm:$0xff]
        %1813 = vrot.lane.b32.xlu0 %v1749, 24
        %v1814 = vpop.permute.xlu0 %1813
        %1815 = vrot.lane.b32.xlu0 %v1750, 24
        %v1816 = vpop.permute.xlu0 %1815
        %1817 = vrot.lane.b32.xlu0 %v1751, 24
        %v1818 = vpop.permute.xlu0 %1817
        %1819 = vrot.lane.b32.xlu0 %v1752, 24
        %v1820 = vpop.permute.xlu0 %1819
        %1821 = vrot.lane.b32.xlu0 %v1753, 24
        %v1822 = vpop.permute.xlu0 %1821
        %1823 = vrot.lane.b32.xlu0 %v1754, 24
        %v1824 = vpop.permute.xlu0 %1823
        %1825 = vrot.lane.b32.xlu0 %v1755, 24
        %v1826 = vpop.permute.xlu0 %1825
        %1827 = vrot.lane.b32.xlu0 %v1756, 24
        %v1828 = vpop.permute.xlu0 %1827
        %1829 = vrot.lane.b32.xlu0 %v1757, 24
        %v1830 = vpop.permute.xlu0 %1829
        %1831 = vrot.lane.b32.xlu0 %v1758, 24
        %v1832 = vpop.permute.xlu0 %1831
        %1833 = vrot.lane.b32.xlu0 %v1759, 24
        %v1834 = vpop.permute.xlu0 %1833
        %1835 = vrot.lane.b32.xlu0 %v1760, 24
        %v1836 = vpop.permute.xlu0 %1835
        %1837 = vrot.lane.b32.xlu0 %v1761, 24
        %v1838 = vpop.permute.xlu0 %1837
        %1839 = vrot.lane.b32.xlu0 %v1762, 24
        %v1840 = vpop.permute.xlu0 %1839
        %1841 = vrot.lane.b32.xlu0 %v1763, 24
        %v1842 = vpop.permute.xlu0 %1841
        %1843 = vrot.lane.b32.xlu0 %v1764, 24
        %v1844 = vpop.permute.xlu0 %1843
        %1845 = vrot.lane.b32.xlu0 %v1765, 24
        %v1846 = vpop.permute.xlu0 %1845
        %1847 = vrot.lane.b32.xlu0 %v1766, 24
        %v1848 = vpop.permute.xlu0 %1847
        %1849 = vrot.lane.b32.xlu0 %v1767, 24
        %v1850 = vpop.permute.xlu0 %1849
        %1851 = vrot.lane.b32.xlu0 %v1768, 24
        %v1852 = vpop.permute.xlu0 %1851
        %1853 = vrot.lane.b32.xlu0 %v1769, 24
        %v1854 = vpop.permute.xlu0 %1853
        %1855 = vrot.lane.b32.xlu0 %v1770, 24
        %v1856 = vpop.permute.xlu0 %1855
        %1857 = vrot.lane.b32.xlu0 %v1771, 24
        %v1858 = vpop.permute.xlu0 %1857
        %1859 = vrot.lane.b32.xlu0 %v1772, 24
        %v1860 = vpop.permute.xlu0 %1859
        %1861 = vrot.lane.b32.xlu0 %v1773, 24
        %v1862 = vpop.permute.xlu0 %1861
        %1863 = vrot.lane.b32.xlu0 %v1774, 24
        %v1864 = vpop.permute.xlu0 %1863
        %1865 = vrot.lane.b32.xlu0 %v1775, 24
        %v1866 = vpop.permute.xlu0 %1865
        %1867 = vrot.lane.b32.xlu0 %v1776, 24
        %v1868 = vpop.permute.xlu0 %1867
        %1869 = vrot.lane.b32.xlu0 %v1777, 24
        %v1870 = vpop.permute.xlu0 %1869
        %1871 = vrot.lane.b32.xlu0 %v1778, 24
        %v1872 = vpop.permute.xlu0 %1871
        %1873 = vrot.lane.b32.xlu0 %v1779, 24
        %v1874 = vpop.permute.xlu0 %1873
        %1875 = vrot.lane.b32.xlu0 %v1780, 24
        %v1876 = vpop.permute.xlu0 %1875
        %vm1909 = vcmask 220352
        %1910 = vst.msk [vmem:[#allocation4] sm:$0xff] %vm1909, %v1814
        %1911 = vst.msk [vmem:[#allocation4 + $0x8] sm:$0xff] %vm1909, %v1816
        %1912 = vst.msk [vmem:[#allocation4 + $0x10] sm:$0xff] %vm1909, %v1818
        %1913 = vst.msk [vmem:[#allocation4 + $0x18] sm:$0xff] %vm1909, %v1820
        %1914 = vst.msk [vmem:[#allocation4 + $0x20] sm:$0xff] %vm1909, %v1822
        %1915 = vst.msk [vmem:[#allocation4 + $0x28] sm:$0xff] %vm1909, %v1824
        %1916 = vst.msk [vmem:[#allocation4 + $0x30] sm:$0xff] %vm1909, %v1826
        %1917 = vst.msk [vmem:[#allocation4 + $0x38] sm:$0xff] %vm1909, %v1828
        %1918 = vst.msk [vmem:[#allocation4 + $0x40] sm:$0xff] %vm1909, %v1830
        %1919 = vst.msk [vmem:[#allocation4 + $0x48] sm:$0xff] %vm1909, %v1832
        %1920 = vst.msk [vmem:[#allocation4 + $0x50] sm:$0xff] %vm1909, %v1834
        %1921 = vst.msk [vmem:[#allocation4 + $0x58] sm:$0xff] %vm1909, %v1836
        %1922 = vst.msk [vmem:[#allocation4 + $0x60] sm:$0xff] %vm1909, %v1838
        %1923 = vst.msk [vmem:[#allocation4 + $0x68] sm:$0xff] %vm1909, %v1840
        %1924 = vst.msk [vmem:[#allocation4 + $0x70] sm:$0xff] %vm1909, %v1842
        %1925 = vst.msk [vmem:[#allocation4 + $0x78] sm:$0xff] %vm1909, %v1844
        %1926 = vst.msk [vmem:[#allocation4 + $0x80] sm:$0xff] %vm1909, %v1846
        %1927 = vst.msk [vmem:[#allocation4 + $0x88] sm:$0xff] %vm1909, %v1848
        %1928 = vst.msk [vmem:[#allocation4 + $0x90] sm:$0xff] %vm1909, %v1850
        %1929 = vst.msk [vmem:[#allocation4 + $0x98] sm:$0xff] %vm1909, %v1852
        %1930 = vst.msk [vmem:[#allocation4 + $0xa0] sm:$0xff] %vm1909, %v1854
        %1931 = vst.msk [vmem:[#allocation4 + $0xa8] sm:$0xff] %vm1909, %v1856
        %1932 = vst.msk [vmem:[#allocation4 + $0xb0] sm:$0xff] %vm1909, %v1858
        %1933 = vst.msk [vmem:[#allocation4 + $0xb8] sm:$0xff] %vm1909, %v1860
        %1934 = vst.msk [vmem:[#allocation4 + $0xc0] sm:$0xff] %vm1909, %v1862
        %1935 = vst.msk [vmem:[#allocation4 + $0xc8] sm:$0xff] %vm1909, %v1864
        %1936 = vst.msk [vmem:[#allocation4 + $0xd0] sm:$0xff] %vm1909, %v1866
        %1937 = vst.msk [vmem:[#allocation4 + $0xd8] sm:$0xff] %vm1909, %v1868
        %1938 = vst.msk [vmem:[#allocation4 + $0xe0] sm:$0xff] %vm1909, %v1870
        %1939 = vst.msk [vmem:[#allocation4 + $0xe8] sm:$0xff] %vm1909, %v1872
        %1940 = vst.msk [vmem:[#allocation4 + $0xf0] sm:$0xff] %vm1909, %v1874
        %1941 = vst.msk [vmem:[#allocation4 + $0xf8] sm:$0xff] %vm1909, %v1876
        %v1942 = vld [vmem:[#allocation4] sm:$0xff]
        %v1943 = vld [vmem:[#allocation4 + $0x8] sm:$0xff]
        %v1944 = vld [vmem:[#allocation4 + $0x10] sm:$0xff]
        %v1945 = vld [vmem:[#allocation4 + $0x18] sm:$0xff]
        %v1946 = vld [vmem:[#allocation4 + $0x20] sm:$0xff]
        %v1947 = vld [vmem:[#allocation4 + $0x28] sm:$0xff]
        %v1948 = vld [vmem:[#allocation4 + $0x30] sm:$0xff]
        %v1949 = vld [vmem:[#allocation4 + $0x38] sm:$0xff]
        %v1950 = vld [vmem:[#allocation4 + $0x40] sm:$0xff]
        %v1951 = vld [vmem:[#allocation4 + $0x48] sm:$0xff]
        %v1952 = vld [vmem:[#allocation4 + $0x50] sm:$0xff]
        %v1953 = vld [vmem:[#allocation4 + $0x58] sm:$0xff]
        %v1954 = vld [vmem:[#allocation4 + $0x60] sm:$0xff]
        %v1955 = vld [vmem:[#allocation4 + $0x68] sm:$0xff]
        %v1956 = vld [vmem:[#allocation4 + $0x70] sm:$0xff]
        %v1957 = vld [vmem:[#allocation4 + $0x78] sm:$0xff]
        %v1958 = vld [vmem:[#allocation4 + $0x80] sm:$0xff]
        %v1959 = vld [vmem:[#allocation4 + $0x88] sm:$0xff]
        %v1960 = vld [vmem:[#allocation4 + $0x90] sm:$0xff]
        %v1961 = vld [vmem:[#allocation4 + $0x98] sm:$0xff]
        %v1962 = vld [vmem:[#allocation4 + $0xa0] sm:$0xff]
        %v1963 = vld [vmem:[#allocation4 + $0xa8] sm:$0xff]
        %v1964 = vld [vmem:[#allocation4 + $0xb0] sm:$0xff]
        %v1965 = vld [vmem:[#allocation4 + $0xb8] sm:$0xff]
        %v1966 = vld [vmem:[#allocation4 + $0xc0] sm:$0xff]
        %v1967 = vld [vmem:[#allocation4 + $0xc8] sm:$0xff]
        %v1968 = vld [vmem:[#allocation4 + $0xd0] sm:$0xff]
        %v1969 = vld [vmem:[#allocation4 + $0xd8] sm:$0xff]
        %v1970 = vld [vmem:[#allocation4 + $0xe0] sm:$0xff]
        %v1971 = vld [vmem:[#allocation4 + $0xe8] sm:$0xff]
        %v1972 = vld [vmem:[#allocation4 + $0xf0] sm:$0xff]
        %v1973 = vld [vmem:[#allocation4 + $0xf8] sm:$0xff]
        %v1974 = vpack.c.bf16 %v1943, %v1942
        %v1975 = vpack.c.bf16 %v1945, %v1944
        %v1976 = vpack.c.bf16 %v1947, %v1946
        %v1977 = vpack.c.bf16 %v1949, %v1948
        %v1978 = vpack.c.bf16 %v1951, %v1950
        %v1979 = vpack.c.bf16 %v1953, %v1952
        %v1980 = vpack.c.bf16 %v1955, %v1954
        %v1981 = vpack.c.bf16 %v1957, %v1956
        %v1982 = vpack.c.bf16 %v1959, %v1958
        %v1983 = vpack.c.bf16 %v1961, %v1960
        %v1984 = vpack.c.bf16 %v1963, %v1962
        %v1985 = vpack.c.bf16 %v1965, %v1964
        %v1986 = vpack.c.bf16 %v1967, %v1966
        %v1987 = vpack.c.bf16 %v1969, %v1968
        %v1988 = vpack.c.bf16 %v1971, %v1970
        %v1989 = vpack.c.bf16 %v1973, %v1972
        %v1990 = vld [vmem:[%s1] sm:$0xf]
        %v1991 = vld [vmem:[%s1 + $0x4] sm:$0xf]
        %v1992 = vld [vmem:[%s1 + $0x8] sm:$0xf]
        %v1993 = vld [vmem:[%s1 + $0xc] sm:$0xf]
        %v1994 = vld [vmem:[%s1 + $0x10] sm:$0xf]
        %v1995 = vld [vmem:[%s1 + $0x14] sm:$0xf]
        %v1996 = vld [vmem:[%s1 + $0x18] sm:$0xf]
        %v1997 = vld [vmem:[%s1 + $0x1c] sm:$0xf]
        %v1998 = vld [vmem:[%s1 + $0x20] sm:$0xf]
        %v1999 = vld [vmem:[%s1 + $0x24] sm:$0xf]
        %v2000 = vld [vmem:[%s1 + $0x28] sm:$0xf]
        %v2001 = vld [vmem:[%s1 + $0x2c] sm:$0xf]
        %v2002 = vld [vmem:[%s1 + $0x30] sm:$0xf]
        %v2003 = vld [vmem:[%s1 + $0x34] sm:$0xf]
        %v2004 = vld [vmem:[%s1 + $0x38] sm:$0xf]
        %v2005 = vld [vmem:[%s1 + $0x3c] sm:$0xf]
        %v2022 = vunpack.c.l.b16 %v1990
        %v2023 = vunpack.c.l.b16 %v1991
        %v2024 = vunpack.c.l.b16 %v1992
        %v2025 = vunpack.c.l.b16 %v1993
        %v2026 = vunpack.c.l.b16 %v1994
        %v2027 = vunpack.c.l.b16 %v1995
        %v2028 = vunpack.c.l.b16 %v1996
        %v2029 = vunpack.c.l.b16 %v1997
        %v2030 = vunpack.c.l.b16 %v1998
        %v2031 = vunpack.c.l.b16 %v1999
        %v2032 = vunpack.c.l.b16 %v2000
        %v2033 = vunpack.c.l.b16 %v2001
        %v2034 = vunpack.c.l.b16 %v2002
        %v2035 = vunpack.c.l.b16 %v2003
        %v2036 = vunpack.c.l.b16 %v2004
        %v2037 = vunpack.c.l.b16 %v2005
        %v2038 = vpack.c.b16 %v2023, %v2022
        %v2039 = vpack.c.b16 %v2025, %v2024
        %v2040 = vpack.c.b16 %v2027, %v2026
        %v2041 = vpack.c.b16 %v2029, %v2028
        %v2042 = vpack.c.b16 %v2031, %v2030
        %v2043 = vpack.c.b16 %v2033, %v2032
        %v2044 = vpack.c.b16 %v2035, %v2034
        %v2045 = vpack.c.b16 %v2037, %v2036
        %2054 = vmatprep.subr.bf16.mxu0 0
        %2055 = vmatpush1.bf16.msra.mxu0 %v2038
        %2056 = vmatprep.subr.bf16.mxu0 0
        %2057 = vmatpush1.bf16.msra.mxu0 %v2039
        %2058 = vmatprep.subr.bf16.mxu0 0
        %2059 = vmatpush1.bf16.msra.mxu0 %v2040
        %2060 = vmatprep.subr.bf16.mxu0 0
        %2061 = vmatpush1.bf16.msra.mxu0 %v2041
        %2062 = vmatprep.subr.bf16.mxu0 0
        %2063 = vmatpush1.bf16.msra.mxu0 %v2042
        %2064 = vmatprep.subr.bf16.mxu0 0
        %2065 = vmatpush1.bf16.msra.mxu0 %v2043
        %2066 = vmatprep.subr.bf16.mxu0 0
        %2067 = vmatpush1.bf16.msra.mxu0 %v2044
        %2068 = vmatprep.subr.bf16.mxu0 0
        %2069 = vmatpush1.bf16.msra.mxu0 %v2045
        %2070 = vmatprep.subr.bf16.mxu0 0
        %2071 = vmatpush1.bf16.msra.mxu0 0
        %2072 = vmatprep.subr.bf16.mxu0 0
        %2073 = vmatpush1.bf16.msra.mxu0 0
        %2074 = vmatprep.subr.bf16.mxu0 0
        %2075 = vmatpush1.bf16.msra.mxu0 0
        %2076 = vmatprep.subr.bf16.mxu0 0
        %2077 = vmatpush1.bf16.msra.mxu0 0
        %2078 = vmatprep.subr.bf16.mxu0 0
        %2079 = vmatpush1.bf16.msra.mxu0 0
        %2080 = vmatprep.subr.bf16.mxu0 0
        %2081 = vmatpush1.bf16.msra.mxu0 0
        %2082 = vmatprep.subr.bf16.mxu0 0
        %2083 = vmatpush1.bf16.msra.mxu0 0
        %2084 = vmatprep.subr.bf16.mxu0 0
        %2085 = vmatpush1.bf16.msra.mxu0 0
        %2086 = vmatprep.mubr.bf16.mxu0 0
        %2087 = vmatmul.mubr.bf16.gmra.mrb[0].mxu0 %v1974
        %v2088 = vpop.f32.mrb[0].mxu0
        %v2089 = vadd.f32 0.0, %v2088
        %v2090 = vpop.f32.mrb[0].mxu0
        %v2091 = vpop.f32.mrb[0].mxu0
        %v2092 = vadd.f32 0.0, %v2091
        %v2093 = vpop.f32.mrb[0].mxu0
        %2094 = vmatprep.mubr.bf16.mxu0 0
        %2095 = vmatmul.mubr.bf16.gmra.mrb[0].mxu0 %v1975
        %v2096 = vpop.f32.mrb[0].mxu0
        %v2097 = vadd.f32 0.0, %v2096
        %v2098 = vpop.f32.mrb[0].mxu0
        %v2099 = vpop.f32.mrb[0].mxu0
        %v2100 = vadd.f32 0.0, %v2099
        %v2101 = vpop.f32.mrb[0].mxu0
        %2102 = vmatprep.mubr.bf16.mxu0 0
        %2103 = vmatmul.mubr.bf16.gmra.mrb[0].mxu0 %v1976
        %v2104 = vpop.f32.mrb[0].mxu0
        %v2105 = vadd.f32 0.0, %v2104
        %v2106 = vpop.f32.mrb[0].mxu0
        %v2107 = vpop.f32.mrb[0].mxu0
        %v2108 = vadd.f32 0.0, %v2107
        %v2109 = vpop.f32.mrb[0].mxu0
        %2110 = vmatprep.mubr.bf16.mxu0 0
        %2111 = vmatmul.mubr.bf16.gmra.mrb[0].mxu0 %v1977
        %v2112 = vpop.f32.mrb[0].mxu0
        %v2113 = vadd.f32 0.0, %v2112
        %v2114 = vpop.f32.mrb[0].mxu0
        %v2115 = vpop.f32.mrb[0].mxu0
        %v2116 = vadd.f32 0.0, %v2115
        %v2117 = vpop.f32.mrb[0].mxu0
        %2118 = vmatprep.mubr.bf16.mxu0 0
        %2119 = vmatmul.mubr.bf16.gmra.mrb[0].mxu0 %v1978
        %v2120 = vpop.f32.mrb[0].mxu0
        %v2121 = vadd.f32 0.0, %v2120
        %v2122 = vpop.f32.mrb[0].mxu0
        %v2123 = vpop.f32.mrb[0].mxu0
        %v2124 = vadd.f32 0.0, %v2123
        %v2125 = vpop.f32.mrb[0].mxu0
        %2126 = vmatprep.mubr.bf16.mxu0 0
        %2127 = vmatmul.mubr.bf16.gmra.mrb[0].mxu0 %v1979
        %v2128 = vpop.f32.mrb[0].mxu0
        %v2129 = vadd.f32 0.0, %v2128
        %v2130 = vpop.f32.mrb[0].mxu0
        %v2131 = vpop.f32.mrb[0].mxu0
        %v2132 = vadd.f32 0.0, %v2131
        %v2133 = vpop.f32.mrb[0].mxu0
        %2134 = vmatprep.mubr.bf16.mxu0 0
        %2135 = vmatmul.mubr.bf16.gmra.mrb[0].mxu0 %v1980
        %v2136 = vpop.f32.mrb[0].mxu0
        %v2137 = vadd.f32 0.0, %v2136
        %v2138 = vpop.f32.mrb[0].mxu0
        %v2139 = vpop.f32.mrb[0].mxu0
        %v2140 = vadd.f32 0.0, %v2139
        %v2141 = vpop.f32.mrb[0].mxu0
        %2142 = vmatprep.mubr.bf16.mxu0 0
        %2143 = vmatmul.mubr.bf16.gmra.mrb[0].mxu0 %v1981
        %v2144 = vpop.f32.mrb[0].mxu0
        %v2145 = vadd.f32 0.0, %v2144
        %v2146 = vpop.f32.mrb[0].mxu0
        %v2147 = vpop.f32.mrb[0].mxu0
        %v2148 = vadd.f32 0.0, %v2147
        %v2149 = vpop.f32.mrb[0].mxu0
        %2150 = vmatprep.mubr.bf16.mxu0 0
        %2151 = vmatmul.mubr.bf16.gmra.mrb[0].mxu0 %v1982
        %v2152 = vpop.f32.mrb[0].mxu0
        %v2153 = vadd.f32 0.0, %v2152
        %v2154 = vpop.f32.mrb[0].mxu0
        %v2155 = vpop.f32.mrb[0].mxu0
        %v2156 = vadd.f32 0.0, %v2155
        %v2157 = vpop.f32.mrb[0].mxu0
        %2158 = vmatprep.mubr.bf16.mxu0 0
        %2159 = vmatmul.mubr.bf16.gmra.mrb[0].mxu0 %v1983
        %v2160 = vpop.f32.mrb[0].mxu0
        %v2161 = vadd.f32 0.0, %v2160
        %v2162 = vpop.f32.mrb[0].mxu0
        %v2163 = vpop.f32.mrb[0].mxu0
        %v2164 = vadd.f32 0.0, %v2163
        %v2165 = vpop.f32.mrb[0].mxu0
        %2166 = vmatprep.mubr.bf16.mxu0 0
        %2167 = vmatmul.mubr.bf16.gmra.mrb[0].mxu0 %v1984
        %v2168 = vpop.f32.mrb[0].mxu0
        %v2169 = vadd.f32 0.0, %v2168
        %v2170 = vpop.f32.mrb[0].mxu0
        %v2171 = vpop.f32.mrb[0].mxu0
        %v2172 = vadd.f32 0.0, %v2171
        %v2173 = vpop.f32.mrb[0].mxu0
        %2174 = vmatprep.mubr.bf16.mxu0 0
        %2175 = vmatmul.mubr.bf16.gmra.mrb[0].mxu0 %v1985
        %v2176 = vpop.f32.mrb[0].mxu0
        %v2177 = vadd.f32 0.0, %v2176
        %v2178 = vpop.f32.mrb[0].mxu0
        %v2179 = vpop.f32.mrb[0].mxu0
        %v2180 = vadd.f32 0.0, %v2179
        %v2181 = vpop.f32.mrb[0].mxu0
        %2182 = vmatprep.mubr.bf16.mxu0 0
        %2183 = vmatmul.mubr.bf16.gmra.mrb[0].mxu0 %v1986
        %v2184 = vpop.f32.mrb[0].mxu0
        %v2185 = vadd.f32 0.0, %v2184
        %v2186 = vpop.f32.mrb[0].mxu0
        %v2187 = vpop.f32.mrb[0].mxu0
        %v2188 = vadd.f32 0.0, %v2187
        %v2189 = vpop.f32.mrb[0].mxu0
        %2190 = vmatprep.mubr.bf16.mxu0 0
        %2191 = vmatmul.mubr.bf16.gmra.mrb[0].mxu0 %v1987
        %v2192 = vpop.f32.mrb[0].mxu0
        %v2193 = vadd.f32 0.0, %v2192
        %v2194 = vpop.f32.mrb[0].mxu0
        %v2195 = vpop.f32.mrb[0].mxu0
        %v2196 = vadd.f32 0.0, %v2195
        %v2197 = vpop.f32.mrb[0].mxu0
        %2198 = vmatprep.mubr.bf16.mxu0 0
        %2199 = vmatmul.mubr.bf16.gmra.mrb[0].mxu0 %v1988
        %v2200 = vpop.f32.mrb[0].mxu0
        %v2201 = vadd.f32 0.0, %v2200
        %v2202 = vpop.f32.mrb[0].mxu0
        %v2203 = vpop.f32.mrb[0].mxu0
        %v2204 = vadd.f32 0.0, %v2203
        %v2205 = vpop.f32.mrb[0].mxu0
        %2206 = vmatprep.mubr.bf16.mxu0 0
        %2207 = vmatmul.mubr.bf16.gmra.mrb[0].mxu0 %v1989
        %v2208 = vpop.f32.mrb[0].mxu0
        %v2209 = vadd.f32 0.0, %v2208
        %v2210 = vpop.f32.mrb[0].mxu0
        %v2211 = vpop.f32.mrb[0].mxu0
        %v2212 = vadd.f32 0.0, %v2211
        %v2213 = vpop.f32.mrb[0].mxu0
        %2214 = vdwg.mxu0
        %v2215 = vmax.f32 %v2089, 0.0
        %v2216 = vmax.f32 %v2092, 0.0
        %v2217 = vmax.f32 %v2097, 0.0
        %v2218 = vmax.f32 %v2100, 0.0
        %v2219 = vmax.f32 %v2105, 0.0
        %v2220 = vmax.f32 %v2108, 0.0
        %v2221 = vmax.f32 %v2113, 0.0
        %v2222 = vmax.f32 %v2116, 0.0
        %v2223 = vmax.f32 %v2121, 0.0
        %v2224 = vmax.f32 %v2124, 0.0
        %v2225 = vmax.f32 %v2129, 0.0
        %v2226 = vmax.f32 %v2132, 0.0
        %v2227 = vmax.f32 %v2137, 0.0
        %v2228 = vmax.f32 %v2140, 0.0
        %v2229 = vmax.f32 %v2145, 0.0
        %v2230 = vmax.f32 %v2148, 0.0
        %v2231 = vmax.f32 %v2153, 0.0
        %v2232 = vmax.f32 %v2156, 0.0
        %v2233 = vmax.f32 %v2161, 0.0
        %v2234 = vmax.f32 %v2164, 0.0
        %v2235 = vmax.f32 %v2169, 0.0
        %v2236 = vmax.f32 %v2172, 0.0
        %v2237 = vmax.f32 %v2177, 0.0
        %v2238 = vmax.f32 %v2180, 0.0
        %v2239 = vmax.f32 %v2185, 0.0
        %v2240 = vmax.f32 %v2188, 0.0
        %v2241 = vmax.f32 %v2193, 0.0
        %v2242 = vmax.f32 %v2196, 0.0
        %v2243 = vmax.f32 %v2201, 0.0
        %v2244 = vmax.f32 %v2204, 0.0
        %v2245 = vmax.f32 %v2209, 0.0
        %v2246 = vmax.f32 %v2212, 0.0
        %2247 = vst.msk [vmem:[#allocation3] sm:$0xff] %vm211, 0.0
        %2248 = vst.msk [vmem:[#allocation3 + $0x8] sm:$0xff] %vm211, 0.0
        %2249 = vst.msk [vmem:[#allocation3 + $0x10] sm:$0x3] %vm214, 0.0
        %2250 = vst.msk [vmem:[#allocation3 + $0x18] sm:$0xff] %vm211, 0.0
        %2251 = vst.msk [vmem:[#allocation3 + $0x20] sm:$0xff] %vm211, 0.0
        %2252 = vst.msk [vmem:[#allocation3 + $0x28] sm:$0x3] %vm214, 0.0
        %2253 = vst.msk [vmem:[#allocation3 + $0x30] sm:$0xff] %vm211, 0.0
        %2254 = vst.msk [vmem:[#allocation3 + $0x38] sm:$0xff] %vm211, 0.0
        %2255 = vst.msk [vmem:[#allocation3 + $0x40] sm:$0x3] %vm214, 0.0
        %2256 = vst.msk [vmem:[#allocation3 + $0x48] sm:$0xff] %vm211, 0.0
        %2257 = vst.msk [vmem:[#allocation3 + $0x50] sm:$0xff] %vm211, 0.0
        %2258 = vst.msk [vmem:[#allocation3 + $0x58] sm:$0x3] %vm214, 0.0
        %2259 = vst.msk [vmem:[#allocation3 + $0x60] sm:$0xff] %vm211, 0.0
        %2260 = vst.msk [vmem:[#allocation3 + $0x68] sm:$0xff] %vm211, 0.0
        %2261 = vst.msk [vmem:[#allocation3 + $0x70] sm:$0x3] %vm214, 0.0
        %2262 = vst.msk [vmem:[#allocation3 + $0x78] sm:$0xff] %vm211, 0.0
        %2263 = vst.msk [vmem:[#allocation3 + $0x80] sm:$0xff] %vm211, 0.0
        %2264 = vst.msk [vmem:[#allocation3 + $0x88] sm:$0x3] %vm214, 0.0
        %2265 = vst.msk [vmem:[#allocation3 + $0x90] sm:$0xff] %vm211, 0.0
        %2266 = vst.msk [vmem:[#allocation3 + $0x98] sm:$0xff] %vm211, 0.0
        %2267 = vst.msk [vmem:[#allocation3 + $0xa0] sm:$0x3] %vm214, 0.0
        %2268 = vst.msk [vmem:[#allocation3 + $0xa8] sm:$0xff] %vm211, 0.0
        %2269 = vst.msk [vmem:[#allocation3 + $0xb0] sm:$0xff] %vm211, 0.0
        %2270 = vst.msk [vmem:[#allocation3 + $0xb8] sm:$0x3] %vm214, 0.0
        %2271 = vst.msk [vmem:[#allocation3 + $0xc0] sm:$0xff] %vm211, 0.0
        %2272 = vst.msk [vmem:[#allocation3 + $0xc8] sm:$0xff] %vm211, 0.0
        %2273 = vst.msk [vmem:[#allocation3 + $0xd0] sm:$0x3] %vm214, 0.0
        %2274 = vst.msk [vmem:[#allocation3 + $0xd8] sm:$0xff] %vm211, 0.0
        %2275 = vst.msk [vmem:[#allocation3 + $0xe0] sm:$0xff] %vm211, 0.0
        %2276 = vst.msk [vmem:[#allocation3 + $0xe8] sm:$0x3] %vm214, 0.0
        %2277 = vst.msk [vmem:[#allocation3 + $0xf0] sm:$0xff] %vm211, 0.0
        %2278 = vst.msk [vmem:[#allocation3 + $0xf8] sm:$0xff] %vm211, 0.0
        %2279 = vst.msk [vmem:[#allocation3 + $0x100] sm:$0x3] %vm214, 0.0
        %2280 = vst.msk [vmem:[#allocation3 + $0x108] sm:$0xff] %vm211, 0.0
        %2281 = vst.msk [vmem:[#allocation3 + $0x110] sm:$0xff] %vm211, 0.0
        %2282 = vst.msk [vmem:[#allocation3 + $0x118] sm:$0x3] %vm214, 0.0
        %2283 = vst.msk [vmem:[#allocation3 + $0x120] sm:$0xff] %vm211, 0.0
        %2284 = vst.msk [vmem:[#allocation3 + $0x128] sm:$0xff] %vm211, 0.0
        %2285 = vst.msk [vmem:[#allocation3 + $0x130] sm:$0x3] %vm214, 0.0
        %2286 = vst.msk [vmem:[#allocation3 + $0x138] sm:$0xff] %vm211, 0.0
        %2287 = vst.msk [vmem:[#allocation3 + $0x140] sm:$0xff] %vm211, 0.0
        %2288 = vst.msk [vmem:[#allocation3 + $0x148] sm:$0x3] %vm214, 0.0
        %2289 = vst.msk [vmem:[#allocation3 + $0x150] sm:$0xff] %vm211, 0.0
        %2290 = vst.msk [vmem:[#allocation3 + $0x158] sm:$0xff] %vm211, 0.0
        %2291 = vst.msk [vmem:[#allocation3 + $0x160] sm:$0x3] %vm214, 0.0
        %2292 = vst.msk [vmem:[#allocation3 + $0x168] sm:$0xff] %vm211, 0.0
        %2293 = vst.msk [vmem:[#allocation3 + $0x170] sm:$0xff] %vm211, 0.0
        %2294 = vst.msk [vmem:[#allocation3 + $0x178] sm:$0x3] %vm214, 0.0
        %2295 = vst.msk [vmem:[#allocation3 + $0x180] sm:$0xff] %vm211, 0.0
        %2296 = vst.msk [vmem:[#allocation3 + $0x188] sm:$0xff] %vm211, 0.0
        %2297 = vst.msk [vmem:[#allocation3 + $0x190] sm:$0x3] %vm214, 0.0
        %2298 = vst.msk [vmem:[#allocation3 + $0x198] sm:$0xff] %vm211, 0.0
        %2299 = vst.msk [vmem:[#allocation3 + $0x1a0] sm:$0xff] %vm211, 0.0
        %2300 = vst.msk [vmem:[#allocation3 + $0x1a8] sm:$0x3] %vm214, 0.0
        %s2301 = scalar_lea.vmem [#allocation3], 24
        %vm2302 = vcmask 31744
        %2303 = vst.msk [vmem:[%s2301 + $0x1] sm:$0xff] %vm2302, %v2215
        %2304 = vst.msk [vmem:[%s2301 + $0x9] sm:$0xff] %vm2302, %v2216
        %2305 = vst.msk [vmem:[%s2301 + $0x19] sm:$0xff] %vm2302, %v2217
        %2306 = vst.msk [vmem:[%s2301 + $0x21] sm:$0xff] %vm2302, %v2218
        %2307 = vst.msk [vmem:[%s2301 + $0x31] sm:$0xff] %vm2302, %v2219
        %2308 = vst.msk [vmem:[%s2301 + $0x39] sm:$0xff] %vm2302, %v2220
        %2309 = vst.msk [vmem:[%s2301 + $0x49] sm:$0xff] %vm2302, %v2221
        %2310 = vst.msk [vmem:[%s2301 + $0x51] sm:$0xff] %vm2302, %v2222
        %2311 = vst.msk [vmem:[%s2301 + $0x61] sm:$0xff] %vm2302, %v2223
        %2312 = vst.msk [vmem:[%s2301 + $0x69] sm:$0xff] %vm2302, %v2224
        %2313 = vst.msk [vmem:[%s2301 + $0x79] sm:$0xff] %vm2302, %v2225
        %2314 = vst.msk [vmem:[%s2301 + $0x81] sm:$0xff] %vm2302, %v2226
        %2315 = vst.msk [vmem:[%s2301 + $0x91] sm:$0xff] %vm2302, %v2227
        %2316 = vst.msk [vmem:[%s2301 + $0x99] sm:$0xff] %vm2302, %v2228
        %2317 = vst.msk [vmem:[%s2301 + $0xa9] sm:$0xff] %vm2302, %v2229
        %2318 = vst.msk [vmem:[%s2301 + $0xb1] sm:$0xff] %vm2302, %v2230
        %2319 = vst.msk [vmem:[%s2301 + $0xc1] sm:$0xff] %vm2302, %v2231
        %2320 = vst.msk [vmem:[%s2301 + $0xc9] sm:$0xff] %vm2302, %v2232
        %2321 = vst.msk [vmem:[%s2301 + $0xd9] sm:$0xff] %vm2302, %v2233
        %2322 = vst.msk [vmem:[%s2301 + $0xe1] sm:$0xff] %vm2302, %v2234
        %2323 = vst.msk [vmem:[%s2301 + $0xf1] sm:$0xff] %vm2302, %v2235
        %2324 = vst.msk [vmem:[%s2301 + $0xf9] sm:$0xff] %vm2302, %v2236
        %2325 = vst.msk [vmem:[%s2301 + $0x109] sm:$0xff] %vm2302, %v2237
        %2326 = vst.msk [vmem:[%s2301 + $0x111] sm:$0xff] %vm2302, %v2238
        %2327 = vst.msk [vmem:[%s2301 + $0x121] sm:$0xff] %vm2302, %v2239
        %2328 = vst.msk [vmem:[%s2301 + $0x129] sm:$0xff] %vm2302, %v2240
        %2329 = vst.msk [vmem:[%s2301 + $0x139] sm:$0xff] %vm2302, %v2241
        %2330 = vst.msk [vmem:[%s2301 + $0x141] sm:$0xff] %vm2302, %v2242
        %2331 = vst.msk [vmem:[%s2301 + $0x151] sm:$0xff] %vm2302, %v2243
        %2332 = vst.msk [vmem:[%s2301 + $0x159] sm:$0xff] %vm2302, %v2244
        %2333 = vst.msk [vmem:[%s2301 + $0x169] sm:$0xff] %vm2302, %v2245
        %2334 = vst.msk [vmem:[%s2301 + $0x171] sm:$0xff] %vm2302, %v2246
        %v2335 = vld [vmem:[#allocation3] sm:$0xff]
        %v2336 = vld [vmem:[#allocation3 + $0x8] sm:$0xff]
        %v2337 = vld [vmem:[#allocation3 + $0x18] sm:$0xff]
        %v2338 = vld [vmem:[#allocation3 + $0x20] sm:$0xff]
        %v2339 = vld [vmem:[#allocation3 + $0x30] sm:$0xff]
        %v2340 = vld [vmem:[#allocation3 + $0x38] sm:$0xff]
        %v2341 = vld [vmem:[#allocation3 + $0x48] sm:$0xff]
        %v2342 = vld [vmem:[#allocation3 + $0x50] sm:$0xff]
        %v2343 = vld [vmem:[#allocation3 + $0x60] sm:$0xff]
        %v2344 = vld [vmem:[#allocation3 + $0x68] sm:$0xff]
        %v2345 = vld [vmem:[#allocation3 + $0x78] sm:$0xff]
        %v2346 = vld [vmem:[#allocation3 + $0x80] sm:$0xff]
        %v2347 = vld [vmem:[#allocation3 + $0x90] sm:$0xff]
        %v2348 = vld [vmem:[#allocation3 + $0x98] sm:$0xff]
        %v2349 = vld [vmem:[#allocation3 + $0xa8] sm:$0xff]
        %v2350 = vld [vmem:[#allocation3 + $0xb0] sm:$0xff]
        %v2351 = vld [vmem:[#allocation3 + $0xc0] sm:$0xff]
        %v2352 = vld [vmem:[#allocation3 + $0xc8] sm:$0xff]
        %v2353 = vld [vmem:[#allocation3 + $0xd8] sm:$0xff]
        %v2354 = vld [vmem:[#allocation3 + $0xe0] sm:$0xff]
        %v2355 = vld [vmem:[#allocation3 + $0xf0] sm:$0xff]
        %v2356 = vld [vmem:[#allocation3 + $0xf8] sm:$0xff]
        %v2357 = vld [vmem:[#allocation3 + $0x108] sm:$0xff]
        %v2358 = vld [vmem:[#allocation3 + $0x110] sm:$0xff]
        %v2359 = vld [vmem:[#allocation3 + $0x120] sm:$0xff]
        %v2360 = vld [vmem:[#allocation3 + $0x128] sm:$0xff]
        %v2361 = vld [vmem:[#allocation3 + $0x138] sm:$0xff]
        %v2362 = vld [vmem:[#allocation3 + $0x140] sm:$0xff]
        %v2363 = vld [vmem:[#allocation3 + $0x150] sm:$0xff]
        %v2364 = vld [vmem:[#allocation3 + $0x158] sm:$0xff]
        %v2365 = vld [vmem:[#allocation3 + $0x168] sm:$0xff]
        %v2366 = vld [vmem:[#allocation3 + $0x170] sm:$0xff]
        %2367 = vst.msk [vmem:[#allocation4] sm:$0xff] %vm2302, %v2335
        %2368 = vst.msk [vmem:[#allocation4 + $0x8] sm:$0xff] %vm2302, %v2336
        %2369 = vst.msk [vmem:[#allocation4 + $0x10] sm:$0xff] %vm2302, %v2337
        %2370 = vst.msk [vmem:[#allocation4 + $0x18] sm:$0xff] %vm2302, %v2338
        %2371 = vst.msk [vmem:[#allocation4 + $0x20] sm:$0xff] %vm2302, %v2339
        %2372 = vst.msk [vmem:[#allocation4 + $0x28] sm:$0xff] %vm2302, %v2340
        %2373 = vst.msk [vmem:[#allocation4 + $0x30] sm:$0xff] %vm2302, %v2341
        %2374 = vst.msk [vmem:[#allocation4 + $0x38] sm:$0xff] %vm2302, %v2342
        %2375 = vst.msk [vmem:[#allocation4 + $0x40] sm:$0xff] %vm2302, %v2343
        %2376 = vst.msk [vmem:[#allocation4 + $0x48] sm:$0xff] %vm2302, %v2344
        %2377 = vst.msk [vmem:[#allocation4 + $0x50] sm:$0xff] %vm2302, %v2345
        %2378 = vst.msk [vmem:[#allocation4 + $0x58] sm:$0xff] %vm2302, %v2346
        %2379 = vst.msk [vmem:[#allocation4 + $0x60] sm:$0xff] %vm2302, %v2347
        %2380 = vst.msk [vmem:[#allocation4 + $0x68] sm:$0xff] %vm2302, %v2348
        %2381 = vst.msk [vmem:[#allocation4 + $0x70] sm:$0xff] %vm2302, %v2349
        %2382 = vst.msk [vmem:[#allocation4 + $0x78] sm:$0xff] %vm2302, %v2350
        %2383 = vst.msk [vmem:[#allocation4 + $0x80] sm:$0xff] %vm2302, %v2351
        %2384 = vst.msk [vmem:[#allocation4 + $0x88] sm:$0xff] %vm2302, %v2352
        %2385 = vst.msk [vmem:[#allocation4 + $0x90] sm:$0xff] %vm2302, %v2353
        %2386 = vst.msk [vmem:[#allocation4 + $0x98] sm:$0xff] %vm2302, %v2354
        %2387 = vst.msk [vmem:[#allocation4 + $0xa0] sm:$0xff] %vm2302, %v2355
        %2388 = vst.msk [vmem:[#allocation4 + $0xa8] sm:$0xff] %vm2302, %v2356
        %2389 = vst.msk [vmem:[#allocation4 + $0xb0] sm:$0xff] %vm2302, %v2357
        %2390 = vst.msk [vmem:[#allocation4 + $0xb8] sm:$0xff] %vm2302, %v2358
        %2391 = vst.msk [vmem:[#allocation4 + $0xc0] sm:$0xff] %vm2302, %v2359
        %2392 = vst.msk [vmem:[#allocation4 + $0xc8] sm:$0xff] %vm2302, %v2360
        %2393 = vst.msk [vmem:[#allocation4 + $0xd0] sm:$0xff] %vm2302, %v2361
        %2394 = vst.msk [vmem:[#allocation4 + $0xd8] sm:$0xff] %vm2302, %v2362
        %2395 = vst.msk [vmem:[#allocation4 + $0xe0] sm:$0xff] %vm2302, %v2363
        %2396 = vst.msk [vmem:[#allocation4 + $0xe8] sm:$0xff] %vm2302, %v2364
        %2397 = vst.msk [vmem:[#allocation4 + $0xf0] sm:$0xff] %vm2302, %v2365
        %2398 = vst.msk [vmem:[#allocation4 + $0xf8] sm:$0xff] %vm2302, %v2366
        %v2399 = vld [vmem:[#allocation3 + $0x1] sm:$0xff]
        %v2400 = vld [vmem:[#allocation3 + $0x9] sm:$0xff]
        %v2401 = vld [vmem:[#allocation3 + $0x19] sm:$0xff]
        %v2402 = vld [vmem:[#allocation3 + $0x21] sm:$0xff]
        %v2403 = vld [vmem:[#allocation3 + $0x31] sm:$0xff]
        %v2404 = vld [vmem:[#allocation3 + $0x39] sm:$0xff]
        %v2405 = vld [vmem:[#allocation3 + $0x49] sm:$0xff]
        %v2406 = vld [vmem:[#allocation3 + $0x51] sm:$0xff]
        %v2407 = vld [vmem:[#allocation3 + $0x61] sm:$0xff]
        %v2408 = vld [vmem:[#allocation3 + $0x69] sm:$0xff]
        %v2409 = vld [vmem:[#allocation3 + $0x79] sm:$0xff]
        %v2410 = vld [vmem:[#allocation3 + $0x81] sm:$0xff]
        %v2411 = vld [vmem:[#allocation3 + $0x91] sm:$0xff]
        %v2412 = vld [vmem:[#allocation3 + $0x99] sm:$0xff]
        %v2413 = vld [vmem:[#allocation3 + $0xa9] sm:$0xff]
        %v2414 = vld [vmem:[#allocation3 + $0xb1] sm:$0xff]
        %v2415 = vld [vmem:[#allocation3 + $0xc1] sm:$0xff]
        %v2416 = vld [vmem:[#allocation3 + $0xc9] sm:$0xff]
        %v2417 = vld [vmem:[#allocation3 + $0xd9] sm:$0xff]
        %v2418 = vld [vmem:[#allocation3 + $0xe1] sm:$0xff]
        %v2419 = vld [vmem:[#allocation3 + $0xf1] sm:$0xff]
        %v2420 = vld [vmem:[#allocation3 + $0xf9] sm:$0xff]
        %v2421 = vld [vmem:[#allocation3 + $0x109] sm:$0xff]
        %v2422 = vld [vmem:[#allocation3 + $0x111] sm:$0xff]
        %v2423 = vld [vmem:[#allocation3 + $0x121] sm:$0xff]
        %v2424 = vld [vmem:[#allocation3 + $0x129] sm:$0xff]
        %v2425 = vld [vmem:[#allocation3 + $0x139] sm:$0xff]
        %v2426 = vld [vmem:[#allocation3 + $0x141] sm:$0xff]
        %v2427 = vld [vmem:[#allocation3 + $0x151] sm:$0xff]
        %v2428 = vld [vmem:[#allocation3 + $0x159] sm:$0xff]
        %v2429 = vld [vmem:[#allocation3 + $0x169] sm:$0xff]
        %v2430 = vld [vmem:[#allocation3 + $0x171] sm:$0xff]
        %2463 = vrot.lane.b32.xlu0 %v2399, 4
        %v2464 = vpop.permute.xlu0 %2463
        %2465 = vrot.lane.b32.xlu0 %v2400, 4
        %v2466 = vpop.permute.xlu0 %2465
        %2467 = vrot.lane.b32.xlu0 %v2401, 4
        %v2468 = vpop.permute.xlu0 %2467
        %2469 = vrot.lane.b32.xlu0 %v2402, 4
        %v2470 = vpop.permute.xlu0 %2469
        %2471 = vrot.lane.b32.xlu0 %v2403, 4
        %v2472 = vpop.permute.xlu0 %2471
        %2473 = vrot.lane.b32.xlu0 %v2404, 4
        %v2474 = vpop.permute.xlu0 %2473
        %2475 = vrot.lane.b32.xlu0 %v2405, 4
        %v2476 = vpop.permute.xlu0 %2475
        %2477 = vrot.lane.b32.xlu0 %v2406, 4
        %v2478 = vpop.permute.xlu0 %2477
        %2479 = vrot.lane.b32.xlu0 %v2407, 4
        %v2480 = vpop.permute.xlu0 %2479
        %2481 = vrot.lane.b32.xlu0 %v2408, 4
        %v2482 = vpop.permute.xlu0 %2481
        %2483 = vrot.lane.b32.xlu0 %v2409, 4
        %v2484 = vpop.permute.xlu0 %2483
        %2485 = vrot.lane.b32.xlu0 %v2410, 4
        %v2486 = vpop.permute.xlu0 %2485
        %2487 = vrot.lane.b32.xlu0 %v2411, 4
        %v2488 = vpop.permute.xlu0 %2487
        %2489 = vrot.lane.b32.xlu0 %v2412, 4
        %v2490 = vpop.permute.xlu0 %2489
        %2491 = vrot.lane.b32.xlu0 %v2413, 4
        %v2492 = vpop.permute.xlu0 %2491
        %2493 = vrot.lane.b32.xlu0 %v2414, 4
        %v2494 = vpop.permute.xlu0 %2493
        %2495 = vrot.lane.b32.xlu0 %v2415, 4
        %v2496 = vpop.permute.xlu0 %2495
        %2497 = vrot.lane.b32.xlu0 %v2416, 4
        %v2498 = vpop.permute.xlu0 %2497
        %2499 = vrot.lane.b32.xlu0 %v2417, 4
        %v2500 = vpop.permute.xlu0 %2499
        %2501 = vrot.lane.b32.xlu0 %v2418, 4
        %v2502 = vpop.permute.xlu0 %2501
        %2503 = vrot.lane.b32.xlu0 %v2419, 4
        %v2504 = vpop.permute.xlu0 %2503
        %2505 = vrot.lane.b32.xlu0 %v2420, 4
        %v2506 = vpop.permute.xlu0 %2505
        %2507 = vrot.lane.b32.xlu0 %v2421, 4
        %v2508 = vpop.permute.xlu0 %2507
        %2509 = vrot.lane.b32.xlu0 %v2422, 4
        %v2510 = vpop.permute.xlu0 %2509
        %2511 = vrot.lane.b32.xlu0 %v2423, 4
        %v2512 = vpop.permute.xlu0 %2511
        %2513 = vrot.lane.b32.xlu0 %v2424, 4
        %v2514 = vpop.permute.xlu0 %2513
        %2515 = vrot.lane.b32.xlu0 %v2425, 4
        %v2516 = vpop.permute.xlu0 %2515
        %2517 = vrot.lane.b32.xlu0 %v2426, 4
        %v2518 = vpop.permute.xlu0 %2517
        %2519 = vrot.lane.b32.xlu0 %v2427, 4
        %v2520 = vpop.permute.xlu0 %2519
        %2521 = vrot.lane.b32.xlu0 %v2428, 4
        %v2522 = vpop.permute.xlu0 %2521
        %2523 = vrot.lane.b32.xlu0 %v2429, 4
        %v2524 = vpop.permute.xlu0 %2523
        %2525 = vrot.lane.b32.xlu0 %v2430, 4
        %v2526 = vpop.permute.xlu0 %2525
        %vm2559 = vcmask 64544
        %2560 = vst.msk [vmem:[#allocation4] sm:$0xff] %vm2559, %v2464
        %2561 = vst.msk [vmem:[#allocation4 + $0x8] sm:$0xff] %vm2559, %v2466
        %2562 = vst.msk [vmem:[#allocation4 + $0x10] sm:$0xff] %vm2559, %v2468
        %2563 = vst.msk [vmem:[#allocation4 + $0x18] sm:$0xff] %vm2559, %v2470
        %2564 = vst.msk [vmem:[#allocation4 + $0x20] sm:$0xff] %vm2559, %v2472
        %2565 = vst.msk [vmem:[#allocation4 + $0x28] sm:$0xff] %vm2559, %v2474
        %2566 = vst.msk [vmem:[#allocation4 + $0x30] sm:$0xff] %vm2559, %v2476
        %2567 = vst.msk [vmem:[#allocation4 + $0x38] sm:$0xff] %vm2559, %v2478
        %2568 = vst.msk [vmem:[#allocation4 + $0x40] sm:$0xff] %vm2559, %v2480
        %2569 = vst.msk [vmem:[#allocation4 + $0x48] sm:$0xff] %vm2559, %v2482
        %2570 = vst.msk [vmem:[#allocation4 + $0x50] sm:$0xff] %vm2559, %v2484
        %2571 = vst.msk [vmem:[#allocation4 + $0x58] sm:$0xff] %vm2559, %v2486
        %2572 = vst.msk [vmem:[#allocation4 + $0x60] sm:$0xff] %vm2559, %v2488
        %2573 = vst.msk [vmem:[#allocation4 + $0x68] sm:$0xff] %vm2559, %v2490
        %2574 = vst.msk [vmem:[#allocation4 + $0x70] sm:$0xff] %vm2559, %v2492
        %2575 = vst.msk [vmem:[#allocation4 + $0x78] sm:$0xff] %vm2559, %v2494
        %2576 = vst.msk [vmem:[#allocation4 + $0x80] sm:$0xff] %vm2559, %v2496
        %2577 = vst.msk [vmem:[#allocation4 + $0x88] sm:$0xff] %vm2559, %v2498
        %2578 = vst.msk [vmem:[#allocation4 + $0x90] sm:$0xff] %vm2559, %v2500
        %2579 = vst.msk [vmem:[#allocation4 + $0x98] sm:$0xff] %vm2559, %v2502
        %2580 = vst.msk [vmem:[#allocation4 + $0xa0] sm:$0xff] %vm2559, %v2504
        %2581 = vst.msk [vmem:[#allocation4 + $0xa8] sm:$0xff] %vm2559, %v2506
        %2582 = vst.msk [vmem:[#allocation4 + $0xb0] sm:$0xff] %vm2559, %v2508
        %2583 = vst.msk [vmem:[#allocation4 + $0xb8] sm:$0xff] %vm2559, %v2510
        %2584 = vst.msk [vmem:[#allocation4 + $0xc0] sm:$0xff] %vm2559, %v2512
        %2585 = vst.msk [vmem:[#allocation4 + $0xc8] sm:$0xff] %vm2559, %v2514
        %2586 = vst.msk [vmem:[#allocation4 + $0xd0] sm:$0xff] %vm2559, %v2516
        %2587 = vst.msk [vmem:[#allocation4 + $0xd8] sm:$0xff] %vm2559, %v2518
        %2588 = vst.msk [vmem:[#allocation4 + $0xe0] sm:$0xff] %vm2559, %v2520
        %2589 = vst.msk [vmem:[#allocation4 + $0xe8] sm:$0xff] %vm2559, %v2522
        %2590 = vst.msk [vmem:[#allocation4 + $0xf0] sm:$0xff] %vm2559, %v2524
        %2591 = vst.msk [vmem:[#allocation4 + $0xf8] sm:$0xff] %vm2559, %v2526
        %v2592 = vld [vmem:[#allocation3 + $0x2] sm:$0xff]
        %v2593 = vld [vmem:[#allocation3 + $0xa] sm:$0xff]
        %v2594 = vld [vmem:[#allocation3 + $0x1a] sm:$0xff]
        %v2595 = vld [vmem:[#allocation3 + $0x22] sm:$0xff]
        %v2596 = vld [vmem:[#allocation3 + $0x32] sm:$0xff]
        %v2597 = vld [vmem:[#allocation3 + $0x3a] sm:$0xff]
        %v2598 = vld [vmem:[#allocation3 + $0x4a] sm:$0xff]
        %v2599 = vld [vmem:[#allocation3 + $0x52] sm:$0xff]
        %v2600 = vld [vmem:[#allocation3 + $0x62] sm:$0xff]
        %v2601 = vld [vmem:[#allocation3 + $0x6a] sm:$0xff]
        %v2602 = vld [vmem:[#allocation3 + $0x7a] sm:$0xff]
        %v2603 = vld [vmem:[#allocation3 + $0x82] sm:$0xff]
        %v2604 = vld [vmem:[#allocation3 + $0x92] sm:$0xff]
        %v2605 = vld [vmem:[#allocation3 + $0x9a] sm:$0xff]
        %v2606 = vld [vmem:[#allocation3 + $0xaa] sm:$0xff]
        %v2607 = vld [vmem:[#allocation3 + $0xb2] sm:$0xff]
        %v2608 = vld [vmem:[#allocation3 + $0xc2] sm:$0xff]
        %v2609 = vld [vmem:[#allocation3 + $0xca] sm:$0xff]
        %v2610 = vld [vmem:[#allocation3 + $0xda] sm:$0xff]
        %v2611 = vld [vmem:[#allocation3 + $0xe2] sm:$0xff]
        %v2612 = vld [vmem:[#allocation3 + $0xf2] sm:$0xff]
        %v2613 = vld [vmem:[#allocation3 + $0xfa] sm:$0xff]
        %v2614 = vld [vmem:[#allocation3 + $0x10a] sm:$0xff]
        %v2615 = vld [vmem:[#allocation3 + $0x112] sm:$0xff]
        %v2616 = vld [vmem:[#allocation3 + $0x122] sm:$0xff]
        %v2617 = vld [vmem:[#allocation3 + $0x12a] sm:$0xff]
        %v2618 = vld [vmem:[#allocation3 + $0x13a] sm:$0xff]
        %v2619 = vld [vmem:[#allocation3 + $0x142] sm:$0xff]
        %v2620 = vld [vmem:[#allocation3 + $0x152] sm:$0xff]
        %v2621 = vld [vmem:[#allocation3 + $0x15a] sm:$0xff]
        %v2622 = vld [vmem:[#allocation3 + $0x16a] sm:$0xff]
        %v2623 = vld [vmem:[#allocation3 + $0x172] sm:$0xff]
        %2656 = vrot.lane.b32.xlu0 %v2592, 8
        %v2657 = vpop.permute.xlu0 %2656
        %2658 = vrot.lane.b32.xlu0 %v2593, 8
        %v2659 = vpop.permute.xlu0 %2658
        %2660 = vrot.lane.b32.xlu0 %v2594, 8
        %v2661 = vpop.permute.xlu0 %2660
        %2662 = vrot.lane.b32.xlu0 %v2595, 8
        %v2663 = vpop.permute.xlu0 %2662
        %2664 = vrot.lane.b32.xlu0 %v2596, 8
        %v2665 = vpop.permute.xlu0 %2664
        %2666 = vrot.lane.b32.xlu0 %v2597, 8
        %v2667 = vpop.permute.xlu0 %2666
        %2668 = vrot.lane.b32.xlu0 %v2598, 8
        %v2669 = vpop.permute.xlu0 %2668
        %2670 = vrot.lane.b32.xlu0 %v2599, 8
        %v2671 = vpop.permute.xlu0 %2670
        %2672 = vrot.lane.b32.xlu0 %v2600, 8
        %v2673 = vpop.permute.xlu0 %2672
        %2674 = vrot.lane.b32.xlu0 %v2601, 8
        %v2675 = vpop.permute.xlu0 %2674
        %2676 = vrot.lane.b32.xlu0 %v2602, 8
        %v2677 = vpop.permute.xlu0 %2676
        %2678 = vrot.lane.b32.xlu0 %v2603, 8
        %v2679 = vpop.permute.xlu0 %2678
        %2680 = vrot.lane.b32.xlu0 %v2604, 8
        %v2681 = vpop.permute.xlu0 %2680
        %2682 = vrot.lane.b32.xlu0 %v2605, 8
        %v2683 = vpop.permute.xlu0 %2682
        %2684 = vrot.lane.b32.xlu0 %v2606, 8
        %v2685 = vpop.permute.xlu0 %2684
        %2686 = vrot.lane.b32.xlu0 %v2607, 8
        %v2687 = vpop.permute.xlu0 %2686
        %2688 = vrot.lane.b32.xlu0 %v2608, 8
        %v2689 = vpop.permute.xlu0 %2688
        %2690 = vrot.lane.b32.xlu0 %v2609, 8
        %v2691 = vpop.permute.xlu0 %2690
        %2692 = vrot.lane.b32.xlu0 %v2610, 8
        %v2693 = vpop.permute.xlu0 %2692
        %2694 = vrot.lane.b32.xlu0 %v2611, 8
        %v2695 = vpop.permute.xlu0 %2694
        %2696 = vrot.lane.b32.xlu0 %v2612, 8
        %v2697 = vpop.permute.xlu0 %2696
        %2698 = vrot.lane.b32.xlu0 %v2613, 8
        %v2699 = vpop.permute.xlu0 %2698
        %2700 = vrot.lane.b32.xlu0 %v2614, 8
        %v2701 = vpop.permute.xlu0 %2700
        %2702 = vrot.lane.b32.xlu0 %v2615, 8
        %v2703 = vpop.permute.xlu0 %2702
        %2704 = vrot.lane.b32.xlu0 %v2616, 8
        %v2705 = vpop.permute.xlu0 %2704
        %2706 = vrot.lane.b32.xlu0 %v2617, 8
        %v2707 = vpop.permute.xlu0 %2706
        %2708 = vrot.lane.b32.xlu0 %v2618, 8
        %v2709 = vpop.permute.xlu0 %2708
        %2710 = vrot.lane.b32.xlu0 %v2619, 8
        %v2711 = vpop.permute.xlu0 %2710
        %2712 = vrot.lane.b32.xlu0 %v2620, 8
        %v2713 = vpop.permute.xlu0 %2712
        %2714 = vrot.lane.b32.xlu0 %v2621, 8
        %v2715 = vpop.permute.xlu0 %2714
        %2716 = vrot.lane.b32.xlu0 %v2622, 8
        %v2717 = vpop.permute.xlu0 %2716
        %2718 = vrot.lane.b32.xlu0 %v2623, 8
        %v2719 = vpop.permute.xlu0 %2718
        %vm2752 = vcmask 97344
        %2753 = vst.msk [vmem:[#allocation4] sm:$0xff] %vm2752, %v2657
        %2754 = vst.msk [vmem:[#allocation4 + $0x8] sm:$0xff] %vm2752, %v2659
        %2755 = vst.msk [vmem:[#allocation4 + $0x10] sm:$0xff] %vm2752, %v2661
        %2756 = vst.msk [vmem:[#allocation4 + $0x18] sm:$0xff] %vm2752, %v2663
        %2757 = vst.msk [vmem:[#allocation4 + $0x20] sm:$0xff] %vm2752, %v2665
        %2758 = vst.msk [vmem:[#allocation4 + $0x28] sm:$0xff] %vm2752, %v2667
        %2759 = vst.msk [vmem:[#allocation4 + $0x30] sm:$0xff] %vm2752, %v2669
        %2760 = vst.msk [vmem:[#allocation4 + $0x38] sm:$0xff] %vm2752, %v2671
        %2761 = vst.msk [vmem:[#allocation4 + $0x40] sm:$0xff] %vm2752, %v2673
        %2762 = vst.msk [vmem:[#allocation4 + $0x48] sm:$0xff] %vm2752, %v2675
        %2763 = vst.msk [vmem:[#allocation4 + $0x50] sm:$0xff] %vm2752, %v2677
        %2764 = vst.msk [vmem:[#allocation4 + $0x58] sm:$0xff] %vm2752, %v2679
        %2765 = vst.msk [vmem:[#allocation4 + $0x60] sm:$0xff] %vm2752, %v2681
        %2766 = vst.msk [vmem:[#allocation4 + $0x68] sm:$0xff] %vm2752, %v2683
        %2767 = vst.msk [vmem:[#allocation4 + $0x70] sm:$0xff] %vm2752, %v2685
        %2768 = vst.msk [vmem:[#allocation4 + $0x78] sm:$0xff] %vm2752, %v2687
        %2769 = vst.msk [vmem:[#allocation4 + $0x80] sm:$0xff] %vm2752, %v2689
        %2770 = vst.msk [vmem:[#allocation4 + $0x88] sm:$0xff] %vm2752, %v2691
        %2771 = vst.msk [vmem:[#allocation4 + $0x90] sm:$0xff] %vm2752, %v2693
        %2772 = vst.msk [vmem:[#allocation4 + $0x98] sm:$0xff] %vm2752, %v2695
        %2773 = vst.msk [vmem:[#allocation4 + $0xa0] sm:$0xff] %vm2752, %v2697
        %2774 = vst.msk [vmem:[#allocation4 + $0xa8] sm:$0xff] %vm2752, %v2699
        %2775 = vst.msk [vmem:[#allocation4 + $0xb0] sm:$0xff] %vm2752, %v2701
        %2776 = vst.msk [vmem:[#allocation4 + $0xb8] sm:$0xff] %vm2752, %v2703
        %2777 = vst.msk [vmem:[#allocation4 + $0xc0] sm:$0xff] %vm2752, %v2705
        %2778 = vst.msk [vmem:[#allocation4 + $0xc8] sm:$0xff] %vm2752, %v2707
        %2779 = vst.msk [vmem:[#allocation4 + $0xd0] sm:$0xff] %vm2752, %v2709
        %2780 = vst.msk [vmem:[#allocation4 + $0xd8] sm:$0xff] %vm2752, %v2711
        %2781 = vst.msk [vmem:[#allocation4 + $0xe0] sm:$0xff] %vm2752, %v2713
        %2782 = vst.msk [vmem:[#allocation4 + $0xe8] sm:$0xff] %vm2752, %v2715
        %2783 = vst.msk [vmem:[#allocation4 + $0xf0] sm:$0xff] %vm2752, %v2717
        %2784 = vst.msk [vmem:[#allocation4 + $0xf8] sm:$0xff] %vm2752, %v2719
        %v2785 = vld [vmem:[%s2301] sm:$0xff]
        %v2786 = vld [vmem:[%s2301 + $0x8] sm:$0xff]
        %v2787 = vld [vmem:[%s2301 + $0x18] sm:$0xff]
        %v2788 = vld [vmem:[%s2301 + $0x20] sm:$0xff]
        %v2789 = vld [vmem:[%s2301 + $0x30] sm:$0xff]
        %v2790 = vld [vmem:[%s2301 + $0x38] sm:$0xff]
        %v2791 = vld [vmem:[%s2301 + $0x48] sm:$0xff]
        %v2792 = vld [vmem:[%s2301 + $0x50] sm:$0xff]
        %v2793 = vld [vmem:[%s2301 + $0x60] sm:$0xff]
        %v2794 = vld [vmem:[%s2301 + $0x68] sm:$0xff]
        %v2795 = vld [vmem:[%s2301 + $0x78] sm:$0xff]
        %v2796 = vld [vmem:[%s2301 + $0x80] sm:$0xff]
        %v2797 = vld [vmem:[%s2301 + $0x90] sm:$0xff]
        %v2798 = vld [vmem:[%s2301 + $0x98] sm:$0xff]
        %v2799 = vld [vmem:[%s2301 + $0xa8] sm:$0xff]
        %v2800 = vld [vmem:[%s2301 + $0xb0] sm:$0xff]
        %v2801 = vld [vmem:[%s2301 + $0xc0] sm:$0xff]
        %v2802 = vld [vmem:[%s2301 + $0xc8] sm:$0xff]
        %v2803 = vld [vmem:[%s2301 + $0xd8] sm:$0xff]
        %v2804 = vld [vmem:[%s2301 + $0xe0] sm:$0xff]
        %v2805 = vld [vmem:[%s2301 + $0xf0] sm:$0xff]
        %v2806 = vld [vmem:[%s2301 + $0xf8] sm:$0xff]
        %v2807 = vld [vmem:[%s2301 + $0x108] sm:$0xff]
        %v2808 = vld [vmem:[%s2301 + $0x110] sm:$0xff]
        %v2809 = vld [vmem:[%s2301 + $0x120] sm:$0xff]
        %v2810 = vld [vmem:[%s2301 + $0x128] sm:$0xff]
        %v2811 = vld [vmem:[%s2301 + $0x138] sm:$0xff]
        %v2812 = vld [vmem:[%s2301 + $0x140] sm:$0xff]
        %v2813 = vld [vmem:[%s2301 + $0x150] sm:$0xff]
        %v2814 = vld [vmem:[%s2301 + $0x158] sm:$0xff]
        %v2815 = vld [vmem:[%s2301 + $0x168] sm:$0xff]
        %v2816 = vld [vmem:[%s2301 + $0x170] sm:$0xff]
        %2849 = vrot.lane.b32.xlu0 %v2785, 12
        %v2850 = vpop.permute.xlu0 %2849
        %2851 = vrot.lane.b32.xlu0 %v2786, 12
        %v2852 = vpop.permute.xlu0 %2851
        %2853 = vrot.lane.b32.xlu0 %v2787, 12
        %v2854 = vpop.permute.xlu0 %2853
        %2855 = vrot.lane.b32.xlu0 %v2788, 12
        %v2856 = vpop.permute.xlu0 %2855
        %2857 = vrot.lane.b32.xlu0 %v2789, 12
        %v2858 = vpop.permute.xlu0 %2857
        %2859 = vrot.lane.b32.xlu0 %v2790, 12
        %v2860 = vpop.permute.xlu0 %2859
        %2861 = vrot.lane.b32.xlu0 %v2791, 12
        %v2862 = vpop.permute.xlu0 %2861
        %2863 = vrot.lane.b32.xlu0 %v2792, 12
        %v2864 = vpop.permute.xlu0 %2863
        %2865 = vrot.lane.b32.xlu0 %v2793, 12
        %v2866 = vpop.permute.xlu0 %2865
        %2867 = vrot.lane.b32.xlu0 %v2794, 12
        %v2868 = vpop.permute.xlu0 %2867
        %2869 = vrot.lane.b32.xlu0 %v2795, 12
        %v2870 = vpop.permute.xlu0 %2869
        %2871 = vrot.lane.b32.xlu0 %v2796, 12
        %v2872 = vpop.permute.xlu0 %2871
        %2873 = vrot.lane.b32.xlu0 %v2797, 12
        %v2874 = vpop.permute.xlu0 %2873
        %2875 = vrot.lane.b32.xlu0 %v2798, 12
        %v2876 = vpop.permute.xlu0 %2875
        %2877 = vrot.lane.b32.xlu0 %v2799, 12
        %v2878 = vpop.permute.xlu0 %2877
        %2879 = vrot.lane.b32.xlu0 %v2800, 12
        %v2880 = vpop.permute.xlu0 %2879
        %2881 = vrot.lane.b32.xlu0 %v2801, 12
        %v2882 = vpop.permute.xlu0 %2881
        %2883 = vrot.lane.b32.xlu0 %v2802, 12
        %v2884 = vpop.permute.xlu0 %2883
        %2885 = vrot.lane.b32.xlu0 %v2803, 12
        %v2886 = vpop.permute.xlu0 %2885
        %2887 = vrot.lane.b32.xlu0 %v2804, 12
        %v2888 = vpop.permute.xlu0 %2887
        %2889 = vrot.lane.b32.xlu0 %v2805, 12
        %v2890 = vpop.permute.xlu0 %2889
        %2891 = vrot.lane.b32.xlu0 %v2806, 12
        %v2892 = vpop.permute.xlu0 %2891
        %2893 = vrot.lane.b32.xlu0 %v2807, 12
        %v2894 = vpop.permute.xlu0 %2893
        %2895 = vrot.lane.b32.xlu0 %v2808, 12
        %v2896 = vpop.permute.xlu0 %2895
        %2897 = vrot.lane.b32.xlu0 %v2809, 12
        %v2898 = vpop.permute.xlu0 %2897
        %2899 = vrot.lane.b32.xlu0 %v2810, 12
        %v2900 = vpop.permute.xlu0 %2899
        %2901 = vrot.lane.b32.xlu0 %v2811, 12
        %v2902 = vpop.permute.xlu0 %2901
        %2903 = vrot.lane.b32.xlu0 %v2812, 12
        %v2904 = vpop.permute.xlu0 %2903
        %2905 = vrot.lane.b32.xlu0 %v2813, 12
        %v2906 = vpop.permute.xlu0 %2905
        %2907 = vrot.lane.b32.xlu0 %v2814, 12
        %v2908 = vpop.permute.xlu0 %2907
        %2909 = vrot.lane.b32.xlu0 %v2815, 12
        %v2910 = vpop.permute.xlu0 %2909
        %2911 = vrot.lane.b32.xlu0 %v2816, 12
        %v2912 = vpop.permute.xlu0 %2911
        %vm2945 = vcmask 130144
        %2946 = vst.msk [vmem:[#allocation4] sm:$0xff] %vm2945, %v2850
        %2947 = vst.msk [vmem:[#allocation4 + $0x8] sm:$0xff] %vm2945, %v2852
        %2948 = vst.msk [vmem:[#allocation4 + $0x10] sm:$0xff] %vm2945, %v2854
        %2949 = vst.msk [vmem:[#allocation4 + $0x18] sm:$0xff] %vm2945, %v2856
        %2950 = vst.msk [vmem:[#allocation4 + $0x20] sm:$0xff] %vm2945, %v2858
        %2951 = vst.msk [vmem:[#allocation4 + $0x28] sm:$0xff] %vm2945, %v2860
        %2952 = vst.msk [vmem:[#allocation4 + $0x30] sm:$0xff] %vm2945, %v2862
        %2953 = vst.msk [vmem:[#allocation4 + $0x38] sm:$0xff] %vm2945, %v2864
        %2954 = vst.msk [vmem:[#allocation4 + $0x40] sm:$0xff] %vm2945, %v2866
        %2955 = vst.msk [vmem:[#allocation4 + $0x48] sm:$0xff] %vm2945, %v2868
        %2956 = vst.msk [vmem:[#allocation4 + $0x50] sm:$0xff] %vm2945, %v2870
        %2957 = vst.msk [vmem:[#allocation4 + $0x58] sm:$0xff] %vm2945, %v2872
        %2958 = vst.msk [vmem:[#allocation4 + $0x60] sm:$0xff] %vm2945, %v2874
        %2959 = vst.msk [vmem:[#allocation4 + $0x68] sm:$0xff] %vm2945, %v2876
        %2960 = vst.msk [vmem:[#allocation4 + $0x70] sm:$0xff] %vm2945, %v2878
        %2961 = vst.msk [vmem:[#allocation4 + $0x78] sm:$0xff] %vm2945, %v2880
        %2962 = vst.msk [vmem:[#allocation4 + $0x80] sm:$0xff] %vm2945, %v2882
        %2963 = vst.msk [vmem:[#allocation4 + $0x88] sm:$0xff] %vm2945, %v2884
        %2964 = vst.msk [vmem:[#allocation4 + $0x90] sm:$0xff] %vm2945, %v2886
        %2965 = vst.msk [vmem:[#allocation4 + $0x98] sm:$0xff] %vm2945, %v2888
        %2966 = vst.msk [vmem:[#allocation4 + $0xa0] sm:$0xff] %vm2945, %v2890
        %2967 = vst.msk [vmem:[#allocation4 + $0xa8] sm:$0xff] %vm2945, %v2892
        %2968 = vst.msk [vmem:[#allocation4 + $0xb0] sm:$0xff] %vm2945, %v2894
        %2969 = vst.msk [vmem:[#allocation4 + $0xb8] sm:$0xff] %vm2945, %v2896
        %2970 = vst.msk [vmem:[#allocation4 + $0xc0] sm:$0xff] %vm2945, %v2898
        %2971 = vst.msk [vmem:[#allocation4 + $0xc8] sm:$0xff] %vm2945, %v2900
        %2972 = vst.msk [vmem:[#allocation4 + $0xd0] sm:$0xff] %vm2945, %v2902
        %2973 = vst.msk [vmem:[#allocation4 + $0xd8] sm:$0xff] %vm2945, %v2904
        %2974 = vst.msk [vmem:[#allocation4 + $0xe0] sm:$0xff] %vm2945, %v2906
        %2975 = vst.msk [vmem:[#allocation4 + $0xe8] sm:$0xff] %vm2945, %v2908
        %2976 = vst.msk [vmem:[#allocation4 + $0xf0] sm:$0xff] %vm2945, %v2910
        %2977 = vst.msk [vmem:[#allocation4 + $0xf8] sm:$0xff] %vm2945, %v2912
        %v2978 = vld [vmem:[%s2301 + $0x1] sm:$0xff]
        %v2979 = vld [vmem:[%s2301 + $0x9] sm:$0xff]
        %v2980 = vld [vmem:[%s2301 + $0x19] sm:$0xff]
        %v2981 = vld [vmem:[%s2301 + $0x21] sm:$0xff]
        %v2982 = vld [vmem:[%s2301 + $0x31] sm:$0xff]
        %v2983 = vld [vmem:[%s2301 + $0x39] sm:$0xff]
        %v2984 = vld [vmem:[%s2301 + $0x49] sm:$0xff]
        %v2985 = vld [vmem:[%s2301 + $0x51] sm:$0xff]
        %v2986 = vld [vmem:[%s2301 + $0x61] sm:$0xff]
        %v2987 = vld [vmem:[%s2301 + $0x69] sm:$0xff]
        %v2988 = vld [vmem:[%s2301 + $0x79] sm:$0xff]
        %v2989 = vld [vmem:[%s2301 + $0x81] sm:$0xff]
        %v2990 = vld [vmem:[%s2301 + $0x91] sm:$0xff]
        %v2991 = vld [vmem:[%s2301 + $0x99] sm:$0xff]
        %v2992 = vld [vmem:[%s2301 + $0xa9] sm:$0xff]
        %v2993 = vld [vmem:[%s2301 + $0xb1] sm:$0xff]
        %v2994 = vld [vmem:[%s2301 + $0xc1] sm:$0xff]
        %v2995 = vld [vmem:[%s2301 + $0xc9] sm:$0xff]
        %v2996 = vld [vmem:[%s2301 + $0xd9] sm:$0xff]
        %v2997 = vld [vmem:[%s2301 + $0xe1] sm:$0xff]
        %v2998 = vld [vmem:[%s2301 + $0xf1] sm:$0xff]
        %v2999 = vld [vmem:[%s2301 + $0xf9] sm:$0xff]
        %v3000 = vld [vmem:[%s2301 + $0x109] sm:$0xff]
        %v3001 = vld [vmem:[%s2301 + $0x111] sm:$0xff]
        %v3002 = vld [vmem:[%s2301 + $0x121] sm:$0xff]
        %v3003 = vld [vmem:[%s2301 + $0x129] sm:$0xff]
        %v3004 = vld [vmem:[%s2301 + $0x139] sm:$0xff]
        %v3005 = vld [vmem:[%s2301 + $0x141] sm:$0xff]
        %v3006 = vld [vmem:[%s2301 + $0x151] sm:$0xff]
        %v3007 = vld [vmem:[%s2301 + $0x159] sm:$0xff]
        %v3008 = vld [vmem:[%s2301 + $0x169] sm:$0xff]
        %v3009 = vld [vmem:[%s2301 + $0x171] sm:$0xff]
        %3042 = vrot.lane.b32.xlu0 %v2978, 16
        %v3043 = vpop.permute.xlu0 %3042
        %3044 = vrot.lane.b32.xlu0 %v2979, 16
        %v3045 = vpop.permute.xlu0 %3044
        %3046 = vrot.lane.b32.xlu0 %v2980, 16
        %v3047 = vpop.permute.xlu0 %3046
        %3048 = vrot.lane.b32.xlu0 %v2981, 16
        %v3049 = vpop.permute.xlu0 %3048
        %3050 = vrot.lane.b32.xlu0 %v2982, 16
        %v3051 = vpop.permute.xlu0 %3050
        %3052 = vrot.lane.b32.xlu0 %v2983, 16
        %v3053 = vpop.permute.xlu0 %3052
        %3054 = vrot.lane.b32.xlu0 %v2984, 16
        %v3055 = vpop.permute.xlu0 %3054
        %3056 = vrot.lane.b32.xlu0 %v2985, 16
        %v3057 = vpop.permute.xlu0 %3056
        %3058 = vrot.lane.b32.xlu0 %v2986, 16
        %v3059 = vpop.permute.xlu0 %3058
        %3060 = vrot.lane.b32.xlu0 %v2987, 16
        %v3061 = vpop.permute.xlu0 %3060
        %3062 = vrot.lane.b32.xlu0 %v2988, 16
        %v3063 = vpop.permute.xlu0 %3062
        %3064 = vrot.lane.b32.xlu0 %v2989, 16
        %v3065 = vpop.permute.xlu0 %3064
        %3066 = vrot.lane.b32.xlu0 %v2990, 16
        %v3067 = vpop.permute.xlu0 %3066
        %3068 = vrot.lane.b32.xlu0 %v2991, 16
        %v3069 = vpop.permute.xlu0 %3068
        %3070 = vrot.lane.b32.xlu0 %v2992, 16
        %v3071 = vpop.permute.xlu0 %3070
        %3072 = vrot.lane.b32.xlu0 %v2993, 16
        %v3073 = vpop.permute.xlu0 %3072
        %3074 = vrot.lane.b32.xlu0 %v2994, 16
        %v3075 = vpop.permute.xlu0 %3074
        %3076 = vrot.lane.b32.xlu0 %v2995, 16
        %v3077 = vpop.permute.xlu0 %3076
        %3078 = vrot.lane.b32.xlu0 %v2996, 16
        %v3079 = vpop.permute.xlu0 %3078
        %3080 = vrot.lane.b32.xlu0 %v2997, 16
        %v3081 = vpop.permute.xlu0 %3080
        %3082 = vrot.lane.b32.xlu0 %v2998, 16
        %v3083 = vpop.permute.xlu0 %3082
        %3084 = vrot.lane.b32.xlu0 %v2999, 16
        %v3085 = vpop.permute.xlu0 %3084
        %3086 = vrot.lane.b32.xlu0 %v3000, 16
        %v3087 = vpop.permute.xlu0 %3086
        %3088 = vrot.lane.b32.xlu0 %v3001, 16
        %v3089 = vpop.permute.xlu0 %3088
        %3090 = vrot.lane.b32.xlu0 %v3002, 16
        %v3091 = vpop.permute.xlu0 %3090
        %3092 = vrot.lane.b32.xlu0 %v3003, 16
        %v3093 = vpop.permute.xlu0 %3092
        %3094 = vrot.lane.b32.xlu0 %v3004, 16
        %v3095 = vpop.permute.xlu0 %3094
        %3096 = vrot.lane.b32.xlu0 %v3005, 16
        %v3097 = vpop.permute.xlu0 %3096
        %3098 = vrot.lane.b32.xlu0 %v3006, 16
        %v3099 = vpop.permute.xlu0 %3098
        %3100 = vrot.lane.b32.xlu0 %v3007, 16
        %v3101 = vpop.permute.xlu0 %3100
        %3102 = vrot.lane.b32.xlu0 %v3008, 16
        %v3103 = vpop.permute.xlu0 %3102
        %3104 = vrot.lane.b32.xlu0 %v3009, 16
        %v3105 = vpop.permute.xlu0 %3104
        %vm3138 = vcmask 162944
        %3139 = vst.msk [vmem:[#allocation4] sm:$0xff] %vm3138, %v3043
        %3140 = vst.msk [vmem:[#allocation4 + $0x8] sm:$0xff] %vm3138, %v3045
        %3141 = vst.msk [vmem:[#allocation4 + $0x10] sm:$0xff] %vm3138, %v3047
        %3142 = vst.msk [vmem:[#allocation4 + $0x18] sm:$0xff] %vm3138, %v3049
        %3143 = vst.msk [vmem:[#allocation4 + $0x20] sm:$0xff] %vm3138, %v3051
        %3144 = vst.msk [vmem:[#allocation4 + $0x28] sm:$0xff] %vm3138, %v3053
        %3145 = vst.msk [vmem:[#allocation4 + $0x30] sm:$0xff] %vm3138, %v3055
        %3146 = vst.msk [vmem:[#allocation4 + $0x38] sm:$0xff] %vm3138, %v3057
        %3147 = vst.msk [vmem:[#allocation4 + $0x40] sm:$0xff] %vm3138, %v3059
        %3148 = vst.msk [vmem:[#allocation4 + $0x48] sm:$0xff] %vm3138, %v3061
        %3149 = vst.msk [vmem:[#allocation4 + $0x50] sm:$0xff] %vm3138, %v3063
        %3150 = vst.msk [vmem:[#allocation4 + $0x58] sm:$0xff] %vm3138, %v3065
        %3151 = vst.msk [vmem:[#allocation4 + $0x60] sm:$0xff] %vm3138, %v3067
        %3152 = vst.msk [vmem:[#allocation4 + $0x68] sm:$0xff] %vm3138, %v3069
        %3153 = vst.msk [vmem:[#allocation4 + $0x70] sm:$0xff] %vm3138, %v3071
        %3154 = vst.msk [vmem:[#allocation4 + $0x78] sm:$0xff] %vm3138, %v3073
        %3155 = vst.msk [vmem:[#allocation4 + $0x80] sm:$0xff] %vm3138, %v3075
        %3156 = vst.msk [vmem:[#allocation4 + $0x88] sm:$0xff] %vm3138, %v3077
        %3157 = vst.msk [vmem:[#allocation4 + $0x90] sm:$0xff] %vm3138, %v3079
        %3158 = vst.msk [vmem:[#allocation4 + $0x98] sm:$0xff] %vm3138, %v3081
        %3159 = vst.msk [vmem:[#allocation4 + $0xa0] sm:$0xff] %vm3138, %v3083
        %3160 = vst.msk [vmem:[#allocation4 + $0xa8] sm:$0xff] %vm3138, %v3085
        %3161 = vst.msk [vmem:[#allocation4 + $0xb0] sm:$0xff] %vm3138, %v3087
        %3162 = vst.msk [vmem:[#allocation4 + $0xb8] sm:$0xff] %vm3138, %v3089
        %3163 = vst.msk [vmem:[#allocation4 + $0xc0] sm:$0xff] %vm3138, %v3091
        %3164 = vst.msk [vmem:[#allocation4 + $0xc8] sm:$0xff] %vm3138, %v3093
        %3165 = vst.msk [vmem:[#allocation4 + $0xd0] sm:$0xff] %vm3138, %v3095
        %3166 = vst.msk [vmem:[#allocation4 + $0xd8] sm:$0xff] %vm3138, %v3097
        %3167 = vst.msk [vmem:[#allocation4 + $0xe0] sm:$0xff] %vm3138, %v3099
        %3168 = vst.msk [vmem:[#allocation4 + $0xe8] sm:$0xff] %vm3138, %v3101
        %3169 = vst.msk [vmem:[#allocation4 + $0xf0] sm:$0xff] %vm3138, %v3103
        %3170 = vst.msk [vmem:[#allocation4 + $0xf8] sm:$0xff] %vm3138, %v3105
        %v3171 = vld [vmem:[%s2301 + $0x2] sm:$0xff]
        %v3172 = vld [vmem:[%s2301 + $0xa] sm:$0xff]
        %v3173 = vld [vmem:[%s2301 + $0x1a] sm:$0xff]
        %v3174 = vld [vmem:[%s2301 + $0x22] sm:$0xff]
        %v3175 = vld [vmem:[%s2301 + $0x32] sm:$0xff]
        %v3176 = vld [vmem:[%s2301 + $0x3a] sm:$0xff]
        %v3177 = vld [vmem:[%s2301 + $0x4a] sm:$0xff]
        %v3178 = vld [vmem:[%s2301 + $0x52] sm:$0xff]
        %v3179 = vld [vmem:[%s2301 + $0x62] sm:$0xff]
        %v3180 = vld [vmem:[%s2301 + $0x6a] sm:$0xff]
        %v3181 = vld [vmem:[%s2301 + $0x7a] sm:$0xff]
        %v3182 = vld [vmem:[%s2301 + $0x82] sm:$0xff]
        %v3183 = vld [vmem:[%s2301 + $0x92] sm:$0xff]
        %v3184 = vld [vmem:[%s2301 + $0x9a] sm:$0xff]
        %v3185 = vld [vmem:[%s2301 + $0xaa] sm:$0xff]
        %v3186 = vld [vmem:[%s2301 + $0xb2] sm:$0xff]
        %v3187 = vld [vmem:[%s2301 + $0xc2] sm:$0xff]
        %v3188 = vld [vmem:[%s2301 + $0xca] sm:$0xff]
        %v3189 = vld [vmem:[%s2301 + $0xda] sm:$0xff]
        %v3190 = vld [vmem:[%s2301 + $0xe2] sm:$0xff]
        %v3191 = vld [vmem:[%s2301 + $0xf2] sm:$0xff]
        %v3192 = vld [vmem:[%s2301 + $0xfa] sm:$0xff]
        %v3193 = vld [vmem:[%s2301 + $0x10a] sm:$0xff]
        %v3194 = vld [vmem:[%s2301 + $0x112] sm:$0xff]
        %v3195 = vld [vmem:[%s2301 + $0x122] sm:$0xff]
        %v3196 = vld [vmem:[%s2301 + $0x12a] sm:$0xff]
        %v3197 = vld [vmem:[%s2301 + $0x13a] sm:$0xff]
        %v3198 = vld [vmem:[%s2301 + $0x142] sm:$0xff]
        %v3199 = vld [vmem:[%s2301 + $0x152] sm:$0xff]
        %v3200 = vld [vmem:[%s2301 + $0x15a] sm:$0xff]
        %v3201 = vld [vmem:[%s2301 + $0x16a] sm:$0xff]
        %v3202 = vld [vmem:[%s2301 + $0x172] sm:$0xff]
        %3235 = vrot.lane.b32.xlu0 %v3171, 20
        %v3236 = vpop.permute.xlu0 %3235
        %3237 = vrot.lane.b32.xlu0 %v3172, 20
        %v3238 = vpop.permute.xlu0 %3237
        %3239 = vrot.lane.b32.xlu0 %v3173, 20
        %v3240 = vpop.permute.xlu0 %3239
        %3241 = vrot.lane.b32.xlu0 %v3174, 20
        %v3242 = vpop.permute.xlu0 %3241
        %3243 = vrot.lane.b32.xlu0 %v3175, 20
        %v3244 = vpop.permute.xlu0 %3243
        %3245 = vrot.lane.b32.xlu0 %v3176, 20
        %v3246 = vpop.permute.xlu0 %3245
        %3247 = vrot.lane.b32.xlu0 %v3177, 20
        %v3248 = vpop.permute.xlu0 %3247
        %3249 = vrot.lane.b32.xlu0 %v3178, 20
        %v3250 = vpop.permute.xlu0 %3249
        %3251 = vrot.lane.b32.xlu0 %v3179, 20
        %v3252 = vpop.permute.xlu0 %3251
        %3253 = vrot.lane.b32.xlu0 %v3180, 20
        %v3254 = vpop.permute.xlu0 %3253
        %3255 = vrot.lane.b32.xlu0 %v3181, 20
        %v3256 = vpop.permute.xlu0 %3255
        %3257 = vrot.lane.b32.xlu0 %v3182, 20
        %v3258 = vpop.permute.xlu0 %3257
        %3259 = vrot.lane.b32.xlu0 %v3183, 20
        %v3260 = vpop.permute.xlu0 %3259
        %3261 = vrot.lane.b32.xlu0 %v3184, 20
        %v3262 = vpop.permute.xlu0 %3261
        %3263 = vrot.lane.b32.xlu0 %v3185, 20
        %v3264 = vpop.permute.xlu0 %3263
        %3265 = vrot.lane.b32.xlu0 %v3186, 20
        %v3266 = vpop.permute.xlu0 %3265
        %3267 = vrot.lane.b32.xlu0 %v3187, 20
        %v3268 = vpop.permute.xlu0 %3267
        %3269 = vrot.lane.b32.xlu0 %v3188, 20
        %v3270 = vpop.permute.xlu0 %3269
        %3271 = vrot.lane.b32.xlu0 %v3189, 20
        %v3272 = vpop.permute.xlu0 %3271
        %3273 = vrot.lane.b32.xlu0 %v3190, 20
        %v3274 = vpop.permute.xlu0 %3273
        %3275 = vrot.lane.b32.xlu0 %v3191, 20
        %v3276 = vpop.permute.xlu0 %3275
        %3277 = vrot.lane.b32.xlu0 %v3192, 20
        %v3278 = vpop.permute.xlu0 %3277
        %3279 = vrot.lane.b32.xlu0 %v3193, 20
        %v3280 = vpop.permute.xlu0 %3279
        %3281 = vrot.lane.b32.xlu0 %v3194, 20
        %v3282 = vpop.permute.xlu0 %3281
        %3283 = vrot.lane.b32.xlu0 %v3195, 20
        %v3284 = vpop.permute.xlu0 %3283
        %3285 = vrot.lane.b32.xlu0 %v3196, 20
        %v3286 = vpop.permute.xlu0 %3285
        %3287 = vrot.lane.b32.xlu0 %v3197, 20
        %v3288 = vpop.permute.xlu0 %3287
        %3289 = vrot.lane.b32.xlu0 %v3198, 20
        %v3290 = vpop.permute.xlu0 %3289
        %3291 = vrot.lane.b32.xlu0 %v3199, 20
        %v3292 = vpop.permute.xlu0 %3291
        %3293 = vrot.lane.b32.xlu0 %v3200, 20
        %v3294 = vpop.permute.xlu0 %3293
        %3295 = vrot.lane.b32.xlu0 %v3201, 20
        %v3296 = vpop.permute.xlu0 %3295
        %3297 = vrot.lane.b32.xlu0 %v3202, 20
        %v3298 = vpop.permute.xlu0 %3297
        %vm3331 = vcmask 195744
        %3332 = vst.msk [vmem:[#allocation4] sm:$0xff] %vm3331, %v3236
        %3333 = vst.msk [vmem:[#allocation4 + $0x8] sm:$0xff] %vm3331, %v3238
        %3334 = vst.msk [vmem:[#allocation4 + $0x10] sm:$0xff] %vm3331, %v3240
        %3335 = vst.msk [vmem:[#allocation4 + $0x18] sm:$0xff] %vm3331, %v3242
        %3336 = vst.msk [vmem:[#allocation4 + $0x20] sm:$0xff] %vm3331, %v3244
        %3337 = vst.msk [vmem:[#allocation4 + $0x28] sm:$0xff] %vm3331, %v3246
        %3338 = vst.msk [vmem:[#allocation4 + $0x30] sm:$0xff] %vm3331, %v3248
        %3339 = vst.msk [vmem:[#allocation4 + $0x38] sm:$0xff] %vm3331, %v3250
        %3340 = vst.msk [vmem:[#allocation4 + $0x40] sm:$0xff] %vm3331, %v3252
        %3341 = vst.msk [vmem:[#allocation4 + $0x48] sm:$0xff] %vm3331, %v3254
        %3342 = vst.msk [vmem:[#allocation4 + $0x50] sm:$0xff] %vm3331, %v3256
        %3343 = vst.msk [vmem:[#allocation4 + $0x58] sm:$0xff] %vm3331, %v3258
        %3344 = vst.msk [vmem:[#allocation4 + $0x60] sm:$0xff] %vm3331, %v3260
        %3345 = vst.msk [vmem:[#allocation4 + $0x68] sm:$0xff] %vm3331, %v3262
        %3346 = vst.msk [vmem:[#allocation4 + $0x70] sm:$0xff] %vm3331, %v3264
        %3347 = vst.msk [vmem:[#allocation4 + $0x78] sm:$0xff] %vm3331, %v3266
        %3348 = vst.msk [vmem:[#allocation4 + $0x80] sm:$0xff] %vm3331, %v3268
        %3349 = vst.msk [vmem:[#allocation4 + $0x88] sm:$0xff] %vm3331, %v3270
        %3350 = vst.msk [vmem:[#allocation4 + $0x90] sm:$0xff] %vm3331, %v3272
        %3351 = vst.msk [vmem:[#allocation4 + $0x98] sm:$0xff] %vm3331, %v3274
        %3352 = vst.msk [vmem:[#allocation4 + $0xa0] sm:$0xff] %vm3331, %v3276
        %3353 = vst.msk [vmem:[#allocation4 + $0xa8] sm:$0xff] %vm3331, %v3278
        %3354 = vst.msk [vmem:[#allocation4 + $0xb0] sm:$0xff] %vm3331, %v3280
        %3355 = vst.msk [vmem:[#allocation4 + $0xb8] sm:$0xff] %vm3331, %v3282
        %3356 = vst.msk [vmem:[#allocation4 + $0xc0] sm:$0xff] %vm3331, %v3284
        %3357 = vst.msk [vmem:[#allocation4 + $0xc8] sm:$0xff] %vm3331, %v3286
        %3358 = vst.msk [vmem:[#allocation4 + $0xd0] sm:$0xff] %vm3331, %v3288
        %3359 = vst.msk [vmem:[#allocation4 + $0xd8] sm:$0xff] %vm3331, %v3290
        %3360 = vst.msk [vmem:[#allocation4 + $0xe0] sm:$0xff] %vm3331, %v3292
        %3361 = vst.msk [vmem:[#allocation4 + $0xe8] sm:$0xff] %vm3331, %v3294
        %3362 = vst.msk [vmem:[#allocation4 + $0xf0] sm:$0xff] %vm3331, %v3296
        %3363 = vst.msk [vmem:[#allocation4 + $0xf8] sm:$0xff] %vm3331, %v3298
        %s3364 = scalar_lea.vmem [#allocation3], 48
        %v3365 = vld [vmem:[%s3364] sm:$0xff]
        %v3366 = vld [vmem:[%s3364 + $0x8] sm:$0xff]
        %v3367 = vld [vmem:[%s3364 + $0x18] sm:$0xff]
        %v3368 = vld [vmem:[%s3364 + $0x20] sm:$0xff]
        %v3369 = vld [vmem:[%s3364 + $0x30] sm:$0xff]
        %v3370 = vld [vmem:[%s3364 + $0x38] sm:$0xff]
        %v3371 = vld [vmem:[%s3364 + $0x48] sm:$0xff]
        %v3372 = vld [vmem:[%s3364 + $0x50] sm:$0xff]
        %v3373 = vld [vmem:[%s3364 + $0x60] sm:$0xff]
        %v3374 = vld [vmem:[%s3364 + $0x68] sm:$0xff]
        %v3375 = vld [vmem:[%s3364 + $0x78] sm:$0xff]
        %v3376 = vld [vmem:[%s3364 + $0x80] sm:$0xff]
        %v3377 = vld [vmem:[%s3364 + $0x90] sm:$0xff]
        %v3378 = vld [vmem:[%s3364 + $0x98] sm:$0xff]
        %v3379 = vld [vmem:[%s3364 + $0xa8] sm:$0xff]
        %v3380 = vld [vmem:[%s3364 + $0xb0] sm:$0xff]
        %v3381 = vld [vmem:[%s3364 + $0xc0] sm:$0xff]
        %v3382 = vld [vmem:[%s3364 + $0xc8] sm:$0xff]
        %v3383 = vld [vmem:[%s3364 + $0xd8] sm:$0xff]
        %v3384 = vld [vmem:[%s3364 + $0xe0] sm:$0xff]
        %v3385 = vld [vmem:[%s3364 + $0xf0] sm:$0xff]
        %v3386 = vld [vmem:[%s3364 + $0xf8] sm:$0xff]
        %v3387 = vld [vmem:[%s3364 + $0x108] sm:$0xff]
        %v3388 = vld [vmem:[%s3364 + $0x110] sm:$0xff]
        %v3389 = vld [vmem:[%s3364 + $0x120] sm:$0xff]
        %v3390 = vld [vmem:[%s3364 + $0x128] sm:$0xff]
        %v3391 = vld [vmem:[%s3364 + $0x138] sm:$0xff]
        %v3392 = vld [vmem:[%s3364 + $0x140] sm:$0xff]
        %v3393 = vld [vmem:[%s3364 + $0x150] sm:$0xff]
        %v3394 = vld [vmem:[%s3364 + $0x158] sm:$0xff]
        %v3395 = vld [vmem:[%s3364 + $0x168] sm:$0xff]
        %v3396 = vld [vmem:[%s3364 + $0x170] sm:$0xff]
        %3429 = vrot.lane.b32.xlu0 %v3365, 24
        %v3430 = vpop.permute.xlu0 %3429
        %3431 = vrot.lane.b32.xlu0 %v3366, 24
        %v3432 = vpop.permute.xlu0 %3431
        %3433 = vrot.lane.b32.xlu0 %v3367, 24
        %v3434 = vpop.permute.xlu0 %3433
        %3435 = vrot.lane.b32.xlu0 %v3368, 24
        %v3436 = vpop.permute.xlu0 %3435
        %3437 = vrot.lane.b32.xlu0 %v3369, 24
        %v3438 = vpop.permute.xlu0 %3437
        %3439 = vrot.lane.b32.xlu0 %v3370, 24
        %v3440 = vpop.permute.xlu0 %3439
        %3441 = vrot.lane.b32.xlu0 %v3371, 24
        %v3442 = vpop.permute.xlu0 %3441
        %3443 = vrot.lane.b32.xlu0 %v3372, 24
        %v3444 = vpop.permute.xlu0 %3443
        %3445 = vrot.lane.b32.xlu0 %v3373, 24
        %v3446 = vpop.permute.xlu0 %3445
        %3447 = vrot.lane.b32.xlu0 %v3374, 24
        %v3448 = vpop.permute.xlu0 %3447
        %3449 = vrot.lane.b32.xlu0 %v3375, 24
        %v3450 = vpop.permute.xlu0 %3449
        %3451 = vrot.lane.b32.xlu0 %v3376, 24
        %v3452 = vpop.permute.xlu0 %3451
        %3453 = vrot.lane.b32.xlu0 %v3377, 24
        %v3454 = vpop.permute.xlu0 %3453
        %3455 = vrot.lane.b32.xlu0 %v3378, 24
        %v3456 = vpop.permute.xlu0 %3455
        %3457 = vrot.lane.b32.xlu0 %v3379, 24
        %v3458 = vpop.permute.xlu0 %3457
        %3459 = vrot.lane.b32.xlu0 %v3380, 24
        %v3460 = vpop.permute.xlu0 %3459
        %3461 = vrot.lane.b32.xlu0 %v3381, 24
        %v3462 = vpop.permute.xlu0 %3461
        %3463 = vrot.lane.b32.xlu0 %v3382, 24
        %v3464 = vpop.permute.xlu0 %3463
        %3465 = vrot.lane.b32.xlu0 %v3383, 24
        %v3466 = vpop.permute.xlu0 %3465
        %3467 = vrot.lane.b32.xlu0 %v3384, 24
        %v3468 = vpop.permute.xlu0 %3467
        %3469 = vrot.lane.b32.xlu0 %v3385, 24
        %v3470 = vpop.permute.xlu0 %3469
        %3471 = vrot.lane.b32.xlu0 %v3386, 24
        %v3472 = vpop.permute.xlu0 %3471
        %3473 = vrot.lane.b32.xlu0 %v3387, 24
        %v3474 = vpop.permute.xlu0 %3473
        %3475 = vrot.lane.b32.xlu0 %v3388, 24
        %v3476 = vpop.permute.xlu0 %3475
        %3477 = vrot.lane.b32.xlu0 %v3389, 24
        %v3478 = vpop.permute.xlu0 %3477
        %3479 = vrot.lane.b32.xlu0 %v3390, 24
        %v3480 = vpop.permute.xlu0 %3479
        %3481 = vrot.lane.b32.xlu0 %v3391, 24
        %v3482 = vpop.permute.xlu0 %3481
        %3483 = vrot.lane.b32.xlu0 %v3392, 24
        %v3484 = vpop.permute.xlu0 %3483
        %3485 = vrot.lane.b32.xlu0 %v3393, 24
        %v3486 = vpop.permute.xlu0 %3485
        %3487 = vrot.lane.b32.xlu0 %v3394, 24
        %v3488 = vpop.permute.xlu0 %3487
        %3489 = vrot.lane.b32.xlu0 %v3395, 24
        %v3490 = vpop.permute.xlu0 %3489
        %3491 = vrot.lane.b32.xlu0 %v3396, 24
        %v3492 = vpop.permute.xlu0 %3491
        %vm3525 = vcmask 228544
        %3526 = vst.msk [vmem:[#allocation4] sm:$0xff] %vm3525, %v3430
        %3527 = vst.msk [vmem:[#allocation4 + $0x8] sm:$0xff] %vm3525, %v3432
        %3528 = vst.msk [vmem:[#allocation4 + $0x10] sm:$0xff] %vm3525, %v3434
        %3529 = vst.msk [vmem:[#allocation4 + $0x18] sm:$0xff] %vm3525, %v3436
        %3530 = vst.msk [vmem:[#allocation4 + $0x20] sm:$0xff] %vm3525, %v3438
        %3531 = vst.msk [vmem:[#allocation4 + $0x28] sm:$0xff] %vm3525, %v3440
        %3532 = vst.msk [vmem:[#allocation4 + $0x30] sm:$0xff] %vm3525, %v3442
        %3533 = vst.msk [vmem:[#allocation4 + $0x38] sm:$0xff] %vm3525, %v3444
        %3534 = vst.msk [vmem:[#allocation4 + $0x40] sm:$0xff] %vm3525, %v3446
        %3535 = vst.msk [vmem:[#allocation4 + $0x48] sm:$0xff] %vm3525, %v3448
        %3536 = vst.msk [vmem:[#allocation4 + $0x50] sm:$0xff] %vm3525, %v3450
        %3537 = vst.msk [vmem:[#allocation4 + $0x58] sm:$0xff] %vm3525, %v3452
        %3538 = vst.msk [vmem:[#allocation4 + $0x60] sm:$0xff] %vm3525, %v3454
        %3539 = vst.msk [vmem:[#allocation4 + $0x68] sm:$0xff] %vm3525, %v3456
        %3540 = vst.msk [vmem:[#allocation4 + $0x70] sm:$0xff] %vm3525, %v3458
        %3541 = vst.msk [vmem:[#allocation4 + $0x78] sm:$0xff] %vm3525, %v3460
        %3542 = vst.msk [vmem:[#allocation4 + $0x80] sm:$0xff] %vm3525, %v3462
        %3543 = vst.msk [vmem:[#allocation4 + $0x88] sm:$0xff] %vm3525, %v3464
        %3544 = vst.msk [vmem:[#allocation4 + $0x90] sm:$0xff] %vm3525, %v3466
        %3545 = vst.msk [vmem:[#allocation4 + $0x98] sm:$0xff] %vm3525, %v3468
        %3546 = vst.msk [vmem:[#allocation4 + $0xa0] sm:$0xff] %vm3525, %v3470
        %3547 = vst.msk [vmem:[#allocation4 + $0xa8] sm:$0xff] %vm3525, %v3472
        %3548 = vst.msk [vmem:[#allocation4 + $0xb0] sm:$0xff] %vm3525, %v3474
        %3549 = vst.msk [vmem:[#allocation4 + $0xb8] sm:$0xff] %vm3525, %v3476
        %3550 = vst.msk [vmem:[#allocation4 + $0xc0] sm:$0xff] %vm3525, %v3478
        %3551 = vst.msk [vmem:[#allocation4 + $0xc8] sm:$0xff] %vm3525, %v3480
        %3552 = vst.msk [vmem:[#allocation4 + $0xd0] sm:$0xff] %vm3525, %v3482
        %3553 = vst.msk [vmem:[#allocation4 + $0xd8] sm:$0xff] %vm3525, %v3484
        %3554 = vst.msk [vmem:[#allocation4 + $0xe0] sm:$0xff] %vm3525, %v3486
        %3555 = vst.msk [vmem:[#allocation4 + $0xe8] sm:$0xff] %vm3525, %v3488
        %3556 = vst.msk [vmem:[#allocation4 + $0xf0] sm:$0xff] %vm3525, %v3490
        %3557 = vst.msk [vmem:[#allocation4 + $0xf8] sm:$0xff] %vm3525, %v3492
        %v3558 = vld [vmem:[%s3364 + $0x1] sm:$0xff]
        %v3559 = vld [vmem:[%s3364 + $0x9] sm:$0xff]
        %v3560 = vld [vmem:[%s3364 + $0x19] sm:$0xff]
        %v3561 = vld [vmem:[%s3364 + $0x21] sm:$0xff]
        %v3562 = vld [vmem:[%s3364 + $0x31] sm:$0xff]
        %v3563 = vld [vmem:[%s3364 + $0x39] sm:$0xff]
        %v3564 = vld [vmem:[%s3364 + $0x49] sm:$0xff]
        %v3565 = vld [vmem:[%s3364 + $0x51] sm:$0xff]
        %v3566 = vld [vmem:[%s3364 + $0x61] sm:$0xff]
        %v3567 = vld [vmem:[%s3364 + $0x69] sm:$0xff]
        %v3568 = vld [vmem:[%s3364 + $0x79] sm:$0xff]
        %v3569 = vld [vmem:[%s3364 + $0x81] sm:$0xff]
        %v3570 = vld [vmem:[%s3364 + $0x91] sm:$0xff]
        %v3571 = vld [vmem:[%s3364 + $0x99] sm:$0xff]
        %v3572 = vld [vmem:[%s3364 + $0xa9] sm:$0xff]
        %v3573 = vld [vmem:[%s3364 + $0xb1] sm:$0xff]
        %v3574 = vld [vmem:[%s3364 + $0xc1] sm:$0xff]
        %v3575 = vld [vmem:[%s3364 + $0xc9] sm:$0xff]
        %v3576 = vld [vmem:[%s3364 + $0xd9] sm:$0xff]
        %v3577 = vld [vmem:[%s3364 + $0xe1] sm:$0xff]
        %v3578 = vld [vmem:[%s3364 + $0xf1] sm:$0xff]
        %v3579 = vld [vmem:[%s3364 + $0xf9] sm:$0xff]
        %v3580 = vld [vmem:[%s3364 + $0x109] sm:$0xff]
        %v3581 = vld [vmem:[%s3364 + $0x111] sm:$0xff]
        %v3582 = vld [vmem:[%s3364 + $0x121] sm:$0xff]
        %v3583 = vld [vmem:[%s3364 + $0x129] sm:$0xff]
        %v3584 = vld [vmem:[%s3364 + $0x139] sm:$0xff]
        %v3585 = vld [vmem:[%s3364 + $0x141] sm:$0xff]
        %v3586 = vld [vmem:[%s3364 + $0x151] sm:$0xff]
        %v3587 = vld [vmem:[%s3364 + $0x159] sm:$0xff]
        %v3588 = vld [vmem:[%s3364 + $0x169] sm:$0xff]
        %v3589 = vld [vmem:[%s3364 + $0x171] sm:$0xff]
        %3622 = vrot.lane.b32.xlu0 %v3558, 28
        %v3623 = vpop.permute.xlu0 %3622
        %3624 = vrot.lane.b32.xlu0 %v3559, 28
        %v3625 = vpop.permute.xlu0 %3624
        %3626 = vrot.lane.b32.xlu0 %v3560, 28
        %v3627 = vpop.permute.xlu0 %3626
        %3628 = vrot.lane.b32.xlu0 %v3561, 28
        %v3629 = vpop.permute.xlu0 %3628
        %3630 = vrot.lane.b32.xlu0 %v3562, 28
        %v3631 = vpop.permute.xlu0 %3630
        %3632 = vrot.lane.b32.xlu0 %v3563, 28
        %v3633 = vpop.permute.xlu0 %3632
        %3634 = vrot.lane.b32.xlu0 %v3564, 28
        %v3635 = vpop.permute.xlu0 %3634
        %3636 = vrot.lane.b32.xlu0 %v3565, 28
        %v3637 = vpop.permute.xlu0 %3636
        %3638 = vrot.lane.b32.xlu0 %v3566, 28
        %v3639 = vpop.permute.xlu0 %3638
        %3640 = vrot.lane.b32.xlu0 %v3567, 28
        %v3641 = vpop.permute.xlu0 %3640
        %3642 = vrot.lane.b32.xlu0 %v3568, 28
        %v3643 = vpop.permute.xlu0 %3642
        %3644 = vrot.lane.b32.xlu0 %v3569, 28
        %v3645 = vpop.permute.xlu0 %3644
        %3646 = vrot.lane.b32.xlu0 %v3570, 28
        %v3647 = vpop.permute.xlu0 %3646
        %3648 = vrot.lane.b32.xlu0 %v3571, 28
        %v3649 = vpop.permute.xlu0 %3648
        %3650 = vrot.lane.b32.xlu0 %v3572, 28
        %v3651 = vpop.permute.xlu0 %3650
        %3652 = vrot.lane.b32.xlu0 %v3573, 28
        %v3653 = vpop.permute.xlu0 %3652
        %3654 = vrot.lane.b32.xlu0 %v3574, 28
        %v3655 = vpop.permute.xlu0 %3654
        %3656 = vrot.lane.b32.xlu0 %v3575, 28
        %v3657 = vpop.permute.xlu0 %3656
        %3658 = vrot.lane.b32.xlu0 %v3576, 28
        %v3659 = vpop.permute.xlu0 %3658
        %3660 = vrot.lane.b32.xlu0 %v3577, 28
        %v3661 = vpop.permute.xlu0 %3660
        %3662 = vrot.lane.b32.xlu0 %v3578, 28
        %v3663 = vpop.permute.xlu0 %3662
        %3664 = vrot.lane.b32.xlu0 %v3579, 28
        %v3665 = vpop.permute.xlu0 %3664
        %3666 = vrot.lane.b32.xlu0 %v3580, 28
        %v3667 = vpop.permute.xlu0 %3666
        %3668 = vrot.lane.b32.xlu0 %v3581, 28
        %v3669 = vpop.permute.xlu0 %3668
        %3670 = vrot.lane.b32.xlu0 %v3582, 28
        %v3671 = vpop.permute.xlu0 %3670
        %3672 = vrot.lane.b32.xlu0 %v3583, 28
        %v3673 = vpop.permute.xlu0 %3672
        %3674 = vrot.lane.b32.xlu0 %v3584, 28
        %v3675 = vpop.permute.xlu0 %3674
        %3676 = vrot.lane.b32.xlu0 %v3585, 28
        %v3677 = vpop.permute.xlu0 %3676
        %3678 = vrot.lane.b32.xlu0 %v3586, 28
        %v3679 = vpop.permute.xlu0 %3678
        %3680 = vrot.lane.b32.xlu0 %v3587, 28
        %v3681 = vpop.permute.xlu0 %3680
        %3682 = vrot.lane.b32.xlu0 %v3588, 28
        %v3683 = vpop.permute.xlu0 %3682
        %3684 = vrot.lane.b32.xlu0 %v3589, 28
        %v3685 = vpop.permute.xlu0 %3684
        %vm3718 = vcmask 261344
        %3719 = vst.msk [vmem:[#allocation4] sm:$0xff] %vm3718, %v3623
        %3720 = vst.msk [vmem:[#allocation4 + $0x8] sm:$0xff] %vm3718, %v3625
        %3721 = vst.msk [vmem:[#allocation4 + $0x10] sm:$0xff] %vm3718, %v3627
        %3722 = vst.msk [vmem:[#allocation4 + $0x18] sm:$0xff] %vm3718, %v3629
        %3723 = vst.msk [vmem:[#allocation4 + $0x20] sm:$0xff] %vm3718, %v3631
        %3724 = vst.msk [vmem:[#allocation4 + $0x28] sm:$0xff] %vm3718, %v3633
        %3725 = vst.msk [vmem:[#allocation4 + $0x30] sm:$0xff] %vm3718, %v3635
        %3726 = vst.msk [vmem:[#allocation4 + $0x38] sm:$0xff] %vm3718, %v3637
        %3727 = vst.msk [vmem:[#allocation4 + $0x40] sm:$0xff] %vm3718, %v3639
        %3728 = vst.msk [vmem:[#allocation4 + $0x48] sm:$0xff] %vm3718, %v3641
        %3729 = vst.msk [vmem:[#allocation4 + $0x50] sm:$0xff] %vm3718, %v3643
        %3730 = vst.msk [vmem:[#allocation4 + $0x58] sm:$0xff] %vm3718, %v3645
        %3731 = vst.msk [vmem:[#allocation4 + $0x60] sm:$0xff] %vm3718, %v3647
        %3732 = vst.msk [vmem:[#allocation4 + $0x68] sm:$0xff] %vm3718, %v3649
        %3733 = vst.msk [vmem:[#allocation4 + $0x70] sm:$0xff] %vm3718, %v3651
        %3734 = vst.msk [vmem:[#allocation4 + $0x78] sm:$0xff] %vm3718, %v3653
        %3735 = vst.msk [vmem:[#allocation4 + $0x80] sm:$0xff] %vm3718, %v3655
        %3736 = vst.msk [vmem:[#allocation4 + $0x88] sm:$0xff] %vm3718, %v3657
        %3737 = vst.msk [vmem:[#allocation4 + $0x90] sm:$0xff] %vm3718, %v3659
        %3738 = vst.msk [vmem:[#allocation4 + $0x98] sm:$0xff] %vm3718, %v3661
        %3739 = vst.msk [vmem:[#allocation4 + $0xa0] sm:$0xff] %vm3718, %v3663
        %3740 = vst.msk [vmem:[#allocation4 + $0xa8] sm:$0xff] %vm3718, %v3665
        %3741 = vst.msk [vmem:[#allocation4 + $0xb0] sm:$0xff] %vm3718, %v3667
        %3742 = vst.msk [vmem:[#allocation4 + $0xb8] sm:$0xff] %vm3718, %v3669
        %3743 = vst.msk [vmem:[#allocation4 + $0xc0] sm:$0xff] %vm3718, %v3671
        %3744 = vst.msk [vmem:[#allocation4 + $0xc8] sm:$0xff] %vm3718, %v3673
        %3745 = vst.msk [vmem:[#allocation4 + $0xd0] sm:$0xff] %vm3718, %v3675
        %3746 = vst.msk [vmem:[#allocation4 + $0xd8] sm:$0xff] %vm3718, %v3677
        %3747 = vst.msk [vmem:[#allocation4 + $0xe0] sm:$0xff] %vm3718, %v3679
        %3748 = vst.msk [vmem:[#allocation4 + $0xe8] sm:$0xff] %vm3718, %v3681
        %3749 = vst.msk [vmem:[#allocation4 + $0xf0] sm:$0xff] %vm3718, %v3683
        %3750 = vst.msk [vmem:[#allocation4 + $0xf8] sm:$0xff] %vm3718, %v3685
        %v3751 = vld [vmem:[%s3364 + $0x2] sm:$0xff]
        %v3752 = vld [vmem:[%s3364 + $0xa] sm:$0xff]
        %v3753 = vld [vmem:[%s3364 + $0x1a] sm:$0xff]
        %v3754 = vld [vmem:[%s3364 + $0x22] sm:$0xff]
        %v3755 = vld [vmem:[%s3364 + $0x32] sm:$0xff]
        %v3756 = vld [vmem:[%s3364 + $0x3a] sm:$0xff]
        %v3757 = vld [vmem:[%s3364 + $0x4a] sm:$0xff]
        %v3758 = vld [vmem:[%s3364 + $0x52] sm:$0xff]
        %v3759 = vld [vmem:[%s3364 + $0x62] sm:$0xff]
        %v3760 = vld [vmem:[%s3364 + $0x6a] sm:$0xff]
        %v3761 = vld [vmem:[%s3364 + $0x7a] sm:$0xff]
        %v3762 = vld [vmem:[%s3364 + $0x82] sm:$0xff]
        %v3763 = vld [vmem:[%s3364 + $0x92] sm:$0xff]
        %v3764 = vld [vmem:[%s3364 + $0x9a] sm:$0xff]
        %v3765 = vld [vmem:[%s3364 + $0xaa] sm:$0xff]
        %v3766 = vld [vmem:[%s3364 + $0xb2] sm:$0xff]
        %v3767 = vld [vmem:[%s3364 + $0xc2] sm:$0xff]
        %v3768 = vld [vmem:[%s3364 + $0xca] sm:$0xff]
        %v3769 = vld [vmem:[%s3364 + $0xda] sm:$0xff]
        %v3770 = vld [vmem:[%s3364 + $0xe2] sm:$0xff]
        %v3771 = vld [vmem:[%s3364 + $0xf2] sm:$0xff]
        %v3772 = vld [vmem:[%s3364 + $0xfa] sm:$0xff]
        %v3773 = vld [vmem:[%s3364 + $0x10a] sm:$0xff]
        %v3774 = vld [vmem:[%s3364 + $0x112] sm:$0xff]
        %v3775 = vld [vmem:[%s3364 + $0x122] sm:$0xff]
        %v3776 = vld [vmem:[%s3364 + $0x12a] sm:$0xff]
        %v3777 = vld [vmem:[%s3364 + $0x13a] sm:$0xff]
        %v3778 = vld [vmem:[%s3364 + $0x142] sm:$0xff]
        %v3779 = vld [vmem:[%s3364 + $0x152] sm:$0xff]
        %v3780 = vld [vmem:[%s3364 + $0x15a] sm:$0xff]
        %v3781 = vld [vmem:[%s3364 + $0x16a] sm:$0xff]
        %v3782 = vld [vmem:[%s3364 + $0x172] sm:$0xff]
        %3815 = vrot.lane.b32.xlu0 %v3751, 32
        %v3816 = vpop.permute.xlu0 %3815
        %3817 = vrot.lane.b32.xlu0 %v3752, 32
        %v3818 = vpop.permute.xlu0 %3817
        %3819 = vrot.lane.b32.xlu0 %v3753, 32
        %v3820 = vpop.permute.xlu0 %3819
        %3821 = vrot.lane.b32.xlu0 %v3754, 32
        %v3822 = vpop.permute.xlu0 %3821
        %3823 = vrot.lane.b32.xlu0 %v3755, 32
        %v3824 = vpop.permute.xlu0 %3823
        %3825 = vrot.lane.b32.xlu0 %v3756, 32
        %v3826 = vpop.permute.xlu0 %3825
        %3827 = vrot.lane.b32.xlu0 %v3757, 32
        %v3828 = vpop.permute.xlu0 %3827
        %3829 = vrot.lane.b32.xlu0 %v3758, 32
        %v3830 = vpop.permute.xlu0 %3829
        %3831 = vrot.lane.b32.xlu0 %v3759, 32
        %v3832 = vpop.permute.xlu0 %3831
        %3833 = vrot.lane.b32.xlu0 %v3760, 32
        %v3834 = vpop.permute.xlu0 %3833
        %3835 = vrot.lane.b32.xlu0 %v3761, 32
        %v3836 = vpop.permute.xlu0 %3835
        %3837 = vrot.lane.b32.xlu0 %v3762, 32
        %v3838 = vpop.permute.xlu0 %3837
        %3839 = vrot.lane.b32.xlu0 %v3763, 32
        %v3840 = vpop.permute.xlu0 %3839
        %3841 = vrot.lane.b32.xlu0 %v3764, 32
        %v3842 = vpop.permute.xlu0 %3841
        %3843 = vrot.lane.b32.xlu0 %v3765, 32
        %v3844 = vpop.permute.xlu0 %3843
        %3845 = vrot.lane.b32.xlu0 %v3766, 32
        %v3846 = vpop.permute.xlu0 %3845
        %3847 = vrot.lane.b32.xlu0 %v3767, 32
        %v3848 = vpop.permute.xlu0 %3847
        %3849 = vrot.lane.b32.xlu0 %v3768, 32
        %v3850 = vpop.permute.xlu0 %3849
        %3851 = vrot.lane.b32.xlu0 %v3769, 32
        %v3852 = vpop.permute.xlu0 %3851
        %3853 = vrot.lane.b32.xlu0 %v3770, 32
        %v3854 = vpop.permute.xlu0 %3853
        %3855 = vrot.lane.b32.xlu0 %v3771, 32
        %v3856 = vpop.permute.xlu0 %3855
        %3857 = vrot.lane.b32.xlu0 %v3772, 32
        %v3858 = vpop.permute.xlu0 %3857
        %3859 = vrot.lane.b32.xlu0 %v3773, 32
        %v3860 = vpop.permute.xlu0 %3859
        %3861 = vrot.lane.b32.xlu0 %v3774, 32
        %v3862 = vpop.permute.xlu0 %3861
        %3863 = vrot.lane.b32.xlu0 %v3775, 32
        %v3864 = vpop.permute.xlu0 %3863
        %3865 = vrot.lane.b32.xlu0 %v3776, 32
        %v3866 = vpop.permute.xlu0 %3865
        %3867 = vrot.lane.b32.xlu0 %v3777, 32
        %v3868 = vpop.permute.xlu0 %3867
        %3869 = vrot.lane.b32.xlu0 %v3778, 32
        %v3870 = vpop.permute.xlu0 %3869
        %3871 = vrot.lane.b32.xlu0 %v3779, 32
        %v3872 = vpop.permute.xlu0 %3871
        %3873 = vrot.lane.b32.xlu0 %v3780, 32
        %v3874 = vpop.permute.xlu0 %3873
        %3875 = vrot.lane.b32.xlu0 %v3781, 32
        %v3876 = vpop.permute.xlu0 %3875
        %3877 = vrot.lane.b32.xlu0 %v3782, 32
        %v3878 = vpop.permute.xlu0 %3877
        %vm3911 = vcmask 294144
        %3912 = vst.msk [vmem:[#allocation4] sm:$0xff] %vm3911, %v3816
        %3913 = vst.msk [vmem:[#allocation4 + $0x8] sm:$0xff] %vm3911, %v3818
        %3914 = vst.msk [vmem:[#allocation4 + $0x10] sm:$0xff] %vm3911, %v3820
        %3915 = vst.msk [vmem:[#allocation4 + $0x18] sm:$0xff] %vm3911, %v3822
        %3916 = vst.msk [vmem:[#allocation4 + $0x20] sm:$0xff] %vm3911, %v3824
        %3917 = vst.msk [vmem:[#allocation4 + $0x28] sm:$0xff] %vm3911, %v3826
        %3918 = vst.msk [vmem:[#allocation4 + $0x30] sm:$0xff] %vm3911, %v3828
        %3919 = vst.msk [vmem:[#allocation4 + $0x38] sm:$0xff] %vm3911, %v3830
        %3920 = vst.msk [vmem:[#allocation4 + $0x40] sm:$0xff] %vm3911, %v3832
        %3921 = vst.msk [vmem:[#allocation4 + $0x48] sm:$0xff] %vm3911, %v3834
        %3922 = vst.msk [vmem:[#allocation4 + $0x50] sm:$0xff] %vm3911, %v3836
        %3923 = vst.msk [vmem:[#allocation4 + $0x58] sm:$0xff] %vm3911, %v3838
        %3924 = vst.msk [vmem:[#allocation4 + $0x60] sm:$0xff] %vm3911, %v3840
        %3925 = vst.msk [vmem:[#allocation4 + $0x68] sm:$0xff] %vm3911, %v3842
        %3926 = vst.msk [vmem:[#allocation4 + $0x70] sm:$0xff] %vm3911, %v3844
        %3927 = vst.msk [vmem:[#allocation4 + $0x78] sm:$0xff] %vm3911, %v3846
        %3928 = vst.msk [vmem:[#allocation4 + $0x80] sm:$0xff] %vm3911, %v3848
        %3929 = vst.msk [vmem:[#allocation4 + $0x88] sm:$0xff] %vm3911, %v3850
        %3930 = vst.msk [vmem:[#allocation4 + $0x90] sm:$0xff] %vm3911, %v3852
        %3931 = vst.msk [vmem:[#allocation4 + $0x98] sm:$0xff] %vm3911, %v3854
        %3932 = vst.msk [vmem:[#allocation4 + $0xa0] sm:$0xff] %vm3911, %v3856
        %3933 = vst.msk [vmem:[#allocation4 + $0xa8] sm:$0xff] %vm3911, %v3858
        %3934 = vst.msk [vmem:[#allocation4 + $0xb0] sm:$0xff] %vm3911, %v3860
        %3935 = vst.msk [vmem:[#allocation4 + $0xb8] sm:$0xff] %vm3911, %v3862
        %3936 = vst.msk [vmem:[#allocation4 + $0xc0] sm:$0xff] %vm3911, %v3864
        %3937 = vst.msk [vmem:[#allocation4 + $0xc8] sm:$0xff] %vm3911, %v3866
        %3938 = vst.msk [vmem:[#allocation4 + $0xd0] sm:$0xff] %vm3911, %v3868
        %3939 = vst.msk [vmem:[#allocation4 + $0xd8] sm:$0xff] %vm3911, %v3870
        %3940 = vst.msk [vmem:[#allocation4 + $0xe0] sm:$0xff] %vm3911, %v3872
        %3941 = vst.msk [vmem:[#allocation4 + $0xe8] sm:$0xff] %vm3911, %v3874
        %3942 = vst.msk [vmem:[#allocation4 + $0xf0] sm:$0xff] %vm3911, %v3876
        %3943 = vst.msk [vmem:[#allocation4 + $0xf8] sm:$0xff] %vm3911, %v3878
        %v3944 = vld [vmem:[#allocation4] sm:$0xff]
        %v3945 = vld [vmem:[#allocation4 + $0x8] sm:$0xff]
        %v3946 = vld [vmem:[#allocation4 + $0x10] sm:$0xff]
        %v3947 = vld [vmem:[#allocation4 + $0x18] sm:$0xff]
        %v3948 = vld [vmem:[#allocation4 + $0x20] sm:$0xff]
        %v3949 = vld [vmem:[#allocation4 + $0x28] sm:$0xff]
        %v3950 = vld [vmem:[#allocation4 + $0x30] sm:$0xff]
        %v3951 = vld [vmem:[#allocation4 + $0x38] sm:$0xff]
        %v3952 = vld [vmem:[#allocation4 + $0x40] sm:$0xff]
        %v3953 = vld [vmem:[#allocation4 + $0x48] sm:$0xff]
        %v3954 = vld [vmem:[#allocation4 + $0x50] sm:$0xff]
        %v3955 = vld [vmem:[#allocation4 + $0x58] sm:$0xff]
        %v3956 = vld [vmem:[#allocation4 + $0x60] sm:$0xff]
        %v3957 = vld [vmem:[#allocation4 + $0x68] sm:$0xff]
        %v3958 = vld [vmem:[#allocation4 + $0x70] sm:$0xff]
        %v3959 = vld [vmem:[#allocation4 + $0x78] sm:$0xff]
        %v3960 = vld [vmem:[#allocation4 + $0x80] sm:$0xff]
        %v3961 = vld [vmem:[#allocation4 + $0x88] sm:$0xff]
        %v3962 = vld [vmem:[#allocation4 + $0x90] sm:$0xff]
        %v3963 = vld [vmem:[#allocation4 + $0x98] sm:$0xff]
        %v3964 = vld [vmem:[#allocation4 + $0xa0] sm:$0xff]
        %v3965 = vld [vmem:[#allocation4 + $0xa8] sm:$0xff]
        %v3966 = vld [vmem:[#allocation4 + $0xb0] sm:$0xff]
        %v3967 = vld [vmem:[#allocation4 + $0xb8] sm:$0xff]
        %v3968 = vld [vmem:[#allocation4 + $0xc0] sm:$0xff]
        %v3969 = vld [vmem:[#allocation4 + $0xc8] sm:$0xff]
        %v3970 = vld [vmem:[#allocation4 + $0xd0] sm:$0xff]
        %v3971 = vld [vmem:[#allocation4 + $0xd8] sm:$0xff]
        %v3972 = vld [vmem:[#allocation4 + $0xe0] sm:$0xff]
        %v3973 = vld [vmem:[#allocation4 + $0xe8] sm:$0xff]
        %v3974 = vld [vmem:[#allocation4 + $0xf0] sm:$0xff]
        %v3975 = vld [vmem:[#allocation4 + $0xf8] sm:$0xff]
        %v3976 = vpack.c.bf16 %v3945, %v3944
        %v3977 = vpack.c.bf16 %v3947, %v3946
        %v3978 = vpack.c.bf16 %v3949, %v3948
        %v3979 = vpack.c.bf16 %v3951, %v3950
        %v3980 = vpack.c.bf16 %v3953, %v3952
        %v3981 = vpack.c.bf16 %v3955, %v3954
        %v3982 = vpack.c.bf16 %v3957, %v3956
        %v3983 = vpack.c.bf16 %v3959, %v3958
        %v3984 = vpack.c.bf16 %v3961, %v3960
        %v3985 = vpack.c.bf16 %v3963, %v3962
        %v3986 = vpack.c.bf16 %v3965, %v3964
        %v3987 = vpack.c.bf16 %v3967, %v3966
        %v3988 = vpack.c.bf16 %v3969, %v3968
        %v3989 = vpack.c.bf16 %v3971, %v3970
        %v3990 = vpack.c.bf16 %v3973, %v3972
        %v3991 = vpack.c.bf16 %v3975, %v3974
        %s3992 = scalar_lea.vmem %s1, 64
        %v3993 = vld [vmem:[%s3992] sm:$0xf]
        %v3994 = vld [vmem:[%s3992 + $0x4] sm:$0xf]
        %v3995 = vld [vmem:[%s3992 + $0x8] sm:$0xf]
        %v3996 = vld [vmem:[%s3992 + $0xc] sm:$0xf]
        %v3997 = vld [vmem:[%s3992 + $0x10] sm:$0xf]
        %v3998 = vld [vmem:[%s3992 + $0x14] sm:$0xf]
        %v3999 = vld [vmem:[%s3992 + $0x18] sm:$0xf]
        %v4000 = vld [vmem:[%s3992 + $0x1c] sm:$0xf]
        %v4001 = vld [vmem:[%s3992 + $0x20] sm:$0xf]
        %v4002 = vld [vmem:[%s3992 + $0x24] sm:$0xf]
        %v4003 = vld [vmem:[%s3992 + $0x28] sm:$0xf]
        %v4004 = vld [vmem:[%s3992 + $0x2c] sm:$0xf]
        %v4005 = vld [vmem:[%s3992 + $0x30] sm:$0xf]
        %v4006 = vld [vmem:[%s3992 + $0x34] sm:$0xf]
        %v4007 = vld [vmem:[%s3992 + $0x38] sm:$0xf]
        %v4008 = vld [vmem:[%s3992 + $0x3c] sm:$0xf]
        %v4025 = vunpack.c.l.b16 %v3993
        %v4026 = vunpack.c.l.b16 %v3994
        %v4027 = vunpack.c.l.b16 %v3995
        %v4028 = vunpack.c.l.b16 %v3996
        %v4029 = vunpack.c.l.b16 %v3997
        %v4030 = vunpack.c.l.b16 %v3998
        %v4031 = vunpack.c.l.b16 %v3999
        %v4032 = vunpack.c.l.b16 %v4000
        %v4033 = vunpack.c.l.b16 %v4001
        %v4034 = vunpack.c.l.b16 %v4002
        %v4035 = vunpack.c.l.b16 %v4003
        %v4036 = vunpack.c.l.b16 %v4004
        %v4037 = vunpack.c.l.b16 %v4005
        %v4038 = vunpack.c.l.b16 %v4006
        %v4039 = vunpack.c.l.b16 %v4007
        %v4040 = vunpack.c.l.b16 %v4008
        %v4041 = vpack.c.b16 %v4026, %v4025
        %v4042 = vpack.c.b16 %v4028, %v4027
        %v4043 = vpack.c.b16 %v4030, %v4029
        %v4044 = vpack.c.b16 %v4032, %v4031
        %v4045 = vpack.c.b16 %v4034, %v4033
        %v4046 = vpack.c.b16 %v4036, %v4035
        %v4047 = vpack.c.b16 %v4038, %v4037
        %v4048 = vpack.c.b16 %v4040, %v4039
        %4057 = vmatprep.subr.bf16.mxu0 0
        %4058 = vmatpush1.bf16.msra.mxu0 %v4041
        %4059 = vmatprep.subr.bf16.mxu0 0
        %4060 = vmatpush1.bf16.msra.mxu0 %v4042
        %4061 = vmatprep.subr.bf16.mxu0 0
        %4062 = vmatpush1.bf16.msra.mxu0 %v4043
        %4063 = vmatprep.subr.bf16.mxu0 0
        %4064 = vmatpush1.bf16.msra.mxu0 %v4044
        %4065 = vmatprep.subr.bf16.mxu0 0
        %4066 = vmatpush1.bf16.msra.mxu0 %v4045
        %4067 = vmatprep.subr.bf16.mxu0 0
        %4068 = vmatpush1.bf16.msra.mxu0 %v4046
        %4069 = vmatprep.subr.bf16.mxu0 0
        %4070 = vmatpush1.bf16.msra.mxu0 %v4047
        %4071 = vmatprep.subr.bf16.mxu0 0
        %4072 = vmatpush1.bf16.msra.mxu0 %v4048
        %4073 = vmatprep.subr.bf16.mxu0 0
        %4074 = vmatpush1.bf16.msra.mxu0 0
        %4075 = vmatprep.subr.bf16.mxu0 0
        %4076 = vmatpush1.bf16.msra.mxu0 0
        %4077 = vmatprep.subr.bf16.mxu0 0
        %4078 = vmatpush1.bf16.msra.mxu0 0
        %4079 = vmatprep.subr.bf16.mxu0 0
        %4080 = vmatpush1.bf16.msra.mxu0 0
        %4081 = vmatprep.subr.bf16.mxu0 0
        %4082 = vmatpush1.bf16.msra.mxu0 0
        %4083 = vmatprep.subr.bf16.mxu0 0
        %4084 = vmatpush1.bf16.msra.mxu0 0
        %4085 = vmatprep.subr.bf16.mxu0 0
        %4086 = vmatpush1.bf16.msra.mxu0 0
        %4087 = vmatprep.subr.bf16.mxu0 0
        %4088 = vmatpush1.bf16.msra.mxu0 0
        %4089 = vmatprep.mubr.bf16.mxu0 0
        %4090 = vmatmul.mubr.bf16.gmra.mrb[0].mxu0 %v3976
        %v4091 = vpop.f32.mrb[0].mxu0
        %v4092 = vadd.f32 0.0, %v4091
        %v4093 = vpop.f32.mrb[0].mxu0
        %v4094 = vpop.f32.mrb[0].mxu0
        %v4095 = vadd.f32 0.0, %v4094
        %v4096 = vpop.f32.mrb[0].mxu0
        %4097 = vmatprep.mubr.bf16.mxu0 0
        %4098 = vmatmul.mubr.bf16.gmra.mrb[0].mxu0 %v3977
        %v4099 = vpop.f32.mrb[0].mxu0
        %v4100 = vadd.f32 0.0, %v4099
        %v4101 = vpop.f32.mrb[0].mxu0
        %v4102 = vpop.f32.mrb[0].mxu0
        %v4103 = vadd.f32 0.0, %v4102
        %v4104 = vpop.f32.mrb[0].mxu0
        %4105 = vmatprep.mubr.bf16.mxu0 0
        %4106 = vmatmul.mubr.bf16.gmra.mrb[0].mxu0 %v3978
        %v4107 = vpop.f32.mrb[0].mxu0
        %v4108 = vadd.f32 0.0, %v4107
        %v4109 = vpop.f32.mrb[0].mxu0
        %v4110 = vpop.f32.mrb[0].mxu0
        %v4111 = vadd.f32 0.0, %v4110
        %v4112 = vpop.f32.mrb[0].mxu0
        %4113 = vmatprep.mubr.bf16.mxu0 0
        %4114 = vmatmul.mubr.bf16.gmra.mrb[0].mxu0 %v3979
        %v4115 = vpop.f32.mrb[0].mxu0
        %v4116 = vadd.f32 0.0, %v4115
        %v4117 = vpop.f32.mrb[0].mxu0
        %v4118 = vpop.f32.mrb[0].mxu0
        %v4119 = vadd.f32 0.0, %v4118
        %v4120 = vpop.f32.mrb[0].mxu0
        %4121 = vmatprep.mubr.bf16.mxu0 0
        %4122 = vmatmul.mubr.bf16.gmra.mrb[0].mxu0 %v3980
        %v4123 = vpop.f32.mrb[0].mxu0
        %v4124 = vadd.f32 0.0, %v4123
        %v4125 = vpop.f32.mrb[0].mxu0
        %v4126 = vpop.f32.mrb[0].mxu0
        %v4127 = vadd.f32 0.0, %v4126
        %v4128 = vpop.f32.mrb[0].mxu0
        %4129 = vmatprep.mubr.bf16.mxu0 0
        %4130 = vmatmul.mubr.bf16.gmra.mrb[0].mxu0 %v3981
        %v4131 = vpop.f32.mrb[0].mxu0
        %v4132 = vadd.f32 0.0, %v4131
        %v4133 = vpop.f32.mrb[0].mxu0
        %v4134 = vpop.f32.mrb[0].mxu0
        %v4135 = vadd.f32 0.0, %v4134
        %v4136 = vpop.f32.mrb[0].mxu0
        %4137 = vmatprep.mubr.bf16.mxu0 0
        %4138 = vmatmul.mubr.bf16.gmra.mrb[0].mxu0 %v3982
        %v4139 = vpop.f32.mrb[0].mxu0
        %v4140 = vadd.f32 0.0, %v4139
        %v4141 = vpop.f32.mrb[0].mxu0
        %v4142 = vpop.f32.mrb[0].mxu0
        %v4143 = vadd.f32 0.0, %v4142
        %v4144 = vpop.f32.mrb[0].mxu0
        %4145 = vmatprep.mubr.bf16.mxu0 0
        %4146 = vmatmul.mubr.bf16.gmra.mrb[0].mxu0 %v3983
        %v4147 = vpop.f32.mrb[0].mxu0
        %v4148 = vadd.f32 0.0, %v4147
        %v4149 = vpop.f32.mrb[0].mxu0
        %v4150 = vpop.f32.mrb[0].mxu0
        %v4151 = vadd.f32 0.0, %v4150
        %v4152 = vpop.f32.mrb[0].mxu0
        %4153 = vmatprep.mubr.bf16.mxu0 0
        %4154 = vmatmul.mubr.bf16.gmra.mrb[0].mxu0 %v3984
        %v4155 = vpop.f32.mrb[0].mxu0
        %v4156 = vadd.f32 0.0, %v4155
        %v4157 = vpop.f32.mrb[0].mxu0
        %v4158 = vpop.f32.mrb[0].mxu0
        %v4159 = vadd.f32 0.0, %v4158
        %v4160 = vpop.f32.mrb[0].mxu0
        %4161 = vmatprep.mubr.bf16.mxu0 0
        %4162 = vmatmul.mubr.bf16.gmra.mrb[0].mxu0 %v3985
        %v4163 = vpop.f32.mrb[0].mxu0
        %v4164 = vadd.f32 0.0, %v4163
        %v4165 = vpop.f32.mrb[0].mxu0
        %v4166 = vpop.f32.mrb[0].mxu0
        %v4167 = vadd.f32 0.0, %v4166
        %v4168 = vpop.f32.mrb[0].mxu0
        %4169 = vmatprep.mubr.bf16.mxu0 0
        %4170 = vmatmul.mubr.bf16.gmra.mrb[0].mxu0 %v3986
        %v4171 = vpop.f32.mrb[0].mxu0
        %v4172 = vadd.f32 0.0, %v4171
        %v4173 = vpop.f32.mrb[0].mxu0
        %v4174 = vpop.f32.mrb[0].mxu0
        %v4175 = vadd.f32 0.0, %v4174
        %v4176 = vpop.f32.mrb[0].mxu0
        %4177 = vmatprep.mubr.bf16.mxu0 0
        %4178 = vmatmul.mubr.bf16.gmra.mrb[0].mxu0 %v3987
        %v4179 = vpop.f32.mrb[0].mxu0
        %v4180 = vadd.f32 0.0, %v4179
        %v4181 = vpop.f32.mrb[0].mxu0
        %v4182 = vpop.f32.mrb[0].mxu0
        %v4183 = vadd.f32 0.0, %v4182
        %v4184 = vpop.f32.mrb[0].mxu0
        %4185 = vmatprep.mubr.bf16.mxu0 0
        %4186 = vmatmul.mubr.bf16.gmra.mrb[0].mxu0 %v3988
        %v4187 = vpop.f32.mrb[0].mxu0
        %v4188 = vadd.f32 0.0, %v4187
        %v4189 = vpop.f32.mrb[0].mxu0
        %v4190 = vpop.f32.mrb[0].mxu0
        %v4191 = vadd.f32 0.0, %v4190
        %v4192 = vpop.f32.mrb[0].mxu0
        %4193 = vmatprep.mubr.bf16.mxu0 0
        %4194 = vmatmul.mubr.bf16.gmra.mrb[0].mxu0 %v3989
        %v4195 = vpop.f32.mrb[0].mxu0
        %v4196 = vadd.f32 0.0, %v4195
        %v4197 = vpop.f32.mrb[0].mxu0
        %v4198 = vpop.f32.mrb[0].mxu0
        %v4199 = vadd.f32 0.0, %v4198
        %v4200 = vpop.f32.mrb[0].mxu0
        %4201 = vmatprep.mubr.bf16.mxu0 0
        %4202 = vmatmul.mubr.bf16.gmra.mrb[0].mxu0 %v3990
        %v4203 = vpop.f32.mrb[0].mxu0
        %v4204 = vadd.f32 0.0, %v4203
        %v4205 = vpop.f32.mrb[0].mxu0
        %v4206 = vpop.f32.mrb[0].mxu0
        %v4207 = vadd.f32 0.0, %v4206
        %v4208 = vpop.f32.mrb[0].mxu0
        %4209 = vmatprep.mubr.bf16.mxu0 0
        %4210 = vmatmul.mubr.bf16.gmra.mrb[0].mxu0 %v3991
        %v4211 = vpop.f32.mrb[0].mxu0
        %v4212 = vadd.f32 0.0, %v4211
        %v4213 = vpop.f32.mrb[0].mxu0
        %v4214 = vpop.f32.mrb[0].mxu0
        %v4215 = vadd.f32 0.0, %v4214
        %v4216 = vpop.f32.mrb[0].mxu0
        %4217 = vdwg.mxu0
        %v4218 = vmax.f32 %v4092, 0.0
        %v4219 = vmax.f32 %v4095, 0.0
        %v4220 = vmax.f32 %v4100, 0.0
        %v4221 = vmax.f32 %v4103, 0.0
        %v4222 = vmax.f32 %v4108, 0.0
        %v4223 = vmax.f32 %v4111, 0.0
        %v4224 = vmax.f32 %v4116, 0.0
        %v4225 = vmax.f32 %v4119, 0.0
        %v4226 = vmax.f32 %v4124, 0.0
        %v4227 = vmax.f32 %v4127, 0.0
        %v4228 = vmax.f32 %v4132, 0.0
        %v4229 = vmax.f32 %v4135, 0.0
        %v4230 = vmax.f32 %v4140, 0.0
        %v4231 = vmax.f32 %v4143, 0.0
        %v4232 = vmax.f32 %v4148, 0.0
        %v4233 = vmax.f32 %v4151, 0.0
        %v4234 = vmax.f32 %v4156, 0.0
        %v4235 = vmax.f32 %v4159, 0.0
        %v4236 = vmax.f32 %v4164, 0.0
        %v4237 = vmax.f32 %v4167, 0.0
        %v4238 = vmax.f32 %v4172, 0.0
        %v4239 = vmax.f32 %v4175, 0.0
        %v4240 = vmax.f32 %v4180, 0.0
        %v4241 = vmax.f32 %v4183, 0.0
        %v4242 = vmax.f32 %v4188, 0.0
        %v4243 = vmax.f32 %v4191, 0.0
        %v4244 = vmax.f32 %v4196, 0.0
        %v4245 = vmax.f32 %v4199, 0.0
        %v4246 = vmax.f32 %v4204, 0.0
        %v4247 = vmax.f32 %v4207, 0.0
        %v4248 = vmax.f32 %v4212, 0.0
        %v4249 = vmax.f32 %v4215, 0.0
        %4250 = vst.msk [vmem:[#allocation2] sm:$0xff] %vm211, 0.0
        %4251 = vst.msk [vmem:[#allocation2 + $0x8] sm:$0xff] %vm211, 0.0
        %4252 = vst.msk [vmem:[#allocation2 + $0x10] sm:$0x3] %vm214, 0.0
        %4253 = vst.msk [vmem:[#allocation2 + $0x18] sm:$0xff] %vm211, 0.0
        %4254 = vst.msk [vmem:[#allocation2 + $0x20] sm:$0xff] %vm211, 0.0
        %4255 = vst.msk [vmem:[#allocation2 + $0x28] sm:$0x3] %vm214, 0.0
        %4256 = vst.msk [vmem:[#allocation2 + $0x30] sm:$0xff] %vm211, 0.0
        %4257 = vst.msk [vmem:[#allocation2 + $0x38] sm:$0xff] %vm211, 0.0
        %4258 = vst.msk [vmem:[#allocation2 + $0x40] sm:$0x3] %vm214, 0.0
        %4259 = vst.msk [vmem:[#allocation2 + $0x48] sm:$0xff] %vm211, 0.0
        %4260 = vst.msk [vmem:[#allocation2 + $0x50] sm:$0xff] %vm211, 0.0
        %4261 = vst.msk [vmem:[#allocation2 + $0x58] sm:$0x3] %vm214, 0.0
        %4262 = vst.msk [vmem:[#allocation2 + $0x60] sm:$0xff] %vm211, 0.0
        %4263 = vst.msk [vmem:[#allocation2 + $0x68] sm:$0xff] %vm211, 0.0
        %4264 = vst.msk [vmem:[#allocation2 + $0x70] sm:$0x3] %vm214, 0.0
        %4265 = vst.msk [vmem:[#allocation2 + $0x78] sm:$0xff] %vm211, 0.0
        %4266 = vst.msk [vmem:[#allocation2 + $0x80] sm:$0xff] %vm211, 0.0
        %4267 = vst.msk [vmem:[#allocation2 + $0x88] sm:$0x3] %vm214, 0.0
        %4268 = vst.msk [vmem:[#allocation2 + $0x90] sm:$0xff] %vm211, 0.0
        %4269 = vst.msk [vmem:[#allocation2 + $0x98] sm:$0xff] %vm211, 0.0
        %4270 = vst.msk [vmem:[#allocation2 + $0xa0] sm:$0x3] %vm214, 0.0
        %4271 = vst.msk [vmem:[#allocation2 + $0xa8] sm:$0xff] %vm211, 0.0
        %4272 = vst.msk [vmem:[#allocation2 + $0xb0] sm:$0xff] %vm211, 0.0
        %4273 = vst.msk [vmem:[#allocation2 + $0xb8] sm:$0x3] %vm214, 0.0
        %4274 = vst.msk [vmem:[#allocation2 + $0xc0] sm:$0xff] %vm211, 0.0
        %4275 = vst.msk [vmem:[#allocation2 + $0xc8] sm:$0xff] %vm211, 0.0
        %4276 = vst.msk [vmem:[#allocation2 + $0xd0] sm:$0x3] %vm214, 0.0
        %4277 = vst.msk [vmem:[#allocation2 + $0xd8] sm:$0xff] %vm211, 0.0
        %4278 = vst.msk [vmem:[#allocation2 + $0xe0] sm:$0xff] %vm211, 0.0
        %4279 = vst.msk [vmem:[#allocation2 + $0xe8] sm:$0x3] %vm214, 0.0
        %4280 = vst.msk [vmem:[#allocation2 + $0xf0] sm:$0xff] %vm211, 0.0
        %4281 = vst.msk [vmem:[#allocation2 + $0xf8] sm:$0xff] %vm211, 0.0
        %4282 = vst.msk [vmem:[#allocation2 + $0x100] sm:$0x3] %vm214, 0.0
        %4283 = vst.msk [vmem:[#allocation2 + $0x108] sm:$0xff] %vm211, 0.0
        %4284 = vst.msk [vmem:[#allocation2 + $0x110] sm:$0xff] %vm211, 0.0
        %4285 = vst.msk [vmem:[#allocation2 + $0x118] sm:$0x3] %vm214, 0.0
        %4286 = vst.msk [vmem:[#allocation2 + $0x120] sm:$0xff] %vm211, 0.0
        %4287 = vst.msk [vmem:[#allocation2 + $0x128] sm:$0xff] %vm211, 0.0
        %4288 = vst.msk [vmem:[#allocation2 + $0x130] sm:$0x3] %vm214, 0.0
        %4289 = vst.msk [vmem:[#allocation2 + $0x138] sm:$0xff] %vm211, 0.0
        %4290 = vst.msk [vmem:[#allocation2 + $0x140] sm:$0xff] %vm211, 0.0
        %4291 = vst.msk [vmem:[#allocation2 + $0x148] sm:$0x3] %vm214, 0.0
        %4292 = vst.msk [vmem:[#allocation2 + $0x150] sm:$0xff] %vm211, 0.0
        %4293 = vst.msk [vmem:[#allocation2 + $0x158] sm:$0xff] %vm211, 0.0
        %4294 = vst.msk [vmem:[#allocation2 + $0x160] sm:$0x3] %vm214, 0.0
        %4295 = vst.msk [vmem:[#allocation2 + $0x168] sm:$0xff] %vm211, 0.0
        %4296 = vst.msk [vmem:[#allocation2 + $0x170] sm:$0xff] %vm211, 0.0
        %4297 = vst.msk [vmem:[#allocation2 + $0x178] sm:$0x3] %vm214, 0.0
        %4298 = vst.msk [vmem:[#allocation2 + $0x180] sm:$0xff] %vm211, 0.0
        %4299 = vst.msk [vmem:[#allocation2 + $0x188] sm:$0xff] %vm211, 0.0
        %4300 = vst.msk [vmem:[#allocation2 + $0x190] sm:$0x3] %vm214, 0.0
        %4301 = vst.msk [vmem:[#allocation2 + $0x198] sm:$0xff] %vm211, 0.0
        %4302 = vst.msk [vmem:[#allocation2 + $0x1a0] sm:$0xff] %vm211, 0.0
        %4303 = vst.msk [vmem:[#allocation2 + $0x1a8] sm:$0x3] %vm214, 0.0
        %4304 = vst.msk [vmem:[%s299 + $0x1] sm:$0xff] %vm2302, %v4218
        %4305 = vst.msk [vmem:[%s299 + $0x9] sm:$0xff] %vm2302, %v4219
        %4306 = vst.msk [vmem:[%s299 + $0x19] sm:$0xff] %vm2302, %v4220
        %4307 = vst.msk [vmem:[%s299 + $0x21] sm:$0xff] %vm2302, %v4221
        %4308 = vst.msk [vmem:[%s299 + $0x31] sm:$0xff] %vm2302, %v4222
        %4309 = vst.msk [vmem:[%s299 + $0x39] sm:$0xff] %vm2302, %v4223
        %4310 = vst.msk [vmem:[%s299 + $0x49] sm:$0xff] %vm2302, %v4224
        %4311 = vst.msk [vmem:[%s299 + $0x51] sm:$0xff] %vm2302, %v4225
        %4312 = vst.msk [vmem:[%s299 + $0x61] sm:$0xff] %vm2302, %v4226
        %4313 = vst.msk [vmem:[%s299 + $0x69] sm:$0xff] %vm2302, %v4227
        %4314 = vst.msk [vmem:[%s299 + $0x79] sm:$0xff] %vm2302, %v4228
        %4315 = vst.msk [vmem:[%s299 + $0x81] sm:$0xff] %vm2302, %v4229
        %4316 = vst.msk [vmem:[%s299 + $0x91] sm:$0xff] %vm2302, %v4230
        %4317 = vst.msk [vmem:[%s299 + $0x99] sm:$0xff] %vm2302, %v4231
        %4318 = vst.msk [vmem:[%s299 + $0xa9] sm:$0xff] %vm2302, %v4232
        %4319 = vst.msk [vmem:[%s299 + $0xb1] sm:$0xff] %vm2302, %v4233
        %4320 = vst.msk [vmem:[%s299 + $0xc1] sm:$0xff] %vm2302, %v4234
        %4321 = vst.msk [vmem:[%s299 + $0xc9] sm:$0xff] %vm2302, %v4235
        %4322 = vst.msk [vmem:[%s299 + $0xd9] sm:$0xff] %vm2302, %v4236
        %4323 = vst.msk [vmem:[%s299 + $0xe1] sm:$0xff] %vm2302, %v4237
        %4324 = vst.msk [vmem:[%s299 + $0xf1] sm:$0xff] %vm2302, %v4238
        %4325 = vst.msk [vmem:[%s299 + $0xf9] sm:$0xff] %vm2302, %v4239
        %4326 = vst.msk [vmem:[%s299 + $0x109] sm:$0xff] %vm2302, %v4240
        %4327 = vst.msk [vmem:[%s299 + $0x111] sm:$0xff] %vm2302, %v4241
        %4328 = vst.msk [vmem:[%s299 + $0x121] sm:$0xff] %vm2302, %v4242
        %4329 = vst.msk [vmem:[%s299 + $0x129] sm:$0xff] %vm2302, %v4243
        %4330 = vst.msk [vmem:[%s299 + $0x139] sm:$0xff] %vm2302, %v4244
        %4331 = vst.msk [vmem:[%s299 + $0x141] sm:$0xff] %vm2302, %v4245
        %4332 = vst.msk [vmem:[%s299 + $0x151] sm:$0xff] %vm2302, %v4246
        %4333 = vst.msk [vmem:[%s299 + $0x159] sm:$0xff] %vm2302, %v4247
        %4334 = vst.msk [vmem:[%s299 + $0x169] sm:$0xff] %vm2302, %v4248
        %4335 = vst.msk [vmem:[%s299 + $0x171] sm:$0xff] %vm2302, %v4249
        %v4336 = vld [vmem:[#allocation2] sm:$0xff]
        %v4337 = vld [vmem:[#allocation2 + $0x8] sm:$0xff]
        %v4338 = vld [vmem:[#allocation2 + $0x18] sm:$0xff]
        %v4339 = vld [vmem:[#allocation2 + $0x20] sm:$0xff]
        %v4340 = vld [vmem:[#allocation2 + $0x30] sm:$0xff]
        %v4341 = vld [vmem:[#allocation2 + $0x38] sm:$0xff]
        %v4342 = vld [vmem:[#allocation2 + $0x48] sm:$0xff]
        %v4343 = vld [vmem:[#allocation2 + $0x50] sm:$0xff]
        %v4344 = vld [vmem:[#allocation2 + $0x60] sm:$0xff]
        %v4345 = vld [vmem:[#allocation2 + $0x68] sm:$0xff]
        %v4346 = vld [vmem:[#allocation2 + $0x78] sm:$0xff]
        %v4347 = vld [vmem:[#allocation2 + $0x80] sm:$0xff]
        %v4348 = vld [vmem:[#allocation2 + $0x90] sm:$0xff]
        %v4349 = vld [vmem:[#allocation2 + $0x98] sm:$0xff]
        %v4350 = vld [vmem:[#allocation2 + $0xa8] sm:$0xff]
        %v4351 = vld [vmem:[#allocation2 + $0xb0] sm:$0xff]
        %v4352 = vld [vmem:[#allocation2 + $0xc0] sm:$0xff]
        %v4353 = vld [vmem:[#allocation2 + $0xc8] sm:$0xff]
        %v4354 = vld [vmem:[#allocation2 + $0xd8] sm:$0xff]
        %v4355 = vld [vmem:[#allocation2 + $0xe0] sm:$0xff]
        %v4356 = vld [vmem:[#allocation2 + $0xf0] sm:$0xff]
        %v4357 = vld [vmem:[#allocation2 + $0xf8] sm:$0xff]
        %v4358 = vld [vmem:[#allocation2 + $0x108] sm:$0xff]
        %v4359 = vld [vmem:[#allocation2 + $0x110] sm:$0xff]
        %v4360 = vld [vmem:[#allocation2 + $0x120] sm:$0xff]
        %v4361 = vld [vmem:[#allocation2 + $0x128] sm:$0xff]
        %v4362 = vld [vmem:[#allocation2 + $0x138] sm:$0xff]
        %v4363 = vld [vmem:[#allocation2 + $0x140] sm:$0xff]
        %v4364 = vld [vmem:[#allocation2 + $0x150] sm:$0xff]
        %v4365 = vld [vmem:[#allocation2 + $0x158] sm:$0xff]
        %v4366 = vld [vmem:[#allocation2 + $0x168] sm:$0xff]
        %v4367 = vld [vmem:[#allocation2 + $0x170] sm:$0xff]
        %4368 = vst.msk [vmem:[#allocation4] sm:$0xff] %vm2302, %v4336
        %4369 = vst.msk [vmem:[#allocation4 + $0x8] sm:$0xff] %vm2302, %v4337
        %4370 = vst.msk [vmem:[#allocation4 + $0x10] sm:$0xff] %vm2302, %v4338
        %4371 = vst.msk [vmem:[#allocation4 + $0x18] sm:$0xff] %vm2302, %v4339
        %4372 = vst.msk [vmem:[#allocation4 + $0x20] sm:$0xff] %vm2302, %v4340
        %4373 = vst.msk [vmem:[#allocation4 + $0x28] sm:$0xff] %vm2302, %v4341
        %4374 = vst.msk [vmem:[#allocation4 + $0x30] sm:$0xff] %vm2302, %v4342
        %4375 = vst.msk [vmem:[#allocation4 + $0x38] sm:$0xff] %vm2302, %v4343
        %4376 = vst.msk [vmem:[#allocation4 + $0x40] sm:$0xff] %vm2302, %v4344
        %4377 = vst.msk [vmem:[#allocation4 + $0x48] sm:$0xff] %vm2302, %v4345
        %4378 = vst.msk [vmem:[#allocation4 + $0x50] sm:$0xff] %vm2302, %v4346
        %4379 = vst.msk [vmem:[#allocation4 + $0x58] sm:$0xff] %vm2302, %v4347
        %4380 = vst.msk [vmem:[#allocation4 + $0x60] sm:$0xff] %vm2302, %v4348
        %4381 = vst.msk [vmem:[#allocation4 + $0x68] sm:$0xff] %vm2302, %v4349
        %4382 = vst.msk [vmem:[#allocation4 + $0x70] sm:$0xff] %vm2302, %v4350
        %4383 = vst.msk [vmem:[#allocation4 + $0x78] sm:$0xff] %vm2302, %v4351
        %4384 = vst.msk [vmem:[#allocation4 + $0x80] sm:$0xff] %vm2302, %v4352
        %4385 = vst.msk [vmem:[#allocation4 + $0x88] sm:$0xff] %vm2302, %v4353
        %4386 = vst.msk [vmem:[#allocation4 + $0x90] sm:$0xff] %vm2302, %v4354
        %4387 = vst.msk [vmem:[#allocation4 + $0x98] sm:$0xff] %vm2302, %v4355
        %4388 = vst.msk [vmem:[#allocation4 + $0xa0] sm:$0xff] %vm2302, %v4356
        %4389 = vst.msk [vmem:[#allocation4 + $0xa8] sm:$0xff] %vm2302, %v4357
        %4390 = vst.msk [vmem:[#allocation4 + $0xb0] sm:$0xff] %vm2302, %v4358
        %4391 = vst.msk [vmem:[#allocation4 + $0xb8] sm:$0xff] %vm2302, %v4359
        %4392 = vst.msk [vmem:[#allocation4 + $0xc0] sm:$0xff] %vm2302, %v4360
        %4393 = vst.msk [vmem:[#allocation4 + $0xc8] sm:$0xff] %vm2302, %v4361
        %4394 = vst.msk [vmem:[#allocation4 + $0xd0] sm:$0xff] %vm2302, %v4362
        %4395 = vst.msk [vmem:[#allocation4 + $0xd8] sm:$0xff] %vm2302, %v4363
        %4396 = vst.msk [vmem:[#allocation4 + $0xe0] sm:$0xff] %vm2302, %v4364
        %4397 = vst.msk [vmem:[#allocation4 + $0xe8] sm:$0xff] %vm2302, %v4365
        %4398 = vst.msk [vmem:[#allocation4 + $0xf0] sm:$0xff] %vm2302, %v4366
        %4399 = vst.msk [vmem:[#allocation4 + $0xf8] sm:$0xff] %vm2302, %v4367
        %v4400 = vld [vmem:[#allocation2 + $0x1] sm:$0xff]
        %v4401 = vld [vmem:[#allocation2 + $0x9] sm:$0xff]
        %v4402 = vld [vmem:[#allocation2 + $0x19] sm:$0xff]
        %v4403 = vld [vmem:[#allocation2 + $0x21] sm:$0xff]
        %v4404 = vld [vmem:[#allocation2 + $0x31] sm:$0xff]
        %v4405 = vld [vmem:[#allocation2 + $0x39] sm:$0xff]
        %v4406 = vld [vmem:[#allocation2 + $0x49] sm:$0xff]
        %v4407 = vld [vmem:[#allocation2 + $0x51] sm:$0xff]
        %v4408 = vld [vmem:[#allocation2 + $0x61] sm:$0xff]
        %v4409 = vld [vmem:[#allocation2 + $0x69] sm:$0xff]
        %v4410 = vld [vmem:[#allocation2 + $0x79] sm:$0xff]
        %v4411 = vld [vmem:[#allocation2 + $0x81] sm:$0xff]
        %v4412 = vld [vmem:[#allocation2 + $0x91] sm:$0xff]
        %v4413 = vld [vmem:[#allocation2 + $0x99] sm:$0xff]
        %v4414 = vld [vmem:[#allocation2 + $0xa9] sm:$0xff]
        %v4415 = vld [vmem:[#allocation2 + $0xb1] sm:$0xff]
        %v4416 = vld [vmem:[#allocation2 + $0xc1] sm:$0xff]
        %v4417 = vld [vmem:[#allocation2 + $0xc9] sm:$0xff]
        %v4418 = vld [vmem:[#allocation2 + $0xd9] sm:$0xff]
        %v4419 = vld [vmem:[#allocation2 + $0xe1] sm:$0xff]
        %v4420 = vld [vmem:[#allocation2 + $0xf1] sm:$0xff]
        %v4421 = vld [vmem:[#allocation2 + $0xf9] sm:$0xff]
        %v4422 = vld [vmem:[#allocation2 + $0x109] sm:$0xff]
        %v4423 = vld [vmem:[#allocation2 + $0x111] sm:$0xff]
        %v4424 = vld [vmem:[#allocation2 + $0x121] sm:$0xff]
        %v4425 = vld [vmem:[#allocation2 + $0x129] sm:$0xff]
        %v4426 = vld [vmem:[#allocation2 + $0x139] sm:$0xff]
        %v4427 = vld [vmem:[#allocation2 + $0x141] sm:$0xff]
        %v4428 = vld [vmem:[#allocation2 + $0x151] sm:$0xff]
        %v4429 = vld [vmem:[#allocation2 + $0x159] sm:$0xff]
        %v4430 = vld [vmem:[#allocation2 + $0x169] sm:$0xff]
        %v4431 = vld [vmem:[#allocation2 + $0x171] sm:$0xff]
        %4464 = vrot.lane.b32.xlu0 %v4400, 4
        %v4465 = vpop.permute.xlu0 %4464
        %4466 = vrot.lane.b32.xlu0 %v4401, 4
        %v4467 = vpop.permute.xlu0 %4466
        %4468 = vrot.lane.b32.xlu0 %v4402, 4
        %v4469 = vpop.permute.xlu0 %4468
        %4470 = vrot.lane.b32.xlu0 %v4403, 4
        %v4471 = vpop.permute.xlu0 %4470
        %4472 = vrot.lane.b32.xlu0 %v4404, 4
        %v4473 = vpop.permute.xlu0 %4472
        %4474 = vrot.lane.b32.xlu0 %v4405, 4
        %v4475 = vpop.permute.xlu0 %4474
        %4476 = vrot.lane.b32.xlu0 %v4406, 4
        %v4477 = vpop.permute.xlu0 %4476
        %4478 = vrot.lane.b32.xlu0 %v4407, 4
        %v4479 = vpop.permute.xlu0 %4478
        %4480 = vrot.lane.b32.xlu0 %v4408, 4
        %v4481 = vpop.permute.xlu0 %4480
        %4482 = vrot.lane.b32.xlu0 %v4409, 4
        %v4483 = vpop.permute.xlu0 %4482
        %4484 = vrot.lane.b32.xlu0 %v4410, 4
        %v4485 = vpop.permute.xlu0 %4484
        %4486 = vrot.lane.b32.xlu0 %v4411, 4
        %v4487 = vpop.permute.xlu0 %4486
        %4488 = vrot.lane.b32.xlu0 %v4412, 4
        %v4489 = vpop.permute.xlu0 %4488
        %4490 = vrot.lane.b32.xlu0 %v4413, 4
        %v4491 = vpop.permute.xlu0 %4490
        %4492 = vrot.lane.b32.xlu0 %v4414, 4
        %v4493 = vpop.permute.xlu0 %4492
        %4494 = vrot.lane.b32.xlu0 %v4415, 4
        %v4495 = vpop.permute.xlu0 %4494
        %4496 = vrot.lane.b32.xlu0 %v4416, 4
        %v4497 = vpop.permute.xlu0 %4496
        %4498 = vrot.lane.b32.xlu0 %v4417, 4
        %v4499 = vpop.permute.xlu0 %4498
        %4500 = vrot.lane.b32.xlu0 %v4418, 4
        %v4501 = vpop.permute.xlu0 %4500
        %4502 = vrot.lane.b32.xlu0 %v4419, 4
        %v4503 = vpop.permute.xlu0 %4502
        %4504 = vrot.lane.b32.xlu0 %v4420, 4
        %v4505 = vpop.permute.xlu0 %4504
        %4506 = vrot.lane.b32.xlu0 %v4421, 4
        %v4507 = vpop.permute.xlu0 %4506
        %4508 = vrot.lane.b32.xlu0 %v4422, 4
        %v4509 = vpop.permute.xlu0 %4508
        %4510 = vrot.lane.b32.xlu0 %v4423, 4
        %v4511 = vpop.permute.xlu0 %4510
        %4512 = vrot.lane.b32.xlu0 %v4424, 4
        %v4513 = vpop.permute.xlu0 %4512
        %4514 = vrot.lane.b32.xlu0 %v4425, 4
        %v4515 = vpop.permute.xlu0 %4514
        %4516 = vrot.lane.b32.xlu0 %v4426, 4
        %v4517 = vpop.permute.xlu0 %4516
        %4518 = vrot.lane.b32.xlu0 %v4427, 4
        %v4519 = vpop.permute.xlu0 %4518
        %4520 = vrot.lane.b32.xlu0 %v4428, 4
        %v4521 = vpop.permute.xlu0 %4520
        %4522 = vrot.lane.b32.xlu0 %v4429, 4
        %v4523 = vpop.permute.xlu0 %4522
        %4524 = vrot.lane.b32.xlu0 %v4430, 4
        %v4525 = vpop.permute.xlu0 %4524
        %4526 = vrot.lane.b32.xlu0 %v4431, 4
        %v4527 = vpop.permute.xlu0 %4526
        %4560 = vst.msk [vmem:[#allocation4] sm:$0xff] %vm2559, %v4465
        %4561 = vst.msk [vmem:[#allocation4 + $0x8] sm:$0xff] %vm2559, %v4467
        %4562 = vst.msk [vmem:[#allocation4 + $0x10] sm:$0xff] %vm2559, %v4469
        %4563 = vst.msk [vmem:[#allocation4 + $0x18] sm:$0xff] %vm2559, %v4471
        %4564 = vst.msk [vmem:[#allocation4 + $0x20] sm:$0xff] %vm2559, %v4473
        %4565 = vst.msk [vmem:[#allocation4 + $0x28] sm:$0xff] %vm2559, %v4475
        %4566 = vst.msk [vmem:[#allocation4 + $0x30] sm:$0xff] %vm2559, %v4477
        %4567 = vst.msk [vmem:[#allocation4 + $0x38] sm:$0xff] %vm2559, %v4479
        %4568 = vst.msk [vmem:[#allocation4 + $0x40] sm:$0xff] %vm2559, %v4481
        %4569 = vst.msk [vmem:[#allocation4 + $0x48] sm:$0xff] %vm2559, %v4483
        %4570 = vst.msk [vmem:[#allocation4 + $0x50] sm:$0xff] %vm2559, %v4485
        %4571 = vst.msk [vmem:[#allocation4 + $0x58] sm:$0xff] %vm2559, %v4487
        %4572 = vst.msk [vmem:[#allocation4 + $0x60] sm:$0xff] %vm2559, %v4489
        %4573 = vst.msk [vmem:[#allocation4 + $0x68] sm:$0xff] %vm2559, %v4491
        %4574 = vst.msk [vmem:[#allocation4 + $0x70] sm:$0xff] %vm2559, %v4493
        %4575 = vst.msk [vmem:[#allocation4 + $0x78] sm:$0xff] %vm2559, %v4495
        %4576 = vst.msk [vmem:[#allocation4 + $0x80] sm:$0xff] %vm2559, %v4497
        %4577 = vst.msk [vmem:[#allocation4 + $0x88] sm:$0xff] %vm2559, %v4499
        %4578 = vst.msk [vmem:[#allocation4 + $0x90] sm:$0xff] %vm2559, %v4501
        %4579 = vst.msk [vmem:[#allocation4 + $0x98] sm:$0xff] %vm2559, %v4503
        %4580 = vst.msk [vmem:[#allocation4 + $0xa0] sm:$0xff] %vm2559, %v4505
        %4581 = vst.msk [vmem:[#allocation4 + $0xa8] sm:$0xff] %vm2559, %v4507
        %4582 = vst.msk [vmem:[#allocation4 + $0xb0] sm:$0xff] %vm2559, %v4509
        %4583 = vst.msk [vmem:[#allocation4 + $0xb8] sm:$0xff] %vm2559, %v4511
        %4584 = vst.msk [vmem:[#allocation4 + $0xc0] sm:$0xff] %vm2559, %v4513
        %4585 = vst.msk [vmem:[#allocation4 + $0xc8] sm:$0xff] %vm2559, %v4515
        %4586 = vst.msk [vmem:[#allocation4 + $0xd0] sm:$0xff] %vm2559, %v4517
        %4587 = vst.msk [vmem:[#allocation4 + $0xd8] sm:$0xff] %vm2559, %v4519
        %4588 = vst.msk [vmem:[#allocation4 + $0xe0] sm:$0xff] %vm2559, %v4521
        %4589 = vst.msk [vmem:[#allocation4 + $0xe8] sm:$0xff] %vm2559, %v4523
        %4590 = vst.msk [vmem:[#allocation4 + $0xf0] sm:$0xff] %vm2559, %v4525
        %4591 = vst.msk [vmem:[#allocation4 + $0xf8] sm:$0xff] %vm2559, %v4527
        %v4592 = vld [vmem:[#allocation2 + $0x2] sm:$0xff]
        %v4593 = vld [vmem:[#allocation2 + $0xa] sm:$0xff]
        %v4594 = vld [vmem:[#allocation2 + $0x1a] sm:$0xff]
        %v4595 = vld [vmem:[#allocation2 + $0x22] sm:$0xff]
        %v4596 = vld [vmem:[#allocation2 + $0x32] sm:$0xff]
        %v4597 = vld [vmem:[#allocation2 + $0x3a] sm:$0xff]
        %v4598 = vld [vmem:[#allocation2 + $0x4a] sm:$0xff]
        %v4599 = vld [vmem:[#allocation2 + $0x52] sm:$0xff]
        %v4600 = vld [vmem:[#allocation2 + $0x62] sm:$0xff]
        %v4601 = vld [vmem:[#allocation2 + $0x6a] sm:$0xff]
        %v4602 = vld [vmem:[#allocation2 + $0x7a] sm:$0xff]
        %v4603 = vld [vmem:[#allocation2 + $0x82] sm:$0xff]
        %v4604 = vld [vmem:[#allocation2 + $0x92] sm:$0xff]
        %v4605 = vld [vmem:[#allocation2 + $0x9a] sm:$0xff]
        %v4606 = vld [vmem:[#allocation2 + $0xaa] sm:$0xff]
        %v4607 = vld [vmem:[#allocation2 + $0xb2] sm:$0xff]
        %v4608 = vld [vmem:[#allocation2 + $0xc2] sm:$0xff]
        %v4609 = vld [vmem:[#allocation2 + $0xca] sm:$0xff]
        %v4610 = vld [vmem:[#allocation2 + $0xda] sm:$0xff]
        %v4611 = vld [vmem:[#allocation2 + $0xe2] sm:$0xff]
        %v4612 = vld [vmem:[#allocation2 + $0xf2] sm:$0xff]
        %v4613 = vld [vmem:[#allocation2 + $0xfa] sm:$0xff]
        %v4614 = vld [vmem:[#allocation2 + $0x10a] sm:$0xff]
        %v4615 = vld [vmem:[#allocation2 + $0x112] sm:$0xff]
        %v4616 = vld [vmem:[#allocation2 + $0x122] sm:$0xff]
        %v4617 = vld [vmem:[#allocation2 + $0x12a] sm:$0xff]
        %v4618 = vld [vmem:[#allocation2 + $0x13a] sm:$0xff]
        %v4619 = vld [vmem:[#allocation2 + $0x142] sm:$0xff]
        %v4620 = vld [vmem:[#allocation2 + $0x152] sm:$0xff]
        %v4621 = vld [vmem:[#allocation2 + $0x15a] sm:$0xff]
        %v4622 = vld [vmem:[#allocation2 + $0x16a] sm:$0xff]
        %v4623 = vld [vmem:[#allocation2 + $0x172] sm:$0xff]
        %4656 = vrot.lane.b32.xlu0 %v4592, 8
        %v4657 = vpop.permute.xlu0 %4656
        %4658 = vrot.lane.b32.xlu0 %v4593, 8
        %v4659 = vpop.permute.xlu0 %4658
        %4660 = vrot.lane.b32.xlu0 %v4594, 8
        %v4661 = vpop.permute.xlu0 %4660
        %4662 = vrot.lane.b32.xlu0 %v4595, 8
        %v4663 = vpop.permute.xlu0 %4662
        %4664 = vrot.lane.b32.xlu0 %v4596, 8
        %v4665 = vpop.permute.xlu0 %4664
        %4666 = vrot.lane.b32.xlu0 %v4597, 8
        %v4667 = vpop.permute.xlu0 %4666
        %4668 = vrot.lane.b32.xlu0 %v4598, 8
        %v4669 = vpop.permute.xlu0 %4668
        %4670 = vrot.lane.b32.xlu0 %v4599, 8
        %v4671 = vpop.permute.xlu0 %4670
        %4672 = vrot.lane.b32.xlu0 %v4600, 8
        %v4673 = vpop.permute.xlu0 %4672
        %4674 = vrot.lane.b32.xlu0 %v4601, 8
        %v4675 = vpop.permute.xlu0 %4674
        %4676 = vrot.lane.b32.xlu0 %v4602, 8
        %v4677 = vpop.permute.xlu0 %4676
        %4678 = vrot.lane.b32.xlu0 %v4603, 8
        %v4679 = vpop.permute.xlu0 %4678
        %4680 = vrot.lane.b32.xlu0 %v4604, 8
        %v4681 = vpop.permute.xlu0 %4680
        %4682 = vrot.lane.b32.xlu0 %v4605, 8
        %v4683 = vpop.permute.xlu0 %4682
        %4684 = vrot.lane.b32.xlu0 %v4606, 8
        %v4685 = vpop.permute.xlu0 %4684
        %4686 = vrot.lane.b32.xlu0 %v4607, 8
        %v4687 = vpop.permute.xlu0 %4686
        %4688 = vrot.lane.b32.xlu0 %v4608, 8
        %v4689 = vpop.permute.xlu0 %4688
        %4690 = vrot.lane.b32.xlu0 %v4609, 8
        %v4691 = vpop.permute.xlu0 %4690
        %4692 = vrot.lane.b32.xlu0 %v4610, 8
        %v4693 = vpop.permute.xlu0 %4692
        %4694 = vrot.lane.b32.xlu0 %v4611, 8
        %v4695 = vpop.permute.xlu0 %4694
        %4696 = vrot.lane.b32.xlu0 %v4612, 8
        %v4697 = vpop.permute.xlu0 %4696
        %4698 = vrot.lane.b32.xlu0 %v4613, 8
        %v4699 = vpop.permute.xlu0 %4698
        %4700 = vrot.lane.b32.xlu0 %v4614, 8
        %v4701 = vpop.permute.xlu0 %4700
        %4702 = vrot.lane.b32.xlu0 %v4615, 8
        %v4703 = vpop.permute.xlu0 %4702
        %4704 = vrot.lane.b32.xlu0 %v4616, 8
        %v4705 = vpop.permute.xlu0 %4704
        %4706 = vrot.lane.b32.xlu0 %v4617, 8
        %v4707 = vpop.permute.xlu0 %4706
        %4708 = vrot.lane.b32.xlu0 %v4618, 8
        %v4709 = vpop.permute.xlu0 %4708
        %4710 = vrot.lane.b32.xlu0 %v4619, 8
        %v4711 = vpop.permute.xlu0 %4710
        %4712 = vrot.lane.b32.xlu0 %v4620, 8
        %v4713 = vpop.permute.xlu0 %4712
        %4714 = vrot.lane.b32.xlu0 %v4621, 8
        %v4715 = vpop.permute.xlu0 %4714
        %4716 = vrot.lane.b32.xlu0 %v4622, 8
        %v4717 = vpop.permute.xlu0 %4716
        %4718 = vrot.lane.b32.xlu0 %v4623, 8
        %v4719 = vpop.permute.xlu0 %4718
        %4752 = vst.msk [vmem:[#allocation4] sm:$0xff] %vm2752, %v4657
        %4753 = vst.msk [vmem:[#allocation4 + $0x8] sm:$0xff] %vm2752, %v4659
        %4754 = vst.msk [vmem:[#allocation4 + $0x10] sm:$0xff] %vm2752, %v4661
        %4755 = vst.msk [vmem:[#allocation4 + $0x18] sm:$0xff] %vm2752, %v4663
        %4756 = vst.msk [vmem:[#allocation4 + $0x20] sm:$0xff] %vm2752, %v4665
        %4757 = vst.msk [vmem:[#allocation4 + $0x28] sm:$0xff] %vm2752, %v4667
        %4758 = vst.msk [vmem:[#allocation4 + $0x30] sm:$0xff] %vm2752, %v4669
        %4759 = vst.msk [vmem:[#allocation4 + $0x38] sm:$0xff] %vm2752, %v4671
        %4760 = vst.msk [vmem:[#allocation4 + $0x40] sm:$0xff] %vm2752, %v4673
        %4761 = vst.msk [vmem:[#allocation4 + $0x48] sm:$0xff] %vm2752, %v4675
        %4762 = vst.msk [vmem:[#allocation4 + $0x50] sm:$0xff] %vm2752, %v4677
        %4763 = vst.msk [vmem:[#allocation4 + $0x58] sm:$0xff] %vm2752, %v4679
        %4764 = vst.msk [vmem:[#allocation4 + $0x60] sm:$0xff] %vm2752, %v4681
        %4765 = vst.msk [vmem:[#allocation4 + $0x68] sm:$0xff] %vm2752, %v4683
        %4766 = vst.msk [vmem:[#allocation4 + $0x70] sm:$0xff] %vm2752, %v4685
        %4767 = vst.msk [vmem:[#allocation4 + $0x78] sm:$0xff] %vm2752, %v4687
        %4768 = vst.msk [vmem:[#allocation4 + $0x80] sm:$0xff] %vm2752, %v4689
        %4769 = vst.msk [vmem:[#allocation4 + $0x88] sm:$0xff] %vm2752, %v4691
        %4770 = vst.msk [vmem:[#allocation4 + $0x90] sm:$0xff] %vm2752, %v4693
        %4771 = vst.msk [vmem:[#allocation4 + $0x98] sm:$0xff] %vm2752, %v4695
        %4772 = vst.msk [vmem:[#allocation4 + $0xa0] sm:$0xff] %vm2752, %v4697
        %4773 = vst.msk [vmem:[#allocation4 + $0xa8] sm:$0xff] %vm2752, %v4699
        %4774 = vst.msk [vmem:[#allocation4 + $0xb0] sm:$0xff] %vm2752, %v4701
        %4775 = vst.msk [vmem:[#allocation4 + $0xb8] sm:$0xff] %vm2752, %v4703
        %4776 = vst.msk [vmem:[#allocation4 + $0xc0] sm:$0xff] %vm2752, %v4705
        %4777 = vst.msk [vmem:[#allocation4 + $0xc8] sm:$0xff] %vm2752, %v4707
        %4778 = vst.msk [vmem:[#allocation4 + $0xd0] sm:$0xff] %vm2752, %v4709
        %4779 = vst.msk [vmem:[#allocation4 + $0xd8] sm:$0xff] %vm2752, %v4711
        %4780 = vst.msk [vmem:[#allocation4 + $0xe0] sm:$0xff] %vm2752, %v4713
        %4781 = vst.msk [vmem:[#allocation4 + $0xe8] sm:$0xff] %vm2752, %v4715
        %4782 = vst.msk [vmem:[#allocation4 + $0xf0] sm:$0xff] %vm2752, %v4717
        %4783 = vst.msk [vmem:[#allocation4 + $0xf8] sm:$0xff] %vm2752, %v4719
        %v4784 = vld [vmem:[%s299] sm:$0xff]
        %v4785 = vld [vmem:[%s299 + $0x8] sm:$0xff]
        %v4786 = vld [vmem:[%s299 + $0x18] sm:$0xff]
        %v4787 = vld [vmem:[%s299 + $0x20] sm:$0xff]
        %v4788 = vld [vmem:[%s299 + $0x30] sm:$0xff]
        %v4789 = vld [vmem:[%s299 + $0x38] sm:$0xff]
        %v4790 = vld [vmem:[%s299 + $0x48] sm:$0xff]
        %v4791 = vld [vmem:[%s299 + $0x50] sm:$0xff]
        %v4792 = vld [vmem:[%s299 + $0x60] sm:$0xff]
        %v4793 = vld [vmem:[%s299 + $0x68] sm:$0xff]
        %v4794 = vld [vmem:[%s299 + $0x78] sm:$0xff]
        %v4795 = vld [vmem:[%s299 + $0x80] sm:$0xff]
        %v4796 = vld [vmem:[%s299 + $0x90] sm:$0xff]
        %v4797 = vld [vmem:[%s299 + $0x98] sm:$0xff]
        %v4798 = vld [vmem:[%s299 + $0xa8] sm:$0xff]
        %v4799 = vld [vmem:[%s299 + $0xb0] sm:$0xff]
        %v4800 = vld [vmem:[%s299 + $0xc0] sm:$0xff]
        %v4801 = vld [vmem:[%s299 + $0xc8] sm:$0xff]
        %v4802 = vld [vmem:[%s299 + $0xd8] sm:$0xff]
        %v4803 = vld [vmem:[%s299 + $0xe0] sm:$0xff]
        %v4804 = vld [vmem:[%s299 + $0xf0] sm:$0xff]
        %v4805 = vld [vmem:[%s299 + $0xf8] sm:$0xff]
        %v4806 = vld [vmem:[%s299 + $0x108] sm:$0xff]
        %v4807 = vld [vmem:[%s299 + $0x110] sm:$0xff]
        %v4808 = vld [vmem:[%s299 + $0x120] sm:$0xff]
        %v4809 = vld [vmem:[%s299 + $0x128] sm:$0xff]
        %v4810 = vld [vmem:[%s299 + $0x138] sm:$0xff]
        %v4811 = vld [vmem:[%s299 + $0x140] sm:$0xff]
        %v4812 = vld [vmem:[%s299 + $0x150] sm:$0xff]
        %v4813 = vld [vmem:[%s299 + $0x158] sm:$0xff]
        %v4814 = vld [vmem:[%s299 + $0x168] sm:$0xff]
        %v4815 = vld [vmem:[%s299 + $0x170] sm:$0xff]
        %4848 = vrot.lane.b32.xlu0 %v4784, 12
        %v4849 = vpop.permute.xlu0 %4848
        %4850 = vrot.lane.b32.xlu0 %v4785, 12
        %v4851 = vpop.permute.xlu0 %4850
        %4852 = vrot.lane.b32.xlu0 %v4786, 12
        %v4853 = vpop.permute.xlu0 %4852
        %4854 = vrot.lane.b32.xlu0 %v4787, 12
        %v4855 = vpop.permute.xlu0 %4854
        %4856 = vrot.lane.b32.xlu0 %v4788, 12
        %v4857 = vpop.permute.xlu0 %4856
        %4858 = vrot.lane.b32.xlu0 %v4789, 12
        %v4859 = vpop.permute.xlu0 %4858
        %4860 = vrot.lane.b32.xlu0 %v4790, 12
        %v4861 = vpop.permute.xlu0 %4860
        %4862 = vrot.lane.b32.xlu0 %v4791, 12
        %v4863 = vpop.permute.xlu0 %4862
        %4864 = vrot.lane.b32.xlu0 %v4792, 12
        %v4865 = vpop.permute.xlu0 %4864
        %4866 = vrot.lane.b32.xlu0 %v4793, 12
        %v4867 = vpop.permute.xlu0 %4866
        %4868 = vrot.lane.b32.xlu0 %v4794, 12
        %v4869 = vpop.permute.xlu0 %4868
        %4870 = vrot.lane.b32.xlu0 %v4795, 12
        %v4871 = vpop.permute.xlu0 %4870
        %4872 = vrot.lane.b32.xlu0 %v4796, 12
        %v4873 = vpop.permute.xlu0 %4872
        %4874 = vrot.lane.b32.xlu0 %v4797, 12
        %v4875 = vpop.permute.xlu0 %4874
        %4876 = vrot.lane.b32.xlu0 %v4798, 12
        %v4877 = vpop.permute.xlu0 %4876
        %4878 = vrot.lane.b32.xlu0 %v4799, 12
        %v4879 = vpop.permute.xlu0 %4878
        %4880 = vrot.lane.b32.xlu0 %v4800, 12
        %v4881 = vpop.permute.xlu0 %4880
        %4882 = vrot.lane.b32.xlu0 %v4801, 12
        %v4883 = vpop.permute.xlu0 %4882
        %4884 = vrot.lane.b32.xlu0 %v4802, 12
        %v4885 = vpop.permute.xlu0 %4884
        %4886 = vrot.lane.b32.xlu0 %v4803, 12
        %v4887 = vpop.permute.xlu0 %4886
        %4888 = vrot.lane.b32.xlu0 %v4804, 12
        %v4889 = vpop.permute.xlu0 %4888
        %4890 = vrot.lane.b32.xlu0 %v4805, 12
        %v4891 = vpop.permute.xlu0 %4890
        %4892 = vrot.lane.b32.xlu0 %v4806, 12
        %v4893 = vpop.permute.xlu0 %4892
        %4894 = vrot.lane.b32.xlu0 %v4807, 12
        %v4895 = vpop.permute.xlu0 %4894
        %4896 = vrot.lane.b32.xlu0 %v4808, 12
        %v4897 = vpop.permute.xlu0 %4896
        %4898 = vrot.lane.b32.xlu0 %v4809, 12
        %v4899 = vpop.permute.xlu0 %4898
        %4900 = vrot.lane.b32.xlu0 %v4810, 12
        %v4901 = vpop.permute.xlu0 %4900
        %4902 = vrot.lane.b32.xlu0 %v4811, 12
        %v4903 = vpop.permute.xlu0 %4902
        %4904 = vrot.lane.b32.xlu0 %v4812, 12
        %v4905 = vpop.permute.xlu0 %4904
        %4906 = vrot.lane.b32.xlu0 %v4813, 12
        %v4907 = vpop.permute.xlu0 %4906
        %4908 = vrot.lane.b32.xlu0 %v4814, 12
        %v4909 = vpop.permute.xlu0 %4908
        %4910 = vrot.lane.b32.xlu0 %v4815, 12
        %v4911 = vpop.permute.xlu0 %4910
        %4944 = vst.msk [vmem:[#allocation4] sm:$0xff] %vm2945, %v4849
        %4945 = vst.msk [vmem:[#allocation4 + $0x8] sm:$0xff] %vm2945, %v4851
        %4946 = vst.msk [vmem:[#allocation4 + $0x10] sm:$0xff] %vm2945, %v4853
        %4947 = vst.msk [vmem:[#allocation4 + $0x18] sm:$0xff] %vm2945, %v4855
        %4948 = vst.msk [vmem:[#allocation4 + $0x20] sm:$0xff] %vm2945, %v4857
        %4949 = vst.msk [vmem:[#allocation4 + $0x28] sm:$0xff] %vm2945, %v4859
        %4950 = vst.msk [vmem:[#allocation4 + $0x30] sm:$0xff] %vm2945, %v4861
        %4951 = vst.msk [vmem:[#allocation4 + $0x38] sm:$0xff] %vm2945, %v4863
        %4952 = vst.msk [vmem:[#allocation4 + $0x40] sm:$0xff] %vm2945, %v4865
        %4953 = vst.msk [vmem:[#allocation4 + $0x48] sm:$0xff] %vm2945, %v4867
        %4954 = vst.msk [vmem:[#allocation4 + $0x50] sm:$0xff] %vm2945, %v4869
        %4955 = vst.msk [vmem:[#allocation4 + $0x58] sm:$0xff] %vm2945, %v4871
        %4956 = vst.msk [vmem:[#allocation4 + $0x60] sm:$0xff] %vm2945, %v4873
        %4957 = vst.msk [vmem:[#allocation4 + $0x68] sm:$0xff] %vm2945, %v4875
        %4958 = vst.msk [vmem:[#allocation4 + $0x70] sm:$0xff] %vm2945, %v4877
        %4959 = vst.msk [vmem:[#allocation4 + $0x78] sm:$0xff] %vm2945, %v4879
        %4960 = vst.msk [vmem:[#allocation4 + $0x80] sm:$0xff] %vm2945, %v4881
        %4961 = vst.msk [vmem:[#allocation4 + $0x88] sm:$0xff] %vm2945, %v4883
        %4962 = vst.msk [vmem:[#allocation4 + $0x90] sm:$0xff] %vm2945, %v4885
        %4963 = vst.msk [vmem:[#allocation4 + $0x98] sm:$0xff] %vm2945, %v4887
        %4964 = vst.msk [vmem:[#allocation4 + $0xa0] sm:$0xff] %vm2945, %v4889
        %4965 = vst.msk [vmem:[#allocation4 + $0xa8] sm:$0xff] %vm2945, %v4891
        %4966 = vst.msk [vmem:[#allocation4 + $0xb0] sm:$0xff] %vm2945, %v4893
        %4967 = vst.msk [vmem:[#allocation4 + $0xb8] sm:$0xff] %vm2945, %v4895
        %4968 = vst.msk [vmem:[#allocation4 + $0xc0] sm:$0xff] %vm2945, %v4897
        %4969 = vst.msk [vmem:[#allocation4 + $0xc8] sm:$0xff] %vm2945, %v4899
        %4970 = vst.msk [vmem:[#allocation4 + $0xd0] sm:$0xff] %vm2945, %v4901
        %4971 = vst.msk [vmem:[#allocation4 + $0xd8] sm:$0xff] %vm2945, %v4903
        %4972 = vst.msk [vmem:[#allocation4 + $0xe0] sm:$0xff] %vm2945, %v4905
        %4973 = vst.msk [vmem:[#allocation4 + $0xe8] sm:$0xff] %vm2945, %v4907
        %4974 = vst.msk [vmem:[#allocation4 + $0xf0] sm:$0xff] %vm2945, %v4909
        %4975 = vst.msk [vmem:[#allocation4 + $0xf8] sm:$0xff] %vm2945, %v4911
        %v4976 = vld [vmem:[%s299 + $0x1] sm:$0xff]
        %v4977 = vld [vmem:[%s299 + $0x9] sm:$0xff]
        %v4978 = vld [vmem:[%s299 + $0x19] sm:$0xff]
        %v4979 = vld [vmem:[%s299 + $0x21] sm:$0xff]
        %v4980 = vld [vmem:[%s299 + $0x31] sm:$0xff]
        %v4981 = vld [vmem:[%s299 + $0x39] sm:$0xff]
        %v4982 = vld [vmem:[%s299 + $0x49] sm:$0xff]
        %v4983 = vld [vmem:[%s299 + $0x51] sm:$0xff]
        %v4984 = vld [vmem:[%s299 + $0x61] sm:$0xff]
        %v4985 = vld [vmem:[%s299 + $0x69] sm:$0xff]
        %v4986 = vld [vmem:[%s299 + $0x79] sm:$0xff]
        %v4987 = vld [vmem:[%s299 + $0x81] sm:$0xff]
        %v4988 = vld [vmem:[%s299 + $0x91] sm:$0xff]
        %v4989 = vld [vmem:[%s299 + $0x99] sm:$0xff]
        %v4990 = vld [vmem:[%s299 + $0xa9] sm:$0xff]
        %v4991 = vld [vmem:[%s299 + $0xb1] sm:$0xff]
        %v4992 = vld [vmem:[%s299 + $0xc1] sm:$0xff]
        %v4993 = vld [vmem:[%s299 + $0xc9] sm:$0xff]
        %v4994 = vld [vmem:[%s299 + $0xd9] sm:$0xff]
        %v4995 = vld [vmem:[%s299 + $0xe1] sm:$0xff]
        %v4996 = vld [vmem:[%s299 + $0xf1] sm:$0xff]
        %v4997 = vld [vmem:[%s299 + $0xf9] sm:$0xff]
        %v4998 = vld [vmem:[%s299 + $0x109] sm:$0xff]
        %v4999 = vld [vmem:[%s299 + $0x111] sm:$0xff]
        %v5000 = vld [vmem:[%s299 + $0x121] sm:$0xff]
        %v5001 = vld [vmem:[%s299 + $0x129] sm:$0xff]
        %v5002 = vld [vmem:[%s299 + $0x139] sm:$0xff]
        %v5003 = vld [vmem:[%s299 + $0x141] sm:$0xff]
        %v5004 = vld [vmem:[%s299 + $0x151] sm:$0xff]
        %v5005 = vld [vmem:[%s299 + $0x159] sm:$0xff]
        %v5006 = vld [vmem:[%s299 + $0x169] sm:$0xff]
        %v5007 = vld [vmem:[%s299 + $0x171] sm:$0xff]
        %5040 = vrot.lane.b32.xlu0 %v4976, 16
        %v5041 = vpop.permute.xlu0 %5040
        %5042 = vrot.lane.b32.xlu0 %v4977, 16
        %v5043 = vpop.permute.xlu0 %5042
        %5044 = vrot.lane.b32.xlu0 %v4978, 16
        %v5045 = vpop.permute.xlu0 %5044
        %5046 = vrot.lane.b32.xlu0 %v4979, 16
        %v5047 = vpop.permute.xlu0 %5046
        %5048 = vrot.lane.b32.xlu0 %v4980, 16
        %v5049 = vpop.permute.xlu0 %5048
        %5050 = vrot.lane.b32.xlu0 %v4981, 16
        %v5051 = vpop.permute.xlu0 %5050
        %5052 = vrot.lane.b32.xlu0 %v4982, 16
        %v5053 = vpop.permute.xlu0 %5052
        %5054 = vrot.lane.b32.xlu0 %v4983, 16
        %v5055 = vpop.permute.xlu0 %5054
        %5056 = vrot.lane.b32.xlu0 %v4984, 16
        %v5057 = vpop.permute.xlu0 %5056
        %5058 = vrot.lane.b32.xlu0 %v4985, 16
        %v5059 = vpop.permute.xlu0 %5058
        %5060 = vrot.lane.b32.xlu0 %v4986, 16
        %v5061 = vpop.permute.xlu0 %5060
        %5062 = vrot.lane.b32.xlu0 %v4987, 16
        %v5063 = vpop.permute.xlu0 %5062
        %5064 = vrot.lane.b32.xlu0 %v4988, 16
        %v5065 = vpop.permute.xlu0 %5064
        %5066 = vrot.lane.b32.xlu0 %v4989, 16
        %v5067 = vpop.permute.xlu0 %5066
        %5068 = vrot.lane.b32.xlu0 %v4990, 16
        %v5069 = vpop.permute.xlu0 %5068
        %5070 = vrot.lane.b32.xlu0 %v4991, 16
        %v5071 = vpop.permute.xlu0 %5070
        %5072 = vrot.lane.b32.xlu0 %v4992, 16
        %v5073 = vpop.permute.xlu0 %5072
        %5074 = vrot.lane.b32.xlu0 %v4993, 16
        %v5075 = vpop.permute.xlu0 %5074
        %5076 = vrot.lane.b32.xlu0 %v4994, 16
        %v5077 = vpop.permute.xlu0 %5076
        %5078 = vrot.lane.b32.xlu0 %v4995, 16
        %v5079 = vpop.permute.xlu0 %5078
        %5080 = vrot.lane.b32.xlu0 %v4996, 16
        %v5081 = vpop.permute.xlu0 %5080
        %5082 = vrot.lane.b32.xlu0 %v4997, 16
        %v5083 = vpop.permute.xlu0 %5082
        %5084 = vrot.lane.b32.xlu0 %v4998, 16
        %v5085 = vpop.permute.xlu0 %5084
        %5086 = vrot.lane.b32.xlu0 %v4999, 16
        %v5087 = vpop.permute.xlu0 %5086
        %5088 = vrot.lane.b32.xlu0 %v5000, 16
        %v5089 = vpop.permute.xlu0 %5088
        %5090 = vrot.lane.b32.xlu0 %v5001, 16
        %v5091 = vpop.permute.xlu0 %5090
        %5092 = vrot.lane.b32.xlu0 %v5002, 16
        %v5093 = vpop.permute.xlu0 %5092
        %5094 = vrot.lane.b32.xlu0 %v5003, 16
        %v5095 = vpop.permute.xlu0 %5094
        %5096 = vrot.lane.b32.xlu0 %v5004, 16
        %v5097 = vpop.permute.xlu0 %5096
        %5098 = vrot.lane.b32.xlu0 %v5005, 16
        %v5099 = vpop.permute.xlu0 %5098
        %5100 = vrot.lane.b32.xlu0 %v5006, 16
        %v5101 = vpop.permute.xlu0 %5100
        %5102 = vrot.lane.b32.xlu0 %v5007, 16
        %v5103 = vpop.permute.xlu0 %5102
        %5136 = vst.msk [vmem:[#allocation4] sm:$0xff] %vm3138, %v5041
        %5137 = vst.msk [vmem:[#allocation4 + $0x8] sm:$0xff] %vm3138, %v5043
        %5138 = vst.msk [vmem:[#allocation4 + $0x10] sm:$0xff] %vm3138, %v5045
        %5139 = vst.msk [vmem:[#allocation4 + $0x18] sm:$0xff] %vm3138, %v5047
        %5140 = vst.msk [vmem:[#allocation4 + $0x20] sm:$0xff] %vm3138, %v5049
        %5141 = vst.msk [vmem:[#allocation4 + $0x28] sm:$0xff] %vm3138, %v5051
        %5142 = vst.msk [vmem:[#allocation4 + $0x30] sm:$0xff] %vm3138, %v5053
        %5143 = vst.msk [vmem:[#allocation4 + $0x38] sm:$0xff] %vm3138, %v5055
        %5144 = vst.msk [vmem:[#allocation4 + $0x40] sm:$0xff] %vm3138, %v5057
        %5145 = vst.msk [vmem:[#allocation4 + $0x48] sm:$0xff] %vm3138, %v5059
        %5146 = vst.msk [vmem:[#allocation4 + $0x50] sm:$0xff] %vm3138, %v5061
        %5147 = vst.msk [vmem:[#allocation4 + $0x58] sm:$0xff] %vm3138, %v5063
        %5148 = vst.msk [vmem:[#allocation4 + $0x60] sm:$0xff] %vm3138, %v5065
        %5149 = vst.msk [vmem:[#allocation4 + $0x68] sm:$0xff] %vm3138, %v5067
        %5150 = vst.msk [vmem:[#allocation4 + $0x70] sm:$0xff] %vm3138, %v5069
        %5151 = vst.msk [vmem:[#allocation4 + $0x78] sm:$0xff] %vm3138, %v5071
        %5152 = vst.msk [vmem:[#allocation4 + $0x80] sm:$0xff] %vm3138, %v5073
        %5153 = vst.msk [vmem:[#allocation4 + $0x88] sm:$0xff] %vm3138, %v5075
        %5154 = vst.msk [vmem:[#allocation4 + $0x90] sm:$0xff] %vm3138, %v5077
        %5155 = vst.msk [vmem:[#allocation4 + $0x98] sm:$0xff] %vm3138, %v5079
        %5156 = vst.msk [vmem:[#allocation4 + $0xa0] sm:$0xff] %vm3138, %v5081
        %5157 = vst.msk [vmem:[#allocation4 + $0xa8] sm:$0xff] %vm3138, %v5083
        %5158 = vst.msk [vmem:[#allocation4 + $0xb0] sm:$0xff] %vm3138, %v5085
        %5159 = vst.msk [vmem:[#allocation4 + $0xb8] sm:$0xff] %vm3138, %v5087
        %5160 = vst.msk [vmem:[#allocation4 + $0xc0] sm:$0xff] %vm3138, %v5089
        %5161 = vst.msk [vmem:[#allocation4 + $0xc8] sm:$0xff] %vm3138, %v5091
        %5162 = vst.msk [vmem:[#allocation4 + $0xd0] sm:$0xff] %vm3138, %v5093
        %5163 = vst.msk [vmem:[#allocation4 + $0xd8] sm:$0xff] %vm3138, %v5095
        %5164 = vst.msk [vmem:[#allocation4 + $0xe0] sm:$0xff] %vm3138, %v5097
        %5165 = vst.msk [vmem:[#allocation4 + $0xe8] sm:$0xff] %vm3138, %v5099
        %5166 = vst.msk [vmem:[#allocation4 + $0xf0] sm:$0xff] %vm3138, %v5101
        %5167 = vst.msk [vmem:[#allocation4 + $0xf8] sm:$0xff] %vm3138, %v5103
        %v5168 = vld [vmem:[%s299 + $0x2] sm:$0xff]
        %v5169 = vld [vmem:[%s299 + $0xa] sm:$0xff]
        %v5170 = vld [vmem:[%s299 + $0x1a] sm:$0xff]
        %v5171 = vld [vmem:[%s299 + $0x22] sm:$0xff]
        %v5172 = vld [vmem:[%s299 + $0x32] sm:$0xff]
        %v5173 = vld [vmem:[%s299 + $0x3a] sm:$0xff]
        %v5174 = vld [vmem:[%s299 + $0x4a] sm:$0xff]
        %v5175 = vld [vmem:[%s299 + $0x52] sm:$0xff]
        %v5176 = vld [vmem:[%s299 + $0x62] sm:$0xff]
        %v5177 = vld [vmem:[%s299 + $0x6a] sm:$0xff]
        %v5178 = vld [vmem:[%s299 + $0x7a] sm:$0xff]
        %v5179 = vld [vmem:[%s299 + $0x82] sm:$0xff]
        %v5180 = vld [vmem:[%s299 + $0x92] sm:$0xff]
        %v5181 = vld [vmem:[%s299 + $0x9a] sm:$0xff]
        %v5182 = vld [vmem:[%s299 + $0xaa] sm:$0xff]
        %v5183 = vld [vmem:[%s299 + $0xb2] sm:$0xff]
        %v5184 = vld [vmem:[%s299 + $0xc2] sm:$0xff]
        %v5185 = vld [vmem:[%s299 + $0xca] sm:$0xff]
        %v5186 = vld [vmem:[%s299 + $0xda] sm:$0xff]
        %v5187 = vld [vmem:[%s299 + $0xe2] sm:$0xff]
        %v5188 = vld [vmem:[%s299 + $0xf2] sm:$0xff]
        %v5189 = vld [vmem:[%s299 + $0xfa] sm:$0xff]
        %v5190 = vld [vmem:[%s299 + $0x10a] sm:$0xff]
        %v5191 = vld [vmem:[%s299 + $0x112] sm:$0xff]
        %v5192 = vld [vmem:[%s299 + $0x122] sm:$0xff]
        %v5193 = vld [vmem:[%s299 + $0x12a] sm:$0xff]
        %v5194 = vld [vmem:[%s299 + $0x13a] sm:$0xff]
        %v5195 = vld [vmem:[%s299 + $0x142] sm:$0xff]
        %v5196 = vld [vmem:[%s299 + $0x152] sm:$0xff]
        %v5197 = vld [vmem:[%s299 + $0x15a] sm:$0xff]
        %v5198 = vld [vmem:[%s299 + $0x16a] sm:$0xff]
        %v5199 = vld [vmem:[%s299 + $0x172] sm:$0xff]
        %5232 = vrot.lane.b32.xlu0 %v5168, 20
        %v5233 = vpop.permute.xlu0 %5232
        %5234 = vrot.lane.b32.xlu0 %v5169, 20
        %v5235 = vpop.permute.xlu0 %5234
        %5236 = vrot.lane.b32.xlu0 %v5170, 20
        %v5237 = vpop.permute.xlu0 %5236
        %5238 = vrot.lane.b32.xlu0 %v5171, 20
        %v5239 = vpop.permute.xlu0 %5238
        %5240 = vrot.lane.b32.xlu0 %v5172, 20
        %v5241 = vpop.permute.xlu0 %5240
        %5242 = vrot.lane.b32.xlu0 %v5173, 20
        %v5243 = vpop.permute.xlu0 %5242
        %5244 = vrot.lane.b32.xlu0 %v5174, 20
        %v5245 = vpop.permute.xlu0 %5244
        %5246 = vrot.lane.b32.xlu0 %v5175, 20
        %v5247 = vpop.permute.xlu0 %5246
        %5248 = vrot.lane.b32.xlu0 %v5176, 20
        %v5249 = vpop.permute.xlu0 %5248
        %5250 = vrot.lane.b32.xlu0 %v5177, 20
        %v5251 = vpop.permute.xlu0 %5250
        %5252 = vrot.lane.b32.xlu0 %v5178, 20
        %v5253 = vpop.permute.xlu0 %5252
        %5254 = vrot.lane.b32.xlu0 %v5179, 20
        %v5255 = vpop.permute.xlu0 %5254
        %5256 = vrot.lane.b32.xlu0 %v5180, 20
        %v5257 = vpop.permute.xlu0 %5256
        %5258 = vrot.lane.b32.xlu0 %v5181, 20
        %v5259 = vpop.permute.xlu0 %5258
        %5260 = vrot.lane.b32.xlu0 %v5182, 20
        %v5261 = vpop.permute.xlu0 %5260
        %5262 = vrot.lane.b32.xlu0 %v5183, 20
        %v5263 = vpop.permute.xlu0 %5262
        %5264 = vrot.lane.b32.xlu0 %v5184, 20
        %v5265 = vpop.permute.xlu0 %5264
        %5266 = vrot.lane.b32.xlu0 %v5185, 20
        %v5267 = vpop.permute.xlu0 %5266
        %5268 = vrot.lane.b32.xlu0 %v5186, 20
        %v5269 = vpop.permute.xlu0 %5268
        %5270 = vrot.lane.b32.xlu0 %v5187, 20
        %v5271 = vpop.permute.xlu0 %5270
        %5272 = vrot.lane.b32.xlu0 %v5188, 20
        %v5273 = vpop.permute.xlu0 %5272
        %5274 = vrot.lane.b32.xlu0 %v5189, 20
        %v5275 = vpop.permute.xlu0 %5274
        %5276 = vrot.lane.b32.xlu0 %v5190, 20
        %v5277 = vpop.permute.xlu0 %5276
        %5278 = vrot.lane.b32.xlu0 %v5191, 20
        %v5279 = vpop.permute.xlu0 %5278
        %5280 = vrot.lane.b32.xlu0 %v5192, 20
        %v5281 = vpop.permute.xlu0 %5280
        %5282 = vrot.lane.b32.xlu0 %v5193, 20
        %v5283 = vpop.permute.xlu0 %5282
        %5284 = vrot.lane.b32.xlu0 %v5194, 20
        %v5285 = vpop.permute.xlu0 %5284
        %5286 = vrot.lane.b32.xlu0 %v5195, 20
        %v5287 = vpop.permute.xlu0 %5286
        %5288 = vrot.lane.b32.xlu0 %v5196, 20
        %v5289 = vpop.permute.xlu0 %5288
        %5290 = vrot.lane.b32.xlu0 %v5197, 20
        %v5291 = vpop.permute.xlu0 %5290
        %5292 = vrot.lane.b32.xlu0 %v5198, 20
        %v5293 = vpop.permute.xlu0 %5292
        %5294 = vrot.lane.b32.xlu0 %v5199, 20
        %v5295 = vpop.permute.xlu0 %5294
        %5328 = vst.msk [vmem:[#allocation4] sm:$0xff] %vm3331, %v5233
        %5329 = vst.msk [vmem:[#allocation4 + $0x8] sm:$0xff] %vm3331, %v5235
        %5330 = vst.msk [vmem:[#allocation4 + $0x10] sm:$0xff] %vm3331, %v5237
        %5331 = vst.msk [vmem:[#allocation4 + $0x18] sm:$0xff] %vm3331, %v5239
        %5332 = vst.msk [vmem:[#allocation4 + $0x20] sm:$0xff] %vm3331, %v5241
        %5333 = vst.msk [vmem:[#allocation4 + $0x28] sm:$0xff] %vm3331, %v5243
        %5334 = vst.msk [vmem:[#allocation4 + $0x30] sm:$0xff] %vm3331, %v5245
        %5335 = vst.msk [vmem:[#allocation4 + $0x38] sm:$0xff] %vm3331, %v5247
        %5336 = vst.msk [vmem:[#allocation4 + $0x40] sm:$0xff] %vm3331, %v5249
        %5337 = vst.msk [vmem:[#allocation4 + $0x48] sm:$0xff] %vm3331, %v5251
        %5338 = vst.msk [vmem:[#allocation4 + $0x50] sm:$0xff] %vm3331, %v5253
        %5339 = vst.msk [vmem:[#allocation4 + $0x58] sm:$0xff] %vm3331, %v5255
        %5340 = vst.msk [vmem:[#allocation4 + $0x60] sm:$0xff] %vm3331, %v5257
        %5341 = vst.msk [vmem:[#allocation4 + $0x68] sm:$0xff] %vm3331, %v5259
        %5342 = vst.msk [vmem:[#allocation4 + $0x70] sm:$0xff] %vm3331, %v5261
        %5343 = vst.msk [vmem:[#allocation4 + $0x78] sm:$0xff] %vm3331, %v5263
        %5344 = vst.msk [vmem:[#allocation4 + $0x80] sm:$0xff] %vm3331, %v5265
        %5345 = vst.msk [vmem:[#allocation4 + $0x88] sm:$0xff] %vm3331, %v5267
        %5346 = vst.msk [vmem:[#allocation4 + $0x90] sm:$0xff] %vm3331, %v5269
        %5347 = vst.msk [vmem:[#allocation4 + $0x98] sm:$0xff] %vm3331, %v5271
        %5348 = vst.msk [vmem:[#allocation4 + $0xa0] sm:$0xff] %vm3331, %v5273
        %5349 = vst.msk [vmem:[#allocation4 + $0xa8] sm:$0xff] %vm3331, %v5275
        %5350 = vst.msk [vmem:[#allocation4 + $0xb0] sm:$0xff] %vm3331, %v5277
        %5351 = vst.msk [vmem:[#allocation4 + $0xb8] sm:$0xff] %vm3331, %v5279
        %5352 = vst.msk [vmem:[#allocation4 + $0xc0] sm:$0xff] %vm3331, %v5281
        %5353 = vst.msk [vmem:[#allocation4 + $0xc8] sm:$0xff] %vm3331, %v5283
        %5354 = vst.msk [vmem:[#allocation4 + $0xd0] sm:$0xff] %vm3331, %v5285
        %5355 = vst.msk [vmem:[#allocation4 + $0xd8] sm:$0xff] %vm3331, %v5287
        %5356 = vst.msk [vmem:[#allocation4 + $0xe0] sm:$0xff] %vm3331, %v5289
        %5357 = vst.msk [vmem:[#allocation4 + $0xe8] sm:$0xff] %vm3331, %v5291
        %5358 = vst.msk [vmem:[#allocation4 + $0xf0] sm:$0xff] %vm3331, %v5293
        %5359 = vst.msk [vmem:[#allocation4 + $0xf8] sm:$0xff] %vm3331, %v5295
        %v5360 = vld [vmem:[%s1362] sm:$0xff]
        %v5361 = vld [vmem:[%s1362 + $0x8] sm:$0xff]
        %v5362 = vld [vmem:[%s1362 + $0x18] sm:$0xff]
        %v5363 = vld [vmem:[%s1362 + $0x20] sm:$0xff]
        %v5364 = vld [vmem:[%s1362 + $0x30] sm:$0xff]
        %v5365 = vld [vmem:[%s1362 + $0x38] sm:$0xff]
        %v5366 = vld [vmem:[%s1362 + $0x48] sm:$0xff]
        %v5367 = vld [vmem:[%s1362 + $0x50] sm:$0xff]
        %v5368 = vld [vmem:[%s1362 + $0x60] sm:$0xff]
        %v5369 = vld [vmem:[%s1362 + $0x68] sm:$0xff]
        %v5370 = vld [vmem:[%s1362 + $0x78] sm:$0xff]
        %v5371 = vld [vmem:[%s1362 + $0x80] sm:$0xff]
        %v5372 = vld [vmem:[%s1362 + $0x90] sm:$0xff]
        %v5373 = vld [vmem:[%s1362 + $0x98] sm:$0xff]
        %v5374 = vld [vmem:[%s1362 + $0xa8] sm:$0xff]
        %v5375 = vld [vmem:[%s1362 + $0xb0] sm:$0xff]
        %v5376 = vld [vmem:[%s1362 + $0xc0] sm:$0xff]
        %v5377 = vld [vmem:[%s1362 + $0xc8] sm:$0xff]
        %v5378 = vld [vmem:[%s1362 + $0xd8] sm:$0xff]
        %v5379 = vld [vmem:[%s1362 + $0xe0] sm:$0xff]
        %v5380 = vld [vmem:[%s1362 + $0xf0] sm:$0xff]
        %v5381 = vld [vmem:[%s1362 + $0xf8] sm:$0xff]
        %v5382 = vld [vmem:[%s1362 + $0x108] sm:$0xff]
        %v5383 = vld [vmem:[%s1362 + $0x110] sm:$0xff]
        %v5384 = vld [vmem:[%s1362 + $0x120] sm:$0xff]
        %v5385 = vld [vmem:[%s1362 + $0x128] sm:$0xff]
        %v5386 = vld [vmem:[%s1362 + $0x138] sm:$0xff]
        %v5387 = vld [vmem:[%s1362 + $0x140] sm:$0xff]
        %v5388 = vld [vmem:[%s1362 + $0x150] sm:$0xff]
        %v5389 = vld [vmem:[%s1362 + $0x158] sm:$0xff]
        %v5390 = vld [vmem:[%s1362 + $0x168] sm:$0xff]
        %v5391 = vld [vmem:[%s1362 + $0x170] sm:$0xff]
        %5424 = vrot.lane.b32.xlu0 %v5360, 24
        %v5425 = vpop.permute.xlu0 %5424
        %5426 = vrot.lane.b32.xlu0 %v5361, 24
        %v5427 = vpop.permute.xlu0 %5426
        %5428 = vrot.lane.b32.xlu0 %v5362, 24
        %v5429 = vpop.permute.xlu0 %5428
        %5430 = vrot.lane.b32.xlu0 %v5363, 24
        %v5431 = vpop.permute.xlu0 %5430
        %5432 = vrot.lane.b32.xlu0 %v5364, 24
        %v5433 = vpop.permute.xlu0 %5432
        %5434 = vrot.lane.b32.xlu0 %v5365, 24
        %v5435 = vpop.permute.xlu0 %5434
        %5436 = vrot.lane.b32.xlu0 %v5366, 24
        %v5437 = vpop.permute.xlu0 %5436
        %5438 = vrot.lane.b32.xlu0 %v5367, 24
        %v5439 = vpop.permute.xlu0 %5438
        %5440 = vrot.lane.b32.xlu0 %v5368, 24
        %v5441 = vpop.permute.xlu0 %5440
        %5442 = vrot.lane.b32.xlu0 %v5369, 24
        %v5443 = vpop.permute.xlu0 %5442
        %5444 = vrot.lane.b32.xlu0 %v5370, 24
        %v5445 = vpop.permute.xlu0 %5444
        %5446 = vrot.lane.b32.xlu0 %v5371, 24
        %v5447 = vpop.permute.xlu0 %5446
        %5448 = vrot.lane.b32.xlu0 %v5372, 24
        %v5449 = vpop.permute.xlu0 %5448
        %5450 = vrot.lane.b32.xlu0 %v5373, 24
        %v5451 = vpop.permute.xlu0 %5450
        %5452 = vrot.lane.b32.xlu0 %v5374, 24
        %v5453 = vpop.permute.xlu0 %5452
        %5454 = vrot.lane.b32.xlu0 %v5375, 24
        %v5455 = vpop.permute.xlu0 %5454
        %5456 = vrot.lane.b32.xlu0 %v5376, 24
        %v5457 = vpop.permute.xlu0 %5456
        %5458 = vrot.lane.b32.xlu0 %v5377, 24
        %v5459 = vpop.permute.xlu0 %5458
        %5460 = vrot.lane.b32.xlu0 %v5378, 24
        %v5461 = vpop.permute.xlu0 %5460
        %5462 = vrot.lane.b32.xlu0 %v5379, 24
        %v5463 = vpop.permute.xlu0 %5462
        %5464 = vrot.lane.b32.xlu0 %v5380, 24
        %v5465 = vpop.permute.xlu0 %5464
        %5466 = vrot.lane.b32.xlu0 %v5381, 24
        %v5467 = vpop.permute.xlu0 %5466
        %5468 = vrot.lane.b32.xlu0 %v5382, 24
        %v5469 = vpop.permute.xlu0 %5468
        %5470 = vrot.lane.b32.xlu0 %v5383, 24
        %v5471 = vpop.permute.xlu0 %5470
        %5472 = vrot.lane.b32.xlu0 %v5384, 24
        %v5473 = vpop.permute.xlu0 %5472
        %5474 = vrot.lane.b32.xlu0 %v5385, 24
        %v5475 = vpop.permute.xlu0 %5474
        %5476 = vrot.lane.b32.xlu0 %v5386, 24
        %v5477 = vpop.permute.xlu0 %5476
        %5478 = vrot.lane.b32.xlu0 %v5387, 24
        %v5479 = vpop.permute.xlu0 %5478
        %5480 = vrot.lane.b32.xlu0 %v5388, 24
        %v5481 = vpop.permute.xlu0 %5480
        %5482 = vrot.lane.b32.xlu0 %v5389, 24
        %v5483 = vpop.permute.xlu0 %5482
        %5484 = vrot.lane.b32.xlu0 %v5390, 24
        %v5485 = vpop.permute.xlu0 %5484
        %5486 = vrot.lane.b32.xlu0 %v5391, 24
        %v5487 = vpop.permute.xlu0 %5486
        %5520 = vst.msk [vmem:[#allocation4] sm:$0xff] %vm3525, %v5425
        %5521 = vst.msk [vmem:[#allocation4 + $0x8] sm:$0xff] %vm3525, %v5427
        %5522 = vst.msk [vmem:[#allocation4 + $0x10] sm:$0xff] %vm3525, %v5429
        %5523 = vst.msk [vmem:[#allocation4 + $0x18] sm:$0xff] %vm3525, %v5431
        %5524 = vst.msk [vmem:[#allocation4 + $0x20] sm:$0xff] %vm3525, %v5433
        %5525 = vst.msk [vmem:[#allocation4 + $0x28] sm:$0xff] %vm3525, %v5435
        %5526 = vst.msk [vmem:[#allocation4 + $0x30] sm:$0xff] %vm3525, %v5437
        %5527 = vst.msk [vmem:[#allocation4 + $0x38] sm:$0xff] %vm3525, %v5439
        %5528 = vst.msk [vmem:[#allocation4 + $0x40] sm:$0xff] %vm3525, %v5441
        %5529 = vst.msk [vmem:[#allocation4 + $0x48] sm:$0xff] %vm3525, %v5443
        %5530 = vst.msk [vmem:[#allocation4 + $0x50] sm:$0xff] %vm3525, %v5445
        %5531 = vst.msk [vmem:[#allocation4 + $0x58] sm:$0xff] %vm3525, %v5447
        %5532 = vst.msk [vmem:[#allocation4 + $0x60] sm:$0xff] %vm3525, %v5449
        %5533 = vst.msk [vmem:[#allocation4 + $0x68] sm:$0xff] %vm3525, %v5451
        %5534 = vst.msk [vmem:[#allocation4 + $0x70] sm:$0xff] %vm3525, %v5453
        %5535 = vst.msk [vmem:[#allocation4 + $0x78] sm:$0xff] %vm3525, %v5455
        %5536 = vst.msk [vmem:[#allocation4 + $0x80] sm:$0xff] %vm3525, %v5457
        %5537 = vst.msk [vmem:[#allocation4 + $0x88] sm:$0xff] %vm3525, %v5459
        %5538 = vst.msk [vmem:[#allocation4 + $0x90] sm:$0xff] %vm3525, %v5461
        %5539 = vst.msk [vmem:[#allocation4 + $0x98] sm:$0xff] %vm3525, %v5463
        %5540 = vst.msk [vmem:[#allocation4 + $0xa0] sm:$0xff] %vm3525, %v5465
        %5541 = vst.msk [vmem:[#allocation4 + $0xa8] sm:$0xff] %vm3525, %v5467
        %5542 = vst.msk [vmem:[#allocation4 + $0xb0] sm:$0xff] %vm3525, %v5469
        %5543 = vst.msk [vmem:[#allocation4 + $0xb8] sm:$0xff] %vm3525, %v5471
        %5544 = vst.msk [vmem:[#allocation4 + $0xc0] sm:$0xff] %vm3525, %v5473
        %5545 = vst.msk [vmem:[#allocation4 + $0xc8] sm:$0xff] %vm3525, %v5475
        %5546 = vst.msk [vmem:[#allocation4 + $0xd0] sm:$0xff] %vm3525, %v5477
        %5547 = vst.msk [vmem:[#allocation4 + $0xd8] sm:$0xff] %vm3525, %v5479
        %5548 = vst.msk [vmem:[#allocation4 + $0xe0] sm:$0xff] %vm3525, %v5481
        %5549 = vst.msk [vmem:[#allocation4 + $0xe8] sm:$0xff] %vm3525, %v5483
        %5550 = vst.msk [vmem:[#allocation4 + $0xf0] sm:$0xff] %vm3525, %v5485
        %5551 = vst.msk [vmem:[#allocation4 + $0xf8] sm:$0xff] %vm3525, %v5487
        %v5552 = vld [vmem:[%s1362 + $0x1] sm:$0xff]
        %v5553 = vld [vmem:[%s1362 + $0x9] sm:$0xff]
        %v5554 = vld [vmem:[%s1362 + $0x19] sm:$0xff]
        %v5555 = vld [vmem:[%s1362 + $0x21] sm:$0xff]
        %v5556 = vld [vmem:[%s1362 + $0x31] sm:$0xff]
        %v5557 = vld [vmem:[%s1362 + $0x39] sm:$0xff]
        %v5558 = vld [vmem:[%s1362 + $0x49] sm:$0xff]
        %v5559 = vld [vmem:[%s1362 + $0x51] sm:$0xff]
        %v5560 = vld [vmem:[%s1362 + $0x61] sm:$0xff]
        %v5561 = vld [vmem:[%s1362 + $0x69] sm:$0xff]
        %v5562 = vld [vmem:[%s1362 + $0x79] sm:$0xff]
        %v5563 = vld [vmem:[%s1362 + $0x81] sm:$0xff]
        %v5564 = vld [vmem:[%s1362 + $0x91] sm:$0xff]
        %v5565 = vld [vmem:[%s1362 + $0x99] sm:$0xff]
        %v5566 = vld [vmem:[%s1362 + $0xa9] sm:$0xff]
        %v5567 = vld [vmem:[%s1362 + $0xb1] sm:$0xff]
        %v5568 = vld [vmem:[%s1362 + $0xc1] sm:$0xff]
        %v5569 = vld [vmem:[%s1362 + $0xc9] sm:$0xff]
        %v5570 = vld [vmem:[%s1362 + $0xd9] sm:$0xff]
        %v5571 = vld [vmem:[%s1362 + $0xe1] sm:$0xff]
        %v5572 = vld [vmem:[%s1362 + $0xf1] sm:$0xff]
        %v5573 = vld [vmem:[%s1362 + $0xf9] sm:$0xff]
        %v5574 = vld [vmem:[%s1362 + $0x109] sm:$0xff]
        %v5575 = vld [vmem:[%s1362 + $0x111] sm:$0xff]
        %v5576 = vld [vmem:[%s1362 + $0x121] sm:$0xff]
        %v5577 = vld [vmem:[%s1362 + $0x129] sm:$0xff]
        %v5578 = vld [vmem:[%s1362 + $0x139] sm:$0xff]
        %v5579 = vld [vmem:[%s1362 + $0x141] sm:$0xff]
        %v5580 = vld [vmem:[%s1362 + $0x151] sm:$0xff]
        %v5581 = vld [vmem:[%s1362 + $0x159] sm:$0xff]
        %v5582 = vld [vmem:[%s1362 + $0x169] sm:$0xff]
        %v5583 = vld [vmem:[%s1362 + $0x171] sm:$0xff]
        %5616 = vrot.lane.b32.xlu0 %v5552, 28
        %v5617 = vpop.permute.xlu0 %5616
        %5618 = vrot.lane.b32.xlu0 %v5553, 28
        %v5619 = vpop.permute.xlu0 %5618
        %5620 = vrot.lane.b32.xlu0 %v5554, 28
        %v5621 = vpop.permute.xlu0 %5620
        %5622 = vrot.lane.b32.xlu0 %v5555, 28
        %v5623 = vpop.permute.xlu0 %5622
        %5624 = vrot.lane.b32.xlu0 %v5556, 28
        %v5625 = vpop.permute.xlu0 %5624
        %5626 = vrot.lane.b32.xlu0 %v5557, 28
        %v5627 = vpop.permute.xlu0 %5626
        %5628 = vrot.lane.b32.xlu0 %v5558, 28
        %v5629 = vpop.permute.xlu0 %5628
        %5630 = vrot.lane.b32.xlu0 %v5559, 28
        %v5631 = vpop.permute.xlu0 %5630
        %5632 = vrot.lane.b32.xlu0 %v5560, 28
        %v5633 = vpop.permute.xlu0 %5632
        %5634 = vrot.lane.b32.xlu0 %v5561, 28
        %v5635 = vpop.permute.xlu0 %5634
        %5636 = vrot.lane.b32.xlu0 %v5562, 28
        %v5637 = vpop.permute.xlu0 %5636
        %5638 = vrot.lane.b32.xlu0 %v5563, 28
        %v5639 = vpop.permute.xlu0 %5638
        %5640 = vrot.lane.b32.xlu0 %v5564, 28
        %v5641 = vpop.permute.xlu0 %5640
        %5642 = vrot.lane.b32.xlu0 %v5565, 28
        %v5643 = vpop.permute.xlu0 %5642
        %5644 = vrot.lane.b32.xlu0 %v5566, 28
        %v5645 = vpop.permute.xlu0 %5644
        %5646 = vrot.lane.b32.xlu0 %v5567, 28
        %v5647 = vpop.permute.xlu0 %5646
        %5648 = vrot.lane.b32.xlu0 %v5568, 28
        %v5649 = vpop.permute.xlu0 %5648
        %5650 = vrot.lane.b32.xlu0 %v5569, 28
        %v5651 = vpop.permute.xlu0 %5650
        %5652 = vrot.lane.b32.xlu0 %v5570, 28
        %v5653 = vpop.permute.xlu0 %5652
        %5654 = vrot.lane.b32.xlu0 %v5571, 28
        %v5655 = vpop.permute.xlu0 %5654
        %5656 = vrot.lane.b32.xlu0 %v5572, 28
        %v5657 = vpop.permute.xlu0 %5656
        %5658 = vrot.lane.b32.xlu0 %v5573, 28
        %v5659 = vpop.permute.xlu0 %5658
        %5660 = vrot.lane.b32.xlu0 %v5574, 28
        %v5661 = vpop.permute.xlu0 %5660
        %5662 = vrot.lane.b32.xlu0 %v5575, 28
        %v5663 = vpop.permute.xlu0 %5662
        %5664 = vrot.lane.b32.xlu0 %v5576, 28
        %v5665 = vpop.permute.xlu0 %5664
        %5666 = vrot.lane.b32.xlu0 %v5577, 28
        %v5667 = vpop.permute.xlu0 %5666
        %5668 = vrot.lane.b32.xlu0 %v5578, 28
        %v5669 = vpop.permute.xlu0 %5668
        %5670 = vrot.lane.b32.xlu0 %v5579, 28
        %v5671 = vpop.permute.xlu0 %5670
        %5672 = vrot.lane.b32.xlu0 %v5580, 28
        %v5673 = vpop.permute.xlu0 %5672
        %5674 = vrot.lane.b32.xlu0 %v5581, 28
        %v5675 = vpop.permute.xlu0 %5674
        %5676 = vrot.lane.b32.xlu0 %v5582, 28
        %v5677 = vpop.permute.xlu0 %5676
        %5678 = vrot.lane.b32.xlu0 %v5583, 28
        %v5679 = vpop.permute.xlu0 %5678
        %5712 = vst.msk [vmem:[#allocation4] sm:$0xff] %vm3718, %v5617
        %5713 = vst.msk [vmem:[#allocation4 + $0x8] sm:$0xff] %vm3718, %v5619
        %5714 = vst.msk [vmem:[#allocation4 + $0x10] sm:$0xff] %vm3718, %v5621
        %5715 = vst.msk [vmem:[#allocation4 + $0x18] sm:$0xff] %vm3718, %v5623
        %5716 = vst.msk [vmem:[#allocation4 + $0x20] sm:$0xff] %vm3718, %v5625
        %5717 = vst.msk [vmem:[#allocation4 + $0x28] sm:$0xff] %vm3718, %v5627
        %5718 = vst.msk [vmem:[#allocation4 + $0x30] sm:$0xff] %vm3718, %v5629
        %5719 = vst.msk [vmem:[#allocation4 + $0x38] sm:$0xff] %vm3718, %v5631
        %5720 = vst.msk [vmem:[#allocation4 + $0x40] sm:$0xff] %vm3718, %v5633
        %5721 = vst.msk [vmem:[#allocation4 + $0x48] sm:$0xff] %vm3718, %v5635
        %5722 = vst.msk [vmem:[#allocation4 + $0x50] sm:$0xff] %vm3718, %v5637
        %5723 = vst.msk [vmem:[#allocation4 + $0x58] sm:$0xff] %vm3718, %v5639
        %5724 = vst.msk [vmem:[#allocation4 + $0x60] sm:$0xff] %vm3718, %v5641
        %5725 = vst.msk [vmem:[#allocation4 + $0x68] sm:$0xff] %vm3718, %v5643
        %5726 = vst.msk [vmem:[#allocation4 + $0x70] sm:$0xff] %vm3718, %v5645
        %5727 = vst.msk [vmem:[#allocation4 + $0x78] sm:$0xff] %vm3718, %v5647
        %5728 = vst.msk [vmem:[#allocation4 + $0x80] sm:$0xff] %vm3718, %v5649
        %5729 = vst.msk [vmem:[#allocation4 + $0x88] sm:$0xff] %vm3718, %v5651
        %5730 = vst.msk [vmem:[#allocation4 + $0x90] sm:$0xff] %vm3718, %v5653
        %5731 = vst.msk [vmem:[#allocation4 + $0x98] sm:$0xff] %vm3718, %v5655
        %5732 = vst.msk [vmem:[#allocation4 + $0xa0] sm:$0xff] %vm3718, %v5657
        %5733 = vst.msk [vmem:[#allocation4 + $0xa8] sm:$0xff] %vm3718, %v5659
        %5734 = vst.msk [vmem:[#allocation4 + $0xb0] sm:$0xff] %vm3718, %v5661
        %5735 = vst.msk [vmem:[#allocation4 + $0xb8] sm:$0xff] %vm3718, %v5663
        %5736 = vst.msk [vmem:[#allocation4 + $0xc0] sm:$0xff] %vm3718, %v5665
        %5737 = vst.msk [vmem:[#allocation4 + $0xc8] sm:$0xff] %vm3718, %v5667
        %5738 = vst.msk [vmem:[#allocation4 + $0xd0] sm:$0xff] %vm3718, %v5669
        %5739 = vst.msk [vmem:[#allocation4 + $0xd8] sm:$0xff] %vm3718, %v5671
        %5740 = vst.msk [vmem:[#allocation4 + $0xe0] sm:$0xff] %vm3718, %v5673
        %5741 = vst.msk [vmem:[#allocation4 + $0xe8] sm:$0xff] %vm3718, %v5675
        %5742 = vst.msk [vmem:[#allocation4 + $0xf0] sm:$0xff] %vm3718, %v5677
        %5743 = vst.msk [vmem:[#allocation4 + $0xf8] sm:$0xff] %vm3718, %v5679
        %v5744 = vld [vmem:[%s1362 + $0x2] sm:$0xff]
        %v5745 = vld [vmem:[%s1362 + $0xa] sm:$0xff]
        %v5746 = vld [vmem:[%s1362 + $0x1a] sm:$0xff]
        %v5747 = vld [vmem:[%s1362 + $0x22] sm:$0xff]
        %v5748 = vld [vmem:[%s1362 + $0x32] sm:$0xff]
        %v5749 = vld [vmem:[%s1362 + $0x3a] sm:$0xff]
        %v5750 = vld [vmem:[%s1362 + $0x4a] sm:$0xff]
        %v5751 = vld [vmem:[%s1362 + $0x52] sm:$0xff]
        %v5752 = vld [vmem:[%s1362 + $0x62] sm:$0xff]
        %v5753 = vld [vmem:[%s1362 + $0x6a] sm:$0xff]
        %v5754 = vld [vmem:[%s1362 + $0x7a] sm:$0xff]
        %v5755 = vld [vmem:[%s1362 + $0x82] sm:$0xff]
        %v5756 = vld [vmem:[%s1362 + $0x92] sm:$0xff]
        %v5757 = vld [vmem:[%s1362 + $0x9a] sm:$0xff]
        %v5758 = vld [vmem:[%s1362 + $0xaa] sm:$0xff]
        %v5759 = vld [vmem:[%s1362 + $0xb2] sm:$0xff]
        %v5760 = vld [vmem:[%s1362 + $0xc2] sm:$0xff]
        %v5761 = vld [vmem:[%s1362 + $0xca] sm:$0xff]
        %v5762 = vld [vmem:[%s1362 + $0xda] sm:$0xff]
        %v5763 = vld [vmem:[%s1362 + $0xe2] sm:$0xff]
        %v5764 = vld [vmem:[%s1362 + $0xf2] sm:$0xff]
        %v5765 = vld [vmem:[%s1362 + $0xfa] sm:$0xff]
        %v5766 = vld [vmem:[%s1362 + $0x10a] sm:$0xff]
        %v5767 = vld [vmem:[%s1362 + $0x112] sm:$0xff]
        %v5768 = vld [vmem:[%s1362 + $0x122] sm:$0xff]
        %v5769 = vld [vmem:[%s1362 + $0x12a] sm:$0xff]
        %v5770 = vld [vmem:[%s1362 + $0x13a] sm:$0xff]
        %v5771 = vld [vmem:[%s1362 + $0x142] sm:$0xff]
        %v5772 = vld [vmem:[%s1362 + $0x152] sm:$0xff]
        %v5773 = vld [vmem:[%s1362 + $0x15a] sm:$0xff]
        %v5774 = vld [vmem:[%s1362 + $0x16a] sm:$0xff]
        %v5775 = vld [vmem:[%s1362 + $0x172] sm:$0xff]
        %5808 = vrot.lane.b32.xlu0 %v5744, 32
        %v5809 = vpop.permute.xlu0 %5808
        %5810 = vrot.lane.b32.xlu0 %v5745, 32
        %v5811 = vpop.permute.xlu0 %5810
        %5812 = vrot.lane.b32.xlu0 %v5746, 32
        %v5813 = vpop.permute.xlu0 %5812
        %5814 = vrot.lane.b32.xlu0 %v5747, 32
        %v5815 = vpop.permute.xlu0 %5814
        %5816 = vrot.lane.b32.xlu0 %v5748, 32
        %v5817 = vpop.permute.xlu0 %5816
        %5818 = vrot.lane.b32.xlu0 %v5749, 32
        %v5819 = vpop.permute.xlu0 %5818
        %5820 = vrot.lane.b32.xlu0 %v5750, 32
        %v5821 = vpop.permute.xlu0 %5820
        %5822 = vrot.lane.b32.xlu0 %v5751, 32
        %v5823 = vpop.permute.xlu0 %5822
        %5824 = vrot.lane.b32.xlu0 %v5752, 32
        %v5825 = vpop.permute.xlu0 %5824
        %5826 = vrot.lane.b32.xlu0 %v5753, 32
        %v5827 = vpop.permute.xlu0 %5826
        %5828 = vrot.lane.b32.xlu0 %v5754, 32
        %v5829 = vpop.permute.xlu0 %5828
        %5830 = vrot.lane.b32.xlu0 %v5755, 32
        %v5831 = vpop.permute.xlu0 %5830
        %5832 = vrot.lane.b32.xlu0 %v5756, 32
        %v5833 = vpop.permute.xlu0 %5832
        %5834 = vrot.lane.b32.xlu0 %v5757, 32
        %v5835 = vpop.permute.xlu0 %5834
        %5836 = vrot.lane.b32.xlu0 %v5758, 32
        %v5837 = vpop.permute.xlu0 %5836
        %5838 = vrot.lane.b32.xlu0 %v5759, 32
        %v5839 = vpop.permute.xlu0 %5838
        %5840 = vrot.lane.b32.xlu0 %v5760, 32
        %v5841 = vpop.permute.xlu0 %5840
        %5842 = vrot.lane.b32.xlu0 %v5761, 32
        %v5843 = vpop.permute.xlu0 %5842
        %5844 = vrot.lane.b32.xlu0 %v5762, 32
        %v5845 = vpop.permute.xlu0 %5844
        %5846 = vrot.lane.b32.xlu0 %v5763, 32
        %v5847 = vpop.permute.xlu0 %5846
        %5848 = vrot.lane.b32.xlu0 %v5764, 32
        %v5849 = vpop.permute.xlu0 %5848
        %5850 = vrot.lane.b32.xlu0 %v5765, 32
        %v5851 = vpop.permute.xlu0 %5850
        %5852 = vrot.lane.b32.xlu0 %v5766, 32
        %v5853 = vpop.permute.xlu0 %5852
        %5854 = vrot.lane.b32.xlu0 %v5767, 32
        %v5855 = vpop.permute.xlu0 %5854
        %5856 = vrot.lane.b32.xlu0 %v5768, 32
        %v5857 = vpop.permute.xlu0 %5856
        %5858 = vrot.lane.b32.xlu0 %v5769, 32
        %v5859 = vpop.permute.xlu0 %5858
        %5860 = vrot.lane.b32.xlu0 %v5770, 32
        %v5861 = vpop.permute.xlu0 %5860
        %5862 = vrot.lane.b32.xlu0 %v5771, 32
        %v5863 = vpop.permute.xlu0 %5862
        %5864 = vrot.lane.b32.xlu0 %v5772, 32
        %v5865 = vpop.permute.xlu0 %5864
        %5866 = vrot.lane.b32.xlu0 %v5773, 32
        %v5867 = vpop.permute.xlu0 %5866
        %5868 = vrot.lane.b32.xlu0 %v5774, 32
        %v5869 = vpop.permute.xlu0 %5868
        %5870 = vrot.lane.b32.xlu0 %v5775, 32
        %v5871 = vpop.permute.xlu0 %5870
        %5904 = vst.msk [vmem:[#allocation4] sm:$0xff] %vm3911, %v5809
        %5905 = vst.msk [vmem:[#allocation4 + $0x8] sm:$0xff] %vm3911, %v5811
        %5906 = vst.msk [vmem:[#allocation4 + $0x10] sm:$0xff] %vm3911, %v5813
        %5907 = vst.msk [vmem:[#allocation4 + $0x18] sm:$0xff] %vm3911, %v5815
        %5908 = vst.msk [vmem:[#allocation4 + $0x20] sm:$0xff] %vm3911, %v5817
        %5909 = vst.msk [vmem:[#allocation4 + $0x28] sm:$0xff] %vm3911, %v5819
        %5910 = vst.msk [vmem:[#allocation4 + $0x30] sm:$0xff] %vm3911, %v5821
        %5911 = vst.msk [vmem:[#allocation4 + $0x38] sm:$0xff] %vm3911, %v5823
        %5912 = vst.msk [vmem:[#allocation4 + $0x40] sm:$0xff] %vm3911, %v5825
        %5913 = vst.msk [vmem:[#allocation4 + $0x48] sm:$0xff] %vm3911, %v5827
        %5914 = vst.msk [vmem:[#allocation4 + $0x50] sm:$0xff] %vm3911, %v5829
        %5915 = vst.msk [vmem:[#allocation4 + $0x58] sm:$0xff] %vm3911, %v5831
        %5916 = vst.msk [vmem:[#allocation4 + $0x60] sm:$0xff] %vm3911, %v5833
        %5917 = vst.msk [vmem:[#allocation4 + $0x68] sm:$0xff] %vm3911, %v5835
        %5918 = vst.msk [vmem:[#allocation4 + $0x70] sm:$0xff] %vm3911, %v5837
        %5919 = vst.msk [vmem:[#allocation4 + $0x78] sm:$0xff] %vm3911, %v5839
        %5920 = vst.msk [vmem:[#allocation4 + $0x80] sm:$0xff] %vm3911, %v5841
        %5921 = vst.msk [vmem:[#allocation4 + $0x88] sm:$0xff] %vm3911, %v5843
        %5922 = vst.msk [vmem:[#allocation4 + $0x90] sm:$0xff] %vm3911, %v5845
        %5923 = vst.msk [vmem:[#allocation4 + $0x98] sm:$0xff] %vm3911, %v5847
        %5924 = vst.msk [vmem:[#allocation4 + $0xa0] sm:$0xff] %vm3911, %v5849
        %5925 = vst.msk [vmem:[#allocation4 + $0xa8] sm:$0xff] %vm3911, %v5851
        %5926 = vst.msk [vmem:[#allocation4 + $0xb0] sm:$0xff] %vm3911, %v5853
        %5927 = vst.msk [vmem:[#allocation4 + $0xb8] sm:$0xff] %vm3911, %v5855
        %5928 = vst.msk [vmem:[#allocation4 + $0xc0] sm:$0xff] %vm3911, %v5857
        %5929 = vst.msk [vmem:[#allocation4 + $0xc8] sm:$0xff] %vm3911, %v5859
        %5930 = vst.msk [vmem:[#allocation4 + $0xd0] sm:$0xff] %vm3911, %v5861
        %5931 = vst.msk [vmem:[#allocation4 + $0xd8] sm:$0xff] %vm3911, %v5863
        %5932 = vst.msk [vmem:[#allocation4 + $0xe0] sm:$0xff] %vm3911, %v5865
        %5933 = vst.msk [vmem:[#allocation4 + $0xe8] sm:$0xff] %vm3911, %v5867
        %5934 = vst.msk [vmem:[#allocation4 + $0xf0] sm:$0xff] %vm3911, %v5869
        %5935 = vst.msk [vmem:[#allocation4 + $0xf8] sm:$0xff] %vm3911, %v5871
        %v5936 = vld [vmem:[#allocation4] sm:$0xff]
        %v5937 = vld [vmem:[#allocation4 + $0x8] sm:$0xff]
        %v5938 = vld [vmem:[#allocation4 + $0x10] sm:$0xff]
        %v5939 = vld [vmem:[#allocation4 + $0x18] sm:$0xff]
        %v5940 = vld [vmem:[#allocation4 + $0x20] sm:$0xff]
        %v5941 = vld [vmem:[#allocation4 + $0x28] sm:$0xff]
        %v5942 = vld [vmem:[#allocation4 + $0x30] sm:$0xff]
        %v5943 = vld [vmem:[#allocation4 + $0x38] sm:$0xff]
        %v5944 = vld [vmem:[#allocation4 + $0x40] sm:$0xff]
        %v5945 = vld [vmem:[#allocation4 + $0x48] sm:$0xff]
        %v5946 = vld [vmem:[#allocation4 + $0x50] sm:$0xff]
        %v5947 = vld [vmem:[#allocation4 + $0x58] sm:$0xff]
        %v5948 = vld [vmem:[#allocation4 + $0x60] sm:$0xff]
        %v5949 = vld [vmem:[#allocation4 + $0x68] sm:$0xff]
        %v5950 = vld [vmem:[#allocation4 + $0x70] sm:$0xff]
        %v5951 = vld [vmem:[#allocation4 + $0x78] sm:$0xff]
        %v5952 = vld [vmem:[#allocation4 + $0x80] sm:$0xff]
        %v5953 = vld [vmem:[#allocation4 + $0x88] sm:$0xff]
        %v5954 = vld [vmem:[#allocation4 + $0x90] sm:$0xff]
        %v5955 = vld [vmem:[#allocation4 + $0x98] sm:$0xff]
        %v5956 = vld [vmem:[#allocation4 + $0xa0] sm:$0xff]
        %v5957 = vld [vmem:[#allocation4 + $0xa8] sm:$0xff]
        %v5958 = vld [vmem:[#allocation4 + $0xb0] sm:$0xff]
        %v5959 = vld [vmem:[#allocation4 + $0xb8] sm:$0xff]
        %v5960 = vld [vmem:[#allocation4 + $0xc0] sm:$0xff]
        %v5961 = vld [vmem:[#allocation4 + $0xc8] sm:$0xff]
        %v5962 = vld [vmem:[#allocation4 + $0xd0] sm:$0xff]
        %v5963 = vld [vmem:[#allocation4 + $0xd8] sm:$0xff]
        %v5964 = vld [vmem:[#allocation4 + $0xe0] sm:$0xff]
        %v5965 = vld [vmem:[#allocation4 + $0xe8] sm:$0xff]
        %v5966 = vld [vmem:[#allocation4 + $0xf0] sm:$0xff]
        %v5967 = vld [vmem:[#allocation4 + $0xf8] sm:$0xff]
        %v5968 = vpack.c.bf16 %v5937, %v5936
        %v5969 = vpack.c.bf16 %v5939, %v5938
        %v5970 = vpack.c.bf16 %v5941, %v5940
        %v5971 = vpack.c.bf16 %v5943, %v5942
        %v5972 = vpack.c.bf16 %v5945, %v5944
        %v5973 = vpack.c.bf16 %v5947, %v5946
        %v5974 = vpack.c.bf16 %v5949, %v5948
        %v5975 = vpack.c.bf16 %v5951, %v5950
        %v5976 = vpack.c.bf16 %v5953, %v5952
        %v5977 = vpack.c.bf16 %v5955, %v5954
        %v5978 = vpack.c.bf16 %v5957, %v5956
        %v5979 = vpack.c.bf16 %v5959, %v5958
        %v5980 = vpack.c.bf16 %v5961, %v5960
        %v5981 = vpack.c.bf16 %v5963, %v5962
        %v5982 = vpack.c.bf16 %v5965, %v5964
        %v5983 = vpack.c.bf16 %v5967, %v5966
        %s5984 = scalar_lea.vmem %s1, 128
        %v5985 = vld [vmem:[%s5984] sm:$0xf]
        %v5986 = vld [vmem:[%s5984 + $0x4] sm:$0xf]
        %v5987 = vld [vmem:[%s5984 + $0x8] sm:$0xf]
        %v5988 = vld [vmem:[%s5984 + $0xc] sm:$0xf]
        %v5989 = vld [vmem:[%s5984 + $0x10] sm:$0xf]
        %v5990 = vld [vmem:[%s5984 + $0x14] sm:$0xf]
        %v5991 = vld [vmem:[%s5984 + $0x18] sm:$0xf]
        %v5992 = vld [vmem:[%s5984 + $0x1c] sm:$0xf]
        %v5993 = vld [vmem:[%s5984 + $0x20] sm:$0xf]
        %v5994 = vld [vmem:[%s5984 + $0x24] sm:$0xf]
        %v5995 = vld [vmem:[%s5984 + $0x28] sm:$0xf]
        %v5996 = vld [vmem:[%s5984 + $0x2c] sm:$0xf]
        %v5997 = vld [vmem:[%s5984 + $0x30] sm:$0xf]
        %v5998 = vld [vmem:[%s5984 + $0x34] sm:$0xf]
        %v5999 = vld [vmem:[%s5984 + $0x38] sm:$0xf]
        %v6000 = vld [vmem:[%s5984 + $0x3c] sm:$0xf]
        %v6017 = vunpack.c.l.b16 %v5985
        %v6018 = vunpack.c.l.b16 %v5986
        %v6019 = vunpack.c.l.b16 %v5987
        %v6020 = vunpack.c.l.b16 %v5988
        %v6021 = vunpack.c.l.b16 %v5989
        %v6022 = vunpack.c.l.b16 %v5990
        %v6023 = vunpack.c.l.b16 %v5991
        %v6024 = vunpack.c.l.b16 %v5992
        %v6025 = vunpack.c.l.b16 %v5993
        %v6026 = vunpack.c.l.b16 %v5994
        %v6027 = vunpack.c.l.b16 %v5995
        %v6028 = vunpack.c.l.b16 %v5996
        %v6029 = vunpack.c.l.b16 %v5997
        %v6030 = vunpack.c.l.b16 %v5998
        %v6031 = vunpack.c.l.b16 %v5999
        %v6032 = vunpack.c.l.b16 %v6000
        %v6033 = vpack.c.b16 %v6018, %v6017
        %v6034 = vpack.c.b16 %v6020, %v6019
        %v6035 = vpack.c.b16 %v6022, %v6021
        %v6036 = vpack.c.b16 %v6024, %v6023
        %v6037 = vpack.c.b16 %v6026, %v6025
        %v6038 = vpack.c.b16 %v6028, %v6027
        %v6039 = vpack.c.b16 %v6030, %v6029
        %v6040 = vpack.c.b16 %v6032, %v6031
        %6049 = vmatprep.subr.bf16.mxu0 0
        %6050 = vmatpush1.bf16.msra.mxu0 %v6033
        %6051 = vmatprep.subr.bf16.mxu0 0
        %6052 = vmatpush1.bf16.msra.mxu0 %v6034
        %6053 = vmatprep.subr.bf16.mxu0 0
        %6054 = vmatpush1.bf16.msra.mxu0 %v6035
        %6055 = vmatprep.subr.bf16.mxu0 0
        %6056 = vmatpush1.bf16.msra.mxu0 %v6036
        %6057 = vmatprep.subr.bf16.mxu0 0
        %6058 = vmatpush1.bf16.msra.mxu0 %v6037
        %6059 = vmatprep.subr.bf16.mxu0 0
        %6060 = vmatpush1.bf16.msra.mxu0 %v6038
        %6061 = vmatprep.subr.bf16.mxu0 0
        %6062 = vmatpush1.bf16.msra.mxu0 %v6039
        %6063 = vmatprep.subr.bf16.mxu0 0
        %6064 = vmatpush1.bf16.msra.mxu0 %v6040
        %6065 = vmatprep.subr.bf16.mxu0 0
        %6066 = vmatpush1.bf16.msra.mxu0 0
        %6067 = vmatprep.subr.bf16.mxu0 0
        %6068 = vmatpush1.bf16.msra.mxu0 0
        %6069 = vmatprep.subr.bf16.mxu0 0
        %6070 = vmatpush1.bf16.msra.mxu0 0
        %6071 = vmatprep.subr.bf16.mxu0 0
        %6072 = vmatpush1.bf16.msra.mxu0 0
        %6073 = vmatprep.subr.bf16.mxu0 0
        %6074 = vmatpush1.bf16.msra.mxu0 0
        %6075 = vmatprep.subr.bf16.mxu0 0
        %6076 = vmatpush1.bf16.msra.mxu0 0
        %6077 = vmatprep.subr.bf16.mxu0 0
        %6078 = vmatpush1.bf16.msra.mxu0 0
        %6079 = vmatprep.subr.bf16.mxu0 0
        %6080 = vmatpush1.bf16.msra.mxu0 0
        %6081 = vmatprep.mubr.bf16.mxu0 0
        %6082 = vmatmul.mubr.bf16.gmra.mrb[0].mxu0 %v5968
        %v6083 = vpop.f32.mrb[0].mxu0
        %v6084 = vadd.f32 0.0, %v6083
        %v6085 = vpop.f32.mrb[0].mxu0
        %v6086 = vpop.f32.mrb[0].mxu0
        %v6087 = vadd.f32 0.0, %v6086
        %v6088 = vpop.f32.mrb[0].mxu0
        %6089 = vmatprep.mubr.bf16.mxu0 0
        %6090 = vmatmul.mubr.bf16.gmra.mrb[0].mxu0 %v5969
        %v6091 = vpop.f32.mrb[0].mxu0
        %v6092 = vadd.f32 0.0, %v6091
        %v6093 = vpop.f32.mrb[0].mxu0
        %v6094 = vpop.f32.mrb[0].mxu0
        %v6095 = vadd.f32 0.0, %v6094
        %v6096 = vpop.f32.mrb[0].mxu0
        %6097 = vmatprep.mubr.bf16.mxu0 0
        %6098 = vmatmul.mubr.bf16.gmra.mrb[0].mxu0 %v5970
        %v6099 = vpop.f32.mrb[0].mxu0
        %v6100 = vadd.f32 0.0, %v6099
        %v6101 = vpop.f32.mrb[0].mxu0
        %v6102 = vpop.f32.mrb[0].mxu0
        %v6103 = vadd.f32 0.0, %v6102
        %v6104 = vpop.f32.mrb[0].mxu0
        %6105 = vmatprep.mubr.bf16.mxu0 0
        %6106 = vmatmul.mubr.bf16.gmra.mrb[0].mxu0 %v5971
        %v6107 = vpop.f32.mrb[0].mxu0
        %v6108 = vadd.f32 0.0, %v6107
        %v6109 = vpop.f32.mrb[0].mxu0
        %v6110 = vpop.f32.mrb[0].mxu0
        %v6111 = vadd.f32 0.0, %v6110
        %v6112 = vpop.f32.mrb[0].mxu0
        %6113 = vmatprep.mubr.bf16.mxu0 0
        %6114 = vmatmul.mubr.bf16.gmra.mrb[0].mxu0 %v5972
        %v6115 = vpop.f32.mrb[0].mxu0
        %v6116 = vadd.f32 0.0, %v6115
        %v6117 = vpop.f32.mrb[0].mxu0
        %v6118 = vpop.f32.mrb[0].mxu0
        %v6119 = vadd.f32 0.0, %v6118
        %v6120 = vpop.f32.mrb[0].mxu0
        %6121 = vmatprep.mubr.bf16.mxu0 0
        %6122 = vmatmul.mubr.bf16.gmra.mrb[0].mxu0 %v5973
        %v6123 = vpop.f32.mrb[0].mxu0
        %v6124 = vadd.f32 0.0, %v6123
        %v6125 = vpop.f32.mrb[0].mxu0
        %v6126 = vpop.f32.mrb[0].mxu0
        %v6127 = vadd.f32 0.0, %v6126
        %v6128 = vpop.f32.mrb[0].mxu0
        %6129 = vmatprep.mubr.bf16.mxu0 0
        %6130 = vmatmul.mubr.bf16.gmra.mrb[0].mxu0 %v5974
        %v6131 = vpop.f32.mrb[0].mxu0
        %v6132 = vadd.f32 0.0, %v6131
        %v6133 = vpop.f32.mrb[0].mxu0
        %v6134 = vpop.f32.mrb[0].mxu0
        %v6135 = vadd.f32 0.0, %v6134
        %v6136 = vpop.f32.mrb[0].mxu0
        %6137 = vmatprep.mubr.bf16.mxu0 0
        %6138 = vmatmul.mubr.bf16.gmra.mrb[0].mxu0 %v5975
        %v6139 = vpop.f32.mrb[0].mxu0
        %v6140 = vadd.f32 0.0, %v6139
        %v6141 = vpop.f32.mrb[0].mxu0
        %v6142 = vpop.f32.mrb[0].mxu0
        %v6143 = vadd.f32 0.0, %v6142
        %v6144 = vpop.f32.mrb[0].mxu0
        %6145 = vmatprep.mubr.bf16.mxu0 0
        %6146 = vmatmul.mubr.bf16.gmra.mrb[0].mxu0 %v5976
        %v6147 = vpop.f32.mrb[0].mxu0
        %v6148 = vadd.f32 0.0, %v6147
        %v6149 = vpop.f32.mrb[0].mxu0
        %v6150 = vpop.f32.mrb[0].mxu0
        %v6151 = vadd.f32 0.0, %v6150
        %v6152 = vpop.f32.mrb[0].mxu0
        %6153 = vmatprep.mubr.bf16.mxu0 0
        %6154 = vmatmul.mubr.bf16.gmra.mrb[0].mxu0 %v5977
        %v6155 = vpop.f32.mrb[0].mxu0
        %v6156 = vadd.f32 0.0, %v6155
        %v6157 = vpop.f32.mrb[0].mxu0
        %v6158 = vpop.f32.mrb[0].mxu0
        %v6159 = vadd.f32 0.0, %v6158
        %v6160 = vpop.f32.mrb[0].mxu0
        %6161 = vmatprep.mubr.bf16.mxu0 0
        %6162 = vmatmul.mubr.bf16.gmra.mrb[0].mxu0 %v5978
        %v6163 = vpop.f32.mrb[0].mxu0
        %v6164 = vadd.f32 0.0, %v6163
        %v6165 = vpop.f32.mrb[0].mxu0
        %v6166 = vpop.f32.mrb[0].mxu0
        %v6167 = vadd.f32 0.0, %v6166
        %v6168 = vpop.f32.mrb[0].mxu0
        %6169 = vmatprep.mubr.bf16.mxu0 0
        %6170 = vmatmul.mubr.bf16.gmra.mrb[0].mxu0 %v5979
        %v6171 = vpop.f32.mrb[0].mxu0
        %v6172 = vadd.f32 0.0, %v6171
        %v6173 = vpop.f32.mrb[0].mxu0
        %v6174 = vpop.f32.mrb[0].mxu0
        %v6175 = vadd.f32 0.0, %v6174
        %v6176 = vpop.f32.mrb[0].mxu0
        %6177 = vmatprep.mubr.bf16.mxu0 0
        %6178 = vmatmul.mubr.bf16.gmra.mrb[0].mxu0 %v5980
        %v6179 = vpop.f32.mrb[0].mxu0
        %v6180 = vadd.f32 0.0, %v6179
        %v6181 = vpop.f32.mrb[0].mxu0
        %v6182 = vpop.f32.mrb[0].mxu0
        %v6183 = vadd.f32 0.0, %v6182
        %v6184 = vpop.f32.mrb[0].mxu0
        %6185 = vmatprep.mubr.bf16.mxu0 0
        %6186 = vmatmul.mubr.bf16.gmra.mrb[0].mxu0 %v5981
        %v6187 = vpop.f32.mrb[0].mxu0
        %v6188 = vadd.f32 0.0, %v6187
        %v6189 = vpop.f32.mrb[0].mxu0
        %v6190 = vpop.f32.mrb[0].mxu0
        %v6191 = vadd.f32 0.0, %v6190
        %v6192 = vpop.f32.mrb[0].mxu0
        %6193 = vmatprep.mubr.bf16.mxu0 0
        %6194 = vmatmul.mubr.bf16.gmra.mrb[0].mxu0 %v5982
        %v6195 = vpop.f32.mrb[0].mxu0
        %v6196 = vadd.f32 0.0, %v6195
        %v6197 = vpop.f32.mrb[0].mxu0
        %v6198 = vpop.f32.mrb[0].mxu0
        %v6199 = vadd.f32 0.0, %v6198
        %v6200 = vpop.f32.mrb[0].mxu0
        %6201 = vmatprep.mubr.bf16.mxu0 0
        %6202 = vmatmul.mubr.bf16.gmra.mrb[0].mxu0 %v5983
        %v6203 = vpop.f32.mrb[0].mxu0
        %v6204 = vadd.f32 0.0, %v6203
        %v6205 = vpop.f32.mrb[0].mxu0
        %v6206 = vpop.f32.mrb[0].mxu0
        %v6207 = vadd.f32 0.0, %v6206
        %v6208 = vpop.f32.mrb[0].mxu0
        %6209 = vdwg.mxu0
        %v6210 = vld [vmem:[%s2301 + $0x1] sm:$0xff]
        %v6211 = vld [vmem:[%s2301 + $0x9] sm:$0xff]
        %v6212 = vld [vmem:[%s2301 + $0x19] sm:$0xff]
        %v6213 = vld [vmem:[%s2301 + $0x21] sm:$0xff]
        %v6214 = vld [vmem:[%s2301 + $0x31] sm:$0xff]
        %v6215 = vld [vmem:[%s2301 + $0x39] sm:$0xff]
        %v6216 = vld [vmem:[%s2301 + $0x49] sm:$0xff]
        %v6217 = vld [vmem:[%s2301 + $0x51] sm:$0xff]
        %v6218 = vld [vmem:[%s2301 + $0x61] sm:$0xff]
        %v6219 = vld [vmem:[%s2301 + $0x69] sm:$0xff]
        %v6220 = vld [vmem:[%s2301 + $0x79] sm:$0xff]
        %v6221 = vld [vmem:[%s2301 + $0x81] sm:$0xff]
        %v6222 = vld [vmem:[%s2301 + $0x91] sm:$0xff]
        %v6223 = vld [vmem:[%s2301 + $0x99] sm:$0xff]
        %v6224 = vld [vmem:[%s2301 + $0xa9] sm:$0xff]
        %v6225 = vld [vmem:[%s2301 + $0xb1] sm:$0xff]
        %v6226 = vld [vmem:[%s2301 + $0xc1] sm:$0xff]
        %v6227 = vld [vmem:[%s2301 + $0xc9] sm:$0xff]
        %v6228 = vld [vmem:[%s2301 + $0xd9] sm:$0xff]
        %v6229 = vld [vmem:[%s2301 + $0xe1] sm:$0xff]
        %v6230 = vld [vmem:[%s2301 + $0xf1] sm:$0xff]
        %v6231 = vld [vmem:[%s2301 + $0xf9] sm:$0xff]
        %v6232 = vld [vmem:[%s2301 + $0x109] sm:$0xff]
        %v6233 = vld [vmem:[%s2301 + $0x111] sm:$0xff]
        %v6234 = vld [vmem:[%s2301 + $0x121] sm:$0xff]
        %v6235 = vld [vmem:[%s2301 + $0x129] sm:$0xff]
        %v6236 = vld [vmem:[%s2301 + $0x139] sm:$0xff]
        %v6237 = vld [vmem:[%s2301 + $0x141] sm:$0xff]
        %v6238 = vld [vmem:[%s2301 + $0x151] sm:$0xff]
        %v6239 = vld [vmem:[%s2301 + $0x159] sm:$0xff]
        %v6240 = vld [vmem:[%s2301 + $0x169] sm:$0xff]
        %v6241 = vld [vmem:[%s2301 + $0x171] sm:$0xff]
        %v6242 = vadd.f32 %v6084, %v6210
        %v6243 = vadd.f32 %v6087, %v6211
        %v6244 = vadd.f32 %v6092, %v6212
        %v6245 = vadd.f32 %v6095, %v6213
        %v6246 = vadd.f32 %v6100, %v6214
        %v6247 = vadd.f32 %v6103, %v6215
        %v6248 = vadd.f32 %v6108, %v6216
        %v6249 = vadd.f32 %v6111, %v6217
        %v6250 = vadd.f32 %v6116, %v6218
        %v6251 = vadd.f32 %v6119, %v6219
        %v6252 = vadd.f32 %v6124, %v6220
        %v6253 = vadd.f32 %v6127, %v6221
        %v6254 = vadd.f32 %v6132, %v6222
        %v6255 = vadd.f32 %v6135, %v6223
        %v6256 = vadd.f32 %v6140, %v6224
        %v6257 = vadd.f32 %v6143, %v6225
        %v6258 = vadd.f32 %v6148, %v6226
        %v6259 = vadd.f32 %v6151, %v6227
        %v6260 = vadd.f32 %v6156, %v6228
        %v6261 = vadd.f32 %v6159, %v6229
        %v6262 = vadd.f32 %v6164, %v6230
        %v6263 = vadd.f32 %v6167, %v6231
        %v6264 = vadd.f32 %v6172, %v6232
        %v6265 = vadd.f32 %v6175, %v6233
        %v6266 = vadd.f32 %v6180, %v6234
        %v6267 = vadd.f32 %v6183, %v6235
        %v6268 = vadd.f32 %v6188, %v6236
        %v6269 = vadd.f32 %v6191, %v6237
        %v6270 = vadd.f32 %v6196, %v6238
        %v6271 = vadd.f32 %v6199, %v6239
        %v6272 = vadd.f32 %v6204, %v6240
        %v6273 = vadd.f32 %v6207, %v6241
        %v6274 = vmax.f32 %v6242, 0.0
        %v6275 = vmax.f32 %v6243, 0.0
        %v6276 = vmax.f32 %v6244, 0.0
        %v6277 = vmax.f32 %v6245, 0.0
        %v6278 = vmax.f32 %v6246, 0.0
        %v6279 = vmax.f32 %v6247, 0.0
        %v6280 = vmax.f32 %v6248, 0.0
        %v6281 = vmax.f32 %v6249, 0.0
        %v6282 = vmax.f32 %v6250, 0.0
        %v6283 = vmax.f32 %v6251, 0.0
        %v6284 = vmax.f32 %v6252, 0.0
        %v6285 = vmax.f32 %v6253, 0.0
        %v6286 = vmax.f32 %v6254, 0.0
        %v6287 = vmax.f32 %v6255, 0.0
        %v6288 = vmax.f32 %v6256, 0.0
        %v6289 = vmax.f32 %v6257, 0.0
        %v6290 = vmax.f32 %v6258, 0.0
        %v6291 = vmax.f32 %v6259, 0.0
        %v6292 = vmax.f32 %v6260, 0.0
        %v6293 = vmax.f32 %v6261, 0.0
        %v6294 = vmax.f32 %v6262, 0.0
        %v6295 = vmax.f32 %v6263, 0.0
        %v6296 = vmax.f32 %v6264, 0.0
        %v6297 = vmax.f32 %v6265, 0.0
        %v6298 = vmax.f32 %v6266, 0.0
        %v6299 = vmax.f32 %v6267, 0.0
        %v6300 = vmax.f32 %v6268, 0.0
        %v6301 = vmax.f32 %v6269, 0.0
        %v6302 = vmax.f32 %v6270, 0.0
        %v6303 = vmax.f32 %v6271, 0.0
        %v6304 = vmax.f32 %v6272, 0.0
        %v6305 = vmax.f32 %v6273, 0.0
        %6306 = vst.msk [vmem:[#allocation2] sm:$0xff] %vm211, 0.0
        %6307 = vst.msk [vmem:[#allocation2 + $0x8] sm:$0xff] %vm211, 0.0
        %6308 = vst.msk [vmem:[#allocation2 + $0x10] sm:$0x3] %vm214, 0.0
        %6309 = vst.msk [vmem:[#allocation2 + $0x18] sm:$0xff] %vm211, 0.0
        %6310 = vst.msk [vmem:[#allocation2 + $0x20] sm:$0xff] %vm211, 0.0
        %6311 = vst.msk [vmem:[#allocation2 + $0x28] sm:$0x3] %vm214, 0.0
        %6312 = vst.msk [vmem:[#allocation2 + $0x30] sm:$0xff] %vm211, 0.0
        %6313 = vst.msk [vmem:[#allocation2 + $0x38] sm:$0xff] %vm211, 0.0
        %6314 = vst.msk [vmem:[#allocation2 + $0x40] sm:$0x3] %vm214, 0.0
        %6315 = vst.msk [vmem:[#allocation2 + $0x48] sm:$0xff] %vm211, 0.0
        %6316 = vst.msk [vmem:[#allocation2 + $0x50] sm:$0xff] %vm211, 0.0
        %6317 = vst.msk [vmem:[#allocation2 + $0x58] sm:$0x3] %vm214, 0.0
        %6318 = vst.msk [vmem:[#allocation2 + $0x60] sm:$0xff] %vm211, 0.0
        %6319 = vst.msk [vmem:[#allocation2 + $0x68] sm:$0xff] %vm211, 0.0
        %6320 = vst.msk [vmem:[#allocation2 + $0x70] sm:$0x3] %vm214, 0.0
        %6321 = vst.msk [vmem:[#allocation2 + $0x78] sm:$0xff] %vm211, 0.0
        %6322 = vst.msk [vmem:[#allocation2 + $0x80] sm:$0xff] %vm211, 0.0
        %6323 = vst.msk [vmem:[#allocation2 + $0x88] sm:$0x3] %vm214, 0.0
        %6324 = vst.msk [vmem:[#allocation2 + $0x90] sm:$0xff] %vm211, 0.0
        %6325 = vst.msk [vmem:[#allocation2 + $0x98] sm:$0xff] %vm211, 0.0
        %6326 = vst.msk [vmem:[#allocation2 + $0xa0] sm:$0x3] %vm214, 0.0
        %6327 = vst.msk [vmem:[#allocation2 + $0xa8] sm:$0xff] %vm211, 0.0
        %6328 = vst.msk [vmem:[#allocation2 + $0xb0] sm:$0xff] %vm211, 0.0
        %6329 = vst.msk [vmem:[#allocation2 + $0xb8] sm:$0x3] %vm214, 0.0
        %6330 = vst.msk [vmem:[#allocation2 + $0xc0] sm:$0xff] %vm211, 0.0
        %6331 = vst.msk [vmem:[#allocation2 + $0xc8] sm:$0xff] %vm211, 0.0
        %6332 = vst.msk [vmem:[#allocation2 + $0xd0] sm:$0x3] %vm214, 0.0
        %6333 = vst.msk [vmem:[#allocation2 + $0xd8] sm:$0xff] %vm211, 0.0
        %6334 = vst.msk [vmem:[#allocation2 + $0xe0] sm:$0xff] %vm211, 0.0
        %6335 = vst.msk [vmem:[#allocation2 + $0xe8] sm:$0x3] %vm214, 0.0
        %6336 = vst.msk [vmem:[#allocation2 + $0xf0] sm:$0xff] %vm211, 0.0
        %6337 = vst.msk [vmem:[#allocation2 + $0xf8] sm:$0xff] %vm211, 0.0
        %6338 = vst.msk [vmem:[#allocation2 + $0x100] sm:$0x3] %vm214, 0.0
        %6339 = vst.msk [vmem:[#allocation2 + $0x108] sm:$0xff] %vm211, 0.0
        %6340 = vst.msk [vmem:[#allocation2 + $0x110] sm:$0xff] %vm211, 0.0
        %6341 = vst.msk [vmem:[#allocation2 + $0x118] sm:$0x3] %vm214, 0.0
        %6342 = vst.msk [vmem:[#allocation2 + $0x120] sm:$0xff] %vm211, 0.0
        %6343 = vst.msk [vmem:[#allocation2 + $0x128] sm:$0xff] %vm211, 0.0
        %6344 = vst.msk [vmem:[#allocation2 + $0x130] sm:$0x3] %vm214, 0.0
        %6345 = vst.msk [vmem:[#allocation2 + $0x138] sm:$0xff] %vm211, 0.0
        %6346 = vst.msk [vmem:[#allocation2 + $0x140] sm:$0xff] %vm211, 0.0
        %6347 = vst.msk [vmem:[#allocation2 + $0x148] sm:$0x3] %vm214, 0.0
        %6348 = vst.msk [vmem:[#allocation2 + $0x150] sm:$0xff] %vm211, 0.0
        %6349 = vst.msk [vmem:[#allocation2 + $0x158] sm:$0xff] %vm211, 0.0
        %6350 = vst.msk [vmem:[#allocation2 + $0x160] sm:$0x3] %vm214, 0.0
        %6351 = vst.msk [vmem:[#allocation2 + $0x168] sm:$0xff] %vm211, 0.0
        %6352 = vst.msk [vmem:[#allocation2 + $0x170] sm:$0xff] %vm211, 0.0
        %6353 = vst.msk [vmem:[#allocation2 + $0x178] sm:$0x3] %vm214, 0.0
        %6354 = vst.msk [vmem:[#allocation2 + $0x180] sm:$0xff] %vm211, 0.0
        %6355 = vst.msk [vmem:[#allocation2 + $0x188] sm:$0xff] %vm211, 0.0
        %6356 = vst.msk [vmem:[#allocation2 + $0x190] sm:$0x3] %vm214, 0.0
        %6357 = vst.msk [vmem:[#allocation2 + $0x198] sm:$0xff] %vm211, 0.0
        %6358 = vst.msk [vmem:[#allocation2 + $0x1a0] sm:$0xff] %vm211, 0.0
        %6359 = vst.msk [vmem:[#allocation2 + $0x1a8] sm:$0x3] %vm214, 0.0
        %6360 = vst.msk [vmem:[%s299 + $0x1] sm:$0xff] %vm2302, %v6274
        %6361 = vst.msk [vmem:[%s299 + $0x9] sm:$0xff] %vm2302, %v6275
        %6362 = vst.msk [vmem:[%s299 + $0x19] sm:$0xff] %vm2302, %v6276
        %6363 = vst.msk [vmem:[%s299 + $0x21] sm:$0xff] %vm2302, %v6277
        %6364 = vst.msk [vmem:[%s299 + $0x31] sm:$0xff] %vm2302, %v6278
        %6365 = vst.msk [vmem:[%s299 + $0x39] sm:$0xff] %vm2302, %v6279
        %6366 = vst.msk [vmem:[%s299 + $0x49] sm:$0xff] %vm2302, %v6280
        %6367 = vst.msk [vmem:[%s299 + $0x51] sm:$0xff] %vm2302, %v6281
        %6368 = vst.msk [vmem:[%s299 + $0x61] sm:$0xff] %vm2302, %v6282
        %6369 = vst.msk [vmem:[%s299 + $0x69] sm:$0xff] %vm2302, %v6283
        %6370 = vst.msk [vmem:[%s299 + $0x79] sm:$0xff] %vm2302, %v6284
        %6371 = vst.msk [vmem:[%s299 + $0x81] sm:$0xff] %vm2302, %v6285
        %6372 = vst.msk [vmem:[%s299 + $0x91] sm:$0xff] %vm2302, %v6286
        %6373 = vst.msk [vmem:[%s299 + $0x99] sm:$0xff] %vm2302, %v6287
        %6374 = vst.msk [vmem:[%s299 + $0xa9] sm:$0xff] %vm2302, %v6288
        %6375 = vst.msk [vmem:[%s299 + $0xb1] sm:$0xff] %vm2302, %v6289
        %6376 = vst.msk [vmem:[%s299 + $0xc1] sm:$0xff] %vm2302, %v6290
        %6377 = vst.msk [vmem:[%s299 + $0xc9] sm:$0xff] %vm2302, %v6291
        %6378 = vst.msk [vmem:[%s299 + $0xd9] sm:$0xff] %vm2302, %v6292
        %6379 = vst.msk [vmem:[%s299 + $0xe1] sm:$0xff] %vm2302, %v6293
        %6380 = vst.msk [vmem:[%s299 + $0xf1] sm:$0xff] %vm2302, %v6294
        %6381 = vst.msk [vmem:[%s299 + $0xf9] sm:$0xff] %vm2302, %v6295
        %6382 = vst.msk [vmem:[%s299 + $0x109] sm:$0xff] %vm2302, %v6296
        %6383 = vst.msk [vmem:[%s299 + $0x111] sm:$0xff] %vm2302, %v6297
        %6384 = vst.msk [vmem:[%s299 + $0x121] sm:$0xff] %vm2302, %v6298
        %6385 = vst.msk [vmem:[%s299 + $0x129] sm:$0xff] %vm2302, %v6299
        %6386 = vst.msk [vmem:[%s299 + $0x139] sm:$0xff] %vm2302, %v6300
        %6387 = vst.msk [vmem:[%s299 + $0x141] sm:$0xff] %vm2302, %v6301
        %6388 = vst.msk [vmem:[%s299 + $0x151] sm:$0xff] %vm2302, %v6302
        %6389 = vst.msk [vmem:[%s299 + $0x159] sm:$0xff] %vm2302, %v6303
        %6390 = vst.msk [vmem:[%s299 + $0x169] sm:$0xff] %vm2302, %v6304
        %6391 = vst.msk [vmem:[%s299 + $0x171] sm:$0xff] %vm2302, %v6305
        %s6392 = scalar_lea.vmem %s299, 1 [#allocation2]
        %v6393 = vld [vmem:[%s6392] ss:$2 sm:$0xff]
        %s6394 = scalar_lea.vmem %s299, 49 [#allocation2]
        %v6395 = vld [vmem:[%s6394] ss:$2 sm:$0xff]
        %s6396 = scalar_lea.vmem %s299, 97 [#allocation2]
        %v6397 = vld [vmem:[%s6396] ss:$2 sm:$0xff]
        %s6398 = scalar_lea.vmem %s299, 145 [#allocation2]
        %v6399 = vld [vmem:[%s6398] ss:$2 sm:$0xff]
        %s6400 = scalar_lea.vmem %s299, 193 [#allocation2]
        %v6401 = vld [vmem:[%s6400] ss:$2 sm:$0xff]
        %s6402 = scalar_lea.vmem %s299, 241 [#allocation2]
        %v6403 = vld [vmem:[%s6402] ss:$2 sm:$0xff]
        %s6404 = scalar_lea.vmem %s299, 289 [#allocation2]
        %v6405 = vld [vmem:[%s6404] ss:$2 sm:$0xff]
        %s6406 = scalar_lea.vmem %s299, 337 [#allocation2]
        %v6407 = vld [vmem:[%s6406] ss:$2 sm:$0xff]
        %6408 = vst.msk [vmem:[#allocation4] sm:$0xff] %vm2302, %v6393
        %6409 = vst.msk [vmem:[#allocation4 + $0x10] sm:$0xff] %vm2302, %v6395
        %6410 = vst.msk [vmem:[#allocation4 + $0x20] sm:$0xff] %vm2302, %v6397
        %6411 = vst.msk [vmem:[#allocation4 + $0x30] sm:$0xff] %vm2302, %v6399
        %6412 = vst.msk [vmem:[#allocation4 + $0x40] sm:$0xff] %vm2302, %v6401
        %6413 = vst.msk [vmem:[#allocation4 + $0x50] sm:$0xff] %vm2302, %v6403
        %6414 = vst.msk [vmem:[#allocation4 + $0x60] sm:$0xff] %vm2302, %v6405
        %6415 = vst.msk [vmem:[#allocation4 + $0x70] sm:$0xff] %vm2302, %v6407
        %v6416 = vld [vmem:[#allocation4] sm:$0xff]
        %v6417 = vld [vmem:[#allocation4 + $0x10] sm:$0xff]
        %v6418 = vld [vmem:[#allocation4 + $0x20] sm:$0xff]
        %v6419 = vld [vmem:[#allocation4 + $0x30] sm:$0xff]
        %v6420 = vld [vmem:[#allocation4 + $0x40] sm:$0xff]
        %v6421 = vld [vmem:[#allocation4 + $0x50] sm:$0xff]
        %v6422 = vld [vmem:[#allocation4 + $0x60] sm:$0xff]
        %v6423 = vld [vmem:[#allocation4 + $0x70] sm:$0xff]
        %v6424 = vpack.c.bf16 %v6417, %v6416
        %v6425 = vpack.c.bf16 %v6419, %v6418
        %v6426 = vpack.c.bf16 %v6421, %v6420
        %v6427 = vpack.c.bf16 %v6423, %v6422
        %s6428 = scalar_lea.vmem %s1, 192
        %v6429 = vld [vmem:[%s6428] sm:$0xf]
        %v6430 = vld [vmem:[%s6428 + $0x4] sm:$0xf]
        %v6431 = vld [vmem:[%s6428 + $0x8] sm:$0xf]
        %v6432 = vld [vmem:[%s6428 + $0xc] sm:$0xf]
        %v6433 = vld [vmem:[%s6428 + $0x10] sm:$0xf]
        %v6434 = vld [vmem:[%s6428 + $0x14] sm:$0xf]
        %v6435 = vld [vmem:[%s6428 + $0x18] sm:$0xf]
        %v6436 = vld [vmem:[%s6428 + $0x1c] sm:$0xf]
        %v6437 = vld [vmem:[%s6428 + $0x20] sm:$0xf]
        %v6438 = vld [vmem:[%s6428 + $0x24] sm:$0xf]
        %v6439 = vld [vmem:[%s6428 + $0x28] sm:$0xf]
        %v6440 = vld [vmem:[%s6428 + $0x2c] sm:$0xf]
        %v6441 = vld [vmem:[%s6428 + $0x30] sm:$0xf]
        %v6442 = vld [vmem:[%s6428 + $0x34] sm:$0xf]
        %v6443 = vld [vmem:[%s6428 + $0x38] sm:$0xf]
        %v6444 = vld [vmem:[%s6428 + $0x3c] sm:$0xf]
        %v6461 = vunpack.c.l.b16 %v6429
        %v6462 = vunpack.c.l.b16 %v6430
        %v6463 = vunpack.c.l.b16 %v6431
        %v6464 = vunpack.c.l.b16 %v6432
        %v6465 = vunpack.c.l.b16 %v6433
        %v6466 = vunpack.c.l.b16 %v6434
        %v6467 = vunpack.c.l.b16 %v6435
        %v6468 = vunpack.c.l.b16 %v6436
        %v6469 = vunpack.c.l.b16 %v6437
        %v6470 = vunpack.c.l.b16 %v6438
        %v6471 = vunpack.c.l.b16 %v6439
        %v6472 = vunpack.c.l.b16 %v6440
        %v6473 = vunpack.c.l.b16 %v6441
        %v6474 = vunpack.c.l.b16 %v6442
        %v6475 = vunpack.c.l.b16 %v6443
        %v6476 = vunpack.c.l.b16 %v6444
        %v6477 = vpack.c.b16 %v6462, %v6461
        %v6478 = vpack.c.b16 %v6464, %v6463
        %v6479 = vpack.c.b16 %v6466, %v6465
        %v6480 = vpack.c.b16 %v6468, %v6467
        %v6481 = vpack.c.b16 %v6470, %v6469
        %v6482 = vpack.c.b16 %v6472, %v6471
        %v6483 = vpack.c.b16 %v6474, %v6473
        %v6484 = vpack.c.b16 %v6476, %v6475
        %6493 = vmatprep.subr.bf16.mxu0 0
        %6494 = vmatpush1.bf16.msra.mxu0 %v6477
        %6495 = vmatprep.subr.bf16.mxu0 0
        %6496 = vmatpush1.bf16.msra.mxu0 %v6478
        %6497 = vmatprep.subr.bf16.mxu0 0
        %6498 = vmatpush1.bf16.msra.mxu0 %v6479
        %6499 = vmatprep.subr.bf16.mxu0 0
        %6500 = vmatpush1.bf16.msra.mxu0 %v6480
        %6501 = vmatprep.subr.bf16.mxu0 0
        %6502 = vmatpush1.bf16.msra.mxu0 %v6481
        %6503 = vmatprep.subr.bf16.mxu0 0
        %6504 = vmatpush1.bf16.msra.mxu0 %v6482
        %6505 = vmatprep.subr.bf16.mxu0 0
        %6506 = vmatpush1.bf16.msra.mxu0 %v6483
        %6507 = vmatprep.subr.bf16.mxu0 0
        %6508 = vmatpush1.bf16.msra.mxu0 %v6484
        %6509 = vmatprep.subr.bf16.mxu0 0
        %6510 = vmatpush1.bf16.msra.mxu0 0
        %6511 = vmatprep.subr.bf16.mxu0 0
        %6512 = vmatpush1.bf16.msra.mxu0 0
        %6513 = vmatprep.subr.bf16.mxu0 0
        %6514 = vmatpush1.bf16.msra.mxu0 0
        %6515 = vmatprep.subr.bf16.mxu0 0
        %6516 = vmatpush1.bf16.msra.mxu0 0
        %6517 = vmatprep.subr.bf16.mxu0 0
        %6518 = vmatpush1.bf16.msra.mxu0 0
        %6519 = vmatprep.subr.bf16.mxu0 0
        %6520 = vmatpush1.bf16.msra.mxu0 0
        %6521 = vmatprep.subr.bf16.mxu0 0
        %6522 = vmatpush1.bf16.msra.mxu0 0
        %6523 = vmatprep.subr.bf16.mxu0 0
        %6524 = vmatpush1.bf16.msra.mxu0 0
        %6525 = vmatprep.mubr.bf16.mxu0 0
        %6526 = vmatmul.mubr.bf16.gmra.mrb[0].mxu0 %v6424
        %v6527 = vpop.f32.mrb[0].mxu0
        %v6528 = vadd.f32 0.0, %v6527
        %v6529 = vpop.f32.mrb[0].mxu0
        %v6530 = vpop.f32.mrb[0].mxu0
        %v6531 = vadd.f32 0.0, %v6530
        %v6532 = vpop.f32.mrb[0].mxu0
        %6533 = vmatprep.mubr.bf16.mxu0 0
        %6534 = vmatmul.mubr.bf16.gmra.mrb[0].mxu0 %v6425
        %v6535 = vpop.f32.mrb[0].mxu0
        %v6536 = vadd.f32 0.0, %v6535
        %v6537 = vpop.f32.mrb[0].mxu0
        %v6538 = vpop.f32.mrb[0].mxu0
        %v6539 = vadd.f32 0.0, %v6538
        %v6540 = vpop.f32.mrb[0].mxu0
        %6541 = vmatprep.mubr.bf16.mxu0 0
        %6542 = vmatmul.mubr.bf16.gmra.mrb[0].mxu0 %v6426
        %v6543 = vpop.f32.mrb[0].mxu0
        %v6544 = vadd.f32 0.0, %v6543
        %v6545 = vpop.f32.mrb[0].mxu0
        %v6546 = vpop.f32.mrb[0].mxu0
        %v6547 = vadd.f32 0.0, %v6546
        %v6548 = vpop.f32.mrb[0].mxu0
        %6549 = vmatprep.mubr.bf16.mxu0 0
        %6550 = vmatmul.mubr.bf16.gmra.mrb[0].mxu0 %v6427
        %v6551 = vpop.f32.mrb[0].mxu0
        %v6552 = vadd.f32 0.0, %v6551
        %v6553 = vpop.f32.mrb[0].mxu0
        %v6554 = vpop.f32.mrb[0].mxu0
        %v6555 = vadd.f32 0.0, %v6554
        %v6556 = vpop.f32.mrb[0].mxu0
        %6557 = vdwg.mxu0
        %6558 = vst [vmem:[#allocation5] sm:$0xff] %v6528
        %6559 = vst [vmem:[#allocation5 + $0x8] sm:$0xff] %v6531
        %6560 = vst [vmem:[#allocation5 + $0x10] sm:$0xff] %v6536
        %6561 = vst [vmem:[#allocation5 + $0x18] sm:$0xff] %v6539
        %6562 = vst [vmem:[#allocation5 + $0x20] sm:$0xff] %v6544
        %6563 = vst [vmem:[#allocation5 + $0x28] sm:$0xff] %v6547
        %6564 = vst [vmem:[#allocation5 + $0x30] sm:$0xff] %v6552
        %6565 = vst [vmem:[#allocation5 + $0x38] sm:$0xff] %v6555
        %v6566 = vld [vmem:[#allocation2] ss:$2 sm:$0xff]
        %s6567 = scalar_lea.vmem [#allocation2], 48
        %v6568 = vld [vmem:[%s6567] ss:$2 sm:$0xff]
        %s6569 = scalar_lea.vmem [#allocation2], 96
        %v6570 = vld [vmem:[%s6569] ss:$2 sm:$0xff]
        %s6571 = scalar_lea.vmem [#allocation2], 144
        %v6572 = vld [vmem:[%s6571] ss:$2 sm:$0xff]
        %s6573 = scalar_lea.vmem [#allocation2], 192
        %v6574 = vld [vmem:[%s6573] ss:$2 sm:$0xff]
        %s6575 = scalar_lea.vmem [#allocation2], 240
        %v6576 = vld [vmem:[%s6575] ss:$2 sm:$0xff]
        %s6577 = scalar_lea.vmem [#allocation2], 288
        %v6578 = vld [vmem:[%s6577] ss:$2 sm:$0xff]
        %s6579 = scalar_lea.vmem [#allocation2], 336
        %v6580 = vld [vmem:[%s6579] ss:$2 sm:$0xff]
        %6581 = vst.msk [vmem:[#allocation4] sm:$0xff] %vm2302, %v6566
        %6582 = vst.msk [vmem:[#allocation4 + $0x10] sm:$0xff] %vm2302, %v6568
        %6583 = vst.msk [vmem:[#allocation4 + $0x20] sm:$0xff] %vm2302, %v6570
        %6584 = vst.msk [vmem:[#allocation4 + $0x30] sm:$0xff] %vm2302, %v6572
        %6585 = vst.msk [vmem:[#allocation4 + $0x40] sm:$0xff] %vm2302, %v6574
        %6586 = vst.msk [vmem:[#allocation4 + $0x50] sm:$0xff] %vm2302, %v6576
        %6587 = vst.msk [vmem:[#allocation4 + $0x60] sm:$0xff] %vm2302, %v6578
        %6588 = vst.msk [vmem:[#allocation4 + $0x70] sm:$0xff] %vm2302, %v6580
        %s6589 = scalar_lea.vmem [#allocation2], 1
        %v6590 = vld [vmem:[%s6589] ss:$2 sm:$0xff]
        %s6591 = scalar_lea.vmem [#allocation2], 49
        %v6592 = vld [vmem:[%s6591] ss:$2 sm:$0xff]
        %s6593 = scalar_lea.vmem [#allocation2], 97
        %v6594 = vld [vmem:[%s6593] ss:$2 sm:$0xff]
        %s6595 = scalar_lea.vmem [#allocation2], 145
        %v6596 = vld [vmem:[%s6595] ss:$2 sm:$0xff]
        %s6597 = scalar_lea.vmem [#allocation2], 193
        %v6598 = vld [vmem:[%s6597] ss:$2 sm:$0xff]
        %s6599 = scalar_lea.vmem [#allocation2], 241
        %v6600 = vld [vmem:[%s6599] ss:$2 sm:$0xff]
        %s6601 = scalar_lea.vmem [#allocation2], 289
        %v6602 = vld [vmem:[%s6601] ss:$2 sm:$0xff]
        %s6603 = scalar_lea.vmem [#allocation2], 337
        %v6604 = vld [vmem:[%s6603] ss:$2 sm:$0xff]
        %6613 = vrot.lane.b32.xlu0 %v6590, 4
        %v6614 = vpop.permute.xlu0 %6613
        %6615 = vrot.lane.b32.xlu0 %v6592, 4
        %v6616 = vpop.permute.xlu0 %6615
        %6617 = vrot.lane.b32.xlu0 %v6594, 4
        %v6618 = vpop.permute.xlu0 %6617
        %6619 = vrot.lane.b32.xlu0 %v6596, 4
        %v6620 = vpop.permute.xlu0 %6619
        %6621 = vrot.lane.b32.xlu0 %v6598, 4
        %v6622 = vpop.permute.xlu0 %6621
        %6623 = vrot.lane.b32.xlu0 %v6600, 4
        %v6624 = vpop.permute.xlu0 %6623
        %6625 = vrot.lane.b32.xlu0 %v6602, 4
        %v6626 = vpop.permute.xlu0 %6625
        %6627 = vrot.lane.b32.xlu0 %v6604, 4
        %v6628 = vpop.permute.xlu0 %6627
        %6637 = vst.msk [vmem:[#allocation4] sm:$0xff] %vm2559, %v6614
        %6638 = vst.msk [vmem:[#allocation4 + $0x10] sm:$0xff] %vm2559, %v6616
        %6639 = vst.msk [vmem:[#allocation4 + $0x20] sm:$0xff] %vm2559, %v6618
        %6640 = vst.msk [vmem:[#allocation4 + $0x30] sm:$0xff] %vm2559, %v6620
        %6641 = vst.msk [vmem:[#allocation4 + $0x40] sm:$0xff] %vm2559, %v6622
        %6642 = vst.msk [vmem:[#allocation4 + $0x50] sm:$0xff] %vm2559, %v6624
        %6643 = vst.msk [vmem:[#allocation4 + $0x60] sm:$0xff] %vm2559, %v6626
        %6644 = vst.msk [vmem:[#allocation4 + $0x70] sm:$0xff] %vm2559, %v6628
        %s6645 = scalar_lea.vmem [#allocation2], 2
        %v6646 = vld [vmem:[%s6645] ss:$2 sm:$0xff]
        %s6647 = scalar_lea.vmem [#allocation2], 50
        %v6648 = vld [vmem:[%s6647] ss:$2 sm:$0xff]
        %s6649 = scalar_lea.vmem [#allocation2], 98
        %v6650 = vld [vmem:[%s6649] ss:$2 sm:$0xff]
        %s6651 = scalar_lea.vmem [#allocation2], 146
        %v6652 = vld [vmem:[%s6651] ss:$2 sm:$0xff]
        %s6653 = scalar_lea.vmem [#allocation2], 194
        %v6654 = vld [vmem:[%s6653] ss:$2 sm:$0xff]
        %s6655 = scalar_lea.vmem [#allocation2], 242
        %v6656 = vld [vmem:[%s6655] ss:$2 sm:$0xff]
        %s6657 = scalar_lea.vmem [#allocation2], 290
        %v6658 = vld [vmem:[%s6657] ss:$2 sm:$0xff]
        %s6659 = scalar_lea.vmem [#allocation2], 338
        %v6660 = vld [vmem:[%s6659] ss:$2 sm:$0xff]
        %6669 = vrot.lane.b32.xlu0 %v6646, 8
        %v6670 = vpop.permute.xlu0 %6669
        %6671 = vrot.lane.b32.xlu0 %v6648, 8
        %v6672 = vpop.permute.xlu0 %6671
        %6673 = vrot.lane.b32.xlu0 %v6650, 8
        %v6674 = vpop.permute.xlu0 %6673
        %6675 = vrot.lane.b32.xlu0 %v6652, 8
        %v6676 = vpop.permute.xlu0 %6675
        %6677 = vrot.lane.b32.xlu0 %v6654, 8
        %v6678 = vpop.permute.xlu0 %6677
        %6679 = vrot.lane.b32.xlu0 %v6656, 8
        %v6680 = vpop.permute.xlu0 %6679
        %6681 = vrot.lane.b32.xlu0 %v6658, 8
        %v6682 = vpop.permute.xlu0 %6681
        %6683 = vrot.lane.b32.xlu0 %v6660, 8
        %v6684 = vpop.permute.xlu0 %6683
        %6693 = vst.msk [vmem:[#allocation4] sm:$0xff] %vm2752, %v6670
        %6694 = vst.msk [vmem:[#allocation4 + $0x10] sm:$0xff] %vm2752, %v6672
        %6695 = vst.msk [vmem:[#allocation4 + $0x20] sm:$0xff] %vm2752, %v6674
        %6696 = vst.msk [vmem:[#allocation4 + $0x30] sm:$0xff] %vm2752, %v6676
        %6697 = vst.msk [vmem:[#allocation4 + $0x40] sm:$0xff] %vm2752, %v6678
        %6698 = vst.msk [vmem:[#allocation4 + $0x50] sm:$0xff] %vm2752, %v6680
        %6699 = vst.msk [vmem:[#allocation4 + $0x60] sm:$0xff] %vm2752, %v6682
        %6700 = vst.msk [vmem:[#allocation4 + $0x70] sm:$0xff] %vm2752, %v6684
        %v6701 = vld [vmem:[%s299] ss:$2 sm:$0xff]
        %s6702 = scalar_lea.vmem %s299, 48 [#allocation2]
        %v6703 = vld [vmem:[%s6702] ss:$2 sm:$0xff]
        %s6704 = scalar_lea.vmem %s299, 96 [#allocation2]
        %v6705 = vld [vmem:[%s6704] ss:$2 sm:$0xff]
        %s6706 = scalar_lea.vmem %s299, 144 [#allocation2]
        %v6707 = vld [vmem:[%s6706] ss:$2 sm:$0xff]
        %s6708 = scalar_lea.vmem %s299, 192 [#allocation2]
        %v6709 = vld [vmem:[%s6708] ss:$2 sm:$0xff]
        %s6710 = scalar_lea.vmem %s299, 240 [#allocation2]
        %v6711 = vld [vmem:[%s6710] ss:$2 sm:$0xff]
        %s6712 = scalar_lea.vmem %s299, 288 [#allocation2]
        %v6713 = vld [vmem:[%s6712] ss:$2 sm:$0xff]
        %s6714 = scalar_lea.vmem %s299, 336 [#allocation2]
        %v6715 = vld [vmem:[%s6714] ss:$2 sm:$0xff]
        %6724 = vrot.lane.b32.xlu0 %v6701, 12
        %v6725 = vpop.permute.xlu0 %6724
        %6726 = vrot.lane.b32.xlu0 %v6703, 12
        %v6727 = vpop.permute.xlu0 %6726
        %6728 = vrot.lane.b32.xlu0 %v6705, 12
        %v6729 = vpop.permute.xlu0 %6728
        %6730 = vrot.lane.b32.xlu0 %v6707, 12
        %v6731 = vpop.permute.xlu0 %6730
        %6732 = vrot.lane.b32.xlu0 %v6709, 12
        %v6733 = vpop.permute.xlu0 %6732
        %6734 = vrot.lane.b32.xlu0 %v6711, 12
        %v6735 = vpop.permute.xlu0 %6734
        %6736 = vrot.lane.b32.xlu0 %v6713, 12
        %v6737 = vpop.permute.xlu0 %6736
        %6738 = vrot.lane.b32.xlu0 %v6715, 12
        %v6739 = vpop.permute.xlu0 %6738
        %6748 = vst.msk [vmem:[#allocation4] sm:$0xff] %vm2945, %v6725
        %6749 = vst.msk [vmem:[#allocation4 + $0x10] sm:$0xff] %vm2945, %v6727
        %6750 = vst.msk [vmem:[#allocation4 + $0x20] sm:$0xff] %vm2945, %v6729
        %6751 = vst.msk [vmem:[#allocation4 + $0x30] sm:$0xff] %vm2945, %v6731
        %6752 = vst.msk [vmem:[#allocation4 + $0x40] sm:$0xff] %vm2945, %v6733
        %6753 = vst.msk [vmem:[#allocation4 + $0x50] sm:$0xff] %vm2945, %v6735
        %6754 = vst.msk [vmem:[#allocation4 + $0x60] sm:$0xff] %vm2945, %v6737
        %6755 = vst.msk [vmem:[#allocation4 + $0x70] sm:$0xff] %vm2945, %v6739
        %v6756 = vld [vmem:[%s6392] ss:$2 sm:$0xff]
        %v6757 = vld [vmem:[%s6394] ss:$2 sm:$0xff]
        %v6758 = vld [vmem:[%s6396] ss:$2 sm:$0xff]
        %v6759 = vld [vmem:[%s6398] ss:$2 sm:$0xff]
        %v6760 = vld [vmem:[%s6400] ss:$2 sm:$0xff]
        %v6761 = vld [vmem:[%s6402] ss:$2 sm:$0xff]
        %v6762 = vld [vmem:[%s6404] ss:$2 sm:$0xff]
        %v6763 = vld [vmem:[%s6406] ss:$2 sm:$0xff]
        %6772 = vrot.lane.b32.xlu0 %v6756, 16
        %v6773 = vpop.permute.xlu0 %6772
        %6774 = vrot.lane.b32.xlu0 %v6757, 16
        %v6775 = vpop.permute.xlu0 %6774
        %6776 = vrot.lane.b32.xlu0 %v6758, 16
        %v6777 = vpop.permute.xlu0 %6776
        %6778 = vrot.lane.b32.xlu0 %v6759, 16
        %v6779 = vpop.permute.xlu0 %6778
        %6780 = vrot.lane.b32.xlu0 %v6760, 16
        %v6781 = vpop.permute.xlu0 %6780
        %6782 = vrot.lane.b32.xlu0 %v6761, 16
        %v6783 = vpop.permute.xlu0 %6782
        %6784 = vrot.lane.b32.xlu0 %v6762, 16
        %v6785 = vpop.permute.xlu0 %6784
        %6786 = vrot.lane.b32.xlu0 %v6763, 16
        %v6787 = vpop.permute.xlu0 %6786
        %6796 = vst.msk [vmem:[#allocation4] sm:$0xff] %vm3138, %v6773
        %6797 = vst.msk [vmem:[#allocation4 + $0x10] sm:$0xff] %vm3138, %v6775
        %6798 = vst.msk [vmem:[#allocation4 + $0x20] sm:$0xff] %vm3138, %v6777
        %6799 = vst.msk [vmem:[#allocation4 + $0x30] sm:$0xff] %vm3138, %v6779
        %6800 = vst.msk [vmem:[#allocation4 + $0x40] sm:$0xff] %vm3138, %v6781
        %6801 = vst.msk [vmem:[#allocation4 + $0x50] sm:$0xff] %vm3138, %v6783
        %6802 = vst.msk [vmem:[#allocation4 + $0x60] sm:$0xff] %vm3138, %v6785
        %6803 = vst.msk [vmem:[#allocation4 + $0x70] sm:$0xff] %vm3138, %v6787
        %s6804 = scalar_lea.vmem %s299, 2 [#allocation2]
        %v6805 = vld [vmem:[%s6804] ss:$2 sm:$0xff]
        %s6806 = scalar_lea.vmem %s299, 50 [#allocation2]
        %v6807 = vld [vmem:[%s6806] ss:$2 sm:$0xff]
        %s6808 = scalar_lea.vmem %s299, 98 [#allocation2]
        %v6809 = vld [vmem:[%s6808] ss:$2 sm:$0xff]
        %s6810 = scalar_lea.vmem %s299, 146 [#allocation2]
        %v6811 = vld [vmem:[%s6810] ss:$2 sm:$0xff]
        %s6812 = scalar_lea.vmem %s299, 194 [#allocation2]
        %v6813 = vld [vmem:[%s6812] ss:$2 sm:$0xff]
        %s6814 = scalar_lea.vmem %s299, 242 [#allocation2]
        %v6815 = vld [vmem:[%s6814] ss:$2 sm:$0xff]
        %s6816 = scalar_lea.vmem %s299, 290 [#allocation2]
        %v6817 = vld [vmem:[%s6816] ss:$2 sm:$0xff]
        %s6818 = scalar_lea.vmem %s299, 338 [#allocation2]
        %v6819 = vld [vmem:[%s6818] ss:$2 sm:$0xff]
        %6828 = vrot.lane.b32.xlu0 %v6805, 20
        %v6829 = vpop.permute.xlu0 %6828
        %6830 = vrot.lane.b32.xlu0 %v6807, 20
        %v6831 = vpop.permute.xlu0 %6830
        %6832 = vrot.lane.b32.xlu0 %v6809, 20
        %v6833 = vpop.permute.xlu0 %6832
        %6834 = vrot.lane.b32.xlu0 %v6811, 20
        %v6835 = vpop.permute.xlu0 %6834
        %6836 = vrot.lane.b32.xlu0 %v6813, 20
        %v6837 = vpop.permute.xlu0 %6836
        %6838 = vrot.lane.b32.xlu0 %v6815, 20
        %v6839 = vpop.permute.xlu0 %6838
        %6840 = vrot.lane.b32.xlu0 %v6817, 20
        %v6841 = vpop.permute.xlu0 %6840
        %6842 = vrot.lane.b32.xlu0 %v6819, 20
        %v6843 = vpop.permute.xlu0 %6842
        %6852 = vst.msk [vmem:[#allocation4] sm:$0xff] %vm3331, %v6829
        %6853 = vst.msk [vmem:[#allocation4 + $0x10] sm:$0xff] %vm3331, %v6831
        %6854 = vst.msk [vmem:[#allocation4 + $0x20] sm:$0xff] %vm3331, %v6833
        %6855 = vst.msk [vmem:[#allocation4 + $0x30] sm:$0xff] %vm3331, %v6835
        %6856 = vst.msk [vmem:[#allocation4 + $0x40] sm:$0xff] %vm3331, %v6837
        %6857 = vst.msk [vmem:[#allocation4 + $0x50] sm:$0xff] %vm3331, %v6839
        %6858 = vst.msk [vmem:[#allocation4 + $0x60] sm:$0xff] %vm3331, %v6841
        %6859 = vst.msk [vmem:[#allocation4 + $0x70] sm:$0xff] %vm3331, %v6843
        %v6860 = vld [vmem:[%s1362] ss:$2 sm:$0xff]
        %s6861 = scalar_lea.vmem %s1362, 48 [#allocation2]
        %v6862 = vld [vmem:[%s6861] ss:$2 sm:$0xff]
        %s6863 = scalar_lea.vmem %s1362, 96 [#allocation2]
        %v6864 = vld [vmem:[%s6863] ss:$2 sm:$0xff]
        %s6865 = scalar_lea.vmem %s1362, 144 [#allocation2]
        %v6866 = vld [vmem:[%s6865] ss:$2 sm:$0xff]
        %s6867 = scalar_lea.vmem %s1362, 192 [#allocation2]
        %v6868 = vld [vmem:[%s6867] ss:$2 sm:$0xff]
        %s6869 = scalar_lea.vmem %s1362, 240 [#allocation2]
        %v6870 = vld [vmem:[%s6869] ss:$2 sm:$0xff]
        %s6871 = scalar_lea.vmem %s1362, 288 [#allocation2]
        %v6872 = vld [vmem:[%s6871] ss:$2 sm:$0xff]
        %s6873 = scalar_lea.vmem %s1362, 336 [#allocation2]
        %v6874 = vld [vmem:[%s6873] ss:$2 sm:$0xff]
        %6883 = vrot.lane.b32.xlu0 %v6860, 24
        %v6884 = vpop.permute.xlu0 %6883
        %6885 = vrot.lane.b32.xlu0 %v6862, 24
        %v6886 = vpop.permute.xlu0 %6885
        %6887 = vrot.lane.b32.xlu0 %v6864, 24
        %v6888 = vpop.permute.xlu0 %6887
        %6889 = vrot.lane.b32.xlu0 %v6866, 24
        %v6890 = vpop.permute.xlu0 %6889
        %6891 = vrot.lane.b32.xlu0 %v6868, 24
        %v6892 = vpop.permute.xlu0 %6891
        %6893 = vrot.lane.b32.xlu0 %v6870, 24
        %v6894 = vpop.permute.xlu0 %6893
        %6895 = vrot.lane.b32.xlu0 %v6872, 24
        %v6896 = vpop.permute.xlu0 %6895
        %6897 = vrot.lane.b32.xlu0 %v6874, 24
        %v6898 = vpop.permute.xlu0 %6897
        %6907 = vst.msk [vmem:[#allocation4] sm:$0xff] %vm3525, %v6884
        %6908 = vst.msk [vmem:[#allocation4 + $0x10] sm:$0xff] %vm3525, %v6886
        %6909 = vst.msk [vmem:[#allocation4 + $0x20] sm:$0xff] %vm3525, %v6888
        %6910 = vst.msk [vmem:[#allocation4 + $0x30] sm:$0xff] %vm3525, %v6890
        %6911 = vst.msk [vmem:[#allocation4 + $0x40] sm:$0xff] %vm3525, %v6892
        %6912 = vst.msk [vmem:[#allocation4 + $0x50] sm:$0xff] %vm3525, %v6894
        %6913 = vst.msk [vmem:[#allocation4 + $0x60] sm:$0xff] %vm3525, %v6896
        %6914 = vst.msk [vmem:[#allocation4 + $0x70] sm:$0xff] %vm3525, %v6898
        %s6915 = scalar_lea.vmem %s1362, 1 [#allocation2]
        %v6916 = vld [vmem:[%s6915] ss:$2 sm:$0xff]
        %s6917 = scalar_lea.vmem %s1362, 49 [#allocation2]
        %v6918 = vld [vmem:[%s6917] ss:$2 sm:$0xff]
        %s6919 = scalar_lea.vmem %s1362, 97 [#allocation2]
        %v6920 = vld [vmem:[%s6919] ss:$2 sm:$0xff]
        %s6921 = scalar_lea.vmem %s1362, 145 [#allocation2]
        %v6922 = vld [vmem:[%s6921] ss:$2 sm:$0xff]
        %s6923 = scalar_lea.vmem %s1362, 193 [#allocation2]
        %v6924 = vld [vmem:[%s6923] ss:$2 sm:$0xff]
        %s6925 = scalar_lea.vmem %s1362, 241 [#allocation2]
        %v6926 = vld [vmem:[%s6925] ss:$2 sm:$0xff]
        %s6927 = scalar_lea.vmem %s1362, 289 [#allocation2]
        %v6928 = vld [vmem:[%s6927] ss:$2 sm:$0xff]
        %s6929 = scalar_lea.vmem %s1362, 337 [#allocation2]
        %v6930 = vld [vmem:[%s6929] ss:$2 sm:$0xff]
        %6939 = vrot.lane.b32.xlu0 %v6916, 28
        %v6940 = vpop.permute.xlu0 %6939
        %6941 = vrot.lane.b32.xlu0 %v6918, 28
        %v6942 = vpop.permute.xlu0 %6941
        %6943 = vrot.lane.b32.xlu0 %v6920, 28
        %v6944 = vpop.permute.xlu0 %6943
        %6945 = vrot.lane.b32.xlu0 %v6922, 28
        %v6946 = vpop.permute.xlu0 %6945
        %6947 = vrot.lane.b32.xlu0 %v6924, 28
        %v6948 = vpop.permute.xlu0 %6947
        %6949 = vrot.lane.b32.xlu0 %v6926, 28
        %v6950 = vpop.permute.xlu0 %6949
        %6951 = vrot.lane.b32.xlu0 %v6928, 28
        %v6952 = vpop.permute.xlu0 %6951
        %6953 = vrot.lane.b32.xlu0 %v6930, 28
        %v6954 = vpop.permute.xlu0 %6953
        %6963 = vst.msk [vmem:[#allocation4] sm:$0xff] %vm3718, %v6940
        %6964 = vst.msk [vmem:[#allocation4 + $0x10] sm:$0xff] %vm3718, %v6942
        %6965 = vst.msk [vmem:[#allocation4 + $0x20] sm:$0xff] %vm3718, %v6944
        %6966 = vst.msk [vmem:[#allocation4 + $0x30] sm:$0xff] %vm3718, %v6946
        %6967 = vst.msk [vmem:[#allocation4 + $0x40] sm:$0xff] %vm3718, %v6948
        %6968 = vst.msk [vmem:[#allocation4 + $0x50] sm:$0xff] %vm3718, %v6950
        %6969 = vst.msk [vmem:[#allocation4 + $0x60] sm:$0xff] %vm3718, %v6952
        %6970 = vst.msk [vmem:[#allocation4 + $0x70] sm:$0xff] %vm3718, %v6954
        %s6971 = scalar_lea.vmem %s1362, 2 [#allocation2]
        %v6972 = vld [vmem:[%s6971] ss:$2 sm:$0xff]
        %s6973 = scalar_lea.vmem %s1362, 50 [#allocation2]
        %v6974 = vld [vmem:[%s6973] ss:$2 sm:$0xff]
        %s6975 = scalar_lea.vmem %s1362, 98 [#allocation2]
        %v6976 = vld [vmem:[%s6975] ss:$2 sm:$0xff]
        %s6977 = scalar_lea.vmem %s1362, 146 [#allocation2]
        %v6978 = vld [vmem:[%s6977] ss:$2 sm:$0xff]
        %s6979 = scalar_lea.vmem %s1362, 194 [#allocation2]
        %v6980 = vld [vmem:[%s6979] ss:$2 sm:$0xff]
        %s6981 = scalar_lea.vmem %s1362, 242 [#allocation2]
        %v6982 = vld [vmem:[%s6981] ss:$2 sm:$0xff]
        %s6983 = scalar_lea.vmem %s1362, 290 [#allocation2]
        %v6984 = vld [vmem:[%s6983] ss:$2 sm:$0xff]
        %s6985 = scalar_lea.vmem %s1362, 338 [#allocation2]
        %v6986 = vld [vmem:[%s6985] ss:$2 sm:$0xff]
        %6995 = vrot.lane.b32.xlu0 %v6972, 32
        %v6996 = vpop.permute.xlu0 %6995
        %6997 = vrot.lane.b32.xlu0 %v6974, 32
        %v6998 = vpop.permute.xlu0 %6997
        %6999 = vrot.lane.b32.xlu0 %v6976, 32
        %v7000 = vpop.permute.xlu0 %6999
        %7001 = vrot.lane.b32.xlu0 %v6978, 32
        %v7002 = vpop.permute.xlu0 %7001
        %7003 = vrot.lane.b32.xlu0 %v6980, 32
        %v7004 = vpop.permute.xlu0 %7003
        %7005 = vrot.lane.b32.xlu0 %v6982, 32
        %v7006 = vpop.permute.xlu0 %7005
        %7007 = vrot.lane.b32.xlu0 %v6984, 32
        %v7008 = vpop.permute.xlu0 %7007
        %7009 = vrot.lane.b32.xlu0 %v6986, 32
        %v7010 = vpop.permute.xlu0 %7009
        %7019 = vst.msk [vmem:[#allocation4] sm:$0xff] %vm3911, %v6996
        %7020 = vst.msk [vmem:[#allocation4 + $0x10] sm:$0xff] %vm3911, %v6998
        %7021 = vst.msk [vmem:[#allocation4 + $0x20] sm:$0xff] %vm3911, %v7000
        %7022 = vst.msk [vmem:[#allocation4 + $0x30] sm:$0xff] %vm3911, %v7002
        %7023 = vst.msk [vmem:[#allocation4 + $0x40] sm:$0xff] %vm3911, %v7004
        %7024 = vst.msk [vmem:[#allocation4 + $0x50] sm:$0xff] %vm3911, %v7006
        %7025 = vst.msk [vmem:[#allocation4 + $0x60] sm:$0xff] %vm3911, %v7008
        %7026 = vst.msk [vmem:[#allocation4 + $0x70] sm:$0xff] %vm3911, %v7010
        %v7027 = vld [vmem:[#allocation4] sm:$0xff]
        %v7028 = vld [vmem:[#allocation4 + $0x10] sm:$0xff]
        %v7029 = vld [vmem:[#allocation4 + $0x20] sm:$0xff]
        %v7030 = vld [vmem:[#allocation4 + $0x30] sm:$0xff]
        %v7031 = vld [vmem:[#allocation4 + $0x40] sm:$0xff]
        %v7032 = vld [vmem:[#allocation4 + $0x50] sm:$0xff]
        %v7033 = vld [vmem:[#allocation4 + $0x60] sm:$0xff]
        %v7034 = vld [vmem:[#allocation4 + $0x70] sm:$0xff]
        %v7035 = vpack.c.bf16 %v7028, %v7027
        %v7036 = vpack.c.bf16 %v7030, %v7029
        %v7037 = vpack.c.bf16 %v7032, %v7031
        %v7038 = vpack.c.bf16 %v7034, %v7033
        %s7039 = scalar_lea.vmem %s1, 256
        %v7040 = vld [vmem:[%s7039] sm:$0xf]
        %v7041 = vld [vmem:[%s7039 + $0x4] sm:$0xf]
        %v7042 = vld [vmem:[%s7039 + $0x8] sm:$0xf]
        %v7043 = vld [vmem:[%s7039 + $0xc] sm:$0xf]
        %v7044 = vld [vmem:[%s7039 + $0x10] sm:$0xf]
        %v7045 = vld [vmem:[%s7039 + $0x14] sm:$0xf]
        %v7046 = vld [vmem:[%s7039 + $0x18] sm:$0xf]
        %v7047 = vld [vmem:[%s7039 + $0x1c] sm:$0xf]
        %v7048 = vld [vmem:[%s7039 + $0x20] sm:$0xf]
        %v7049 = vld [vmem:[%s7039 + $0x24] sm:$0xf]
        %v7050 = vld [vmem:[%s7039 + $0x28] sm:$0xf]
        %v7051 = vld [vmem:[%s7039 + $0x2c] sm:$0xf]
        %v7052 = vld [vmem:[%s7039 + $0x30] sm:$0xf]
        %v7053 = vld [vmem:[%s7039 + $0x34] sm:$0xf]
        %v7054 = vld [vmem:[%s7039 + $0x38] sm:$0xf]
        %v7055 = vld [vmem:[%s7039 + $0x3c] sm:$0xf]
        %v7072 = vunpack.c.l.b16 %v7040
        %v7073 = vunpack.c.l.b16 %v7041
        %v7074 = vunpack.c.l.b16 %v7042
        %v7075 = vunpack.c.l.b16 %v7043
        %v7076 = vunpack.c.l.b16 %v7044
        %v7077 = vunpack.c.l.b16 %v7045
        %v7078 = vunpack.c.l.b16 %v7046
        %v7079 = vunpack.c.l.b16 %v7047
        %v7080 = vunpack.c.l.b16 %v7048
        %v7081 = vunpack.c.l.b16 %v7049
        %v7082 = vunpack.c.l.b16 %v7050
        %v7083 = vunpack.c.l.b16 %v7051
        %v7084 = vunpack.c.l.b16 %v7052
        %v7085 = vunpack.c.l.b16 %v7053
        %v7086 = vunpack.c.l.b16 %v7054
        %v7087 = vunpack.c.l.b16 %v7055
        %v7088 = vpack.c.b16 %v7073, %v7072
        %v7089 = vpack.c.b16 %v7075, %v7074
        %v7090 = vpack.c.b16 %v7077, %v7076
        %v7091 = vpack.c.b16 %v7079, %v7078
        %v7092 = vpack.c.b16 %v7081, %v7080
        %v7093 = vpack.c.b16 %v7083, %v7082
        %v7094 = vpack.c.b16 %v7085, %v7084
        %v7095 = vpack.c.b16 %v7087, %v7086
        %7104 = vmatprep.subr.bf16.mxu0 0
        %7105 = vmatpush1.bf16.msra.mxu0 %v7088
        %7106 = vmatprep.subr.bf16.mxu0 0
        %7107 = vmatpush1.bf16.msra.mxu0 %v7089
        %7108 = vmatprep.subr.bf16.mxu0 0
        %7109 = vmatpush1.bf16.msra.mxu0 %v7090
        %7110 = vmatprep.subr.bf16.mxu0 0
        %7111 = vmatpush1.bf16.msra.mxu0 %v7091
        %7112 = vmatprep.subr.bf16.mxu0 0
        %7113 = vmatpush1.bf16.msra.mxu0 %v7092
        %7114 = vmatprep.subr.bf16.mxu0 0
        %7115 = vmatpush1.bf16.msra.mxu0 %v7093
        %7116 = vmatprep.subr.bf16.mxu0 0
        %7117 = vmatpush1.bf16.msra.mxu0 %v7094
        %7118 = vmatprep.subr.bf16.mxu0 0
        %7119 = vmatpush1.bf16.msra.mxu0 %v7095
        %7120 = vmatprep.subr.bf16.mxu0 0
        %7121 = vmatpush1.bf16.msra.mxu0 0
        %7122 = vmatprep.subr.bf16.mxu0 0
        %7123 = vmatpush1.bf16.msra.mxu0 0
        %7124 = vmatprep.subr.bf16.mxu0 0
        %7125 = vmatpush1.bf16.msra.mxu0 0
        %7126 = vmatprep.subr.bf16.mxu0 0
        %7127 = vmatpush1.bf16.msra.mxu0 0
        %7128 = vmatprep.subr.bf16.mxu0 0
        %7129 = vmatpush1.bf16.msra.mxu0 0
        %7130 = vmatprep.subr.bf16.mxu0 0
        %7131 = vmatpush1.bf16.msra.mxu0 0
        %7132 = vmatprep.subr.bf16.mxu0 0
        %7133 = vmatpush1.bf16.msra.mxu0 0
        %7134 = vmatprep.subr.bf16.mxu0 0
        %7135 = vmatpush1.bf16.msra.mxu0 0
        %7136 = vmatprep.mubr.bf16.mxu0 0
        %7137 = vmatmul.mubr.bf16.gmra.mrb[0].mxu0 %v7035
        %v7138 = vpop.f32.mrb[0].mxu0
        %v7139 = vadd.f32 0.0, %v7138
        %v7140 = vpop.f32.mrb[0].mxu0
        %v7141 = vpop.f32.mrb[0].mxu0
        %v7142 = vadd.f32 0.0, %v7141
        %v7143 = vpop.f32.mrb[0].mxu0
        %7144 = vmatprep.mubr.bf16.mxu0 0
        %7145 = vmatmul.mubr.bf16.gmra.mrb[0].mxu0 %v7036
        %v7146 = vpop.f32.mrb[0].mxu0
        %v7147 = vadd.f32 0.0, %v7146
        %v7148 = vpop.f32.mrb[0].mxu0
        %v7149 = vpop.f32.mrb[0].mxu0
        %v7150 = vadd.f32 0.0, %v7149
        %v7151 = vpop.f32.mrb[0].mxu0
        %7152 = vmatprep.mubr.bf16.mxu0 0
        %7153 = vmatmul.mubr.bf16.gmra.mrb[0].mxu0 %v7037
        %v7154 = vpop.f32.mrb[0].mxu0
        %v7155 = vadd.f32 0.0, %v7154
        %v7156 = vpop.f32.mrb[0].mxu0
        %v7157 = vpop.f32.mrb[0].mxu0
        %v7158 = vadd.f32 0.0, %v7157
        %v7159 = vpop.f32.mrb[0].mxu0
        %7160 = vmatprep.mubr.bf16.mxu0 0
        %7161 = vmatmul.mubr.bf16.gmra.mrb[0].mxu0 %v7038
        %v7162 = vpop.f32.mrb[0].mxu0
        %v7163 = vadd.f32 0.0, %v7162
        %v7164 = vpop.f32.mrb[0].mxu0
        %v7165 = vpop.f32.mrb[0].mxu0
        %v7166 = vadd.f32 0.0, %v7165
        %v7167 = vpop.f32.mrb[0].mxu0
        %7168 = vdwg.mxu0
        %v7169 = vmax.f32 %v7139, 0.0
        %v7170 = vmax.f32 %v7142, 0.0
        %v7171 = vmax.f32 %v7147, 0.0
        %v7172 = vmax.f32 %v7150, 0.0
        %v7173 = vmax.f32 %v7155, 0.0
        %v7174 = vmax.f32 %v7158, 0.0
        %v7175 = vmax.f32 %v7163, 0.0
        %v7176 = vmax.f32 %v7166, 0.0
        %7177 = vst.msk [vmem:[#allocation3] sm:$0xff] %vm211, 0.0
        %7178 = vst.msk [vmem:[#allocation3 + $0x8] sm:$0xff] %vm211, 0.0
        %7179 = vst.msk [vmem:[#allocation3 + $0x10] sm:$0x3] %vm214, 0.0
        %7180 = vst.msk [vmem:[#allocation3 + $0x18] sm:$0xff] %vm211, 0.0
        %7181 = vst.msk [vmem:[#allocation3 + $0x20] sm:$0xff] %vm211, 0.0
        %7182 = vst.msk [vmem:[#allocation3 + $0x28] sm:$0x3] %vm214, 0.0
        %7183 = vst.msk [vmem:[#allocation3 + $0x30] sm:$0xff] %vm211, 0.0
        %7184 = vst.msk [vmem:[#allocation3 + $0x38] sm:$0xff] %vm211, 0.0
        %7185 = vst.msk [vmem:[#allocation3 + $0x40] sm:$0x3] %vm214, 0.0
        %7186 = vst.msk [vmem:[#allocation3 + $0x48] sm:$0xff] %vm211, 0.0
        %7187 = vst.msk [vmem:[#allocation3 + $0x50] sm:$0xff] %vm211, 0.0
        %7188 = vst.msk [vmem:[#allocation3 + $0x58] sm:$0x3] %vm214, 0.0
        %7189 = vst.msk [vmem:[#allocation3 + $0x60] sm:$0xff] %vm211, 0.0
        %7190 = vst.msk [vmem:[#allocation3 + $0x68] sm:$0xff] %vm211, 0.0
        %7191 = vst.msk [vmem:[#allocation3 + $0x70] sm:$0x3] %vm214, 0.0
        %7192 = vst.msk [vmem:[#allocation3 + $0x78] sm:$0xff] %vm211, 0.0
        %7193 = vst.msk [vmem:[#allocation3 + $0x80] sm:$0xff] %vm211, 0.0
        %7194 = vst.msk [vmem:[#allocation3 + $0x88] sm:$0x3] %vm214, 0.0
        %7195 = vst.msk [vmem:[#allocation3 + $0x90] sm:$0xff] %vm211, 0.0
        %7196 = vst.msk [vmem:[#allocation3 + $0x98] sm:$0xff] %vm211, 0.0
        %7197 = vst.msk [vmem:[#allocation3 + $0xa0] sm:$0x3] %vm214, 0.0
        %7198 = vst.msk [vmem:[#allocation3 + $0xa8] sm:$0xff] %vm211, 0.0
        %7199 = vst.msk [vmem:[#allocation3 + $0xb0] sm:$0xff] %vm211, 0.0
        %7200 = vst.msk [vmem:[#allocation3 + $0xb8] sm:$0x3] %vm214, 0.0
        %7201 = vst.msk [vmem:[#allocation3 + $0xc0] sm:$0xff] %vm211, 0.0
        %7202 = vst.msk [vmem:[#allocation3 + $0xc8] sm:$0xff] %vm211, 0.0
        %7203 = vst.msk [vmem:[#allocation3 + $0xd0] sm:$0x3] %vm214, 0.0
        %7204 = vst.msk [vmem:[#allocation3 + $0xd8] sm:$0xff] %vm211, 0.0
        %7205 = vst.msk [vmem:[#allocation3 + $0xe0] sm:$0xff] %vm211, 0.0
        %7206 = vst.msk [vmem:[#allocation3 + $0xe8] sm:$0x3] %vm214, 0.0
        %7207 = vst.msk [vmem:[#allocation3 + $0xf0] sm:$0xff] %vm211, 0.0
        %7208 = vst.msk [vmem:[#allocation3 + $0xf8] sm:$0xff] %vm211, 0.0
        %7209 = vst.msk [vmem:[#allocation3 + $0x100] sm:$0x3] %vm214, 0.0
        %7210 = vst.msk [vmem:[#allocation3 + $0x108] sm:$0xff] %vm211, 0.0
        %7211 = vst.msk [vmem:[#allocation3 + $0x110] sm:$0xff] %vm211, 0.0
        %7212 = vst.msk [vmem:[#allocation3 + $0x118] sm:$0x3] %vm214, 0.0
        %7213 = vst.msk [vmem:[#allocation3 + $0x120] sm:$0xff] %vm211, 0.0
        %7214 = vst.msk [vmem:[#allocation3 + $0x128] sm:$0xff] %vm211, 0.0
        %7215 = vst.msk [vmem:[#allocation3 + $0x130] sm:$0x3] %vm214, 0.0
        %7216 = vst.msk [vmem:[#allocation3 + $0x138] sm:$0xff] %vm211, 0.0
        %7217 = vst.msk [vmem:[#allocation3 + $0x140] sm:$0xff] %vm211, 0.0
        %7218 = vst.msk [vmem:[#allocation3 + $0x148] sm:$0x3] %vm214, 0.0
        %7219 = vst.msk [vmem:[#allocation3 + $0x150] sm:$0xff] %vm211, 0.0
        %7220 = vst.msk [vmem:[#allocation3 + $0x158] sm:$0xff] %vm211, 0.0
        %7221 = vst.msk [vmem:[#allocation3 + $0x160] sm:$0x3] %vm214, 0.0
        %7222 = vst.msk [vmem:[#allocation3 + $0x168] sm:$0xff] %vm211, 0.0
        %7223 = vst.msk [vmem:[#allocation3 + $0x170] sm:$0xff] %vm211, 0.0
        %7224 = vst.msk [vmem:[#allocation3 + $0x178] sm:$0x3] %vm214, 0.0
        %7225 = vst.msk [vmem:[#allocation3 + $0x180] sm:$0xff] %vm211, 0.0
        %7226 = vst.msk [vmem:[#allocation3 + $0x188] sm:$0xff] %vm211, 0.0
        %7227 = vst.msk [vmem:[#allocation3 + $0x190] sm:$0x3] %vm214, 0.0
        %7228 = vst.msk [vmem:[#allocation3 + $0x198] sm:$0xff] %vm211, 0.0
        %7229 = vst.msk [vmem:[#allocation3 + $0x1a0] sm:$0xff] %vm211, 0.0
        %7230 = vst.msk [vmem:[#allocation3 + $0x1a8] sm:$0x3] %vm214, 0.0
        %7231 = vst.msk [vmem:[%s2301 + $0x1] sm:$0xff] %vm211, %v7169
        %7232 = vst.msk [vmem:[%s2301 + $0x19] sm:$0xff] %vm211, %v7170
        %7233 = vst.msk [vmem:[%s2301 + $0x31] sm:$0xff] %vm211, %v7171
        %7234 = vst.msk [vmem:[%s2301 + $0x49] sm:$0xff] %vm211, %v7172
        %7235 = vst.msk [vmem:[%s2301 + $0x61] sm:$0xff] %vm211, %v7173
        %7236 = vst.msk [vmem:[%s2301 + $0x79] sm:$0xff] %vm211, %v7174
        %7237 = vst.msk [vmem:[%s2301 + $0x91] sm:$0xff] %vm211, %v7175
        %7238 = vst.msk [vmem:[%s2301 + $0xa9] sm:$0xff] %vm211, %v7176
        %v7239 = vld [vmem:[#allocation3] sm:$0xff]
        %v7240 = vld [vmem:[#allocation3 + $0x18] sm:$0xff]
        %v7241 = vld [vmem:[#allocation3 + $0x30] sm:$0xff]
        %v7242 = vld [vmem:[#allocation3 + $0x48] sm:$0xff]
        %v7243 = vld [vmem:[#allocation3 + $0x60] sm:$0xff]
        %v7244 = vld [vmem:[#allocation3 + $0x78] sm:$0xff]
        %v7245 = vld [vmem:[#allocation3 + $0x90] sm:$0xff]
        %v7246 = vld [vmem:[#allocation3 + $0xa8] sm:$0xff]
        %7247 = vst.msk [vmem:[#allocation4] sm:$0xff] %vm211, %v7239
        %7248 = vst.msk [vmem:[#allocation4 + $0x10] sm:$0xff] %vm211, %v7240
        %7249 = vst.msk [vmem:[#allocation4 + $0x20] sm:$0xff] %vm211, %v7241
        %7250 = vst.msk [vmem:[#allocation4 + $0x30] sm:$0xff] %vm211, %v7242
        %7251 = vst.msk [vmem:[#allocation4 + $0x40] sm:$0xff] %vm211, %v7243
        %7252 = vst.msk [vmem:[#allocation4 + $0x50] sm:$0xff] %vm211, %v7244
        %7253 = vst.msk [vmem:[#allocation4 + $0x60] sm:$0xff] %vm211, %v7245
        %7254 = vst.msk [vmem:[#allocation4 + $0x70] sm:$0xff] %vm211, %v7246
        %v7255 = vld [vmem:[#allocation3 + $0x1] sm:$0xff]
        %v7256 = vld [vmem:[#allocation3 + $0x19] sm:$0xff]
        %v7257 = vld [vmem:[#allocation3 + $0x31] sm:$0xff]
        %v7258 = vld [vmem:[#allocation3 + $0x49] sm:$0xff]
        %v7259 = vld [vmem:[#allocation3 + $0x61] sm:$0xff]
        %v7260 = vld [vmem:[#allocation3 + $0x79] sm:$0xff]
        %v7261 = vld [vmem:[#allocation3 + $0x91] sm:$0xff]
        %v7262 = vld [vmem:[#allocation3 + $0xa9] sm:$0xff]
        %7271 = vrot.lane.b32.xlu0 %v7255, 8
        %v7272 = vpop.permute.xlu0 %7271
        %7273 = vrot.lane.b32.xlu0 %v7256, 8
        %v7274 = vpop.permute.xlu0 %7273
        %7275 = vrot.lane.b32.xlu0 %v7257, 8
        %v7276 = vpop.permute.xlu0 %7275
        %7277 = vrot.lane.b32.xlu0 %v7258, 8
        %v7278 = vpop.permute.xlu0 %7277
        %7279 = vrot.lane.b32.xlu0 %v7259, 8
        %v7280 = vpop.permute.xlu0 %7279
        %7281 = vrot.lane.b32.xlu0 %v7260, 8
        %v7282 = vpop.permute.xlu0 %7281
        %7283 = vrot.lane.b32.xlu0 %v7261, 8
        %v7284 = vpop.permute.xlu0 %7283
        %7285 = vrot.lane.b32.xlu0 %v7262, 8
        %v7286 = vpop.permute.xlu0 %7285
        %vm7295 = vcmask 130112
        %7296 = vst.msk [vmem:[#allocation4] sm:$0xff] %vm7295, %v7272
        %7297 = vst.msk [vmem:[#allocation4 + $0x10] sm:$0xff] %vm7295, %v7274
        %7298 = vst.msk [vmem:[#allocation4 + $0x20] sm:$0xff] %vm7295, %v7276
        %7299 = vst.msk [vmem:[#allocation4 + $0x30] sm:$0xff] %vm7295, %v7278
        %7300 = vst.msk [vmem:[#allocation4 + $0x40] sm:$0xff] %vm7295, %v7280
        %7301 = vst.msk [vmem:[#allocation4 + $0x50] sm:$0xff] %vm7295, %v7282
        %7302 = vst.msk [vmem:[#allocation4 + $0x60] sm:$0xff] %vm7295, %v7284
        %7303 = vst.msk [vmem:[#allocation4 + $0x70] sm:$0xff] %vm7295, %v7286
        %v7304 = vld [vmem:[#allocation3 + $0x2] sm:$0xff]
        %v7305 = vld [vmem:[#allocation3 + $0x1a] sm:$0xff]
        %v7306 = vld [vmem:[#allocation3 + $0x32] sm:$0xff]
        %v7307 = vld [vmem:[#allocation3 + $0x4a] sm:$0xff]
        %v7308 = vld [vmem:[#allocation3 + $0x62] sm:$0xff]
        %v7309 = vld [vmem:[#allocation3 + $0x7a] sm:$0xff]
        %v7310 = vld [vmem:[#allocation3 + $0x92] sm:$0xff]
        %v7311 = vld [vmem:[#allocation3 + $0xaa] sm:$0xff]
        %7320 = vrot.lane.b32.xlu0 %v7304, 16
        %v7321 = vpop.permute.xlu0 %7320
        %7322 = vrot.lane.b32.xlu0 %v7305, 16
        %v7323 = vpop.permute.xlu0 %7322
        %7324 = vrot.lane.b32.xlu0 %v7306, 16
        %v7325 = vpop.permute.xlu0 %7324
        %7326 = vrot.lane.b32.xlu0 %v7307, 16
        %v7327 = vpop.permute.xlu0 %7326
        %7328 = vrot.lane.b32.xlu0 %v7308, 16
        %v7329 = vpop.permute.xlu0 %7328
        %7330 = vrot.lane.b32.xlu0 %v7309, 16
        %v7331 = vpop.permute.xlu0 %7330
        %7332 = vrot.lane.b32.xlu0 %v7310, 16
        %v7333 = vpop.permute.xlu0 %7332
        %7334 = vrot.lane.b32.xlu0 %v7311, 16
        %v7335 = vpop.permute.xlu0 %7334
        %vm7344 = vcmask 195712
        %7345 = vst.msk [vmem:[#allocation4] sm:$0xff] %vm7344, %v7321
        %7346 = vst.msk [vmem:[#allocation4 + $0x10] sm:$0xff] %vm7344, %v7323
        %7347 = vst.msk [vmem:[#allocation4 + $0x20] sm:$0xff] %vm7344, %v7325
        %7348 = vst.msk [vmem:[#allocation4 + $0x30] sm:$0xff] %vm7344, %v7327
        %7349 = vst.msk [vmem:[#allocation4 + $0x40] sm:$0xff] %vm7344, %v7329
        %7350 = vst.msk [vmem:[#allocation4 + $0x50] sm:$0xff] %vm7344, %v7331
        %7351 = vst.msk [vmem:[#allocation4 + $0x60] sm:$0xff] %vm7344, %v7333
        %7352 = vst.msk [vmem:[#allocation4 + $0x70] sm:$0xff] %vm7344, %v7335
        %v7353 = vld [vmem:[%s2301] sm:$0xff]
        %v7354 = vld [vmem:[%s2301 + $0x18] sm:$0xff]
        %v7355 = vld [vmem:[%s2301 + $0x30] sm:$0xff]
        %v7356 = vld [vmem:[%s2301 + $0x48] sm:$0xff]
        %v7357 = vld [vmem:[%s2301 + $0x60] sm:$0xff]
        %v7358 = vld [vmem:[%s2301 + $0x78] sm:$0xff]
        %v7359 = vld [vmem:[%s2301 + $0x90] sm:$0xff]
        %v7360 = vld [vmem:[%s2301 + $0xa8] sm:$0xff]
        %7369 = vrot.lane.b32.xlu0 %v7353, 24
        %v7370 = vpop.permute.xlu0 %7369
        %7371 = vrot.lane.b32.xlu0 %v7354, 24
        %v7372 = vpop.permute.xlu0 %7371
        %7373 = vrot.lane.b32.xlu0 %v7355, 24
        %v7374 = vpop.permute.xlu0 %7373
        %7375 = vrot.lane.b32.xlu0 %v7356, 24
        %v7376 = vpop.permute.xlu0 %7375
        %7377 = vrot.lane.b32.xlu0 %v7357, 24
        %v7378 = vpop.permute.xlu0 %7377
        %7379 = vrot.lane.b32.xlu0 %v7358, 24
        %v7380 = vpop.permute.xlu0 %7379
        %7381 = vrot.lane.b32.xlu0 %v7359, 24
        %v7382 = vpop.permute.xlu0 %7381
        %7383 = vrot.lane.b32.xlu0 %v7360, 24
        %v7384 = vpop.permute.xlu0 %7383
        %vm7393 = vcmask 261312
        %7394 = vst.msk [vmem:[#allocation4] sm:$0xff] %vm7393, %v7370
        %7395 = vst.msk [vmem:[#allocation4 + $0x10] sm:$0xff] %vm7393, %v7372
        %7396 = vst.msk [vmem:[#allocation4 + $0x20] sm:$0xff] %vm7393, %v7374
        %7397 = vst.msk [vmem:[#allocation4 + $0x30] sm:$0xff] %vm7393, %v7376
        %7398 = vst.msk [vmem:[#allocation4 + $0x40] sm:$0xff] %vm7393, %v7378
        %7399 = vst.msk [vmem:[#allocation4 + $0x50] sm:$0xff] %vm7393, %v7380
        %7400 = vst.msk [vmem:[#allocation4 + $0x60] sm:$0xff] %vm7393, %v7382
        %7401 = vst.msk [vmem:[#allocation4 + $0x70] sm:$0xff] %vm7393, %v7384
        %v7402 = vld [vmem:[%s2301 + $0x1] sm:$0xff]
        %v7403 = vld [vmem:[%s2301 + $0x19] sm:$0xff]
        %v7404 = vld [vmem:[%s2301 + $0x31] sm:$0xff]
        %v7405 = vld [vmem:[%s2301 + $0x49] sm:$0xff]
        %v7406 = vld [vmem:[%s2301 + $0x61] sm:$0xff]
        %v7407 = vld [vmem:[%s2301 + $0x79] sm:$0xff]
        %v7408 = vld [vmem:[%s2301 + $0x91] sm:$0xff]
        %v7409 = vld [vmem:[%s2301 + $0xa9] sm:$0xff]
        %7418 = vrot.lane.b32.xlu0 %v7402, 32
        %v7419 = vpop.permute.xlu0 %7418
        %7420 = vrot.lane.b32.xlu0 %v7403, 32
        %v7421 = vpop.permute.xlu0 %7420
        %7422 = vrot.lane.b32.xlu0 %v7404, 32
        %v7423 = vpop.permute.xlu0 %7422
        %7424 = vrot.lane.b32.xlu0 %v7405, 32
        %v7425 = vpop.permute.xlu0 %7424
        %7426 = vrot.lane.b32.xlu0 %v7406, 32
        %v7427 = vpop.permute.xlu0 %7426
        %7428 = vrot.lane.b32.xlu0 %v7407, 32
        %v7429 = vpop.permute.xlu0 %7428
        %7430 = vrot.lane.b32.xlu0 %v7408, 32
        %v7431 = vpop.permute.xlu0 %7430
        %7432 = vrot.lane.b32.xlu0 %v7409, 32
        %v7433 = vpop.permute.xlu0 %7432
        %vm7442 = vcmask 326912
        %7443 = vst.msk [vmem:[#allocation4] sm:$0xff] %vm7442, %v7419
        %7444 = vst.msk [vmem:[#allocation4 + $0x10] sm:$0xff] %vm7442, %v7421
        %7445 = vst.msk [vmem:[#allocation4 + $0x20] sm:$0xff] %vm7442, %v7423
        %7446 = vst.msk [vmem:[#allocation4 + $0x30] sm:$0xff] %vm7442, %v7425
        %7447 = vst.msk [vmem:[#allocation4 + $0x40] sm:$0xff] %vm7442, %v7427
        %7448 = vst.msk [vmem:[#allocation4 + $0x50] sm:$0xff] %vm7442, %v7429
        %7449 = vst.msk [vmem:[#allocation4 + $0x60] sm:$0xff] %vm7442, %v7431
        %7450 = vst.msk [vmem:[#allocation4 + $0x70] sm:$0xff] %vm7442, %v7433
        %v7451 = vld [vmem:[%s2301 + $0x2] sm:$0xff]
        %v7452 = vld [vmem:[%s2301 + $0x1a] sm:$0xff]
        %v7453 = vld [vmem:[%s2301 + $0x32] sm:$0xff]
        %v7454 = vld [vmem:[%s2301 + $0x4a] sm:$0xff]
        %v7455 = vld [vmem:[%s2301 + $0x62] sm:$0xff]
        %v7456 = vld [vmem:[%s2301 + $0x7a] sm:$0xff]
        %v7457 = vld [vmem:[%s2301 + $0x92] sm:$0xff]
        %v7458 = vld [vmem:[%s2301 + $0xaa] sm:$0xff]
        %7467 = vrot.lane.b32.xlu0 %v7451, 40
        %v7468 = vpop.permute.xlu0 %7467
        %7469 = vrot.lane.b32.xlu0 %v7452, 40
        %v7470 = vpop.permute.xlu0 %7469
        %7471 = vrot.lane.b32.xlu0 %v7453, 40
        %v7472 = vpop.permute.xlu0 %7471
        %7473 = vrot.lane.b32.xlu0 %v7454, 40
        %v7474 = vpop.permute.xlu0 %7473
        %7475 = vrot.lane.b32.xlu0 %v7455, 40
        %v7476 = vpop.permute.xlu0 %7475
        %7477 = vrot.lane.b32.xlu0 %v7456, 40
        %v7478 = vpop.permute.xlu0 %7477
        %7479 = vrot.lane.b32.xlu0 %v7457, 40
        %v7480 = vpop.permute.xlu0 %7479
        %7481 = vrot.lane.b32.xlu0 %v7458, 40
        %v7482 = vpop.permute.xlu0 %7481
        %vm7491 = vcmask 392512
        %7492 = vst.msk [vmem:[#allocation4] sm:$0xff] %vm7491, %v7468
        %7493 = vst.msk [vmem:[#allocation4 + $0x10] sm:$0xff] %vm7491, %v7470
        %7494 = vst.msk [vmem:[#allocation4 + $0x20] sm:$0xff] %vm7491, %v7472
        %7495 = vst.msk [vmem:[#allocation4 + $0x30] sm:$0xff] %vm7491, %v7474
        %7496 = vst.msk [vmem:[#allocation4 + $0x40] sm:$0xff] %vm7491, %v7476
        %7497 = vst.msk [vmem:[#allocation4 + $0x50] sm:$0xff] %vm7491, %v7478
        %7498 = vst.msk [vmem:[#allocation4 + $0x60] sm:$0xff] %vm7491, %v7480
        %7499 = vst.msk [vmem:[#allocation4 + $0x70] sm:$0xff] %vm7491, %v7482
        %v7500 = vld [vmem:[%s3364] sm:$0xff]
        %v7501 = vld [vmem:[%s3364 + $0x18] sm:$0xff]
        %v7502 = vld [vmem:[%s3364 + $0x30] sm:$0xff]
        %v7503 = vld [vmem:[%s3364 + $0x48] sm:$0xff]
        %v7504 = vld [vmem:[%s3364 + $0x60] sm:$0xff]
        %v7505 = vld [vmem:[%s3364 + $0x78] sm:$0xff]
        %v7506 = vld [vmem:[%s3364 + $0x90] sm:$0xff]
        %v7507 = vld [vmem:[%s3364 + $0xa8] sm:$0xff]
        %7516 = vrot.lane.b32.xlu0 %v7500, 48
        %v7517 = vpop.permute.xlu0 %7516
        %7518 = vrot.lane.b32.xlu0 %v7501, 48
        %v7519 = vpop.permute.xlu0 %7518
        %7520 = vrot.lane.b32.xlu0 %v7502, 48
        %v7521 = vpop.permute.xlu0 %7520
        %7522 = vrot.lane.b32.xlu0 %v7503, 48
        %v7523 = vpop.permute.xlu0 %7522
        %7524 = vrot.lane.b32.xlu0 %v7504, 48
        %v7525 = vpop.permute.xlu0 %7524
        %7526 = vrot.lane.b32.xlu0 %v7505, 48
        %v7527 = vpop.permute.xlu0 %7526
        %7528 = vrot.lane.b32.xlu0 %v7506, 48
        %v7529 = vpop.permute.xlu0 %7528
        %7530 = vrot.lane.b32.xlu0 %v7507, 48
        %v7531 = vpop.permute.xlu0 %7530
        %vm7540 = vcmask 458112
        %7541 = vst.msk [vmem:[#allocation4] sm:$0xff] %vm7540, %v7517
        %7542 = vst.msk [vmem:[#allocation4 + $0x10] sm:$0xff] %vm7540, %v7519
        %7543 = vst.msk [vmem:[#allocation4 + $0x20] sm:$0xff] %vm7540, %v7521
        %7544 = vst.msk [vmem:[#allocation4 + $0x30] sm:$0xff] %vm7540, %v7523
        %7545 = vst.msk [vmem:[#allocation4 + $0x40] sm:$0xff] %vm7540, %v7525
        %7546 = vst.msk [vmem:[#allocation4 + $0x50] sm:$0xff] %vm7540, %v7527
        %7547 = vst.msk [vmem:[#allocation4 + $0x60] sm:$0xff] %vm7540, %v7529
        %7548 = vst.msk [vmem:[#allocation4 + $0x70] sm:$0xff] %vm7540, %v7531
        %v7549 = vld [vmem:[%s3364 + $0x1] sm:$0xff]
        %v7550 = vld [vmem:[%s3364 + $0x19] sm:$0xff]
        %v7551 = vld [vmem:[%s3364 + $0x31] sm:$0xff]
        %v7552 = vld [vmem:[%s3364 + $0x49] sm:$0xff]
        %v7553 = vld [vmem:[%s3364 + $0x61] sm:$0xff]
        %v7554 = vld [vmem:[%s3364 + $0x79] sm:$0xff]
        %v7555 = vld [vmem:[%s3364 + $0x91] sm:$0xff]
        %v7556 = vld [vmem:[%s3364 + $0xa9] sm:$0xff]
        %7565 = vrot.lane.b32.xlu0 %v7549, 56
        %v7566 = vpop.permute.xlu0 %7565
        %7567 = vrot.lane.b32.xlu0 %v7550, 56
        %v7568 = vpop.permute.xlu0 %7567
        %7569 = vrot.lane.b32.xlu0 %v7551, 56
        %v7570 = vpop.permute.xlu0 %7569
        %7571 = vrot.lane.b32.xlu0 %v7552, 56
        %v7572 = vpop.permute.xlu0 %7571
        %7573 = vrot.lane.b32.xlu0 %v7553, 56
        %v7574 = vpop.permute.xlu0 %7573
        %7575 = vrot.lane.b32.xlu0 %v7554, 56
        %v7576 = vpop.permute.xlu0 %7575
        %7577 = vrot.lane.b32.xlu0 %v7555, 56
        %v7578 = vpop.permute.xlu0 %7577
        %7579 = vrot.lane.b32.xlu0 %v7556, 56
        %v7580 = vpop.permute.xlu0 %7579
        %vm7589 = vcmask 523712
        %7590 = vst.msk [vmem:[#allocation4] sm:$0xff] %vm7589, %v7566
        %7591 = vst.msk [vmem:[#allocation4 + $0x10] sm:$0xff] %vm7589, %v7568
        %7592 = vst.msk [vmem:[#allocation4 + $0x20] sm:$0xff] %vm7589, %v7570
        %7593 = vst.msk [vmem:[#allocation4 + $0x30] sm:$0xff] %vm7589, %v7572
        %7594 = vst.msk [vmem:[#allocation4 + $0x40] sm:$0xff] %vm7589, %v7574
        %7595 = vst.msk [vmem:[#allocation4 + $0x50] sm:$0xff] %vm7589, %v7576
        %7596 = vst.msk [vmem:[#allocation4 + $0x60] sm:$0xff] %vm7589, %v7578
        %7597 = vst.msk [vmem:[#allocation4 + $0x70] sm:$0xff] %vm7589, %v7580
        %v7598 = vld [vmem:[%s3364 + $0x2] sm:$0xff]
        %v7599 = vld [vmem:[%s3364 + $0x1a] sm:$0xff]
        %v7600 = vld [vmem:[%s3364 + $0x32] sm:$0xff]
        %v7601 = vld [vmem:[%s3364 + $0x4a] sm:$0xff]
        %v7602 = vld [vmem:[%s3364 + $0x62] sm:$0xff]
        %v7603 = vld [vmem:[%s3364 + $0x7a] sm:$0xff]
        %v7604 = vld [vmem:[%s3364 + $0x92] sm:$0xff]
        %v7605 = vld [vmem:[%s3364 + $0xaa] sm:$0xff]
        %7614 = vrot.lane.b32.xlu0 %v7598, 64
        %v7615 = vpop.permute.xlu0 %7614
        %7616 = vrot.lane.b32.xlu0 %v7599, 64
        %v7617 = vpop.permute.xlu0 %7616
        %7618 = vrot.lane.b32.xlu0 %v7600, 64
        %v7619 = vpop.permute.xlu0 %7618
        %7620 = vrot.lane.b32.xlu0 %v7601, 64
        %v7621 = vpop.permute.xlu0 %7620
        %7622 = vrot.lane.b32.xlu0 %v7602, 64
        %v7623 = vpop.permute.xlu0 %7622
        %7624 = vrot.lane.b32.xlu0 %v7603, 64
        %v7625 = vpop.permute.xlu0 %7624
        %7626 = vrot.lane.b32.xlu0 %v7604, 64
        %v7627 = vpop.permute.xlu0 %7626
        %7628 = vrot.lane.b32.xlu0 %v7605, 64
        %v7629 = vpop.permute.xlu0 %7628
        %vm7638 = vcmask 589312
        %7639 = vst.msk [vmem:[#allocation4] sm:$0xff] %vm7638, %v7615
        %7640 = vst.msk [vmem:[#allocation4 + $0x10] sm:$0xff] %vm7638, %v7617
        %7641 = vst.msk [vmem:[#allocation4 + $0x20] sm:$0xff] %vm7638, %v7619
        %7642 = vst.msk [vmem:[#allocation4 + $0x30] sm:$0xff] %vm7638, %v7621
        %7643 = vst.msk [vmem:[#allocation4 + $0x40] sm:$0xff] %vm7638, %v7623
        %7644 = vst.msk [vmem:[#allocation4 + $0x50] sm:$0xff] %vm7638, %v7625
        %7645 = vst.msk [vmem:[#allocation4 + $0x60] sm:$0xff] %vm7638, %v7627
        %7646 = vst.msk [vmem:[#allocation4 + $0x70] sm:$0xff] %vm7638, %v7629
        %v7647 = vld [vmem:[#allocation4] sm:$0xff]
        %v7648 = vld [vmem:[#allocation4 + $0x10] sm:$0xff]
        %v7649 = vld [vmem:[#allocation4 + $0x20] sm:$0xff]
        %v7650 = vld [vmem:[#allocation4 + $0x30] sm:$0xff]
        %v7651 = vld [vmem:[#allocation4 + $0x40] sm:$0xff]
        %v7652 = vld [vmem:[#allocation4 + $0x50] sm:$0xff]
        %v7653 = vld [vmem:[#allocation4 + $0x60] sm:$0xff]
        %v7654 = vld [vmem:[#allocation4 + $0x70] sm:$0xff]
        %v7655 = vpack.c.bf16 %v7648, %v7647
        %v7656 = vpack.c.bf16 %v7650, %v7649
        %v7657 = vpack.c.bf16 %v7652, %v7651
        %v7658 = vpack.c.bf16 %v7654, %v7653
        %s7659 = scalar_lea.vmem %s1, 320
        %v7660 = vld [vmem:[%s7659] sm:$0xf]
        %v7661 = vld [vmem:[%s7659 + $0x4] sm:$0xf]
        %v7662 = vld [vmem:[%s7659 + $0x8] sm:$0xf]
        %v7663 = vld [vmem:[%s7659 + $0xc] sm:$0xf]
        %v7664 = vld [vmem:[%s7659 + $0x10] sm:$0xf]
        %v7665 = vld [vmem:[%s7659 + $0x14] sm:$0xf]
        %v7666 = vld [vmem:[%s7659 + $0x18] sm:$0xf]
        %v7667 = vld [vmem:[%s7659 + $0x1c] sm:$0xf]
        %v7668 = vld [vmem:[%s7659 + $0x20] sm:$0xf]
        %v7669 = vld [vmem:[%s7659 + $0x24] sm:$0xf]
        %v7670 = vld [vmem:[%s7659 + $0x28] sm:$0xf]
        %v7671 = vld [vmem:[%s7659 + $0x2c] sm:$0xf]
        %v7672 = vld [vmem:[%s7659 + $0x30] sm:$0xf]
        %v7673 = vld [vmem:[%s7659 + $0x34] sm:$0xf]
        %v7674 = vld [vmem:[%s7659 + $0x38] sm:$0xf]
        %v7675 = vld [vmem:[%s7659 + $0x3c] sm:$0xf]
        %v7676 = vld [vmem:[#allocation5] sm:$0xff]
        %v7677 = vld [vmem:[#allocation5 + $0x8] sm:$0xff]
        %v7678 = vld [vmem:[#allocation5 + $0x10] sm:$0xff]
        %v7679 = vld [vmem:[#allocation5 + $0x18] sm:$0xff]
        %v7680 = vld [vmem:[#allocation5 + $0x20] sm:$0xff]
        %v7681 = vld [vmem:[#allocation5 + $0x28] sm:$0xff]
        %v7682 = vld [vmem:[#allocation5 + $0x30] sm:$0xff]
        %v7683 = vld [vmem:[#allocation5 + $0x38] sm:$0xff]
        %v7700 = vunpack.c.l.b16 %v7660
        %v7701 = vunpack.c.l.b16 %v7661
        %v7702 = vunpack.c.l.b16 %v7662
        %v7703 = vunpack.c.l.b16 %v7663
        %v7704 = vunpack.c.l.b16 %v7664
        %v7705 = vunpack.c.l.b16 %v7665
        %v7706 = vunpack.c.l.b16 %v7666
        %v7707 = vunpack.c.l.b16 %v7667
        %v7708 = vunpack.c.l.b16 %v7668
        %v7709 = vunpack.c.l.b16 %v7669
        %v7710 = vunpack.c.l.b16 %v7670
        %v7711 = vunpack.c.l.b16 %v7671
        %v7712 = vunpack.c.l.b16 %v7672
        %v7713 = vunpack.c.l.b16 %v7673
        %v7714 = vunpack.c.l.b16 %v7674
        %v7715 = vunpack.c.l.b16 %v7675
        %v7716 = vpack.c.b16 %v7701, %v7700
        %v7717 = vpack.c.b16 %v7703, %v7702
        %v7718 = vpack.c.b16 %v7705, %v7704
        %v7719 = vpack.c.b16 %v7707, %v7706
        %v7720 = vpack.c.b16 %v7709, %v7708
        %v7721 = vpack.c.b16 %v7711, %v7710
        %v7722 = vpack.c.b16 %v7713, %v7712
        %v7723 = vpack.c.b16 %v7715, %v7714
        %7732 = vmatprep.subr.bf16.mxu0 0
        %7733 = vmatpush1.bf16.msra.mxu0 %v7716
        %7734 = vmatprep.subr.bf16.mxu0 0
        %7735 = vmatpush1.bf16.msra.mxu0 %v7717
        %7736 = vmatprep.subr.bf16.mxu0 0
        %7737 = vmatpush1.bf16.msra.mxu0 %v7718
        %7738 = vmatprep.subr.bf16.mxu0 0
        %7739 = vmatpush1.bf16.msra.mxu0 %v7719
        %7740 = vmatprep.subr.bf16.mxu0 0
        %7741 = vmatpush1.bf16.msra.mxu0 %v7720
        %7742 = vmatprep.subr.bf16.mxu0 0
        %7743 = vmatpush1.bf16.msra.mxu0 %v7721
        %7744 = vmatprep.subr.bf16.mxu0 0
        %7745 = vmatpush1.bf16.msra.mxu0 %v7722
        %7746 = vmatprep.subr.bf16.mxu0 0
        %7747 = vmatpush1.bf16.msra.mxu0 %v7723
        %7748 = vmatprep.subr.bf16.mxu0 0
        %7749 = vmatpush1.bf16.msra.mxu0 0
        %7750 = vmatprep.subr.bf16.mxu0 0
        %7751 = vmatpush1.bf16.msra.mxu0 0
        %7752 = vmatprep.subr.bf16.mxu0 0
        %7753 = vmatpush1.bf16.msra.mxu0 0
        %7754 = vmatprep.subr.bf16.mxu0 0
        %7755 = vmatpush1.bf16.msra.mxu0 0
        %7756 = vmatprep.subr.bf16.mxu0 0
        %7757 = vmatpush1.bf16.msra.mxu0 0
        %7758 = vmatprep.subr.bf16.mxu0 0
        %7759 = vmatpush1.bf16.msra.mxu0 0
        %7760 = vmatprep.subr.bf16.mxu0 0
        %7761 = vmatpush1.bf16.msra.mxu0 0
        %7762 = vmatprep.subr.bf16.mxu0 0
        %7763 = vmatpush1.bf16.msra.mxu0 0
        %7764 = vmatprep.mubr.bf16.mxu0 0
        %7765 = vmatmul.mubr.bf16.gmra.mrb[0].mxu0 %v7655
        %v7766 = vpop.f32.mrb[0].mxu0
        %v7767 = vadd.f32 %v7676, %v7766
        %v7768 = vpop.f32.mrb[0].mxu0
        %v7769 = vpop.f32.mrb[0].mxu0
        %v7770 = vadd.f32 %v7677, %v7769
        %v7771 = vpop.f32.mrb[0].mxu0
        %7772 = vmatprep.mubr.bf16.mxu0 0
        %7773 = vmatmul.mubr.bf16.gmra.mrb[0].mxu0 %v7656
        %v7774 = vpop.f32.mrb[0].mxu0
        %v7775 = vadd.f32 %v7678, %v7774
        %v7776 = vpop.f32.mrb[0].mxu0
        %v7777 = vpop.f32.mrb[0].mxu0
        %v7778 = vadd.f32 %v7679, %v7777
        %v7779 = vpop.f32.mrb[0].mxu0
        %7780 = vmatprep.mubr.bf16.mxu0 0
        %7781 = vmatmul.mubr.bf16.gmra.mrb[0].mxu0 %v7657
        %v7782 = vpop.f32.mrb[0].mxu0
        %v7783 = vadd.f32 %v7680, %v7782
        %v7784 = vpop.f32.mrb[0].mxu0
        %v7785 = vpop.f32.mrb[0].mxu0
        %v7786 = vadd.f32 %v7681, %v7785
        %v7787 = vpop.f32.mrb[0].mxu0
        %7788 = vmatprep.mubr.bf16.mxu0 0
        %7789 = vmatmul.mubr.bf16.gmra.mrb[0].mxu0 %v7658
        %v7790 = vpop.f32.mrb[0].mxu0
        %v7791 = vadd.f32 %v7682, %v7790
        %v7792 = vpop.f32.mrb[0].mxu0
        %v7793 = vpop.f32.mrb[0].mxu0
        %v7794 = vadd.f32 %v7683, %v7793
        %v7795 = vpop.f32.mrb[0].mxu0
        %7796 = vdwg.mxu0
        %v7797 = vmax.f32 %v7767, 0.0
        %v7798 = vmax.f32 %v7770, 0.0
        %v7799 = vmax.f32 %v7775, 0.0
        %v7800 = vmax.f32 %v7778, 0.0
        %v7801 = vmax.f32 %v7783, 0.0
        %v7802 = vmax.f32 %v7786, 0.0
        %v7803 = vmax.f32 %v7791, 0.0
        %v7804 = vmax.f32 %v7794, 0.0
        %v7805 = vadd.f32 %v7797, %v7798
        %v7806 = vadd.f32 %v7805, %v7799
        %v7807 = vadd.f32 %v7806, %v7800
        %v7808 = vadd.f32 %v7807, %v7801
        %v7809 = vadd.f32 %v7808, %v7802
        %v7810 = vadd.f32 %v7809, %v7803
        %v7811 = vadd.f32 %v7810, %v7804
        %v7812 = vrot.slane %v7811, 4
        %v7813 = vadd.f32 %v7811, %v7812
        %v7814 = vrot.slane %v7813, 2
        %v7815 = vadd.f32 %v7813, %v7814
        %v7816 = vrot.slane %v7815, 1
        %v7817 = vadd.f32 %v7815, %v7816
        %v7818 = vmul.f32 %v7817, 0.015625
        %vm7819 = vcmask 57344
        %7820 = vst.msk [vmem:[%s166] sm:$0x1] %vm7819, %v7818
        %v7821 = vpack.c.bf16 %v7818, %v7818
        %s7822 = scalar_lea.vmem %s1, 384
        %v7823 = vld [vmem:[%s7822] sm:$0xf]
        %v7824 = vld [vmem:[%s7822 + $0x4] sm:$0xf]
        %v7825 = vld [vmem:[%s7822 + $0x8] sm:$0xf]
        %v7826 = vld [vmem:[%s7822 + $0xc] sm:$0xf]
        %v7827 = vld [vmem:[%s7822 + $0x10] sm:$0xf]
        %v7828 = vld [vmem:[%s7822 + $0x14] sm:$0xf]
        %v7829 = vld [vmem:[%s7822 + $0x18] sm:$0xf]
        %v7830 = vld [vmem:[%s7822 + $0x1c] sm:$0xf]
        %v7831 = vld [vmem:[%s7822 + $0x20] sm:$0xf]
        %v7832 = vld [vmem:[%s7822 + $0x24] sm:$0xf]
        %v7833 = vld [vmem:[%s7822 + $0x28] sm:$0xf]
        %v7834 = vld [vmem:[%s7822 + $0x2c] sm:$0xf]
        %v7835 = vld [vmem:[%s7822 + $0x30] sm:$0xf]
        %v7836 = vld [vmem:[%s7822 + $0x34] sm:$0xf]
        %v7837 = vld [vmem:[%s7822 + $0x38] sm:$0xf]
        %v7838 = vld [vmem:[%s7822 + $0x3c] sm:$0xf]
        %v7855 = vunpack.c.l.b16 %v7823
        %v7856 = vunpack.c.l.b16 %v7824
        %v7857 = vunpack.c.l.b16 %v7825
        %v7858 = vunpack.c.l.b16 %v7826
        %v7859 = vunpack.c.l.b16 %v7827
        %v7860 = vunpack.c.l.b16 %v7828
        %v7861 = vunpack.c.l.b16 %v7829
        %v7862 = vunpack.c.l.b16 %v7830
        %v7863 = vunpack.c.l.b16 %v7831
        %v7864 = vunpack.c.l.b16 %v7832
        %v7865 = vunpack.c.l.b16 %v7833
        %v7866 = vunpack.c.l.b16 %v7834
        %v7867 = vunpack.c.l.b16 %v7835
        %v7868 = vunpack.c.l.b16 %v7836
        %v7869 = vunpack.c.l.b16 %v7837
        %v7870 = vunpack.c.l.b16 %v7838
        %v7871 = vpack.c.b16 %v7856, %v7855
        %v7872 = vpack.c.b16 %v7858, %v7857
        %v7873 = vpack.c.b16 %v7860, %v7859
        %v7874 = vpack.c.b16 %v7862, %v7861
        %v7875 = vpack.c.b16 %v7864, %v7863
        %v7876 = vpack.c.b16 %v7866, %v7865
        %v7877 = vpack.c.b16 %v7868, %v7867
        %v7878 = vpack.c.b16 %v7870, %v7869
        %7887 = vmatprep.subr.bf16.mxu0 0
        %7888 = vmatpush1.bf16.msra.mxu0 %v7871
        %7889 = vmatprep.subr.bf16.mxu0 0
        %7890 = vmatpush1.bf16.msra.mxu0 %v7872
        %7891 = vmatprep.subr.bf16.mxu0 0
        %7892 = vmatpush1.bf16.msra.mxu0 %v7873
        %7893 = vmatprep.subr.bf16.mxu0 0
        %7894 = vmatpush1.bf16.msra.mxu0 %v7874
        %7895 = vmatprep.subr.bf16.mxu0 0
        %7896 = vmatpush1.bf16.msra.mxu0 %v7875
        %7897 = vmatprep.subr.bf16.mxu0 0
        %7898 = vmatpush1.bf16.msra.mxu0 %v7876
        %7899 = vmatprep.subr.bf16.mxu0 0
        %7900 = vmatpush1.bf16.msra.mxu0 %v7877
        %7901 = vmatprep.subr.bf16.mxu0 0
        %7902 = vmatpush1.bf16.msra.mxu0 %v7878
        %7903 = vmatprep.subr.bf16.mxu0 0
        %7904 = vmatpush1.bf16.msra.mxu0 0
        %7905 = vmatprep.subr.bf16.mxu0 0
        %7906 = vmatpush1.bf16.msra.mxu0 0
        %7907 = vmatprep.subr.bf16.mxu0 0
        %7908 = vmatpush1.bf16.msra.mxu0 0
        %7909 = vmatprep.subr.bf16.mxu0 0
        %7910 = vmatpush1.bf16.msra.mxu0 0
        %7911 = vmatprep.subr.bf16.mxu0 0
        %7912 = vmatpush1.bf16.msra.mxu0 0
        %7913 = vmatprep.subr.bf16.mxu0 0
        %7914 = vmatpush1.bf16.msra.mxu0 0
        %7915 = vmatprep.subr.bf16.mxu0 0
        %7916 = vmatpush1.bf16.msra.mxu0 0
        %7917 = vmatprep.subr.bf16.mxu0 0
        %7918 = vmatpush1.bf16.msra.mxu0 0
        %7919 = vmatprep.mubr.bf16.mxu0 0
        %7920 = vmatmul.mubr.bf16.gmra.mrb[0].mxu0 %v7821
        %v7921 = vpop.f32.mrb[0].mxu0
        %v7922 = vadd.f32 0.0, %v7921
        %v7923 = vpop.f32.mrb[0].mxu0
        %v7924 = vpop.f32.mrb[0].mxu0
        %v7925 = vpop.f32.mrb[0].mxu0
        %7926 = vdwg.mxu0
        %7927 = vst.msk [vmem:[%s172] sm:$0x1] %vm7819, %v7922
        %s7928 = sand.u32 %s76, 1
        %s7929 = scalar_lea.sflag [#allocation7], %s7928
        %s7930 = sand.u32 %s76, 1
        %s7931 = scalar_lea.vmem [#allocation6], %s7930
        %s7932 = sand.u32 %s102, 1
        %s7933 = scalar_lea.sflag [#allocation9], %s7932
        %s7934 = sand.u32 %s102, 1
        %s7935 = scalar_lea.vmem [#allocation8], %s7934
        // Predicated region
        $region29: #{resnet_tsa_forward.1} parent=27 // pred_check
          %p7936 = pneg %p86
        $region30: #{resnet_tsa_forward.1} parent=27 // pred_check_branch
          %7938 = sbr.rel (%p7936) target = $region32
        $region31: #{resnet_tsa_forward.1} parent=27 // pred_region
          %s7940 = ssub.s32 16, 16
          %7941 = vsyncadd %s7929, %s7940
          %s7942 = smul.addr %s21, 16
          %s7943 = scalar_lea.hbm %s2, %s7942
          %s7945 = sshll.u32 %s7931, 4
          %s7946 = int_to_ptr.vmem [resolvable:$true] %s7945
          %7948 = dma.vmem_to_hbm [thread:$0]  %s7946, 16, %s7943, %s7929
        $region32: #{resnet_tsa_forward.1} parent=27 // pred_fallthru
          _
        // Predicated region
        $region33: #{resnet_tsa_forward.1} parent=27 // pred_check
          %p7949 = pneg %p112
        $region34: #{resnet_tsa_forward.1} parent=27 // pred_check_branch
          %7951 = sbr.rel (%p7949) target = $region36
        $region35: #{resnet_tsa_forward.1} parent=27 // pred_region
          %s7953 = ssub.s32 16, 16
          %7954 = vsyncadd %s7933, %s7953
          %s7955 = smul.addr %s21, 16
          %s7956 = scalar_lea.hbm %s3, %s7955
          %s7958 = sshll.u32 %s7935, 4
          %s7959 = int_to_ptr.vmem [resolvable:$true] %s7958
          %7961 = dma.vmem_to_hbm [thread:$0]  %s7959, 16, %s7956, %s7933
        $region36: #{resnet_tsa_forward.1} parent=27 // pred_fallthru
          _
      $region28: #{resnet_tsa_forward.1} parent=5 // pred_fallthru
        _
      %p7962 = scmp.le.s32.totalorder 2, %s16
      // Predicated region
      $region37: #{resnet_tsa_forward.1} parent=5 // pred_check
        %p7963 = pneg %p7962
      $region38: #{resnet_tsa_forward.1} parent=5 // pred_check_branch
        %7965 = sbr.rel (%p7963) target = $region40
      $region39: #{resnet_tsa_forward.1} parent=5 // pred_region
        %s7966 = ssub.s32 %s16, 2
        // Predicated region
        $region41: #{resnet_tsa_forward.1} parent=39 // pred_check
          %p7967 = pneg %p92
        $region42: #{resnet_tsa_forward.1} parent=39 // pred_check_branch
          %7969 = sbr.rel (%p7967) target = $region44
        $region43: #{resnet_tsa_forward.1} parent=39 // pred_region
          %s7970 = sand.u32 %s77, 1
          %s7971 = scalar_lea.sflag [#allocation7], %s7970
          %s7972 = sand.u32 %s77, 1
          %s7973 = scalar_lea.vmem [#allocation6], %s7972
          %7974 = dma.done %s7971, 16
        $region44: #{resnet_tsa_forward.1} parent=39 // pred_fallthru
          _
        // Predicated region
        $region45: #{resnet_tsa_forward.1} parent=39 // pred_check
          %p7975 = pneg %p118
        $region46: #{resnet_tsa_forward.1} parent=39 // pred_check_branch
          %7977 = sbr.rel (%p7975) target = $region48
        $region47: #{resnet_tsa_forward.1} parent=39 // pred_region
          %s7978 = sand.u32 %s103, 1
          %s7979 = scalar_lea.sflag [#allocation9], %s7978
          %s7980 = sand.u32 %s103, 1
          %s7981 = scalar_lea.vmem [#allocation8], %s7980
          %7982 = dma.done %s7979, 16
        $region48: #{resnet_tsa_forward.1} parent=39 // pred_fallthru
          _
      $region40: #{resnet_tsa_forward.1} parent=5 // pred_fallthru
        _
    $region6: #{resnet_tsa_forward.1} parent=1 // loop_footer
      %s20 = sadd.s32 1, %s16
    $region7: #{resnet_tsa_forward.1} parent=1 // loop_footer_branch
      %15 = sbr.rel target = $region3
    $region8: #{resnet_tsa_forward.1} parent=1 // loop_exit
      _
    %7983 = vsyncpa [#allocation7], 1
    %s7984 = scalar_lea.sflag [#allocation7], 1
    %7985 = vsyncpa %s7984, 1
    %7986 = vsyncpa [#allocation9], 1
    %s7987 = scalar_lea.sflag [#allocation9], 1
    %7988 = vsyncpa %s7987, 1

</llo_original>
